<compile_context>
chip_gen: v7x
topology: tpu7x:2x2x1
jax: 0.10.0
libtpu: 0.0.40
codegen_flags: <defaults>
</compile_context>

<pallas_src>
from functools import partial

import jax
import jax.numpy as jnp
from jax.experimental import pallas as pl
from jax.experimental.pallas import tpu as pltpu


_CH_ALIGN = 16  # channel alignment (bf16 sublane packing); no-op for real widths


def _round_up(v, m):
    return ((v + m - 1) // m) * m


# ----------------------------------------------------------------------------
# In-kernel helper: nine shifted-tap matmuls, f32 accumulation on the MXU.
# ----------------------------------------------------------------------------
def _taps_matmul(tap_fn, w_refs):
    """out_j = sum_k tap_fn(k) @ w_j[k*Cin:(k+1)*Cin, :]   (f32 accumulate).

    tap_fn(k) -> (Ho, Wo, Cin) bf16 tile for 3x3 tap k (k = 3*ky + kx).
    w_refs[j] -> (9*Cin, Cout) bf16 weight ref (BN scale already folded in).
    """
    accs = [None] * len(w_refs)
    for k in range(9):
        tap = tap_fn(k)
        ho, wo, cin = tap.shape
        t2 = tap.reshape(ho * wo, cin)
        for j, w_ref in enumerate(w_refs):
            wk = w_ref[pl.ds(k * cin, cin), :]
            d = jnp.dot(t2, wk, preferred_element_type=jnp.float32)
            accs[j] = d if accs[j] is None else accs[j] + d
    return accs


# ----------------------------------------------------------------------------
# Fused Block kernel, identity skip (stride 1): one invocation per image.
# ----------------------------------------------------------------------------
def _block_identity_kernel(x_ref, w1_ref, s1_ref, w2_ref, s2_ref, o_ref,
                           xpad_ref, hpad_ref, *, H, W):
    # Stage the input tile with a zero halo (conv padding handled in VMEM),
    # cast to bf16 for the MXU taps.
    xpad_ref[...] = jnp.zeros_like(xpad_ref)
    xpad_ref[pl.ds(1, H), pl.ds(1, W), :] = x_ref[0].astype(xpad_ref.dtype)

    # conv1 + BN1 + ReLU  (BN scale folded into w1, per-channel shift here).
    h = _taps_matmul(lambda k: xpad_ref[pl.ds(k // 3, H), pl.ds(k % 3, W), :],
                     [w1_ref])[0]
    h = jnp.maximum(h + s1_ref[...], 0.0)                      # (H*W, Cp) f32

    # Stage conv1 output with a zero halo for conv2's taps (bf16, VMEM only).
    hpad_ref[...] = jnp.zeros_like(hpad_ref)
    hpad_ref[pl.ds(1, H), pl.ds(1, W), :] = (
        h.reshape(H, W, -1).astype(hpad_ref.dtype))

    # conv2 + BN2 (no ReLU yet).
    y = _taps_matmul(lambda k: hpad_ref[pl.ds(k // 3, H), pl.ds(k % 3, W), :],
                     [w2_ref])[0]
    y = y + s2_ref[...]

    # Identity residual (kept f32) + final ReLU.
    skip = x_ref[0].astype(jnp.float32).reshape(H * W, -1)
    y = jnp.maximum(y + skip, 0.0)
    o_ref[0] = y.reshape(H, W, -1).astype(o_ref.dtype)


# ----------------------------------------------------------------------------
# Fused Block kernel, down-sample path (conv1 & skip conv at stride 2).
# ----------------------------------------------------------------------------
def _block_down_kernel(xph_ref, w1_ref, s1_ref, wd_ref, sd_ref,
                       w2_ref, s2_ref, o_ref, hpad_ref, *, Ho, Wo, HpB):
    # Stride-2 3x3 taps are contiguous slices of the phase-decomposed input:
    #   xph[p*HpB + i, j, :] == x_pad[2*i + p//2, 2*j + p%2, :]
    def tap_s2(k):
        ky, kx = k // 3, k % 3
        p = (ky % 2) * 2 + (kx % 2)
        return xph_ref[0, pl.ds(p * HpB + ky // 2, Ho), pl.ds(kx // 2, Wo), :]

    # conv1 and the down-sample conv share the same input taps.
    h, skip = _taps_matmul(tap_s2, [w1_ref, wd_ref])
    h = jnp.maximum(h + s1_ref[...], 0.0)                      # conv1 + BN1 + ReLU
    skip = jnp.maximum(skip + sd_ref[...], 0.0)                # down conv + BN + ReLU

    hpad_ref[...] = jnp.zeros_like(hpad_ref)
    hpad_ref[pl.ds(1, Ho), pl.ds(1, Wo), :] = (
        h.reshape(Ho, Wo, -1).astype(hpad_ref.dtype))

    # conv2 + BN2, residual add, final ReLU.
    y = _taps_matmul(lambda k: hpad_ref[pl.ds(k // 3, Ho), pl.ds(k % 3, Wo), :],
                     [w2_ref])[0]
    y = jnp.maximum(y + s2_ref[...] + skip, 0.0)
    o_ref[0] = y.reshape(Ho, Wo, -1).astype(o_ref.dtype)


# ----------------------------------------------------------------------------
# Wrapper-side parameter prep: fold inference BN into the conv weights.
# ----------------------------------------------------------------------------
def _fold_conv_bn(w, b, gamma, beta, mean, var, *, cin_pad, cout_pad, eps=1e-5):
    cout, cin = w.shape[0], w.shape[1]
    scale = gamma / jnp.sqrt(var + eps)                        # (cout,)
    w_hwio = jnp.transpose(w, (2, 3, 1, 0)) * scale[None, None, None, :]
    w_hwio = jnp.pad(w_hwio, ((0, 0), (0, 0),
                              (0, cin_pad - cin), (0, cout_pad - cout)))
    w_fold = w_hwio.reshape(9 * cin_pad, cout_pad).astype(jnp.bfloat16)
    shift = beta + scale * (b - mean)                          # conv bias folded in
    shift = jnp.pad(shift, (0, cout_pad - cout)).astype(jnp.float32)
    return w_fold, shift.reshape(1, cout_pad)


# ----------------------------------------------------------------------------
# Block forward (matches the PyTorch module semantics, inference-mode BN).
# ----------------------------------------------------------------------------
@partial(jax.jit, static_argnames=("down_sample",))
def block_forward(x_nchw, params, *, down_sample=False):
    x = jnp.transpose(x_nchw, (0, 2, 3, 1))                    # NCHW -> NHWC
    N, H, W, cin = x.shape
    cout = params["conv1"][0].shape[0]
    cp_in = _round_up(cin, _CH_ALIGN)
    cp_out = _round_up(cout, _CH_ALIGN)

    w1, s1 = _fold_conv_bn(*params["conv1"], cin_pad=cp_in, cout_pad=cp_out)
    w2, s2 = _fold_conv_bn(*params["conv2"], cin_pad=cp_out, cout_pad=cp_out)

    if cp_in != cin:                                           # zero-pad channels
        x = jnp.pad(x, ((0, 0), (0, 0), (0, 0), (0, cp_in - cin)))

    def wspec(shape):
        return pl.BlockSpec(shape, lambda n: (0, 0))

    cparams = pltpu.CompilerParams(
        dimension_semantics=("parallel",),      # batch steps shard across TCs (v7x)
        vmem_limit_bytes=32 * 1024 * 1024)

    if not down_sample:
        assert cin == cout, "identity skip requires in_channel == out_channel"
        out = pl.pallas_call(
            partial(_block_identity_kernel, H=H, W=W),
            out_shape=jax.ShapeDtypeStruct((N, H, W, cp_out), x.dtype),
            grid=(N,),
            in_specs=[
                pl.BlockSpec((1, H, W, cp_in), lambda n: (n, 0, 0, 0)),
                wspec((9 * cp_in, cp_out)), wspec((1, cp_out)),
                wspec((9 * cp_out, cp_out)), wspec((1, cp_out)),
            ],
            out_specs=pl.BlockSpec((1, H, W, cp_out), lambda n: (n, 0, 0, 0)),
            scratch_shapes=[
                pltpu.VMEM((H + 2, W + 2, cp_in), jnp.bfloat16),
                pltpu.VMEM((H + 2, W + 2, cp_out), jnp.bfloat16),
            ],
            compiler_params=cparams,
        )(x, w1, s1, w2, s2)
    else:
        wd, sd = _fold_conv_bn(*params["down"], cin_pad=cp_in, cout_pad=cp_out)
        Ho = (H - 1) // 2 + 1
        Wo = (W - 1) // 2 + 1
        # Zero-pad the halo, make spatial dims even, then phase-decompose so
        # stride-2 taps become contiguous slices inside the kernel (one ~1x
        # relayout copy that replaces any im2col materialization).
        xp = jnp.pad(x, ((0, 0), (1, 1), (1, 1), (0, 0)))
        Hp, Wp = H + 2, W + 2
        if Hp % 2:
            xp = jnp.pad(xp, ((0, 0), (0, 1), (0, 0), (0, 0)))
            Hp += 1
        if Wp % 2:
            xp = jnp.pad(xp, ((0, 0), (0, 0), (0, 1), (0, 0)))
            Wp += 1
        HpB, WpB = Hp // 2, Wp // 2
        assert HpB >= Ho + 1 and WpB >= Wo + 1
        xph = (xp.reshape(N, HpB, 2, WpB, 2, cp_in)
                 .transpose(0, 2, 4, 1, 3, 5)
                 .reshape(N, 4 * HpB, WpB, cp_in)
                 .astype(jnp.bfloat16))                        # GEMM-only -> bf16
        out = pl.pallas_call(
            partial(_block_down_kernel, Ho=Ho, Wo=Wo, HpB=HpB),
            out_shape=jax.ShapeDtypeStruct((N, Ho, Wo, cp_out), x.dtype),
            grid=(N,),
            in_specs=[
                pl.BlockSpec((1, 4 * HpB, WpB, cp_in), lambda n: (n, 0, 0, 0)),
                wspec((9 * cp_in, cp_out)), wspec((1, cp_out)),
                wspec((9 * cp_in, cp_out)), wspec((1, cp_out)),
                wspec((9 * cp_out, cp_out)), wspec((1, cp_out)),
            ],
            out_specs=pl.BlockSpec((1, Ho, Wo, cp_out), lambda n: (n, 0, 0, 0)),
            scratch_shapes=[
                pltpu.VMEM((Ho + 2, Wo + 2, cp_out), jnp.bfloat16),
            ],
            compiler_params=cparams,
        )(xph, w1, s1, wd, sd, w2, s2)

    out = out[..., :cout]                                      # drop channel pad
    return jnp.transpose(out, (0, 3, 1, 2))                    # NHWC -> NCHW


# ----------------------------------------------------------------------------
# Pure-JAX reference (f32) for verification.
# ----------------------------------------------------------------------------
def _ref_conv_bn_act(x_nhwc, w, b, gamma, beta, mean, var, stride, relu,
                     eps=1e-5):
    y = jax.lax.conv_general_dilated(
        x_nhwc, jnp.transpose(w, (2, 3, 1, 0)),
        window_strides=(stride, stride), padding=((1, 1), (1, 1)),
        dimension_numbers=("NHWC", "HWIO", "NHWC"))
    y = y + b
    scale = gamma / jnp.sqrt(var + eps)
    y = scale * (y - mean) + beta
    if relu:
        y = jnp.maximum(y, 0.0)
    return y


def block_ref(x_nchw, params, *, down_sample=False):
    x = jnp.transpose(x_nchw, (0, 2, 3, 1))
    stride = 2 if down_sample else 1
    h = _ref_conv_bn_act(x, *params["conv1"], stride, True)
    skip = (_ref_conv_bn_act(x, *params["down"], stride, True)
            if down_sample else x)
    y = _ref_conv_bn_act(h, *params["conv2"], 1, False)
    y = jnp.maximum(y + skip, 0.0)
    return jnp.transpose(y, (0, 3, 1, 2))


# ----------------------------------------------------------------------------
if __name__ == "__main__":
    x = jax.random.normal(jax.random.PRNGKey(0), (2, 4, 16, 16),
                          dtype=jnp.float32)

    def make_conv_params(key, cin, cout):
        k1, k2, k3, k4, k5, k6 = jax.random.split(key, 6)
        w = 0.1 * jax.random.normal(k1, (cout, cin, 3, 3), jnp.float32)
        b = 0.1 * jax.random.normal(k2, (cout,), jnp.float32)
        gamma = 1.0 + 0.1 * jax.random.normal(k3, (cout,), jnp.float32)
        beta = 0.1 * jax.random.normal(k4, (cout,), jnp.float32)
        mean = 0.1 * jax.random.normal(k5, (cout,), jnp.float32)
        var = jnp.abs(jax.random.normal(k6, (cout,), jnp.float32)) + 0.5
        return (w, b, gamma, beta, mean, var)

    kp = jax.random.split(jax.random.PRNGKey(1), 3)
    params_plain = {"conv1": make_conv_params(kp[0], 4, 4),
                    "conv2": make_conv_params(kp[1], 4, 4)}
    params_down = {"conv1": make_conv_params(kp[0], 4, 8),
                   "conv2": make_conv_params(kp[1], 8, 8),
                   "down": make_conv_params(kp[2], 4, 8)}

    # Plain residual block (stride 1, identity skip).
    y1 = jax.block_until_ready(block_forward(x, params_plain,
                                             down_sample=False))
    # Down-sampling block (stride 2, conv skip).
    y2 = jax.block_until_ready(block_forward(x, params_down,
                                             down_sample=True))

    r1 = block_ref(x, params_plain, down_sample=False)
    r2 = block_ref(x, params_down, down_sample=True)

    assert y1.shape == (2, 4, 16, 16) and y1.dtype == x.dtype
    assert y2.shape == (2, 8, 8, 8) and y2.dtype == x.dtype
    # bf16 MXU operands (f32 accumulation) -> loosened tolerance vs f32 ref.
    assert jnp.allclose(y1, r1, atol=5e-2, rtol=5e-2), \
        float(jnp.max(jnp.abs(y1 - r1)))
    assert jnp.allclose(y2, r2, atol=5e-2, rtol=5e-2), \
        float(jnp.max(jnp.abs(y2 - r2)))
    print("KERNEL_OK")
</pallas_src>

<mosaic_0001>
module attributes {stable_mosaic.version = 11 : i64} {
  func.func @_block_identity_kernel(%arg0: i32, %arg1: memref<1x16x16x16xf32, #tpu.memory_space<vmem>>, %arg2: memref<144x16xbf16, #tpu.memory_space<vmem>>, %arg3: memref<1x16xf32, #tpu.memory_space<vmem>>, %arg4: memref<144x16xbf16, #tpu.memory_space<vmem>>, %arg5: memref<1x16xf32, #tpu.memory_space<vmem>>, %arg6: memref<1x16x16x16xf32, #tpu.memory_space<vmem>>, %arg7: memref<18x18x16xbf16, #tpu.memory_space<vmem>>, %arg8: memref<18x18x16xbf16, #tpu.memory_space<vmem>>) attributes {dimension_semantics = [#tpu.dimension_semantics<parallel>], iteration_bounds = array<i64: 2>, scalar_prefetch = 0 : i64, scratch_operands = 2 : i64, tpu.core_type = #tpu.core_type<tc>, window_params = [{transform_indices = @transform_0, window_bounds = array<i64: 1, 16, 16, 16>}, {pipeline_mode = #tpu.pipeline_mode<synchronous>, transform_indices = @transform_1, window_bounds = array<i64: 144, 16>}, {pipeline_mode = #tpu.pipeline_mode<synchronous>, transform_indices = @transform_2, window_bounds = array<i64: 1, 16>}, {pipeline_mode = #tpu.pipeline_mode<synchronous>, transform_indices = @transform_3, window_bounds = array<i64: 144, 16>}, {pipeline_mode = #tpu.pipeline_mode<synchronous>, transform_indices = @transform_4, window_bounds = array<i64: 1, 16>}, {transform_indices = @transform_5, window_bounds = array<i64: 1, 16, 16, 16>}]} {
    %cst = arith.constant 0.000000e+00 : bf16
    %0 = vector.broadcast %cst : bf16 to vector<18x18x16xbf16>
    %c0 = arith.constant 0 : index
    %c0_0 = arith.constant 0 : index
    %c0_1 = arith.constant 0 : index
    %1 = vector.load %arg7[%c0, %c0_0, %c0_1] : memref<18x18x16xbf16, #tpu.memory_space<vmem>>, vector<18x18x16xbf16>
    tpu.vector_store %arg7[%c0, %c0_0, %c0_1], %0 {strides = array<i32>} : memref<18x18x16xbf16, #tpu.memory_space<vmem>>, vector<18x18x16xbf16>,
    %c0_2 = arith.constant 0 : index
    %c0_3 = arith.constant 0 : index
    %c0_4 = arith.constant 0 : index
    %c0_5 = arith.constant 0 : index
    %2 = vector.load %arg1[%c0_2, %c0_3, %c0_4, %c0_5] : memref<1x16x16x16xf32, #tpu.memory_space<vmem>>, vector<1x16x16x16xf32>
    %3 = vector.shape_cast %2 : vector<1x16x16x16xf32> to vector<16x16x16xf32>
    %4 = arith.truncf %3 : vector<16x16x16xf32> to vector<16x16x16xbf16>
    %c1 = arith.constant 1 : index
    %c1_6 = arith.constant 1 : index
    %c0_7 = arith.constant 0 : index
    %5 = vector.load %arg7[%c1, %c1_6, %c0_7] : memref<18x18x16xbf16, #tpu.memory_space<vmem>>, vector<16x16x16xbf16>
    tpu.vector_store %arg7[%c1, %c1_6, %c0_7], %4 {strides = array<i32>} : memref<18x18x16xbf16, #tpu.memory_space<vmem>>, vector<16x16x16xbf16>,
    %c0_8 = arith.constant 0 : index
    %c0_9 = arith.constant 0 : index
    %c0_10 = arith.constant 0 : index
    %6 = vector.load %arg7[%c0_8, %c0_9, %c0_10] : memref<18x18x16xbf16, #tpu.memory_space<vmem>>, vector<16x16x16xbf16>
    %7 = vector.shape_cast %6 : vector<16x16x16xbf16> to vector<256x16xbf16>
    %c0_11 = arith.constant 0 : index
    %c0_12 = arith.constant 0 : index
    %8 = vector.load %arg2[%c0_11, %c0_12] : memref<144x16xbf16, #tpu.memory_space<vmem>>, vector<16x16xbf16>
    %cst_13 = arith.constant dense<0.000000e+00> : vector<256x16xf32>
    %9 = tpu.matmul %7, %8, %cst_13 {dimension_numbers = #tpu.dot_dimension_numbers<[1], [0], [0], [1], [0, 0, 1, 1], [], []>} : vector<256x16xbf16>, vector<16x16xbf16>, vector<256x16xf32> -> vector<256x16xf32>
    %c0_14 = arith.constant 0 : index
    %c1_15 = arith.constant 1 : index
    %c0_16 = arith.constant 0 : index
    %10 = vector.load %arg7[%c0_14, %c1_15, %c0_16] : memref<18x18x16xbf16, #tpu.memory_space<vmem>>, vector<16x16x16xbf16>
    %11 = vector.shape_cast %10 : vector<16x16x16xbf16> to vector<256x16xbf16>
    %c16 = arith.constant 16 : index
    %c0_17 = arith.constant 0 : index
    %12 = vector.load %arg2[%c16, %c0_17] : memref<144x16xbf16, #tpu.memory_space<vmem>>, vector<16x16xbf16>
    %cst_18 = arith.constant dense<0.000000e+00> : vector<256x16xf32>
    %13 = tpu.matmul %11, %12, %cst_18 {dimension_numbers = #tpu.dot_dimension_numbers<[1], [0], [0], [1], [0, 0, 1, 1], [], []>} : vector<256x16xbf16>, vector<16x16xbf16>, vector<256x16xf32> -> vector<256x16xf32>
    %14 = arith.addf %9, %13 : vector<256x16xf32>
    %c0_19 = arith.constant 0 : index
    %c2 = arith.constant 2 : index
    %c0_20 = arith.constant 0 : index
    %15 = vector.load %arg7[%c0_19, %c2, %c0_20] : memref<18x18x16xbf16, #tpu.memory_space<vmem>>, vector<16x16x16xbf16>
    %16 = vector.shape_cast %15 : vector<16x16x16xbf16> to vector<256x16xbf16>
    %c32 = arith.constant 32 : index
    %c0_21 = arith.constant 0 : index
    %17 = vector.load %arg2[%c32, %c0_21] : memref<144x16xbf16, #tpu.memory_space<vmem>>, vector<16x16xbf16>
    %cst_22 = arith.constant dense<0.000000e+00> : vector<256x16xf32>
    %18 = tpu.matmul %16, %17, %cst_22 {dimension_numbers = #tpu.dot_dimension_numbers<[1], [0], [0], [1], [0, 0, 1, 1], [], []>} : vector<256x16xbf16>, vector<16x16xbf16>, vector<256x16xf32> -> vector<256x16xf32>
    %19 = arith.addf %14, %18 : vector<256x16xf32>
    %c1_23 = arith.constant 1 : index
    %c0_24 = arith.constant 0 : index
    %c0_25 = arith.constant 0 : index
    %20 = vector.load %arg7[%c1_23, %c0_24, %c0_25] : memref<18x18x16xbf16, #tpu.memory_space<vmem>>, vector<16x16x16xbf16>
    %21 = vector.shape_cast %20 : vector<16x16x16xbf16> to vector<256x16xbf16>
    %c48 = arith.constant 48 : index
    %c0_26 = arith.constant 0 : index
    %22 = vector.load %arg2[%c48, %c0_26] : memref<144x16xbf16, #tpu.memory_space<vmem>>, vector<16x16xbf16>
    %cst_27 = arith.constant dense<0.000000e+00> : vector<256x16xf32>
    %23 = tpu.matmul %21, %22, %cst_27 {dimension_numbers = #tpu.dot_dimension_numbers<[1], [0], [0], [1], [0, 0, 1, 1], [], []>} : vector<256x16xbf16>, vector<16x16xbf16>, vector<256x16xf32> -> vector<256x16xf32>
    %24 = arith.addf %19, %23 : vector<256x16xf32>
    %c1_28 = arith.constant 1 : index
    %c1_29 = arith.constant 1 : index
    %c0_30 = arith.constant 0 : index
    %25 = vector.load %arg7[%c1_28, %c1_29, %c0_30] : memref<18x18x16xbf16, #tpu.memory_space<vmem>>, vector<16x16x16xbf16>
    %26 = vector.shape_cast %25 : vector<16x16x16xbf16> to vector<256x16xbf16>
    %c64 = arith.constant 64 : index
    %c0_31 = arith.constant 0 : index
    %27 = vector.load %arg2[%c64, %c0_31] : memref<144x16xbf16, #tpu.memory_space<vmem>>, vector<16x16xbf16>
    %cst_32 = arith.constant dense<0.000000e+00> : vector<256x16xf32>
    %28 = tpu.matmul %26, %27, %cst_32 {dimension_numbers = #tpu.dot_dimension_numbers<[1], [0], [0], [1], [0, 0, 1, 1], [], []>} : vector<256x16xbf16>, vector<16x16xbf16>, vector<256x16xf32> -> vector<256x16xf32>
    %29 = arith.addf %24, %28 : vector<256x16xf32>
    %c1_33 = arith.constant 1 : index
    %c2_34 = arith.constant 2 : index
    %c0_35 = arith.constant 0 : index
    %30 = vector.load %arg7[%c1_33, %c2_34, %c0_35] : memref<18x18x16xbf16, #tpu.memory_space<vmem>>, vector<16x16x16xbf16>
    %31 = vector.shape_cast %30 : vector<16x16x16xbf16> to vector<256x16xbf16>
    %c80 = arith.constant 80 : index
    %c0_36 = arith.constant 0 : index
    %32 = vector.load %arg2[%c80, %c0_36] : memref<144x16xbf16, #tpu.memory_space<vmem>>, vector<16x16xbf16>
    %cst_37 = arith.constant dense<0.000000e+00> : vector<256x16xf32>
    %33 = tpu.matmul %31, %32, %cst_37 {dimension_numbers = #tpu.dot_dimension_numbers<[1], [0], [0], [1], [0, 0, 1, 1], [], []>} : vector<256x16xbf16>, vector<16x16xbf16>, vector<256x16xf32> -> vector<256x16xf32>
    %34 = arith.addf %29, %33 : vector<256x16xf32>
    %c2_38 = arith.constant 2 : index
    %c0_39 = arith.constant 0 : index
    %c0_40 = arith.constant 0 : index
    %35 = vector.load %arg7[%c2_38, %c0_39, %c0_40] : memref<18x18x16xbf16, #tpu.memory_space<vmem>>, vector<16x16x16xbf16>
    %36 = vector.shape_cast %35 : vector<16x16x16xbf16> to vector<256x16xbf16>
    %c96 = arith.constant 96 : index
    %c0_41 = arith.constant 0 : index
    %37 = vector.load %arg2[%c96, %c0_41] : memref<144x16xbf16, #tpu.memory_space<vmem>>, vector<16x16xbf16>
    %cst_42 = arith.constant dense<0.000000e+00> : vector<256x16xf32>
    %38 = tpu.matmul %36, %37, %cst_42 {dimension_numbers = #tpu.dot_dimension_numbers<[1], [0], [0], [1], [0, 0, 1, 1], [], []>} : vector<256x16xbf16>, vector<16x16xbf16>, vector<256x16xf32> -> vector<256x16xf32>
    %39 = arith.addf %34, %38 : vector<256x16xf32>
    %c2_43 = arith.constant 2 : index
    %c1_44 = arith.constant 1 : index
    %c0_45 = arith.constant 0 : index
    %40 = vector.load %arg7[%c2_43, %c1_44, %c0_45] : memref<18x18x16xbf16, #tpu.memory_space<vmem>>, vector<16x16x16xbf16>
    %41 = vector.shape_cast %40 : vector<16x16x16xbf16> to vector<256x16xbf16>
    %c112 = arith.constant 112 : index
    %c0_46 = arith.constant 0 : index
    %42 = vector.load %arg2[%c112, %c0_46] : memref<144x16xbf16, #tpu.memory_space<vmem>>, vector<16x16xbf16>
    %cst_47 = arith.constant dense<0.000000e+00> : vector<256x16xf32>
    %43 = tpu.matmul %41, %42, %cst_47 {dimension_numbers = #tpu.dot_dimension_numbers<[1], [0], [0], [1], [0, 0, 1, 1], [], []>} : vector<256x16xbf16>, vector<16x16xbf16>, vector<256x16xf32> -> vector<256x16xf32>
    %44 = arith.addf %39, %43 : vector<256x16xf32>
    %c2_48 = arith.constant 2 : index
    %c2_49 = arith.constant 2 : index
    %c0_50 = arith.constant 0 : index
    %45 = vector.load %arg7[%c2_48, %c2_49, %c0_50] : memref<18x18x16xbf16, #tpu.memory_space<vmem>>, vector<16x16x16xbf16>
    %46 = vector.shape_cast %45 : vector<16x16x16xbf16> to vector<256x16xbf16>
    %c128 = arith.constant 128 : index
    %c0_51 = arith.constant 0 : index
    %47 = vector.load %arg2[%c128, %c0_51] : memref<144x16xbf16, #tpu.memory_space<vmem>>, vector<16x16xbf16>
    %cst_52 = arith.constant dense<0.000000e+00> : vector<256x16xf32>
    %48 = tpu.matmul %46, %47, %cst_52 {dimension_numbers = #tpu.dot_dimension_numbers<[1], [0], [0], [1], [0, 0, 1, 1], [], []>} : vector<256x16xbf16>, vector<16x16xbf16>, vector<256x16xf32> -> vector<256x16xf32>
    %49 = arith.addf %44, %48 : vector<256x16xf32>
    %c0_53 = arith.constant 0 : index
    %c0_54 = arith.constant 0 : index
    %50 = vector.load %arg3[%c0_53, %c0_54] : memref<1x16xf32, #tpu.memory_space<vmem>>, vector<1x16xf32>
    %51 = vector.broadcast %50 : vector<1x16xf32> to vector<256x16xf32>
    %52 = arith.addf %49, %51 : vector<256x16xf32>
    %cst_55 = arith.constant 0.000000e+00 : f32
    %53 = vector.broadcast %cst_55 : f32 to vector<256x16xf32>
    %54 = arith.maximumf %52, %53 : vector<256x16xf32>
    %cst_56 = arith.constant 0.000000e+00 : bf16
    %55 = vector.broadcast %cst_56 : bf16 to vector<18x18x16xbf16>
    %c0_57 = arith.constant 0 : index
    %c0_58 = arith.constant 0 : index
    %c0_59 = arith.constant 0 : index
    %56 = vector.load %arg8[%c0_57, %c0_58, %c0_59] : memref<18x18x16xbf16, #tpu.memory_space<vmem>>, vector<18x18x16xbf16>
    tpu.vector_store %arg8[%c0_57, %c0_58, %c0_59], %55 {strides = array<i32>} : memref<18x18x16xbf16, #tpu.memory_space<vmem>>, vector<18x18x16xbf16>,
    %57 = vector.shape_cast %54 : vector<256x16xf32> to vector<16x16x16xf32>
    %58 = arith.truncf %57 : vector<16x16x16xf32> to vector<16x16x16xbf16>
    %c1_60 = arith.constant 1 : index
    %c1_61 = arith.constant 1 : index
    %c0_62 = arith.constant 0 : index
    %59 = vector.load %arg8[%c1_60, %c1_61, %c0_62] : memref<18x18x16xbf16, #tpu.memory_space<vmem>>, vector<16x16x16xbf16>
    tpu.vector_store %arg8[%c1_60, %c1_61, %c0_62], %58 {strides = array<i32>} : memref<18x18x16xbf16, #tpu.memory_space<vmem>>, vector<16x16x16xbf16>,
    %c0_63 = arith.constant 0 : index
    %c0_64 = arith.constant 0 : index
    %c0_65 = arith.constant 0 : index
    %60 = vector.load %arg8[%c0_63, %c0_64, %c0_65] : memref<18x18x16xbf16, #tpu.memory_space<vmem>>, vector<16x16x16xbf16>
    %61 = vector.shape_cast %60 : vector<16x16x16xbf16> to vector<256x16xbf16>
    %c0_66 = arith.constant 0 : index
    %c0_67 = arith.constant 0 : index
    %62 = vector.load %arg4[%c0_66, %c0_67] : memref<144x16xbf16, #tpu.memory_space<vmem>>, vector<16x16xbf16>
    %cst_68 = arith.constant dense<0.000000e+00> : vector<256x16xf32>
    %63 = tpu.matmul %61, %62, %cst_68 {dimension_numbers = #tpu.dot_dimension_numbers<[1], [0], [0], [1], [0, 0, 1, 1], [], []>} : vector<256x16xbf16>, vector<16x16xbf16>, vector<256x16xf32> -> vector<256x16xf32>
    %c0_69 = arith.constant 0 : index
    %c1_70 = arith.constant 1 : index
    %c0_71 = arith.constant 0 : index
    %64 = vector.load %arg8[%c0_69, %c1_70, %c0_71] : memref<18x18x16xbf16, #tpu.memory_space<vmem>>, vector<16x16x16xbf16>
    %65 = vector.shape_cast %64 : vector<16x16x16xbf16> to vector<256x16xbf16>
    %c16_72 = arith.constant 16 : index
    %c0_73 = arith.constant 0 : index
    %66 = vector.load %arg4[%c16_72, %c0_73] : memref<144x16xbf16, #tpu.memory_space<vmem>>, vector<16x16xbf16>
    %cst_74 = arith.constant dense<0.000000e+00> : vector<256x16xf32>
    %67 = tpu.matmul %65, %66, %cst_74 {dimension_numbers = #tpu.dot_dimension_numbers<[1], [0], [0], [1], [0, 0, 1, 1], [], []>} : vector<256x16xbf16>, vector<16x16xbf16>, vector<256x16xf32> -> vector<256x16xf32>
    %68 = arith.addf %63, %67 : vector<256x16xf32>
    %c0_75 = arith.constant 0 : index
    %c2_76 = arith.constant 2 : index
    %c0_77 = arith.constant 0 : index
    %69 = vector.load %arg8[%c0_75, %c2_76, %c0_77] : memref<18x18x16xbf16, #tpu.memory_space<vmem>>, vector<16x16x16xbf16>
    %70 = vector.shape_cast %69 : vector<16x16x16xbf16> to vector<256x16xbf16>
    %c32_78 = arith.constant 32 : index
    %c0_79 = arith.constant 0 : index
    %71 = vector.load %arg4[%c32_78, %c0_79] : memref<144x16xbf16, #tpu.memory_space<vmem>>, vector<16x16xbf16>
    %cst_80 = arith.constant dense<0.000000e+00> : vector<256x16xf32>
    %72 = tpu.matmul %70, %71, %cst_80 {dimension_numbers = #tpu.dot_dimension_numbers<[1], [0], [0], [1], [0, 0, 1, 1], [], []>} : vector<256x16xbf16>, vector<16x16xbf16>, vector<256x16xf32> -> vector<256x16xf32>
    %73 = arith.addf %68, %72 : vector<256x16xf32>
    %c1_81 = arith.constant 1 : index
    %c0_82 = arith.constant 0 : index
    %c0_83 = arith.constant 0 : index
    %74 = vector.load %arg8[%c1_81, %c0_82, %c0_83] : memref<18x18x16xbf16, #tpu.memory_space<vmem>>, vector<16x16x16xbf16>
    %75 = vector.shape_cast %74 : vector<16x16x16xbf16> to vector<256x16xbf16>
    %c48_84 = arith.constant 48 : index
    %c0_85 = arith.constant 0 : index
    %76 = vector.load %arg4[%c48_84, %c0_85] : memref<144x16xbf16, #tpu.memory_space<vmem>>, vector<16x16xbf16>
    %cst_86 = arith.constant dense<0.000000e+00> : vector<256x16xf32>
    %77 = tpu.matmul %75, %76, %cst_86 {dimension_numbers = #tpu.dot_dimension_numbers<[1], [0], [0], [1], [0, 0, 1, 1], [], []>} : vector<256x16xbf16>, vector<16x16xbf16>, vector<256x16xf32> -> vector<256x16xf32>
    %78 = arith.addf %73, %77 : vector<256x16xf32>
    %c1_87 = arith.constant 1 : index
    %c1_88 = arith.constant 1 : index
    %c0_89 = arith.constant 0 : index
    %79 = vector.load %arg8[%c1_87, %c1_88, %c0_89] : memref<18x18x16xbf16, #tpu.memory_space<vmem>>, vector<16x16x16xbf16>
    %80 = vector.shape_cast %79 : vector<16x16x16xbf16> to vector<256x16xbf16>
    %c64_90 = arith.constant 64 : index
    %c0_91 = arith.constant 0 : index
    %81 = vector.load %arg4[%c64_90, %c0_91] : memref<144x16xbf16, #tpu.memory_space<vmem>>, vector<16x16xbf16>
    %cst_92 = arith.constant dense<0.000000e+00> : vector<256x16xf32>
    %82 = tpu.matmul %80, %81, %cst_92 {dimension_numbers = #tpu.dot_dimension_numbers<[1], [0], [0], [1], [0, 0, 1, 1], [], []>} : vector<256x16xbf16>, vector<16x16xbf16>, vector<256x16xf32> -> vector<256x16xf32>
    %83 = arith.addf %78, %82 : vector<256x16xf32>
    %c1_93 = arith.constant 1 : index
    %c2_94 = arith.constant 2 : index
    %c0_95 = arith.constant 0 : index
    %84 = vector.load %arg8[%c1_93, %c2_94, %c0_95] : memref<18x18x16xbf16, #tpu.memory_space<vmem>>, vector<16x16x16xbf16>
    %85 = vector.shape_cast %84 : vector<16x16x16xbf16> to vector<256x16xbf16>
    %c80_96 = arith.constant 80 : index
    %c0_97 = arith.constant 0 : index
    %86 = vector.load %arg4[%c80_96, %c0_97] : memref<144x16xbf16, #tpu.memory_space<vmem>>, vector<16x16xbf16>
    %cst_98 = arith.constant dense<0.000000e+00> : vector<256x16xf32>
    %87 = tpu.matmul %85, %86, %cst_98 {dimension_numbers = #tpu.dot_dimension_numbers<[1], [0], [0], [1], [0, 0, 1, 1], [], []>} : vector<256x16xbf16>, vector<16x16xbf16>, vector<256x16xf32> -> vector<256x16xf32>
    %88 = arith.addf %83, %87 : vector<256x16xf32>
    %c2_99 = arith.constant 2 : index
    %c0_100 = arith.constant 0 : index
    %c0_101 = arith.constant 0 : index
    %89 = vector.load %arg8[%c2_99, %c0_100, %c0_101] : memref<18x18x16xbf16, #tpu.memory_space<vmem>>, vector<16x16x16xbf16>
    %90 = vector.shape_cast %89 : vector<16x16x16xbf16> to vector<256x16xbf16>
    %c96_102 = arith.constant 96 : index
    %c0_103 = arith.constant 0 : index
    %91 = vector.load %arg4[%c96_102, %c0_103] : memref<144x16xbf16, #tpu.memory_space<vmem>>, vector<16x16xbf16>
    %cst_104 = arith.constant dense<0.000000e+00> : vector<256x16xf32>
    %92 = tpu.matmul %90, %91, %cst_104 {dimension_numbers = #tpu.dot_dimension_numbers<[1], [0], [0], [1], [0, 0, 1, 1], [], []>} : vector<256x16xbf16>, vector<16x16xbf16>, vector<256x16xf32> -> vector<256x16xf32>
    %93 = arith.addf %88, %92 : vector<256x16xf32>
    %c2_105 = arith.constant 2 : index
    %c1_106 = arith.constant 1 : index
    %c0_107 = arith.constant 0 : index
    %94 = vector.load %arg8[%c2_105, %c1_106, %c0_107] : memref<18x18x16xbf16, #tpu.memory_space<vmem>>, vector<16x16x16xbf16>
    %95 = vector.shape_cast %94 : vector<16x16x16xbf16> to vector<256x16xbf16>
    %c112_108 = arith.constant 112 : index
    %c0_109 = arith.constant 0 : index
    %96 = vector.load %arg4[%c112_108, %c0_109] : memref<144x16xbf16, #tpu.memory_space<vmem>>, vector<16x16xbf16>
    %cst_110 = arith.constant dense<0.000000e+00> : vector<256x16xf32>
    %97 = tpu.matmul %95, %96, %cst_110 {dimension_numbers = #tpu.dot_dimension_numbers<[1], [0], [0], [1], [0, 0, 1, 1], [], []>} : vector<256x16xbf16>, vector<16x16xbf16>, vector<256x16xf32> -> vector<256x16xf32>
    %98 = arith.addf %93, %97 : vector<256x16xf32>
    %c2_111 = arith.constant 2 : index
    %c2_112 = arith.constant 2 : index
    %c0_113 = arith.constant 0 : index
    %99 = vector.load %arg8[%c2_111, %c2_112, %c0_113] : memref<18x18x16xbf16, #tpu.memory_space<vmem>>, vector<16x16x16xbf16>
    %100 = vector.shape_cast %99 : vector<16x16x16xbf16> to vector<256x16xbf16>
    %c128_114 = arith.constant 128 : index
    %c0_115 = arith.constant 0 : index
    %101 = vector.load %arg4[%c128_114, %c0_115] : memref<144x16xbf16, #tpu.memory_space<vmem>>, vector<16x16xbf16>
    %cst_116 = arith.constant dense<0.000000e+00> : vector<256x16xf32>
    %102 = tpu.matmul %100, %101, %cst_116 {dimension_numbers = #tpu.dot_dimension_numbers<[1], [0], [0], [1], [0, 0, 1, 1], [], []>} : vector<256x16xbf16>, vector<16x16xbf16>, vector<256x16xf32> -> vector<256x16xf32>
    %103 = arith.addf %98, %102 : vector<256x16xf32>
    %c0_117 = arith.constant 0 : index
    %c0_118 = arith.constant 0 : index
    %104 = vector.load %arg5[%c0_117, %c0_118] : memref<1x16xf32, #tpu.memory_space<vmem>>, vector<1x16xf32>
    %105 = vector.broadcast %104 : vector<1x16xf32> to vector<256x16xf32>
    %106 = arith.addf %103, %105 : vector<256x16xf32>
    %c0_119 = arith.constant 0 : index
    %c0_120 = arith.constant 0 : index
    %c0_121 = arith.constant 0 : index
    %c0_122 = arith.constant 0 : index
    %107 = vector.load %arg1[%c0_119, %c0_120, %c0_121, %c0_122] : memref<1x16x16x16xf32, #tpu.memory_space<vmem>>, vector<1x16x16x16xf32>
    %108 = vector.shape_cast %107 : vector<1x16x16x16xf32> to vector<16x16x16xf32>
    %109 = vector.shape_cast %108 : vector<16x16x16xf32> to vector<256x16xf32>
    %110 = arith.addf %106, %109 : vector<256x16xf32>
    %cst_123 = arith.constant 0.000000e+00 : f32
    %111 = vector.broadcast %cst_123 : f32 to vector<256x16xf32>
    %112 = arith.maximumf %110, %111 : vector<256x16xf32>
    %113 = vector.shape_cast %112 : vector<256x16xf32> to vector<16x16x16xf32>
    %c0_124 = arith.constant 0 : index
    %c0_125 = arith.constant 0 : index
    %c0_126 = arith.constant 0 : index
    %c0_127 = arith.constant 0 : index
    %114 = vector.load %arg6[%c0_124, %c0_125, %c0_126, %c0_127] : memref<1x16x16x16xf32, #tpu.memory_space<vmem>>, vector<1x16x16x16xf32>
    %115 = vector.shape_cast %114 : vector<1x16x16x16xf32> to vector<16x16x16xf32>
    %116 = vector.shape_cast %113 : vector<16x16x16xf32> to vector<1x16x16x16xf32>
    tpu.vector_store %arg6[%c0_124, %c0_125, %c0_126, %c0_127], %116 {strides = array<i32>} : memref<1x16x16x16xf32, #tpu.memory_space<vmem>>, vector<1x16x16x16xf32>,
    return
  }
  func.func @transform_0(%arg0: i32) -> (i32, i32, i32, i32) {
    %c0_i32 = arith.constant 0 : i32
    %c0_i32_0 = arith.constant 0 : i32
    %c0_i32_1 = arith.constant 0 : i32
    %c0_i32_2 = arith.constant 0 : i32
    return %arg0, %c0_i32, %c0_i32_0, %c0_i32_1 : i32, i32, i32, i32
  }
  func.func @transform_1(%arg0: i32) -> (i32, i32) {
    %c0_i32 = arith.constant 0 : i32
    %c0_i32_0 = arith.constant 0 : i32
    %c0_i32_1 = arith.constant 0 : i32
    return %c0_i32, %c0_i32_0 : i32, i32
  }
  func.func @transform_2(%arg0: i32) -> (i32, i32) {
    %c0_i32 = arith.constant 0 : i32
    %c0_i32_0 = arith.constant 0 : i32
    %c0_i32_1 = arith.constant 0 : i32
    return %c0_i32, %c0_i32_0 : i32, i32
  }
  func.func @transform_3(%arg0: i32) -> (i32, i32) {
    %c0_i32 = arith.constant 0 : i32
    %c0_i32_0 = arith.constant 0 : i32
    %c0_i32_1 = arith.constant 0 : i32
    return %c0_i32, %c0_i32_0 : i32, i32
  }
  func.func @transform_4(%arg0: i32) -> (i32, i32) {
    %c0_i32 = arith.constant 0 : i32
    %c0_i32_0 = arith.constant 0 : i32
    %c0_i32_1 = arith.constant 0 : i32
    return %c0_i32, %c0_i32_0 : i32, i32
  }
  func.func @transform_5(%arg0: i32) -> (i32, i32, i32, i32) {
    %c0_i32 = arith.constant 0 : i32
    %c0_i32_0 = arith.constant 0 : i32
    %c0_i32_1 = arith.constant 0 : i32
    %c0_i32_2 = arith.constant 0 : i32
    return %arg0, %c0_i32, %c0_i32_0, %c0_i32_1 : i32, i32, i32, i32
  }
}

</mosaic_0001>

<llo_original>
// kernel: block_forward.1
$region0: #{block_forward.1}
  #allocation0 [shape = 'u32[]', space=smem, size = 0x4, offset = 0x4, fixed_abs, tag = 'smem constant byte address 0x4 - core index']
  #allocation1 [shape = 'u32[144,128]{1,0:T(1,128)}', space=vmem, size = 0x12000, scoped, tag = 'internal scratch']
  #allocation2 [shape = 'bf16[18,18,16]{2,1,0:T(8,128)(2,1)}', space=vmem, size = 0x1b000, scoped, tag = 'scratch operand']
  #allocation3 [shape = 'bf16[18,18,16]{2,1,0:T(8,128)(2,1)}', space=vmem, size = 0x1b000, scoped, tag = 'scratch operand']
  %s0 = inlined_call_operand.vmem [shape: f32[2,16,16,16], index: 0, kind: input, shape index: {}]
  %s1 = inlined_call_operand.vmem [shape: bf16[144,16], index: 1, kind: input, shape index: {}]
  %s2 = inlined_call_operand.vmem [shape: f32[1,16], index: 2, kind: input, shape index: {}]
  %s3 = inlined_call_operand.vmem [shape: bf16[144,16], index: 3, kind: input, shape index: {}]
  %s4 = inlined_call_operand.vmem [shape: f32[1,16], index: 4, kind: input, shape index: {}]
  %s5 = inlined_call_operand.vmem [shape: f32[2,16,16,16], index: 5, kind: output, shape index: {}]
  %s6 = sld [smem:[#allocation0]]
  $region53: #{block_forward.1} parent=0
    _
  %s8 = ssub.s32 1, %s6
  %s9 = scalar_select 0, %s8, %s6
  loop: start=0, step=1, limit=4
  $region2: #{block_forward.1} parent=0 // loop_pre_header
    _
  $region3: #{block_forward.1} parent=0 // loop_header
    %s11 = sphi 0, %s15
    %p12 = scmp.ge.s32.totalorder %s11, 4
    %s21 = sphi 0, %s23
    %s24 = sphi 0, %s21
    %s25 = sphi 0, %s24
    %s41 = sphi 0, %s25
    %s45 = sphi 0, %s45
    %s47 = sphi 0, %s45
    %s48 = sphi 0, %s47
    %s62 = sphi 0, %s48
    %s66 = sphi 0, %s66
    %s68 = sphi 0, %s66
    %s69 = sphi 0, %s68
    %s83 = sphi 0, %s69
    %s87 = sphi 0, %s87
    %s89 = sphi 0, %s87
    %s90 = sphi 0, %s89
    %s104 = sphi 0, %s90
    %s108 = sphi 0, %s108
    %s110 = sphi 0, %s108
    %s111 = sphi 0, %s110
    %s125 = sphi 0, %s111
    %s131 = sphi 0, %s133
    %s134 = sphi 0, %s131
    %s135 = sphi 0, %s134
    %s151 = sphi 0, %s135
  $region4: #{block_forward.1} parent=0 // loop_header_branch
    %14 = sbr.rel (%p12) target = $region8
  $region5: #{block_forward.1} parent=0 // loop_body
    %s16 = ssub.s32 %s11, 1
    %s17 = ssub.s32 %s11, 2
    %s18 = sadd.s32 %s11, 1
    %s19 = ssub.s32 %s11, %s18
    %p20 = scmp.eq.s32.totalorder %s19, 0
    %s22 = sadd.s32 %s21, 1
    %s23 = scalar_select %p20, %s21, %s22
    %p26 = pneg %p20
    %p27 = scmp.eq.s32.totalorder %s11, 1
    %p28 = por %p26, %p27
    %p29 = scmp.ne.s32.totalorder %s21, %s24
    %p30 = scmp.eq.s32.totalorder %s11, 0
    %p31 = por %p29, %p30
    %p32 = scmp.ne.s32.totalorder %s21, %s24
    %p33 = scmp.eq.s32.totalorder %s16, 1
    %p34 = por %p32, %p33
    %p35 = scmp.ne.s32.totalorder %s24, %s25
    %p36 = scmp.eq.s32.totalorder %s16, 0
    %p37 = por %p35, %p36
    %p38 = scmp.ne.s32.totalorder %s24, %s25
    %p39 = scmp.eq.s32.totalorder %s17, 1
    %p40 = por %p38, %p39
    %p42 = scmp.ne.s32.totalorder %s25, %s41
    %p43 = scmp.eq.s32.totalorder %s17, 0
    %p44 = por %p42, %p43
    %s46 = sadd.s32 %s45, 1
    %p49 = scmp.eq.s32.totalorder %s11, 1
    %p50 = scmp.ne.s32.totalorder %s45, %s47
    %p51 = scmp.eq.s32.totalorder %s11, 0
    %p52 = por %p50, %p51
    %p53 = scmp.ne.s32.totalorder %s45, %s47
    %p54 = scmp.eq.s32.totalorder %s16, 1
    %p55 = por %p53, %p54
    %p56 = scmp.ne.s32.totalorder %s47, %s48
    %p57 = scmp.eq.s32.totalorder %s16, 0
    %p58 = por %p56, %p57
    %p59 = scmp.ne.s32.totalorder %s47, %s48
    %p60 = scmp.eq.s32.totalorder %s17, 1
    %p61 = por %p59, %p60
    %p63 = scmp.ne.s32.totalorder %s48, %s62
    %p64 = scmp.eq.s32.totalorder %s17, 0
    %p65 = por %p63, %p64
    %s67 = sadd.s32 %s66, 1
    %p70 = scmp.eq.s32.totalorder %s11, 1
    %p71 = scmp.ne.s32.totalorder %s66, %s68
    %p72 = scmp.eq.s32.totalorder %s11, 0
    %p73 = por %p71, %p72
    %p74 = scmp.ne.s32.totalorder %s66, %s68
    %p75 = scmp.eq.s32.totalorder %s16, 1
    %p76 = por %p74, %p75
    %p77 = scmp.ne.s32.totalorder %s68, %s69
    %p78 = scmp.eq.s32.totalorder %s16, 0
    %p79 = por %p77, %p78
    %p80 = scmp.ne.s32.totalorder %s68, %s69
    %p81 = scmp.eq.s32.totalorder %s17, 1
    %p82 = por %p80, %p81
    %p84 = scmp.ne.s32.totalorder %s69, %s83
    %p85 = scmp.eq.s32.totalorder %s17, 0
    %p86 = por %p84, %p85
    %s88 = sadd.s32 %s87, 1
    %p91 = scmp.eq.s32.totalorder %s11, 1
    %p92 = scmp.ne.s32.totalorder %s87, %s89
    %p93 = scmp.eq.s32.totalorder %s11, 0
    %p94 = por %p92, %p93
    %p95 = scmp.ne.s32.totalorder %s87, %s89
    %p96 = scmp.eq.s32.totalorder %s16, 1
    %p97 = por %p95, %p96
    %p98 = scmp.ne.s32.totalorder %s89, %s90
    %p99 = scmp.eq.s32.totalorder %s16, 0
    %p100 = por %p98, %p99
    %p101 = scmp.ne.s32.totalorder %s89, %s90
    %p102 = scmp.eq.s32.totalorder %s17, 1
    %p103 = por %p101, %p102
    %p105 = scmp.ne.s32.totalorder %s90, %s104
    %p106 = scmp.eq.s32.totalorder %s17, 0
    %p107 = por %p105, %p106
    %s109 = sadd.s32 %s108, 1
    %p112 = scmp.eq.s32.totalorder %s11, 1
    %p113 = scmp.ne.s32.totalorder %s108, %s110
    %p114 = scmp.eq.s32.totalorder %s11, 0
    %p115 = por %p113, %p114
    %p116 = scmp.ne.s32.totalorder %s108, %s110
    %p117 = scmp.eq.s32.totalorder %s16, 1
    %p118 = por %p116, %p117
    %p119 = scmp.ne.s32.totalorder %s110, %s111
    %p120 = scmp.eq.s32.totalorder %s16, 0
    %p121 = por %p119, %p120
    %p122 = scmp.ne.s32.totalorder %s110, %s111
    %p123 = scmp.eq.s32.totalorder %s17, 1
    %p124 = por %p122, %p123
    %p126 = scmp.ne.s32.totalorder %s111, %s125
    %p127 = scmp.eq.s32.totalorder %s17, 0
    %p128 = por %p126, %p127
    %s129 = ssub.s32 %s11, %s18
    %p130 = scmp.eq.s32.totalorder %s129, 0
    %s132 = sadd.s32 %s131, 1
    %s133 = scalar_select %p130, %s131, %s132
    %p136 = pneg %p130
    %p137 = scmp.eq.s32.totalorder %s11, 1
    %p138 = por %p136, %p137
    %p139 = scmp.ne.s32.totalorder %s131, %s134
    %p140 = scmp.eq.s32.totalorder %s11, 0
    %p141 = por %p139, %p140
    %p142 = scmp.ne.s32.totalorder %s131, %s134
    %p143 = scmp.eq.s32.totalorder %s16, 1
    %p144 = por %p142, %p143
    %p145 = scmp.ne.s32.totalorder %s134, %s135
    %p146 = scmp.eq.s32.totalorder %s16, 0
    %p147 = por %p145, %p146
    %p148 = scmp.ne.s32.totalorder %s134, %s135
    %p149 = scmp.eq.s32.totalorder %s17, 1
    %p150 = por %p148, %p149
    %p152 = scmp.ne.s32.totalorder %s135, %s151
    %p153 = scmp.eq.s32.totalorder %s17, 0
    %p154 = por %p152, %p153
    %p155 = scmp.le.s32.totalorder 1, %s11
    %p156 = scmp.lt.s32.totalorder %s11, 3
    %p157 = pnand %p155, %p156
    %p158 = pneg %p157
    // Predicated region
    $region9: #{block_forward.1} parent=5 // pred_check
      _
    $region10: #{block_forward.1} parent=5 // pred_check_branch
      %160 = sbr.rel (%p157) target = $region12
    $region11: #{block_forward.1} parent=5 // pred_region
      %s161 = ssub.s32 %s11, 1
      // Predicated region
      $region13: #{block_forward.1} parent=11 // pred_check
        %p162 = pneg %p58
      $region14: #{block_forward.1} parent=11 // pred_check_branch
        %164 = sbr.rel (%p162) target = $region16
      $region15: #{block_forward.1} parent=11 // pred_region
        _
      $region16: #{block_forward.1} parent=11 // pred_fallthru
        _
      // Predicated region
      $region17: #{block_forward.1} parent=11 // pred_check
        %p165 = pneg %p79
      $region18: #{block_forward.1} parent=11 // pred_check_branch
        %167 = sbr.rel (%p165) target = $region20
      $region19: #{block_forward.1} parent=11 // pred_region
        _
      $region20: #{block_forward.1} parent=11 // pred_fallthru
        _
      // Predicated region
      $region21: #{block_forward.1} parent=11 // pred_check
        %p168 = pneg %p100
      $region22: #{block_forward.1} parent=11 // pred_check_branch
        %170 = sbr.rel (%p168) target = $region24
      $region23: #{block_forward.1} parent=11 // pred_region
        _
      $region24: #{block_forward.1} parent=11 // pred_fallthru
        _
      // Predicated region
      $region25: #{block_forward.1} parent=11 // pred_check
        %p171 = pneg %p121
      $region26: #{block_forward.1} parent=11 // pred_check_branch
        %173 = sbr.rel (%p171) target = $region28
      $region27: #{block_forward.1} parent=11 // pred_region
        _
      $region28: #{block_forward.1} parent=11 // pred_fallthru
        _
    $region12: #{block_forward.1} parent=5 // pred_fallthru
      _
    %p174 = scmp.lt.s32.totalorder %s11, 2
    // Predicated region
    $region29: #{block_forward.1} parent=5 // pred_check
      %p175 = pneg %p174
    $region30: #{block_forward.1} parent=5 // pred_check_branch
      %177 = sbr.rel (%p175) target = $region32
    $region31: #{block_forward.1} parent=5 // pred_region
      // Predicated region
      $region33: #{block_forward.1} parent=31 // pred_check
        %p178 = pneg %p31
      $region34: #{block_forward.1} parent=31 // pred_check_branch
        %180 = sbr.rel (%p178) target = $region36
      $region35: #{block_forward.1} parent=31 // pred_region
        %p181 = scmp.lt.s32.totalorder %s11, 1
        %s182 = scalar_select %p181, %s11, 1
        %s183 = smul.addr %s182, 32
        %s184 = smul.addr %s183, 8
        %s185 = scalar_lea.vmem %s0, %s184
      $region36: #{block_forward.1} parent=31 // pred_fallthru
        _
    $region32: #{block_forward.1} parent=5 // pred_fallthru
      _
    %p186 = scmp.le.s32.totalorder 1, %s11
    %p187 = scmp.lt.s32.totalorder %s11, 3
    %p188 = pnand %p186, %p187
    %p189 = pneg %p188
    // Predicated region
    $region37: #{block_forward.1} parent=5 // pred_check
      _
    $region38: #{block_forward.1} parent=5 // pred_check_branch
      %191 = sbr.rel (%p188) target = $region40
    $region39: #{block_forward.1} parent=5 // pred_region
      %s192 = ssub.s32 %s11, 1
      %p193 = scmp.lt.s32.totalorder %s16, 1
      %s194 = scalar_select %p193, %s16, 1
      %s195 = smul.addr %s194, 32
      %s196 = smul.addr %s195, 8
      %s197 = scalar_lea.vmem %s0, %s196
      %p198 = pneg %p37
      %p199 = pneg %p34
      %p200 = pneg %p58
      %p201 = pneg %p55
      %p202 = pneg %p79
      %p203 = pneg %p76
      %p204 = pneg %p100
      %p205 = pneg %p97
      %p206 = pneg %p121
      %p207 = pneg %p118
      %p208 = pneg %p147
      %p209 = pneg %p144
      %p210 = scmp.lt.s32.totalorder %s16, 1
      %s211 = scalar_select %p210, %s16, 1
      %s212 = smul.addr %s211, 32
      %s213 = smul.addr %s212, 8
      %s214 = scalar_lea.vmem %s5, %s213
      %p215 = scmp.lt.s32.totalorder %s16, 1
      %s216 = scalar_select %p215, %s16, 1
      %s217 = smul.addr %s216, 32
      %s218 = smul.addr %s217, 8
      %s219 = scalar_lea.vmem %s0, %s218
      %p220 = scmp.lt.s32.totalorder %s16, 1
      %s221 = scalar_select %p220, %s16, 1
      %s222 = smul.addr %s221, 32
      %s223 = smul.addr %s222, 8
      %s224 = scalar_lea.vmem %s5, %s223
      %vm226 = vcmask 125952
      %227 = vst.msk [vmem:[#allocation2] sm:$0xf] %vm226, 0
      %228 = vst.msk [vmem:[#allocation2 + $0x4] sm:$0xf] %vm226, 0
      %vm229 = vcmask 122880
      %230 = vst.msk [vmem:[#allocation2 + $0x8] sm:$0x1] %vm229, 0
      %231 = vst.msk [vmem:[#allocation2 + $0xc] sm:$0xf] %vm226, 0
      %232 = vst.msk [vmem:[#allocation2 + $0x10] sm:$0xf] %vm226, 0
      %233 = vst.msk [vmem:[#allocation2 + $0x14] sm:$0x1] %vm229, 0
      %234 = vst.msk [vmem:[#allocation2 + $0x18] sm:$0xf] %vm226, 0
      %235 = vst.msk [vmem:[#allocation2 + $0x1c] sm:$0xf] %vm226, 0
      %236 = vst.msk [vmem:[#allocation2 + $0x20] sm:$0x1] %vm229, 0
      %237 = vst.msk [vmem:[#allocation2 + $0x24] sm:$0xf] %vm226, 0
      %238 = vst.msk [vmem:[#allocation2 + $0x28] sm:$0xf] %vm226, 0
      %239 = vst.msk [vmem:[#allocation2 + $0x2c] sm:$0x1] %vm229, 0
      %240 = vst.msk [vmem:[#allocation2 + $0x30] sm:$0xf] %vm226, 0
      %241 = vst.msk [vmem:[#allocation2 + $0x34] sm:$0xf] %vm226, 0
      %242 = vst.msk [vmem:[#allocation2 + $0x38] sm:$0x1] %vm229, 0
      %243 = vst.msk [vmem:[#allocation2 + $0x3c] sm:$0xf] %vm226, 0
      %244 = vst.msk [vmem:[#allocation2 + $0x40] sm:$0xf] %vm226, 0
      %245 = vst.msk [vmem:[#allocation2 + $0x44] sm:$0x1] %vm229, 0
      %246 = vst.msk [vmem:[#allocation2 + $0x48] sm:$0xf] %vm226, 0
      %247 = vst.msk [vmem:[#allocation2 + $0x4c] sm:$0xf] %vm226, 0
      %248 = vst.msk [vmem:[#allocation2 + $0x50] sm:$0x1] %vm229, 0
      %249 = vst.msk [vmem:[#allocation2 + $0x54] sm:$0xf] %vm226, 0
      %250 = vst.msk [vmem:[#allocation2 + $0x58] sm:$0xf] %vm226, 0
      %251 = vst.msk [vmem:[#allocation2 + $0x5c] sm:$0x1] %vm229, 0
      %252 = vst.msk [vmem:[#allocation2 + $0x60] sm:$0xf] %vm226, 0
      %253 = vst.msk [vmem:[#allocation2 + $0x64] sm:$0xf] %vm226, 0
      %254 = vst.msk [vmem:[#allocation2 + $0x68] sm:$0x1] %vm229, 0
      %255 = vst.msk [vmem:[#allocation2 + $0x6c] sm:$0xf] %vm226, 0
      %256 = vst.msk [vmem:[#allocation2 + $0x70] sm:$0xf] %vm226, 0
      %257 = vst.msk [vmem:[#allocation2 + $0x74] sm:$0x1] %vm229, 0
      %258 = vst.msk [vmem:[#allocation2 + $0x78] sm:$0xf] %vm226, 0
      %259 = vst.msk [vmem:[#allocation2 + $0x7c] sm:$0xf] %vm226, 0
      %260 = vst.msk [vmem:[#allocation2 + $0x80] sm:$0x1] %vm229, 0
      %261 = vst.msk [vmem:[#allocation2 + $0x84] sm:$0xf] %vm226, 0
      %262 = vst.msk [vmem:[#allocation2 + $0x88] sm:$0xf] %vm226, 0
      %263 = vst.msk [vmem:[#allocation2 + $0x8c] sm:$0x1] %vm229, 0
      %264 = vst.msk [vmem:[#allocation2 + $0x90] sm:$0xf] %vm226, 0
      %265 = vst.msk [vmem:[#allocation2 + $0x94] sm:$0xf] %vm226, 0
      %266 = vst.msk [vmem:[#allocation2 + $0x98] sm:$0x1] %vm229, 0
      %267 = vst.msk [vmem:[#allocation2 + $0x9c] sm:$0xf] %vm226, 0
      %268 = vst.msk [vmem:[#allocation2 + $0xa0] sm:$0xf] %vm226, 0
      %269 = vst.msk [vmem:[#allocation2 + $0xa4] sm:$0x1] %vm229, 0
      %270 = vst.msk [vmem:[#allocation2 + $0xa8] sm:$0xf] %vm226, 0
      %271 = vst.msk [vmem:[#allocation2 + $0xac] sm:$0xf] %vm226, 0
      %272 = vst.msk [vmem:[#allocation2 + $0xb0] sm:$0x1] %vm229, 0
      %273 = vst.msk [vmem:[#allocation2 + $0xb4] sm:$0xf] %vm226, 0
      %274 = vst.msk [vmem:[#allocation2 + $0xb8] sm:$0xf] %vm226, 0
      %275 = vst.msk [vmem:[#allocation2 + $0xbc] sm:$0x1] %vm229, 0
      %276 = vst.msk [vmem:[#allocation2 + $0xc0] sm:$0xf] %vm226, 0
      %277 = vst.msk [vmem:[#allocation2 + $0xc4] sm:$0xf] %vm226, 0
      %278 = vst.msk [vmem:[#allocation2 + $0xc8] sm:$0x1] %vm229, 0
      %279 = vst.msk [vmem:[#allocation2 + $0xcc] sm:$0xf] %vm226, 0
      %280 = vst.msk [vmem:[#allocation2 + $0xd0] sm:$0xf] %vm226, 0
      %281 = vst.msk [vmem:[#allocation2 + $0xd4] sm:$0x1] %vm229, 0
      %v282 = vld [vmem:[%s219] sm:$0xff]
      %v283 = vld [vmem:[%s219 + $0x8] sm:$0xff]
      %v284 = vld [vmem:[%s219 + $0x10] sm:$0xff]
      %v285 = vld [vmem:[%s219 + $0x18] sm:$0xff]
      %v286 = vld [vmem:[%s219 + $0x20] sm:$0xff]
      %v287 = vld [vmem:[%s219 + $0x28] sm:$0xff]
      %v288 = vld [vmem:[%s219 + $0x30] sm:$0xff]
      %v289 = vld [vmem:[%s219 + $0x38] sm:$0xff]
      %v290 = vld [vmem:[%s219 + $0x40] sm:$0xff]
      %v291 = vld [vmem:[%s219 + $0x48] sm:$0xff]
      %v292 = vld [vmem:[%s219 + $0x50] sm:$0xff]
      %v293 = vld [vmem:[%s219 + $0x58] sm:$0xff]
      %v294 = vld [vmem:[%s219 + $0x60] sm:$0xff]
      %v295 = vld [vmem:[%s219 + $0x68] sm:$0xff]
      %v296 = vld [vmem:[%s219 + $0x70] sm:$0xff]
      %v297 = vld [vmem:[%s219 + $0x78] sm:$0xff]
      %v298 = vld [vmem:[%s219 + $0x80] sm:$0xff]
      %v299 = vld [vmem:[%s219 + $0x88] sm:$0xff]
      %v300 = vld [vmem:[%s219 + $0x90] sm:$0xff]
      %v301 = vld [vmem:[%s219 + $0x98] sm:$0xff]
      %v302 = vld [vmem:[%s219 + $0xa0] sm:$0xff]
      %v303 = vld [vmem:[%s219 + $0xa8] sm:$0xff]
      %v304 = vld [vmem:[%s219 + $0xb0] sm:$0xff]
      %v305 = vld [vmem:[%s219 + $0xb8] sm:$0xff]
      %v306 = vld [vmem:[%s219 + $0xc0] sm:$0xff]
      %v307 = vld [vmem:[%s219 + $0xc8] sm:$0xff]
      %v308 = vld [vmem:[%s219 + $0xd0] sm:$0xff]
      %v309 = vld [vmem:[%s219 + $0xd8] sm:$0xff]
      %v310 = vld [vmem:[%s219 + $0xe0] sm:$0xff]
      %v311 = vld [vmem:[%s219 + $0xe8] sm:$0xff]
      %v312 = vld [vmem:[%s219 + $0xf0] sm:$0xff]
      %v313 = vld [vmem:[%s219 + $0xf8] sm:$0xff]
      %v314 = vpack.c.bf16 %v283, %v282
      %v315 = vpack.c.bf16 %v285, %v284
      %v316 = vpack.c.bf16 %v287, %v286
      %v317 = vpack.c.bf16 %v289, %v288
      %v318 = vpack.c.bf16 %v291, %v290
      %v319 = vpack.c.bf16 %v293, %v292
      %v320 = vpack.c.bf16 %v295, %v294
      %v321 = vpack.c.bf16 %v297, %v296
      %v322 = vpack.c.bf16 %v299, %v298
      %v323 = vpack.c.bf16 %v301, %v300
      %v324 = vpack.c.bf16 %v303, %v302
      %v325 = vpack.c.bf16 %v305, %v304
      %v326 = vpack.c.bf16 %v307, %v306
      %v327 = vpack.c.bf16 %v309, %v308
      %v328 = vpack.c.bf16 %v311, %v310
      %v329 = vpack.c.bf16 %v313, %v312
      %v346 = vunpack.c.l.b16 %v314
      %v347 = vunpack.c.h.b16 %v314
      %v348 = vunpack.c.l.b16 %v315
      %v349 = vunpack.c.h.b16 %v315
      %v350 = vunpack.c.l.b16 %v316
      %v351 = vunpack.c.h.b16 %v316
      %v352 = vunpack.c.l.b16 %v317
      %v353 = vunpack.c.h.b16 %v317
      %v354 = vunpack.c.l.b16 %v318
      %v355 = vunpack.c.h.b16 %v318
      %v356 = vunpack.c.l.b16 %v319
      %v357 = vunpack.c.h.b16 %v319
      %v358 = vunpack.c.l.b16 %v320
      %v359 = vunpack.c.h.b16 %v320
      %v360 = vunpack.c.l.b16 %v321
      %v361 = vunpack.c.h.b16 %v321
      %v362 = vunpack.c.l.b16 %v322
      %v363 = vunpack.c.h.b16 %v322
      %v364 = vunpack.c.l.b16 %v323
      %v365 = vunpack.c.h.b16 %v323
      %v366 = vunpack.c.l.b16 %v324
      %v367 = vunpack.c.h.b16 %v324
      %v368 = vunpack.c.l.b16 %v325
      %v369 = vunpack.c.h.b16 %v325
      %v370 = vunpack.c.l.b16 %v326
      %v371 = vunpack.c.h.b16 %v326
      %v372 = vunpack.c.l.b16 %v327
      %v373 = vunpack.c.h.b16 %v327
      %v374 = vunpack.c.l.b16 %v328
      %v375 = vunpack.c.h.b16 %v328
      %v376 = vunpack.c.l.b16 %v329
      %v377 = vunpack.c.h.b16 %v329
      %v378 = vpack.c.b16 %v346, %v346
      %v379 = vpack.c.b16 %v347, %v347
      %v380 = vpack.c.b16 %v348, %v348
      %v381 = vpack.c.b16 %v349, %v349
      %v382 = vpack.c.b16 %v350, %v350
      %v383 = vpack.c.b16 %v351, %v351
      %v384 = vpack.c.b16 %v352, %v352
      %v385 = vpack.c.b16 %v353, %v353
      %v386 = vpack.c.b16 %v354, %v354
      %v387 = vpack.c.b16 %v355, %v355
      %v388 = vpack.c.b16 %v356, %v356
      %v389 = vpack.c.b16 %v357, %v357
      %v390 = vpack.c.b16 %v358, %v358
      %v391 = vpack.c.b16 %v359, %v359
      %v392 = vpack.c.b16 %v360, %v360
      %v393 = vpack.c.b16 %v361, %v361
      %v394 = vpack.c.b16 %v362, %v362
      %v395 = vpack.c.b16 %v363, %v363
      %v396 = vpack.c.b16 %v364, %v364
      %v397 = vpack.c.b16 %v365, %v365
      %v398 = vpack.c.b16 %v366, %v366
      %v399 = vpack.c.b16 %v367, %v367
      %v400 = vpack.c.b16 %v368, %v368
      %v401 = vpack.c.b16 %v369, %v369
      %v402 = vpack.c.b16 %v370, %v370
      %v403 = vpack.c.b16 %v371, %v371
      %v404 = vpack.c.b16 %v372, %v372
      %v405 = vpack.c.b16 %v373, %v373
      %v406 = vpack.c.b16 %v374, %v374
      %v407 = vpack.c.b16 %v375, %v375
      %v408 = vpack.c.b16 %v376, %v376
      %v409 = vpack.c.b16 %v377, %v377
      %vm410 = vsmask.f32 256
      %vm411 = vsmask.f32 4368
      %vm412 = vmor %vm410, %vm411
      %v414 = vshrl.u32 %v378, 16
      %v416 = vrot.slane %v414, 7
      %v417 = vshll.u32 %v378, 16
      %v419 = vor.u32 %v416, %v417
      %v420 = vrot.slane %v416, 4
      %v422 = vshrl.u32 %v379, 16
      %v424 = vrot.slane %v422, 7
      %v425 = vshll.u32 %v379, 16
      %v427 = vor.u32 %v424, %v425
      %v428 = vsel %vm412, %v420, %v427
      %v429 = vrot.slane %v424, 4
      %v431 = vshrl.u32 %v380, 16
      %v433 = vrot.slane %v431, 7
      %v434 = vshll.u32 %v380, 16
      %v436 = vor.u32 %v433, %v434
      %v437 = vrot.slane %v433, 4
      %v439 = vshrl.u32 %v381, 16
      %v441 = vrot.slane %v439, 7
      %v442 = vshll.u32 %v381, 16
      %v444 = vor.u32 %v441, %v442
      %v445 = vsel %vm412, %v437, %v444
      %v446 = vrot.slane %v441, 4
      %v448 = vshrl.u32 %v382, 16
      %v450 = vrot.slane %v448, 7
      %v451 = vshll.u32 %v382, 16
      %v453 = vor.u32 %v450, %v451
      %v454 = vrot.slane %v450, 4
      %v456 = vshrl.u32 %v383, 16
      %v458 = vrot.slane %v456, 7
      %v459 = vshll.u32 %v383, 16
      %v461 = vor.u32 %v458, %v459
      %v462 = vsel %vm412, %v454, %v461
      %v463 = vrot.slane %v458, 4
      %v465 = vshrl.u32 %v384, 16
      %v467 = vrot.slane %v465, 7
      %v468 = vshll.u32 %v384, 16
      %v470 = vor.u32 %v467, %v468
      %v471 = vrot.slane %v467, 4
      %v473 = vshrl.u32 %v385, 16
      %v475 = vrot.slane %v473, 7
      %v476 = vshll.u32 %v385, 16
      %v478 = vor.u32 %v475, %v476
      %v479 = vsel %vm412, %v471, %v478
      %v480 = vrot.slane %v475, 4
      %v482 = vshrl.u32 %v386, 16
      %v484 = vrot.slane %v482, 7
      %v485 = vshll.u32 %v386, 16
      %v487 = vor.u32 %v484, %v485
      %v488 = vrot.slane %v484, 4
      %v490 = vshrl.u32 %v387, 16
      %v492 = vrot.slane %v490, 7
      %v493 = vshll.u32 %v387, 16
      %v495 = vor.u32 %v492, %v493
      %v496 = vsel %vm412, %v488, %v495
      %v497 = vrot.slane %v492, 4
      %v499 = vshrl.u32 %v388, 16
      %v501 = vrot.slane %v499, 7
      %v502 = vshll.u32 %v388, 16
      %v504 = vor.u32 %v501, %v502
      %v505 = vrot.slane %v501, 4
      %v507 = vshrl.u32 %v389, 16
      %v509 = vrot.slane %v507, 7
      %v510 = vshll.u32 %v389, 16
      %v512 = vor.u32 %v509, %v510
      %v513 = vsel %vm412, %v505, %v512
      %v514 = vrot.slane %v509, 4
      %v516 = vshrl.u32 %v390, 16
      %v518 = vrot.slane %v516, 7
      %v519 = vshll.u32 %v390, 16
      %v521 = vor.u32 %v518, %v519
      %v522 = vrot.slane %v518, 4
      %v524 = vshrl.u32 %v391, 16
      %v526 = vrot.slane %v524, 7
      %v527 = vshll.u32 %v391, 16
      %v529 = vor.u32 %v526, %v527
      %v530 = vsel %vm412, %v522, %v529
      %v531 = vrot.slane %v526, 4
      %v533 = vshrl.u32 %v392, 16
      %v535 = vrot.slane %v533, 7
      %v536 = vshll.u32 %v392, 16
      %v538 = vor.u32 %v535, %v536
      %v539 = vrot.slane %v535, 4
      %v541 = vshrl.u32 %v393, 16
      %v543 = vrot.slane %v541, 7
      %v544 = vshll.u32 %v393, 16
      %v546 = vor.u32 %v543, %v544
      %v547 = vsel %vm412, %v539, %v546
      %v548 = vrot.slane %v543, 4
      %v550 = vshrl.u32 %v394, 16
      %v552 = vrot.slane %v550, 7
      %v553 = vshll.u32 %v394, 16
      %v555 = vor.u32 %v552, %v553
      %v556 = vrot.slane %v552, 4
      %v558 = vshrl.u32 %v395, 16
      %v560 = vrot.slane %v558, 7
      %v561 = vshll.u32 %v395, 16
      %v563 = vor.u32 %v560, %v561
      %v564 = vsel %vm412, %v556, %v563
      %v565 = vrot.slane %v560, 4
      %v567 = vshrl.u32 %v396, 16
      %v569 = vrot.slane %v567, 7
      %v570 = vshll.u32 %v396, 16
      %v572 = vor.u32 %v569, %v570
      %v573 = vrot.slane %v569, 4
      %v575 = vshrl.u32 %v397, 16
      %v577 = vrot.slane %v575, 7
      %v578 = vshll.u32 %v397, 16
      %v580 = vor.u32 %v577, %v578
      %v581 = vsel %vm412, %v573, %v580
      %v582 = vrot.slane %v577, 4
      %v584 = vshrl.u32 %v398, 16
      %v586 = vrot.slane %v584, 7
      %v587 = vshll.u32 %v398, 16
      %v589 = vor.u32 %v586, %v587
      %v590 = vrot.slane %v586, 4
      %v592 = vshrl.u32 %v399, 16
      %v594 = vrot.slane %v592, 7
      %v595 = vshll.u32 %v399, 16
      %v597 = vor.u32 %v594, %v595
      %v598 = vsel %vm412, %v590, %v597
      %v599 = vrot.slane %v594, 4
      %v601 = vshrl.u32 %v400, 16
      %v603 = vrot.slane %v601, 7
      %v604 = vshll.u32 %v400, 16
      %v606 = vor.u32 %v603, %v604
      %v607 = vrot.slane %v603, 4
      %v609 = vshrl.u32 %v401, 16
      %v611 = vrot.slane %v609, 7
      %v612 = vshll.u32 %v401, 16
      %v614 = vor.u32 %v611, %v612
      %v615 = vsel %vm412, %v607, %v614
      %v616 = vrot.slane %v611, 4
      %v618 = vshrl.u32 %v402, 16
      %v620 = vrot.slane %v618, 7
      %v621 = vshll.u32 %v402, 16
      %v623 = vor.u32 %v620, %v621
      %v624 = vrot.slane %v620, 4
      %v626 = vshrl.u32 %v403, 16
      %v628 = vrot.slane %v626, 7
      %v629 = vshll.u32 %v403, 16
      %v631 = vor.u32 %v628, %v629
      %v632 = vsel %vm412, %v624, %v631
      %v633 = vrot.slane %v628, 4
      %v635 = vshrl.u32 %v404, 16
      %v637 = vrot.slane %v635, 7
      %v638 = vshll.u32 %v404, 16
      %v640 = vor.u32 %v637, %v638
      %v641 = vrot.slane %v637, 4
      %v643 = vshrl.u32 %v405, 16
      %v645 = vrot.slane %v643, 7
      %v646 = vshll.u32 %v405, 16
      %v648 = vor.u32 %v645, %v646
      %v649 = vsel %vm412, %v641, %v648
      %v650 = vrot.slane %v645, 4
      %v652 = vshrl.u32 %v406, 16
      %v654 = vrot.slane %v652, 7
      %v655 = vshll.u32 %v406, 16
      %v657 = vor.u32 %v654, %v655
      %v658 = vrot.slane %v654, 4
      %v660 = vshrl.u32 %v407, 16
      %v662 = vrot.slane %v660, 7
      %v663 = vshll.u32 %v407, 16
      %v665 = vor.u32 %v662, %v663
      %v666 = vsel %vm412, %v658, %v665
      %v667 = vrot.slane %v662, 4
      %v669 = vshrl.u32 %v408, 16
      %v671 = vrot.slane %v669, 7
      %v672 = vshll.u32 %v408, 16
      %v674 = vor.u32 %v671, %v672
      %v675 = vrot.slane %v671, 4
      %v677 = vshrl.u32 %v409, 16
      %v679 = vrot.slane %v677, 7
      %v680 = vshll.u32 %v409, 16
      %v682 = vor.u32 %v679, %v680
      %v683 = vsel %vm412, %v675, %v682
      %v684 = vrot.slane %v679, 4
      %s733 = scalar_lea.vmem [#allocation2], 12
      %vm734 = vcmask 125952
      %vm735 = vsmask.f32 7938
      %vm736 = vmand %vm734, %vm735
      %v737 = vld [vmem:[%s733] sm:$0xf]
      %v738 = vsel %vm736, %v419, %v737
      %739 = vst [vmem:[%s733] sm:$0xf] %v738
      %740 = vst.msk [vmem:[%s733 + $0x4] sm:$0xf] %vm226, %v428
      %vm741 = vcmask 122880
      %vm742 = vmand %vm741, %vm410
      %v743 = vld [vmem:[%s733 + $0x8] sm:$0x1]
      %v744 = vsel %vm742, %v429, %v743
      %745 = vst [vmem:[%s733 + $0x8] sm:$0x1] %v744
      %v746 = vld [vmem:[%s733 + $0xc] sm:$0xf]
      %v747 = vsel %vm736, %v436, %v746
      %748 = vst [vmem:[%s733 + $0xc] sm:$0xf] %v747
      %749 = vst.msk [vmem:[%s733 + $0x10] sm:$0xf] %vm226, %v445
      %v750 = vld [vmem:[%s733 + $0x14] sm:$0x1]
      %v751 = vsel %vm742, %v446, %v750
      %752 = vst [vmem:[%s733 + $0x14] sm:$0x1] %v751
      %v753 = vld [vmem:[%s733 + $0x18] sm:$0xf]
      %v754 = vsel %vm736, %v453, %v753
      %755 = vst [vmem:[%s733 + $0x18] sm:$0xf] %v754
      %756 = vst.msk [vmem:[%s733 + $0x1c] sm:$0xf] %vm226, %v462
      %v757 = vld [vmem:[%s733 + $0x20] sm:$0x1]
      %v758 = vsel %vm742, %v463, %v757
      %759 = vst [vmem:[%s733 + $0x20] sm:$0x1] %v758
      %v760 = vld [vmem:[%s733 + $0x24] sm:$0xf]
      %v761 = vsel %vm736, %v470, %v760
      %762 = vst [vmem:[%s733 + $0x24] sm:$0xf] %v761
      %763 = vst.msk [vmem:[%s733 + $0x28] sm:$0xf] %vm226, %v479
      %v764 = vld [vmem:[%s733 + $0x2c] sm:$0x1]
      %v765 = vsel %vm742, %v480, %v764
      %766 = vst [vmem:[%s733 + $0x2c] sm:$0x1] %v765
      %v767 = vld [vmem:[%s733 + $0x30] sm:$0xf]
      %v768 = vsel %vm736, %v487, %v767
      %769 = vst [vmem:[%s733 + $0x30] sm:$0xf] %v768
      %770 = vst.msk [vmem:[%s733 + $0x34] sm:$0xf] %vm226, %v496
      %v771 = vld [vmem:[%s733 + $0x38] sm:$0x1]
      %v772 = vsel %vm742, %v497, %v771
      %773 = vst [vmem:[%s733 + $0x38] sm:$0x1] %v772
      %v774 = vld [vmem:[%s733 + $0x3c] sm:$0xf]
      %v775 = vsel %vm736, %v504, %v774
      %776 = vst [vmem:[%s733 + $0x3c] sm:$0xf] %v775
      %777 = vst.msk [vmem:[%s733 + $0x40] sm:$0xf] %vm226, %v513
      %v778 = vld [vmem:[%s733 + $0x44] sm:$0x1]
      %v779 = vsel %vm742, %v514, %v778
      %780 = vst [vmem:[%s733 + $0x44] sm:$0x1] %v779
      %v781 = vld [vmem:[%s733 + $0x48] sm:$0xf]
      %v782 = vsel %vm736, %v521, %v781
      %783 = vst [vmem:[%s733 + $0x48] sm:$0xf] %v782
      %784 = vst.msk [vmem:[%s733 + $0x4c] sm:$0xf] %vm226, %v530
      %v785 = vld [vmem:[%s733 + $0x50] sm:$0x1]
      %v786 = vsel %vm742, %v531, %v785
      %787 = vst [vmem:[%s733 + $0x50] sm:$0x1] %v786
      %v788 = vld [vmem:[%s733 + $0x54] sm:$0xf]
      %v789 = vsel %vm736, %v538, %v788
      %790 = vst [vmem:[%s733 + $0x54] sm:$0xf] %v789
      %791 = vst.msk [vmem:[%s733 + $0x58] sm:$0xf] %vm226, %v547
      %v792 = vld [vmem:[%s733 + $0x5c] sm:$0x1]
      %v793 = vsel %vm742, %v548, %v792
      %794 = vst [vmem:[%s733 + $0x5c] sm:$0x1] %v793
      %v795 = vld [vmem:[%s733 + $0x60] sm:$0xf]
      %v796 = vsel %vm736, %v555, %v795
      %797 = vst [vmem:[%s733 + $0x60] sm:$0xf] %v796
      %798 = vst.msk [vmem:[%s733 + $0x64] sm:$0xf] %vm226, %v564
      %v799 = vld [vmem:[%s733 + $0x68] sm:$0x1]
      %v800 = vsel %vm742, %v565, %v799
      %801 = vst [vmem:[%s733 + $0x68] sm:$0x1] %v800
      %v802 = vld [vmem:[%s733 + $0x6c] sm:$0xf]
      %v803 = vsel %vm736, %v572, %v802
      %804 = vst [vmem:[%s733 + $0x6c] sm:$0xf] %v803
      %805 = vst.msk [vmem:[%s733 + $0x70] sm:$0xf] %vm226, %v581
      %v806 = vld [vmem:[%s733 + $0x74] sm:$0x1]
      %v807 = vsel %vm742, %v582, %v806
      %808 = vst [vmem:[%s733 + $0x74] sm:$0x1] %v807
      %v809 = vld [vmem:[%s733 + $0x78] sm:$0xf]
      %v810 = vsel %vm736, %v589, %v809
      %811 = vst [vmem:[%s733 + $0x78] sm:$0xf] %v810
      %812 = vst.msk [vmem:[%s733 + $0x7c] sm:$0xf] %vm226, %v598
      %v813 = vld [vmem:[%s733 + $0x80] sm:$0x1]
      %v814 = vsel %vm742, %v599, %v813
      %815 = vst [vmem:[%s733 + $0x80] sm:$0x1] %v814
      %v816 = vld [vmem:[%s733 + $0x84] sm:$0xf]
      %v817 = vsel %vm736, %v606, %v816
      %818 = vst [vmem:[%s733 + $0x84] sm:$0xf] %v817
      %819 = vst.msk [vmem:[%s733 + $0x88] sm:$0xf] %vm226, %v615
      %v820 = vld [vmem:[%s733 + $0x8c] sm:$0x1]
      %v821 = vsel %vm742, %v616, %v820
      %822 = vst [vmem:[%s733 + $0x8c] sm:$0x1] %v821
      %v823 = vld [vmem:[%s733 + $0x90] sm:$0xf]
      %v824 = vsel %vm736, %v623, %v823
      %825 = vst [vmem:[%s733 + $0x90] sm:$0xf] %v824
      %826 = vst.msk [vmem:[%s733 + $0x94] sm:$0xf] %vm226, %v632
      %v827 = vld [vmem:[%s733 + $0x98] sm:$0x1]
      %v828 = vsel %vm742, %v633, %v827
      %829 = vst [vmem:[%s733 + $0x98] sm:$0x1] %v828
      %v830 = vld [vmem:[%s733 + $0x9c] sm:$0xf]
      %v831 = vsel %vm736, %v640, %v830
      %832 = vst [vmem:[%s733 + $0x9c] sm:$0xf] %v831
      %833 = vst.msk [vmem:[%s733 + $0xa0] sm:$0xf] %vm226, %v649
      %v834 = vld [vmem:[%s733 + $0xa4] sm:$0x1]
      %v835 = vsel %vm742, %v650, %v834
      %836 = vst [vmem:[%s733 + $0xa4] sm:$0x1] %v835
      %v837 = vld [vmem:[%s733 + $0xa8] sm:$0xf]
      %v838 = vsel %vm736, %v657, %v837
      %839 = vst [vmem:[%s733 + $0xa8] sm:$0xf] %v838
      %840 = vst.msk [vmem:[%s733 + $0xac] sm:$0xf] %vm226, %v666
      %v841 = vld [vmem:[%s733 + $0xb0] sm:$0x1]
      %v842 = vsel %vm742, %v667, %v841
      %843 = vst [vmem:[%s733 + $0xb0] sm:$0x1] %v842
      %v844 = vld [vmem:[%s733 + $0xb4] sm:$0xf]
      %v845 = vsel %vm736, %v674, %v844
      %846 = vst [vmem:[%s733 + $0xb4] sm:$0xf] %v845
      %847 = vst.msk [vmem:[%s733 + $0xb8] sm:$0xf] %vm226, %v683
      %v848 = vld [vmem:[%s733 + $0xbc] sm:$0x1]
      %v849 = vsel %vm742, %v684, %v848
      %850 = vst [vmem:[%s733 + $0xbc] sm:$0x1] %v849
      %v851 = vld [vmem:[#allocation2] sm:$0xf]
      %v852 = vld [vmem:[#allocation2 + $0x4] sm:$0xf]
      %v853 = vld [vmem:[#allocation2 + $0xc] sm:$0xf]
      %v854 = vld [vmem:[#allocation2 + $0x10] sm:$0xf]
      %v855 = vld [vmem:[#allocation2 + $0x18] sm:$0xf]
      %v856 = vld [vmem:[#allocation2 + $0x1c] sm:$0xf]
      %v857 = vld [vmem:[#allocation2 + $0x24] sm:$0xf]
      %v858 = vld [vmem:[#allocation2 + $0x28] sm:$0xf]
      %v859 = vld [vmem:[#allocation2 + $0x30] sm:$0xf]
      %v860 = vld [vmem:[#allocation2 + $0x34] sm:$0xf]
      %v861 = vld [vmem:[#allocation2 + $0x3c] sm:$0xf]
      %v862 = vld [vmem:[#allocation2 + $0x40] sm:$0xf]
      %v863 = vld [vmem:[#allocation2 + $0x48] sm:$0xf]
      %v864 = vld [vmem:[#allocation2 + $0x4c] sm:$0xf]
      %v865 = vld [vmem:[#allocation2 + $0x54] sm:$0xf]
      %v866 = vld [vmem:[#allocation2 + $0x58] sm:$0xf]
      %v867 = vld [vmem:[#allocation2 + $0x60] sm:$0xf]
      %v868 = vld [vmem:[#allocation2 + $0x64] sm:$0xf]
      %v869 = vld [vmem:[#allocation2 + $0x6c] sm:$0xf]
      %v870 = vld [vmem:[#allocation2 + $0x70] sm:$0xf]
      %v871 = vld [vmem:[#allocation2 + $0x78] sm:$0xf]
      %v872 = vld [vmem:[#allocation2 + $0x7c] sm:$0xf]
      %v873 = vld [vmem:[#allocation2 + $0x84] sm:$0xf]
      %v874 = vld [vmem:[#allocation2 + $0x88] sm:$0xf]
      %v875 = vld [vmem:[#allocation2 + $0x90] sm:$0xf]
      %v876 = vld [vmem:[#allocation2 + $0x94] sm:$0xf]
      %v877 = vld [vmem:[#allocation2 + $0x9c] sm:$0xf]
      %v878 = vld [vmem:[#allocation2 + $0xa0] sm:$0xf]
      %v879 = vld [vmem:[#allocation2 + $0xa8] sm:$0xf]
      %v880 = vld [vmem:[#allocation2 + $0xac] sm:$0xf]
      %v881 = vld [vmem:[#allocation2 + $0xb4] sm:$0xf]
      %v882 = vld [vmem:[#allocation2 + $0xb8] sm:$0xf]
      %v883 = vld [vmem:[%s1] sm:$0xf]
      %v884 = vld [vmem:[%s1 + $0x4] sm:$0xf]
      %v885 = vld [vmem:[#allocation2 + $0x8] sm:$0x1]
      %v886 = vld [vmem:[#allocation2 + $0x14] sm:$0x1]
      %v887 = vld [vmem:[#allocation2 + $0x20] sm:$0x1]
      %v888 = vld [vmem:[#allocation2 + $0x2c] sm:$0x1]
      %v889 = vld [vmem:[#allocation2 + $0x38] sm:$0x1]
      %v890 = vld [vmem:[#allocation2 + $0x44] sm:$0x1]
      %v891 = vld [vmem:[#allocation2 + $0x50] sm:$0x1]
      %v892 = vld [vmem:[#allocation2 + $0x5c] sm:$0x1]
      %v893 = vld [vmem:[#allocation2 + $0x68] sm:$0x1]
      %v894 = vld [vmem:[#allocation2 + $0x74] sm:$0x1]
      %v895 = vld [vmem:[#allocation2 + $0x80] sm:$0x1]
      %v896 = vld [vmem:[#allocation2 + $0x8c] sm:$0x1]
      %v897 = vld [vmem:[#allocation2 + $0x98] sm:$0x1]
      %v898 = vld [vmem:[#allocation2 + $0xa4] sm:$0x1]
      %v899 = vld [vmem:[#allocation2 + $0xb0] sm:$0x1]
      %v900 = vld [vmem:[#allocation2 + $0xbc] sm:$0x1]
      %vm901 = vsmask.f32 3328
      %vm902 = vsmask.f32 7440
      %vm903 = vmor %vm901, %vm902
      %v905 = vshrl.u32 %v851, 16
      %v907 = vrot.slane %v905, 4
      %v908 = vshll.u32 %v851, 16
      %v910 = vrot.slane %v908, 5
      %v911 = vor.u32 %v907, %v910
      %v912 = vrot.slane %v911, 4
      %v914 = vshll.u32 %v852, 16
      %v916 = vrot.slane %v914, 5
      %v917 = vsel %vm903, %v912, %v916
      %v918 = vshrl.u32 %v852, 16
      %v920 = vrot.slane %v918, 4
      %v921 = vor.u32 %v920, %v916
      %v922 = vrot.slane %v921, 4
      %v924 = vshll.u32 %v885, 16
      %v926 = vrot.slane %v924, 5
      %v927 = vsel %vm903, %v922, %v926
      %v929 = vshrl.u32 %v853, 16
      %v931 = vrot.slane %v929, 4
      %v932 = vshll.u32 %v853, 16
      %v934 = vrot.slane %v932, 5
      %v935 = vor.u32 %v931, %v934
      %v936 = vrot.slane %v935, 4
      %v938 = vshll.u32 %v854, 16
      %v940 = vrot.slane %v938, 5
      %v941 = vsel %vm903, %v936, %v940
      %v942 = vshrl.u32 %v854, 16
      %v944 = vrot.slane %v942, 4
      %v945 = vor.u32 %v944, %v940
      %v946 = vrot.slane %v945, 4
      %v948 = vshll.u32 %v886, 16
      %v950 = vrot.slane %v948, 5
      %v951 = vsel %vm903, %v946, %v950
      %v953 = vshrl.u32 %v855, 16
      %v955 = vrot.slane %v953, 4
      %v956 = vshll.u32 %v855, 16
      %v958 = vrot.slane %v956, 5
      %v959 = vor.u32 %v955, %v958
      %v960 = vrot.slane %v959, 4
      %v962 = vshll.u32 %v856, 16
      %v964 = vrot.slane %v962, 5
      %v965 = vsel %vm903, %v960, %v964
      %v966 = vshrl.u32 %v856, 16
      %v968 = vrot.slane %v966, 4
      %v969 = vor.u32 %v968, %v964
      %v970 = vrot.slane %v969, 4
      %v972 = vshll.u32 %v887, 16
      %v974 = vrot.slane %v972, 5
      %v975 = vsel %vm903, %v970, %v974
      %v977 = vshrl.u32 %v857, 16
      %v979 = vrot.slane %v977, 4
      %v980 = vshll.u32 %v857, 16
      %v982 = vrot.slane %v980, 5
      %v983 = vor.u32 %v979, %v982
      %v984 = vrot.slane %v983, 4
      %v986 = vshll.u32 %v858, 16
      %v988 = vrot.slane %v986, 5
      %v989 = vsel %vm903, %v984, %v988
      %v990 = vshrl.u32 %v858, 16
      %v992 = vrot.slane %v990, 4
      %v993 = vor.u32 %v992, %v988
      %v994 = vrot.slane %v993, 4
      %v996 = vshll.u32 %v888, 16
      %v998 = vrot.slane %v996, 5
      %v999 = vsel %vm903, %v994, %v998
      %v1001 = vshrl.u32 %v859, 16
      %v1003 = vrot.slane %v1001, 4
      %v1004 = vshll.u32 %v859, 16
      %v1006 = vrot.slane %v1004, 5
      %v1007 = vor.u32 %v1003, %v1006
      %v1008 = vrot.slane %v1007, 4
      %v1010 = vshll.u32 %v860, 16
      %v1012 = vrot.slane %v1010, 5
      %v1013 = vsel %vm903, %v1008, %v1012
      %v1014 = vshrl.u32 %v860, 16
      %v1016 = vrot.slane %v1014, 4
      %v1017 = vor.u32 %v1016, %v1012
      %v1018 = vrot.slane %v1017, 4
      %v1020 = vshll.u32 %v889, 16
      %v1022 = vrot.slane %v1020, 5
      %v1023 = vsel %vm903, %v1018, %v1022
      %v1025 = vshrl.u32 %v861, 16
      %v1027 = vrot.slane %v1025, 4
      %v1028 = vshll.u32 %v861, 16
      %v1030 = vrot.slane %v1028, 5
      %v1031 = vor.u32 %v1027, %v1030
      %v1032 = vrot.slane %v1031, 4
      %v1034 = vshll.u32 %v862, 16
      %v1036 = vrot.slane %v1034, 5
      %v1037 = vsel %vm903, %v1032, %v1036
      %v1038 = vshrl.u32 %v862, 16
      %v1040 = vrot.slane %v1038, 4
      %v1041 = vor.u32 %v1040, %v1036
      %v1042 = vrot.slane %v1041, 4
      %v1044 = vshll.u32 %v890, 16
      %v1046 = vrot.slane %v1044, 5
      %v1047 = vsel %vm903, %v1042, %v1046
      %v1049 = vshrl.u32 %v863, 16
      %v1051 = vrot.slane %v1049, 4
      %v1052 = vshll.u32 %v863, 16
      %v1054 = vrot.slane %v1052, 5
      %v1055 = vor.u32 %v1051, %v1054
      %v1056 = vrot.slane %v1055, 4
      %v1058 = vshll.u32 %v864, 16
      %v1060 = vrot.slane %v1058, 5
      %v1061 = vsel %vm903, %v1056, %v1060
      %v1062 = vshrl.u32 %v864, 16
      %v1064 = vrot.slane %v1062, 4
      %v1065 = vor.u32 %v1064, %v1060
      %v1066 = vrot.slane %v1065, 4
      %v1068 = vshll.u32 %v891, 16
      %v1070 = vrot.slane %v1068, 5
      %v1071 = vsel %vm903, %v1066, %v1070
      %v1073 = vshrl.u32 %v865, 16
      %v1075 = vrot.slane %v1073, 4
      %v1076 = vshll.u32 %v865, 16
      %v1078 = vrot.slane %v1076, 5
      %v1079 = vor.u32 %v1075, %v1078
      %v1080 = vrot.slane %v1079, 4
      %v1082 = vshll.u32 %v866, 16
      %v1084 = vrot.slane %v1082, 5
      %v1085 = vsel %vm903, %v1080, %v1084
      %v1086 = vshrl.u32 %v866, 16
      %v1088 = vrot.slane %v1086, 4
      %v1089 = vor.u32 %v1088, %v1084
      %v1090 = vrot.slane %v1089, 4
      %v1092 = vshll.u32 %v892, 16
      %v1094 = vrot.slane %v1092, 5
      %v1095 = vsel %vm903, %v1090, %v1094
      %v1097 = vshrl.u32 %v867, 16
      %v1099 = vrot.slane %v1097, 4
      %v1100 = vshll.u32 %v867, 16
      %v1102 = vrot.slane %v1100, 5
      %v1103 = vor.u32 %v1099, %v1102
      %v1104 = vrot.slane %v1103, 4
      %v1106 = vshll.u32 %v868, 16
      %v1108 = vrot.slane %v1106, 5
      %v1109 = vsel %vm903, %v1104, %v1108
      %v1110 = vshrl.u32 %v868, 16
      %v1112 = vrot.slane %v1110, 4
      %v1113 = vor.u32 %v1112, %v1108
      %v1114 = vrot.slane %v1113, 4
      %v1116 = vshll.u32 %v893, 16
      %v1118 = vrot.slane %v1116, 5
      %v1119 = vsel %vm903, %v1114, %v1118
      %v1121 = vshrl.u32 %v869, 16
      %v1123 = vrot.slane %v1121, 4
      %v1124 = vshll.u32 %v869, 16
      %v1126 = vrot.slane %v1124, 5
      %v1127 = vor.u32 %v1123, %v1126
      %v1128 = vrot.slane %v1127, 4
      %v1130 = vshll.u32 %v870, 16
      %v1132 = vrot.slane %v1130, 5
      %v1133 = vsel %vm903, %v1128, %v1132
      %v1134 = vshrl.u32 %v870, 16
      %v1136 = vrot.slane %v1134, 4
      %v1137 = vor.u32 %v1136, %v1132
      %v1138 = vrot.slane %v1137, 4
      %v1140 = vshll.u32 %v894, 16
      %v1142 = vrot.slane %v1140, 5
      %v1143 = vsel %vm903, %v1138, %v1142
      %v1145 = vshrl.u32 %v871, 16
      %v1147 = vrot.slane %v1145, 4
      %v1148 = vshll.u32 %v871, 16
      %v1150 = vrot.slane %v1148, 5
      %v1151 = vor.u32 %v1147, %v1150
      %v1152 = vrot.slane %v1151, 4
      %v1154 = vshll.u32 %v872, 16
      %v1156 = vrot.slane %v1154, 5
      %v1157 = vsel %vm903, %v1152, %v1156
      %v1158 = vshrl.u32 %v872, 16
      %v1160 = vrot.slane %v1158, 4
      %v1161 = vor.u32 %v1160, %v1156
      %v1162 = vrot.slane %v1161, 4
      %v1164 = vshll.u32 %v895, 16
      %v1166 = vrot.slane %v1164, 5
      %v1167 = vsel %vm903, %v1162, %v1166
      %v1169 = vshrl.u32 %v873, 16
      %v1171 = vrot.slane %v1169, 4
      %v1172 = vshll.u32 %v873, 16
      %v1174 = vrot.slane %v1172, 5
      %v1175 = vor.u32 %v1171, %v1174
      %v1176 = vrot.slane %v1175, 4
      %v1178 = vshll.u32 %v874, 16
      %v1180 = vrot.slane %v1178, 5
      %v1181 = vsel %vm903, %v1176, %v1180
      %v1182 = vshrl.u32 %v874, 16
      %v1184 = vrot.slane %v1182, 4
      %v1185 = vor.u32 %v1184, %v1180
      %v1186 = vrot.slane %v1185, 4
      %v1188 = vshll.u32 %v896, 16
      %v1190 = vrot.slane %v1188, 5
      %v1191 = vsel %vm903, %v1186, %v1190
      %v1193 = vshrl.u32 %v875, 16
      %v1195 = vrot.slane %v1193, 4
      %v1196 = vshll.u32 %v875, 16
      %v1198 = vrot.slane %v1196, 5
      %v1199 = vor.u32 %v1195, %v1198
      %v1200 = vrot.slane %v1199, 4
      %v1202 = vshll.u32 %v876, 16
      %v1204 = vrot.slane %v1202, 5
      %v1205 = vsel %vm903, %v1200, %v1204
      %v1206 = vshrl.u32 %v876, 16
      %v1208 = vrot.slane %v1206, 4
      %v1209 = vor.u32 %v1208, %v1204
      %v1210 = vrot.slane %v1209, 4
      %v1212 = vshll.u32 %v897, 16
      %v1214 = vrot.slane %v1212, 5
      %v1215 = vsel %vm903, %v1210, %v1214
      %v1217 = vshrl.u32 %v877, 16
      %v1219 = vrot.slane %v1217, 4
      %v1220 = vshll.u32 %v877, 16
      %v1222 = vrot.slane %v1220, 5
      %v1223 = vor.u32 %v1219, %v1222
      %v1224 = vrot.slane %v1223, 4
      %v1226 = vshll.u32 %v878, 16
      %v1228 = vrot.slane %v1226, 5
      %v1229 = vsel %vm903, %v1224, %v1228
      %v1230 = vshrl.u32 %v878, 16
      %v1232 = vrot.slane %v1230, 4
      %v1233 = vor.u32 %v1232, %v1228
      %v1234 = vrot.slane %v1233, 4
      %v1236 = vshll.u32 %v898, 16
      %v1238 = vrot.slane %v1236, 5
      %v1239 = vsel %vm903, %v1234, %v1238
      %v1241 = vshrl.u32 %v879, 16
      %v1243 = vrot.slane %v1241, 4
      %v1244 = vshll.u32 %v879, 16
      %v1246 = vrot.slane %v1244, 5
      %v1247 = vor.u32 %v1243, %v1246
      %v1248 = vrot.slane %v1247, 4
      %v1250 = vshll.u32 %v880, 16
      %v1252 = vrot.slane %v1250, 5
      %v1253 = vsel %vm903, %v1248, %v1252
      %v1254 = vshrl.u32 %v880, 16
      %v1256 = vrot.slane %v1254, 4
      %v1257 = vor.u32 %v1256, %v1252
      %v1258 = vrot.slane %v1257, 4
      %v1260 = vshll.u32 %v899, 16
      %v1262 = vrot.slane %v1260, 5
      %v1263 = vsel %vm903, %v1258, %v1262
      %v1265 = vshrl.u32 %v881, 16
      %v1267 = vrot.slane %v1265, 4
      %v1268 = vshll.u32 %v881, 16
      %v1270 = vrot.slane %v1268, 5
      %v1271 = vor.u32 %v1267, %v1270
      %v1272 = vrot.slane %v1271, 4
      %v1274 = vshll.u32 %v882, 16
      %v1276 = vrot.slane %v1274, 5
      %v1277 = vsel %vm903, %v1272, %v1276
      %v1278 = vshrl.u32 %v882, 16
      %v1280 = vrot.slane %v1278, 4
      %v1281 = vor.u32 %v1280, %v1276
      %v1282 = vrot.slane %v1281, 4
      %v1284 = vshll.u32 %v900, 16
      %v1286 = vrot.slane %v1284, 5
      %v1287 = vsel %vm903, %v1282, %v1286
      %v1288 = vld [vmem:[%s1 + $0x8] sm:$0xf]
      %v1289 = vld [vmem:[%s1 + $0xc] sm:$0xf]
      %v1290 = vunpack.c.l.b16 %v917
      %v1291 = vunpack.c.l.b16 %v927
      %v1292 = vunpack.c.l.b16 %v941
      %v1293 = vunpack.c.l.b16 %v951
      %v1294 = vunpack.c.l.b16 %v965
      %v1295 = vunpack.c.l.b16 %v975
      %v1296 = vunpack.c.l.b16 %v989
      %v1297 = vunpack.c.l.b16 %v999
      %v1298 = vunpack.c.l.b16 %v1013
      %v1299 = vunpack.c.l.b16 %v1023
      %v1300 = vunpack.c.l.b16 %v1037
      %v1301 = vunpack.c.l.b16 %v1047
      %v1302 = vunpack.c.l.b16 %v1061
      %v1303 = vunpack.c.l.b16 %v1071
      %v1304 = vunpack.c.l.b16 %v1085
      %v1305 = vunpack.c.l.b16 %v1095
      %v1306 = vunpack.c.l.b16 %v1109
      %v1307 = vunpack.c.l.b16 %v1119
      %v1308 = vunpack.c.l.b16 %v1133
      %v1309 = vunpack.c.l.b16 %v1143
      %v1310 = vunpack.c.l.b16 %v1157
      %v1311 = vunpack.c.l.b16 %v1167
      %v1312 = vunpack.c.l.b16 %v1181
      %v1313 = vunpack.c.l.b16 %v1191
      %v1314 = vunpack.c.l.b16 %v1205
      %v1315 = vunpack.c.l.b16 %v1215
      %v1316 = vunpack.c.l.b16 %v1229
      %v1317 = vunpack.c.l.b16 %v1239
      %v1318 = vunpack.c.l.b16 %v1253
      %v1319 = vunpack.c.l.b16 %v1263
      %v1320 = vunpack.c.l.b16 %v1277
      %v1321 = vunpack.c.l.b16 %v1287
      %v1322 = vpack.c.b16 %v1291, %v1290
      %v1323 = vpack.c.b16 %v1293, %v1292
      %v1324 = vpack.c.b16 %v1295, %v1294
      %v1325 = vpack.c.b16 %v1297, %v1296
      %v1326 = vpack.c.b16 %v1299, %v1298
      %v1327 = vpack.c.b16 %v1301, %v1300
      %v1328 = vpack.c.b16 %v1303, %v1302
      %v1329 = vpack.c.b16 %v1305, %v1304
      %v1330 = vpack.c.b16 %v1307, %v1306
      %v1331 = vpack.c.b16 %v1309, %v1308
      %v1332 = vpack.c.b16 %v1311, %v1310
      %v1333 = vpack.c.b16 %v1313, %v1312
      %v1334 = vpack.c.b16 %v1315, %v1314
      %v1335 = vpack.c.b16 %v1317, %v1316
      %v1336 = vpack.c.b16 %v1319, %v1318
      %v1337 = vpack.c.b16 %v1321, %v1320
      %v1340 = vunpack.c.l.b16 %v1288
      %v1341 = vunpack.c.l.b16 %v1289
      %v1342 = vpack.c.b16 %v1341, %v1340
      %vm1344 = vcmask 130048
      %v1346 = vsel %vm1344, %v1322, 0
      %v1349 = vsel %vm1344, %v1323, 0
      %v1352 = vsel %vm1344, %v1324, 0
      %v1355 = vsel %vm1344, %v1325, 0
      %v1358 = vsel %vm1344, %v1326, 0
      %v1361 = vsel %vm1344, %v1327, 0
      %v1364 = vsel %vm1344, %v1328, 0
      %v1367 = vsel %vm1344, %v1329, 0
      %v1370 = vsel %vm1344, %v1330, 0
      %v1373 = vsel %vm1344, %v1331, 0
      %v1376 = vsel %vm1344, %v1332, 0
      %v1379 = vsel %vm1344, %v1333, 0
      %v1382 = vsel %vm1344, %v1334, 0
      %v1385 = vsel %vm1344, %v1335, 0
      %v1388 = vsel %vm1344, %v1336, 0
      %v1391 = vsel %vm1344, %v1337, 0
      %1393 = vmatprep.subr.bf16.mxu0 0
      %1394 = vmatpush1.bf16.msra.mxu0 %v1342
      %1395 = vmatprep.subr.bf16.mxu0 0
      %1396 = vmatpush1.bf16.msra.mxu0 0
      %1397 = vmatprep.subr.bf16.mxu0 0
      %1398 = vmatpush1.bf16.msra.mxu0 0
      %1399 = vmatprep.subr.bf16.mxu0 0
      %1400 = vmatpush1.bf16.msra.mxu0 0
      %1401 = vmatprep.subr.bf16.mxu0 0
      %1402 = vmatpush1.bf16.msra.mxu0 0
      %1403 = vmatprep.subr.bf16.mxu0 0
      %1404 = vmatpush1.bf16.msra.mxu0 0
      %1405 = vmatprep.subr.bf16.mxu0 0
      %1406 = vmatpush1.bf16.msra.mxu0 0
      %1407 = vmatprep.subr.bf16.mxu0 0
      %1408 = vmatpush1.bf16.msra.mxu0 0
      %1409 = vmatprep.subr.bf16.mxu0 0
      %1410 = vmatpush1.bf16.msra.mxu0 0
      %1411 = vmatprep.subr.bf16.mxu0 0
      %1412 = vmatpush1.bf16.msra.mxu0 0
      %1413 = vmatprep.subr.bf16.mxu0 0
      %1414 = vmatpush1.bf16.msra.mxu0 0
      %1415 = vmatprep.subr.bf16.mxu0 0
      %1416 = vmatpush1.bf16.msra.mxu0 0
      %1417 = vmatprep.subr.bf16.mxu0 0
      %1418 = vmatpush1.bf16.msra.mxu0 0
      %1419 = vmatprep.subr.bf16.mxu0 0
      %1420 = vmatpush1.bf16.msra.mxu0 0
      %1421 = vmatprep.subr.bf16.mxu0 0
      %1422 = vmatpush1.bf16.msra.mxu0 0
      %1423 = vmatprep.subr.bf16.mxu0 0
      %1424 = vmatpush1.bf16.msra.mxu0 0
      %1425 = vmatprep.mubr.bf16.mxu0 0
      %1426 = vmatmul.mubr.bf16.gmra.mrb[0].mxu0 %v1346
      %v1427 = vpop.f32.mrb[0].mxu0
      %v1428 = vadd.f32 0.0, %v1427
      %v1429 = vpop.f32.mrb[0].mxu0
      %v1430 = vpop.f32.mrb[0].mxu0
      %v1431 = vadd.f32 0.0, %v1430
      %v1432 = vpop.f32.mrb[0].mxu0
      %1433 = vmatprep.mubr.bf16.mxu0 0
      %1434 = vmatmul.mubr.bf16.gmra.mrb[0].mxu0 %v1349
      %v1435 = vpop.f32.mrb[0].mxu0
      %v1436 = vadd.f32 0.0, %v1435
      %v1437 = vpop.f32.mrb[0].mxu0
      %v1438 = vpop.f32.mrb[0].mxu0
      %v1439 = vadd.f32 0.0, %v1438
      %v1440 = vpop.f32.mrb[0].mxu0
      %1441 = vmatprep.mubr.bf16.mxu0 0
      %1442 = vmatmul.mubr.bf16.gmra.mrb[0].mxu0 %v1352
      %v1443 = vpop.f32.mrb[0].mxu0
      %v1444 = vadd.f32 0.0, %v1443
      %v1445 = vpop.f32.mrb[0].mxu0
      %v1446 = vpop.f32.mrb[0].mxu0
      %v1447 = vadd.f32 0.0, %v1446
      %v1448 = vpop.f32.mrb[0].mxu0
      %1449 = vmatprep.mubr.bf16.mxu0 0
      %1450 = vmatmul.mubr.bf16.gmra.mrb[0].mxu0 %v1355
      %v1451 = vpop.f32.mrb[0].mxu0
      %v1452 = vadd.f32 0.0, %v1451
      %v1453 = vpop.f32.mrb[0].mxu0
      %v1454 = vpop.f32.mrb[0].mxu0
      %v1455 = vadd.f32 0.0, %v1454
      %v1456 = vpop.f32.mrb[0].mxu0
      %1457 = vmatprep.mubr.bf16.mxu0 0
      %1458 = vmatmul.mubr.bf16.gmra.mrb[0].mxu0 %v1358
      %v1459 = vpop.f32.mrb[0].mxu0
      %v1460 = vadd.f32 0.0, %v1459
      %v1461 = vpop.f32.mrb[0].mxu0
      %v1462 = vpop.f32.mrb[0].mxu0
      %v1463 = vadd.f32 0.0, %v1462
      %v1464 = vpop.f32.mrb[0].mxu0
      %1465 = vmatprep.mubr.bf16.mxu0 0
      %1466 = vmatmul.mubr.bf16.gmra.mrb[0].mxu0 %v1361
      %v1467 = vpop.f32.mrb[0].mxu0
      %v1468 = vadd.f32 0.0, %v1467
      %v1469 = vpop.f32.mrb[0].mxu0
      %v1470 = vpop.f32.mrb[0].mxu0
      %v1471 = vadd.f32 0.0, %v1470
      %v1472 = vpop.f32.mrb[0].mxu0
      %1473 = vmatprep.mubr.bf16.mxu0 0
      %1474 = vmatmul.mubr.bf16.gmra.mrb[0].mxu0 %v1364
      %v1475 = vpop.f32.mrb[0].mxu0
      %v1476 = vadd.f32 0.0, %v1475
      %v1477 = vpop.f32.mrb[0].mxu0
      %v1478 = vpop.f32.mrb[0].mxu0
      %v1479 = vadd.f32 0.0, %v1478
      %v1480 = vpop.f32.mrb[0].mxu0
      %1481 = vmatprep.mubr.bf16.mxu0 0
      %1482 = vmatmul.mubr.bf16.gmra.mrb[0].mxu0 %v1367
      %v1483 = vpop.f32.mrb[0].mxu0
      %v1484 = vadd.f32 0.0, %v1483
      %v1485 = vpop.f32.mrb[0].mxu0
      %v1486 = vpop.f32.mrb[0].mxu0
      %v1487 = vadd.f32 0.0, %v1486
      %v1488 = vpop.f32.mrb[0].mxu0
      %1489 = vmatprep.mubr.bf16.mxu0 0
      %1490 = vmatmul.mubr.bf16.gmra.mrb[0].mxu0 %v1370
      %v1491 = vpop.f32.mrb[0].mxu0
      %v1492 = vadd.f32 0.0, %v1491
      %v1493 = vpop.f32.mrb[0].mxu0
      %v1494 = vpop.f32.mrb[0].mxu0
      %v1495 = vadd.f32 0.0, %v1494
      %v1496 = vpop.f32.mrb[0].mxu0
      %1497 = vmatprep.mubr.bf16.mxu0 0
      %1498 = vmatmul.mubr.bf16.gmra.mrb[0].mxu0 %v1373
      %v1499 = vpop.f32.mrb[0].mxu0
      %v1500 = vadd.f32 0.0, %v1499
      %v1501 = vpop.f32.mrb[0].mxu0
      %v1502 = vpop.f32.mrb[0].mxu0
      %v1503 = vadd.f32 0.0, %v1502
      %v1504 = vpop.f32.mrb[0].mxu0
      %1505 = vmatprep.mubr.bf16.mxu0 0
      %1506 = vmatmul.mubr.bf16.gmra.mrb[0].mxu0 %v1376
      %v1507 = vpop.f32.mrb[0].mxu0
      %v1508 = vadd.f32 0.0, %v1507
      %v1509 = vpop.f32.mrb[0].mxu0
      %v1510 = vpop.f32.mrb[0].mxu0
      %v1511 = vadd.f32 0.0, %v1510
      %v1512 = vpop.f32.mrb[0].mxu0
      %1513 = vmatprep.mubr.bf16.mxu0 0
      %1514 = vmatmul.mubr.bf16.gmra.mrb[0].mxu0 %v1379
      %v1515 = vpop.f32.mrb[0].mxu0
      %v1516 = vadd.f32 0.0, %v1515
      %v1517 = vpop.f32.mrb[0].mxu0
      %v1518 = vpop.f32.mrb[0].mxu0
      %v1519 = vadd.f32 0.0, %v1518
      %v1520 = vpop.f32.mrb[0].mxu0
      %1521 = vmatprep.mubr.bf16.mxu0 0
      %1522 = vmatmul.mubr.bf16.gmra.mrb[0].mxu0 %v1382
      %v1523 = vpop.f32.mrb[0].mxu0
      %v1524 = vadd.f32 0.0, %v1523
      %v1525 = vpop.f32.mrb[0].mxu0
      %v1526 = vpop.f32.mrb[0].mxu0
      %v1527 = vadd.f32 0.0, %v1526
      %v1528 = vpop.f32.mrb[0].mxu0
      %1529 = vmatprep.mubr.bf16.mxu0 0
      %1530 = vmatmul.mubr.bf16.gmra.mrb[0].mxu0 %v1385
      %v1531 = vpop.f32.mrb[0].mxu0
      %v1532 = vadd.f32 0.0, %v1531
      %v1533 = vpop.f32.mrb[0].mxu0
      %v1534 = vpop.f32.mrb[0].mxu0
      %v1535 = vadd.f32 0.0, %v1534
      %v1536 = vpop.f32.mrb[0].mxu0
      %1537 = vmatprep.mubr.bf16.mxu0 0
      %1538 = vmatmul.mubr.bf16.gmra.mrb[0].mxu0 %v1388
      %v1539 = vpop.f32.mrb[0].mxu0
      %v1540 = vadd.f32 0.0, %v1539
      %v1541 = vpop.f32.mrb[0].mxu0
      %v1542 = vpop.f32.mrb[0].mxu0
      %v1543 = vadd.f32 0.0, %v1542
      %v1544 = vpop.f32.mrb[0].mxu0
      %1545 = vmatprep.mubr.bf16.mxu0 0
      %1546 = vmatmul.mubr.bf16.gmra.mrb[0].mxu0 %v1391
      %v1547 = vpop.f32.mrb[0].mxu0
      %v1548 = vadd.f32 0.0, %v1547
      %v1549 = vpop.f32.mrb[0].mxu0
      %v1550 = vpop.f32.mrb[0].mxu0
      %v1551 = vadd.f32 0.0, %v1550
      %v1552 = vpop.f32.mrb[0].mxu0
      %1553 = vdwg.mxu0
      %v1586 = vunpack.c.l.b16 %v851
      %v1587 = vunpack.c.l.b16 %v852
      %v1588 = vunpack.c.l.b16 %v853
      %v1589 = vunpack.c.l.b16 %v854
      %v1590 = vunpack.c.l.b16 %v855
      %v1591 = vunpack.c.l.b16 %v856
      %v1592 = vunpack.c.l.b16 %v857
      %v1593 = vunpack.c.l.b16 %v858
      %v1594 = vunpack.c.l.b16 %v859
      %v1595 = vunpack.c.l.b16 %v860
      %v1596 = vunpack.c.l.b16 %v861
      %v1597 = vunpack.c.l.b16 %v862
      %v1598 = vunpack.c.l.b16 %v863
      %v1599 = vunpack.c.l.b16 %v864
      %v1600 = vunpack.c.l.b16 %v865
      %v1601 = vunpack.c.l.b16 %v866
      %v1602 = vunpack.c.l.b16 %v867
      %v1603 = vunpack.c.l.b16 %v868
      %v1604 = vunpack.c.l.b16 %v869
      %v1605 = vunpack.c.l.b16 %v870
      %v1606 = vunpack.c.l.b16 %v871
      %v1607 = vunpack.c.l.b16 %v872
      %v1608 = vunpack.c.l.b16 %v873
      %v1609 = vunpack.c.l.b16 %v874
      %v1610 = vunpack.c.l.b16 %v875
      %v1611 = vunpack.c.l.b16 %v876
      %v1612 = vunpack.c.l.b16 %v877
      %v1613 = vunpack.c.l.b16 %v878
      %v1614 = vunpack.c.l.b16 %v879
      %v1615 = vunpack.c.l.b16 %v880
      %v1616 = vunpack.c.l.b16 %v881
      %v1617 = vunpack.c.l.b16 %v882
      %v1618 = vpack.c.b16 %v1587, %v1586
      %v1619 = vpack.c.b16 %v1589, %v1588
      %v1620 = vpack.c.b16 %v1591, %v1590
      %v1621 = vpack.c.b16 %v1593, %v1592
      %v1622 = vpack.c.b16 %v1595, %v1594
      %v1623 = vpack.c.b16 %v1597, %v1596
      %v1624 = vpack.c.b16 %v1599, %v1598
      %v1625 = vpack.c.b16 %v1601, %v1600
      %v1626 = vpack.c.b16 %v1603, %v1602
      %v1627 = vpack.c.b16 %v1605, %v1604
      %v1628 = vpack.c.b16 %v1607, %v1606
      %v1629 = vpack.c.b16 %v1609, %v1608
      %v1630 = vpack.c.b16 %v1611, %v1610
      %v1631 = vpack.c.b16 %v1613, %v1612
      %v1632 = vpack.c.b16 %v1615, %v1614
      %v1633 = vpack.c.b16 %v1617, %v1616
      %v1636 = vunpack.c.l.b16 %v883
      %v1637 = vunpack.c.l.b16 %v884
      %v1638 = vpack.c.b16 %v1637, %v1636
      %v1641 = vsel %vm1344, %v1618, 0
      %v1644 = vsel %vm1344, %v1619, 0
      %v1647 = vsel %vm1344, %v1620, 0
      %v1650 = vsel %vm1344, %v1621, 0
      %v1653 = vsel %vm1344, %v1622, 0
      %v1656 = vsel %vm1344, %v1623, 0
      %v1659 = vsel %vm1344, %v1624, 0
      %v1662 = vsel %vm1344, %v1625, 0
      %v1665 = vsel %vm1344, %v1626, 0
      %v1668 = vsel %vm1344, %v1627, 0
      %v1671 = vsel %vm1344, %v1628, 0
      %v1674 = vsel %vm1344, %v1629, 0
      %v1677 = vsel %vm1344, %v1630, 0
      %v1680 = vsel %vm1344, %v1631, 0
      %v1683 = vsel %vm1344, %v1632, 0
      %v1686 = vsel %vm1344, %v1633, 0
      %1688 = vmatprep.subr.bf16.mxu0 0
      %1689 = vmatpush1.bf16.msra.mxu0 %v1638
      %1690 = vmatprep.subr.bf16.mxu0 0
      %1691 = vmatpush1.bf16.msra.mxu0 0
      %1692 = vmatprep.subr.bf16.mxu0 0
      %1693 = vmatpush1.bf16.msra.mxu0 0
      %1694 = vmatprep.subr.bf16.mxu0 0
      %1695 = vmatpush1.bf16.msra.mxu0 0
      %1696 = vmatprep.subr.bf16.mxu0 0
      %1697 = vmatpush1.bf16.msra.mxu0 0
      %1698 = vmatprep.subr.bf16.mxu0 0
      %1699 = vmatpush1.bf16.msra.mxu0 0
      %1700 = vmatprep.subr.bf16.mxu0 0
      %1701 = vmatpush1.bf16.msra.mxu0 0
      %1702 = vmatprep.subr.bf16.mxu0 0
      %1703 = vmatpush1.bf16.msra.mxu0 0
      %1704 = vmatprep.subr.bf16.mxu0 0
      %1705 = vmatpush1.bf16.msra.mxu0 0
      %1706 = vmatprep.subr.bf16.mxu0 0
      %1707 = vmatpush1.bf16.msra.mxu0 0
      %1708 = vmatprep.subr.bf16.mxu0 0
      %1709 = vmatpush1.bf16.msra.mxu0 0
      %1710 = vmatprep.subr.bf16.mxu0 0
      %1711 = vmatpush1.bf16.msra.mxu0 0
      %1712 = vmatprep.subr.bf16.mxu0 0
      %1713 = vmatpush1.bf16.msra.mxu0 0
      %1714 = vmatprep.subr.bf16.mxu0 0
      %1715 = vmatpush1.bf16.msra.mxu0 0
      %1716 = vmatprep.subr.bf16.mxu0 0
      %1717 = vmatpush1.bf16.msra.mxu0 0
      %1718 = vmatprep.subr.bf16.mxu0 0
      %1719 = vmatpush1.bf16.msra.mxu0 0
      %1720 = vmatprep.mubr.bf16.mxu0 0
      %1721 = vmatmul.mubr.bf16.gmra.mrb[0].mxu0 %v1641
      %v1722 = vpop.f32.mrb[0].mxu0
      %v1723 = vadd.f32 %v1428, %v1722
      %v1724 = vpop.f32.mrb[0].mxu0
      %v1725 = vpop.f32.mrb[0].mxu0
      %v1726 = vadd.f32 %v1431, %v1725
      %v1727 = vpop.f32.mrb[0].mxu0
      %1728 = vmatprep.mubr.bf16.mxu0 0
      %1729 = vmatmul.mubr.bf16.gmra.mrb[0].mxu0 %v1644
      %v1730 = vpop.f32.mrb[0].mxu0
      %v1731 = vadd.f32 %v1436, %v1730
      %v1732 = vpop.f32.mrb[0].mxu0
      %v1733 = vpop.f32.mrb[0].mxu0
      %v1734 = vadd.f32 %v1439, %v1733
      %v1735 = vpop.f32.mrb[0].mxu0
      %1736 = vmatprep.mubr.bf16.mxu0 0
      %1737 = vmatmul.mubr.bf16.gmra.mrb[0].mxu0 %v1647
      %v1738 = vpop.f32.mrb[0].mxu0
      %v1739 = vadd.f32 %v1444, %v1738
      %v1740 = vpop.f32.mrb[0].mxu0
      %v1741 = vpop.f32.mrb[0].mxu0
      %v1742 = vadd.f32 %v1447, %v1741
      %v1743 = vpop.f32.mrb[0].mxu0
      %1744 = vmatprep.mubr.bf16.mxu0 0
      %1745 = vmatmul.mubr.bf16.gmra.mrb[0].mxu0 %v1650
      %v1746 = vpop.f32.mrb[0].mxu0
      %v1747 = vadd.f32 %v1452, %v1746
      %v1748 = vpop.f32.mrb[0].mxu0
      %v1749 = vpop.f32.mrb[0].mxu0
      %v1750 = vadd.f32 %v1455, %v1749
      %v1751 = vpop.f32.mrb[0].mxu0
      %1752 = vmatprep.mubr.bf16.mxu0 0
      %1753 = vmatmul.mubr.bf16.gmra.mrb[0].mxu0 %v1653
      %v1754 = vpop.f32.mrb[0].mxu0
      %v1755 = vadd.f32 %v1460, %v1754
      %v1756 = vpop.f32.mrb[0].mxu0
      %v1757 = vpop.f32.mrb[0].mxu0
      %v1758 = vadd.f32 %v1463, %v1757
      %v1759 = vpop.f32.mrb[0].mxu0
      %1760 = vmatprep.mubr.bf16.mxu0 0
      %1761 = vmatmul.mubr.bf16.gmra.mrb[0].mxu0 %v1656
      %v1762 = vpop.f32.mrb[0].mxu0
      %v1763 = vadd.f32 %v1468, %v1762
      %v1764 = vpop.f32.mrb[0].mxu0
      %v1765 = vpop.f32.mrb[0].mxu0
      %v1766 = vadd.f32 %v1471, %v1765
      %v1767 = vpop.f32.mrb[0].mxu0
      %1768 = vmatprep.mubr.bf16.mxu0 0
      %1769 = vmatmul.mubr.bf16.gmra.mrb[0].mxu0 %v1659
      %v1770 = vpop.f32.mrb[0].mxu0
      %v1771 = vadd.f32 %v1476, %v1770
      %v1772 = vpop.f32.mrb[0].mxu0
      %v1773 = vpop.f32.mrb[0].mxu0
      %v1774 = vadd.f32 %v1479, %v1773
      %v1775 = vpop.f32.mrb[0].mxu0
      %1776 = vmatprep.mubr.bf16.mxu0 0
      %1777 = vmatmul.mubr.bf16.gmra.mrb[0].mxu0 %v1662
      %v1778 = vpop.f32.mrb[0].mxu0
      %v1779 = vadd.f32 %v1484, %v1778
      %v1780 = vpop.f32.mrb[0].mxu0
      %v1781 = vpop.f32.mrb[0].mxu0
      %v1782 = vadd.f32 %v1487, %v1781
      %v1783 = vpop.f32.mrb[0].mxu0
      %1784 = vmatprep.mubr.bf16.mxu0 0
      %1785 = vmatmul.mubr.bf16.gmra.mrb[0].mxu0 %v1665
      %v1786 = vpop.f32.mrb[0].mxu0
      %v1787 = vadd.f32 %v1492, %v1786
      %v1788 = vpop.f32.mrb[0].mxu0
      %v1789 = vpop.f32.mrb[0].mxu0
      %v1790 = vadd.f32 %v1495, %v1789
      %v1791 = vpop.f32.mrb[0].mxu0
      %1792 = vmatprep.mubr.bf16.mxu0 0
      %1793 = vmatmul.mubr.bf16.gmra.mrb[0].mxu0 %v1668
      %v1794 = vpop.f32.mrb[0].mxu0
      %v1795 = vadd.f32 %v1500, %v1794
      %v1796 = vpop.f32.mrb[0].mxu0
      %v1797 = vpop.f32.mrb[0].mxu0
      %v1798 = vadd.f32 %v1503, %v1797
      %v1799 = vpop.f32.mrb[0].mxu0
      %1800 = vmatprep.mubr.bf16.mxu0 0
      %1801 = vmatmul.mubr.bf16.gmra.mrb[0].mxu0 %v1671
      %v1802 = vpop.f32.mrb[0].mxu0
      %v1803 = vadd.f32 %v1508, %v1802
      %v1804 = vpop.f32.mrb[0].mxu0
      %v1805 = vpop.f32.mrb[0].mxu0
      %v1806 = vadd.f32 %v1511, %v1805
      %v1807 = vpop.f32.mrb[0].mxu0
      %1808 = vmatprep.mubr.bf16.mxu0 0
      %1809 = vmatmul.mubr.bf16.gmra.mrb[0].mxu0 %v1674
      %v1810 = vpop.f32.mrb[0].mxu0
      %v1811 = vadd.f32 %v1516, %v1810
      %v1812 = vpop.f32.mrb[0].mxu0
      %v1813 = vpop.f32.mrb[0].mxu0
      %v1814 = vadd.f32 %v1519, %v1813
      %v1815 = vpop.f32.mrb[0].mxu0
      %1816 = vmatprep.mubr.bf16.mxu0 0
      %1817 = vmatmul.mubr.bf16.gmra.mrb[0].mxu0 %v1677
      %v1818 = vpop.f32.mrb[0].mxu0
      %v1819 = vadd.f32 %v1524, %v1818
      %v1820 = vpop.f32.mrb[0].mxu0
      %v1821 = vpop.f32.mrb[0].mxu0
      %v1822 = vadd.f32 %v1527, %v1821
      %v1823 = vpop.f32.mrb[0].mxu0
      %1824 = vmatprep.mubr.bf16.mxu0 0
      %1825 = vmatmul.mubr.bf16.gmra.mrb[0].mxu0 %v1680
      %v1826 = vpop.f32.mrb[0].mxu0
      %v1827 = vadd.f32 %v1532, %v1826
      %v1828 = vpop.f32.mrb[0].mxu0
      %v1829 = vpop.f32.mrb[0].mxu0
      %v1830 = vadd.f32 %v1535, %v1829
      %v1831 = vpop.f32.mrb[0].mxu0
      %1832 = vmatprep.mubr.bf16.mxu0 0
      %1833 = vmatmul.mubr.bf16.gmra.mrb[0].mxu0 %v1683
      %v1834 = vpop.f32.mrb[0].mxu0
      %v1835 = vadd.f32 %v1540, %v1834
      %v1836 = vpop.f32.mrb[0].mxu0
      %v1837 = vpop.f32.mrb[0].mxu0
      %v1838 = vadd.f32 %v1543, %v1837
      %v1839 = vpop.f32.mrb[0].mxu0
      %1840 = vmatprep.mubr.bf16.mxu0 0
      %1841 = vmatmul.mubr.bf16.gmra.mrb[0].mxu0 %v1686
      %v1842 = vpop.f32.mrb[0].mxu0
      %v1843 = vadd.f32 %v1548, %v1842
      %v1844 = vpop.f32.mrb[0].mxu0
      %v1845 = vpop.f32.mrb[0].mxu0
      %v1846 = vadd.f32 %v1551, %v1845
      %v1847 = vpop.f32.mrb[0].mxu0
      %1848 = vdwg.mxu0
      %v1849 = vld [vmem:[#allocation2] sm:$0xe]
      %v1850 = vld [vmem:[#allocation2 + $0xc] sm:$0xe]
      %v1851 = vld [vmem:[#allocation2 + $0x18] sm:$0xe]
      %v1852 = vld [vmem:[#allocation2 + $0x24] sm:$0xe]
      %v1853 = vld [vmem:[#allocation2 + $0x30] sm:$0xe]
      %v1854 = vld [vmem:[#allocation2 + $0x3c] sm:$0xe]
      %v1855 = vld [vmem:[#allocation2 + $0x48] sm:$0xe]
      %v1856 = vld [vmem:[#allocation2 + $0x54] sm:$0xe]
      %v1857 = vld [vmem:[#allocation2 + $0x60] sm:$0xe]
      %v1858 = vld [vmem:[#allocation2 + $0x6c] sm:$0xe]
      %v1859 = vld [vmem:[#allocation2 + $0x78] sm:$0xe]
      %v1860 = vld [vmem:[#allocation2 + $0x84] sm:$0xe]
      %v1861 = vld [vmem:[#allocation2 + $0x90] sm:$0xe]
      %v1862 = vld [vmem:[#allocation2 + $0x9c] sm:$0xe]
      %v1863 = vld [vmem:[#allocation2 + $0xa8] sm:$0xe]
      %v1864 = vld [vmem:[#allocation2 + $0xb4] sm:$0xe]
      %vm1897 = vcmask 1042432
      %vm1898 = vcmask 1046532
      %vm1899 = vmor %vm1897, %vm1898
      %v1900 = vrot.slane %v1849, 5
      %v1901 = vrot.slane %v1900, 4
      %v1902 = vrot.slane %v852, 5
      %v1903 = vsel %vm1899, %v1901, %v1902
      %v1904 = vrot.slane %v1902, 4
      %v1905 = vrot.slane %v885, 5
      %v1906 = vsel %vm1899, %v1904, %v1905
      %v1907 = vrot.slane %v1850, 5
      %v1908 = vrot.slane %v1907, 4
      %v1909 = vrot.slane %v854, 5
      %v1910 = vsel %vm1899, %v1908, %v1909
      %v1911 = vrot.slane %v1909, 4
      %v1912 = vrot.slane %v886, 5
      %v1913 = vsel %vm1899, %v1911, %v1912
      %v1914 = vrot.slane %v1851, 5
      %v1915 = vrot.slane %v1914, 4
      %v1916 = vrot.slane %v856, 5
      %v1917 = vsel %vm1899, %v1915, %v1916
      %v1918 = vrot.slane %v1916, 4
      %v1919 = vrot.slane %v887, 5
      %v1920 = vsel %vm1899, %v1918, %v1919
      %v1921 = vrot.slane %v1852, 5
      %v1922 = vrot.slane %v1921, 4
      %v1923 = vrot.slane %v858, 5
      %v1924 = vsel %vm1899, %v1922, %v1923
      %v1925 = vrot.slane %v1923, 4
      %v1926 = vrot.slane %v888, 5
      %v1927 = vsel %vm1899, %v1925, %v1926
      %v1928 = vrot.slane %v1853, 5
      %v1929 = vrot.slane %v1928, 4
      %v1930 = vrot.slane %v860, 5
      %v1931 = vsel %vm1899, %v1929, %v1930
      %v1932 = vrot.slane %v1930, 4
      %v1933 = vrot.slane %v889, 5
      %v1934 = vsel %vm1899, %v1932, %v1933
      %v1935 = vrot.slane %v1854, 5
      %v1936 = vrot.slane %v1935, 4
      %v1937 = vrot.slane %v862, 5
      %v1938 = vsel %vm1899, %v1936, %v1937
      %v1939 = vrot.slane %v1937, 4
      %v1940 = vrot.slane %v890, 5
      %v1941 = vsel %vm1899, %v1939, %v1940
      %v1942 = vrot.slane %v1855, 5
      %v1943 = vrot.slane %v1942, 4
      %v1944 = vrot.slane %v864, 5
      %v1945 = vsel %vm1899, %v1943, %v1944
      %v1946 = vrot.slane %v1944, 4
      %v1947 = vrot.slane %v891, 5
      %v1948 = vsel %vm1899, %v1946, %v1947
      %v1949 = vrot.slane %v1856, 5
      %v1950 = vrot.slane %v1949, 4
      %v1951 = vrot.slane %v866, 5
      %v1952 = vsel %vm1899, %v1950, %v1951
      %v1953 = vrot.slane %v1951, 4
      %v1954 = vrot.slane %v892, 5
      %v1955 = vsel %vm1899, %v1953, %v1954
      %v1956 = vrot.slane %v1857, 5
      %v1957 = vrot.slane %v1956, 4
      %v1958 = vrot.slane %v868, 5
      %v1959 = vsel %vm1899, %v1957, %v1958
      %v1960 = vrot.slane %v1958, 4
      %v1961 = vrot.slane %v893, 5
      %v1962 = vsel %vm1899, %v1960, %v1961
      %v1963 = vrot.slane %v1858, 5
      %v1964 = vrot.slane %v1963, 4
      %v1965 = vrot.slane %v870, 5
      %v1966 = vsel %vm1899, %v1964, %v1965
      %v1967 = vrot.slane %v1965, 4
      %v1968 = vrot.slane %v894, 5
      %v1969 = vsel %vm1899, %v1967, %v1968
      %v1970 = vrot.slane %v1859, 5
      %v1971 = vrot.slane %v1970, 4
      %v1972 = vrot.slane %v872, 5
      %v1973 = vsel %vm1899, %v1971, %v1972
      %v1974 = vrot.slane %v1972, 4
      %v1975 = vrot.slane %v895, 5
      %v1976 = vsel %vm1899, %v1974, %v1975
      %v1977 = vrot.slane %v1860, 5
      %v1978 = vrot.slane %v1977, 4
      %v1979 = vrot.slane %v874, 5
      %v1980 = vsel %vm1899, %v1978, %v1979
      %v1981 = vrot.slane %v1979, 4
      %v1982 = vrot.slane %v896, 5
      %v1983 = vsel %vm1899, %v1981, %v1982
      %v1984 = vrot.slane %v1861, 5
      %v1985 = vrot.slane %v1984, 4
      %v1986 = vrot.slane %v876, 5
      %v1987 = vsel %vm1899, %v1985, %v1986
      %v1988 = vrot.slane %v1986, 4
      %v1989 = vrot.slane %v897, 5
      %v1990 = vsel %vm1899, %v1988, %v1989
      %v1991 = vrot.slane %v1862, 5
      %v1992 = vrot.slane %v1991, 4
      %v1993 = vrot.slane %v878, 5
      %v1994 = vsel %vm1899, %v1992, %v1993
      %v1995 = vrot.slane %v1993, 4
      %v1996 = vrot.slane %v898, 5
      %v1997 = vsel %vm1899, %v1995, %v1996
      %v1998 = vrot.slane %v1863, 5
      %v1999 = vrot.slane %v1998, 4
      %v2000 = vrot.slane %v880, 5
      %v2001 = vsel %vm1899, %v1999, %v2000
      %v2002 = vrot.slane %v2000, 4
      %v2003 = vrot.slane %v899, 5
      %v2004 = vsel %vm1899, %v2002, %v2003
      %v2005 = vrot.slane %v1864, 5
      %v2006 = vrot.slane %v2005, 4
      %v2007 = vrot.slane %v882, 5
      %v2008 = vsel %vm1899, %v2006, %v2007
      %v2009 = vrot.slane %v2007, 4
      %v2010 = vrot.slane %v900, 5
      %v2011 = vsel %vm1899, %v2009, %v2010
      %v2012 = vld [vmem:[%s1 + $0x10] sm:$0xf]
      %v2013 = vld [vmem:[%s1 + $0x14] sm:$0xf]
      %v2014 = vunpack.c.l.b16 %v1903
      %v2015 = vunpack.c.l.b16 %v1906
      %v2016 = vunpack.c.l.b16 %v1910
      %v2017 = vunpack.c.l.b16 %v1913
      %v2018 = vunpack.c.l.b16 %v1917
      %v2019 = vunpack.c.l.b16 %v1920
      %v2020 = vunpack.c.l.b16 %v1924
      %v2021 = vunpack.c.l.b16 %v1927
      %v2022 = vunpack.c.l.b16 %v1931
      %v2023 = vunpack.c.l.b16 %v1934
      %v2024 = vunpack.c.l.b16 %v1938
      %v2025 = vunpack.c.l.b16 %v1941
      %v2026 = vunpack.c.l.b16 %v1945
      %v2027 = vunpack.c.l.b16 %v1948
      %v2028 = vunpack.c.l.b16 %v1952
      %v2029 = vunpack.c.l.b16 %v1955
      %v2030 = vunpack.c.l.b16 %v1959
      %v2031 = vunpack.c.l.b16 %v1962
      %v2032 = vunpack.c.l.b16 %v1966
      %v2033 = vunpack.c.l.b16 %v1969
      %v2034 = vunpack.c.l.b16 %v1973
      %v2035 = vunpack.c.l.b16 %v1976
      %v2036 = vunpack.c.l.b16 %v1980
      %v2037 = vunpack.c.l.b16 %v1983
      %v2038 = vunpack.c.l.b16 %v1987
      %v2039 = vunpack.c.l.b16 %v1990
      %v2040 = vunpack.c.l.b16 %v1994
      %v2041 = vunpack.c.l.b16 %v1997
      %v2042 = vunpack.c.l.b16 %v2001
      %v2043 = vunpack.c.l.b16 %v2004
      %v2044 = vunpack.c.l.b16 %v2008
      %v2045 = vunpack.c.l.b16 %v2011
      %v2046 = vpack.c.b16 %v2015, %v2014
      %v2047 = vpack.c.b16 %v2017, %v2016
      %v2048 = vpack.c.b16 %v2019, %v2018
      %v2049 = vpack.c.b16 %v2021, %v2020
      %v2050 = vpack.c.b16 %v2023, %v2022
      %v2051 = vpack.c.b16 %v2025, %v2024
      %v2052 = vpack.c.b16 %v2027, %v2026
      %v2053 = vpack.c.b16 %v2029, %v2028
      %v2054 = vpack.c.b16 %v2031, %v2030
      %v2055 = vpack.c.b16 %v2033, %v2032
      %v2056 = vpack.c.b16 %v2035, %v2034
      %v2057 = vpack.c.b16 %v2037, %v2036
      %v2058 = vpack.c.b16 %v2039, %v2038
      %v2059 = vpack.c.b16 %v2041, %v2040
      %v2060 = vpack.c.b16 %v2043, %v2042
      %v2061 = vpack.c.b16 %v2045, %v2044
      %v2064 = vunpack.c.l.b16 %v2012
      %v2065 = vunpack.c.l.b16 %v2013
      %v2066 = vpack.c.b16 %v2065, %v2064
      %v2069 = vsel %vm1344, %v2046, 0
      %v2072 = vsel %vm1344, %v2047, 0
      %v2075 = vsel %vm1344, %v2048, 0
      %v2078 = vsel %vm1344, %v2049, 0
      %v2081 = vsel %vm1344, %v2050, 0
      %v2084 = vsel %vm1344, %v2051, 0
      %v2087 = vsel %vm1344, %v2052, 0
      %v2090 = vsel %vm1344, %v2053, 0
      %v2093 = vsel %vm1344, %v2054, 0
      %v2096 = vsel %vm1344, %v2055, 0
      %v2099 = vsel %vm1344, %v2056, 0
      %v2102 = vsel %vm1344, %v2057, 0
      %v2105 = vsel %vm1344, %v2058, 0
      %v2108 = vsel %vm1344, %v2059, 0
      %v2111 = vsel %vm1344, %v2060, 0
      %v2114 = vsel %vm1344, %v2061, 0
      %2116 = vmatprep.subr.bf16.mxu0 0
      %2117 = vmatpush1.bf16.msra.mxu0 %v2066
      %2118 = vmatprep.subr.bf16.mxu0 0
      %2119 = vmatpush1.bf16.msra.mxu0 0
      %2120 = vmatprep.subr.bf16.mxu0 0
      %2121 = vmatpush1.bf16.msra.mxu0 0
      %2122 = vmatprep.subr.bf16.mxu0 0
      %2123 = vmatpush1.bf16.msra.mxu0 0
      %2124 = vmatprep.subr.bf16.mxu0 0
      %2125 = vmatpush1.bf16.msra.mxu0 0
      %2126 = vmatprep.subr.bf16.mxu0 0
      %2127 = vmatpush1.bf16.msra.mxu0 0
      %2128 = vmatprep.subr.bf16.mxu0 0
      %2129 = vmatpush1.bf16.msra.mxu0 0
      %2130 = vmatprep.subr.bf16.mxu0 0
      %2131 = vmatpush1.bf16.msra.mxu0 0
      %2132 = vmatprep.subr.bf16.mxu0 0
      %2133 = vmatpush1.bf16.msra.mxu0 0
      %2134 = vmatprep.subr.bf16.mxu0 0
      %2135 = vmatpush1.bf16.msra.mxu0 0
      %2136 = vmatprep.subr.bf16.mxu0 0
      %2137 = vmatpush1.bf16.msra.mxu0 0
      %2138 = vmatprep.subr.bf16.mxu0 0
      %2139 = vmatpush1.bf16.msra.mxu0 0
      %2140 = vmatprep.subr.bf16.mxu0 0
      %2141 = vmatpush1.bf16.msra.mxu0 0
      %2142 = vmatprep.subr.bf16.mxu0 0
      %2143 = vmatpush1.bf16.msra.mxu0 0
      %2144 = vmatprep.subr.bf16.mxu0 0
      %2145 = vmatpush1.bf16.msra.mxu0 0
      %2146 = vmatprep.subr.bf16.mxu0 0
      %2147 = vmatpush1.bf16.msra.mxu0 0
      %2148 = vmatprep.mubr.bf16.mxu0 0
      %2149 = vmatmul.mubr.bf16.gmra.mrb[0].mxu0 %v2069
      %v2150 = vpop.f32.mrb[0].mxu0
      %v2151 = vadd.f32 0.0, %v2150
      %v2152 = vpop.f32.mrb[0].mxu0
      %v2153 = vpop.f32.mrb[0].mxu0
      %v2154 = vadd.f32 0.0, %v2153
      %v2155 = vpop.f32.mrb[0].mxu0
      %2156 = vmatprep.mubr.bf16.mxu0 0
      %2157 = vmatmul.mubr.bf16.gmra.mrb[0].mxu0 %v2072
      %v2158 = vpop.f32.mrb[0].mxu0
      %v2159 = vadd.f32 0.0, %v2158
      %v2160 = vpop.f32.mrb[0].mxu0
      %v2161 = vpop.f32.mrb[0].mxu0
      %v2162 = vadd.f32 0.0, %v2161
      %v2163 = vpop.f32.mrb[0].mxu0
      %2164 = vmatprep.mubr.bf16.mxu0 0
      %2165 = vmatmul.mubr.bf16.gmra.mrb[0].mxu0 %v2075
      %v2166 = vpop.f32.mrb[0].mxu0
      %v2167 = vadd.f32 0.0, %v2166
      %v2168 = vpop.f32.mrb[0].mxu0
      %v2169 = vpop.f32.mrb[0].mxu0
      %v2170 = vadd.f32 0.0, %v2169
      %v2171 = vpop.f32.mrb[0].mxu0
      %2172 = vmatprep.mubr.bf16.mxu0 0
      %2173 = vmatmul.mubr.bf16.gmra.mrb[0].mxu0 %v2078
      %v2174 = vpop.f32.mrb[0].mxu0
      %v2175 = vadd.f32 0.0, %v2174
      %v2176 = vpop.f32.mrb[0].mxu0
      %v2177 = vpop.f32.mrb[0].mxu0
      %v2178 = vadd.f32 0.0, %v2177
      %v2179 = vpop.f32.mrb[0].mxu0
      %2180 = vmatprep.mubr.bf16.mxu0 0
      %2181 = vmatmul.mubr.bf16.gmra.mrb[0].mxu0 %v2081
      %v2182 = vpop.f32.mrb[0].mxu0
      %v2183 = vadd.f32 0.0, %v2182
      %v2184 = vpop.f32.mrb[0].mxu0
      %v2185 = vpop.f32.mrb[0].mxu0
      %v2186 = vadd.f32 0.0, %v2185
      %v2187 = vpop.f32.mrb[0].mxu0
      %2188 = vmatprep.mubr.bf16.mxu0 0
      %2189 = vmatmul.mubr.bf16.gmra.mrb[0].mxu0 %v2084
      %v2190 = vpop.f32.mrb[0].mxu0
      %v2191 = vadd.f32 0.0, %v2190
      %v2192 = vpop.f32.mrb[0].mxu0
      %v2193 = vpop.f32.mrb[0].mxu0
      %v2194 = vadd.f32 0.0, %v2193
      %v2195 = vpop.f32.mrb[0].mxu0
      %2196 = vmatprep.mubr.bf16.mxu0 0
      %2197 = vmatmul.mubr.bf16.gmra.mrb[0].mxu0 %v2087
      %v2198 = vpop.f32.mrb[0].mxu0
      %v2199 = vadd.f32 0.0, %v2198
      %v2200 = vpop.f32.mrb[0].mxu0
      %v2201 = vpop.f32.mrb[0].mxu0
      %v2202 = vadd.f32 0.0, %v2201
      %v2203 = vpop.f32.mrb[0].mxu0
      %2204 = vmatprep.mubr.bf16.mxu0 0
      %2205 = vmatmul.mubr.bf16.gmra.mrb[0].mxu0 %v2090
      %v2206 = vpop.f32.mrb[0].mxu0
      %v2207 = vadd.f32 0.0, %v2206
      %v2208 = vpop.f32.mrb[0].mxu0
      %v2209 = vpop.f32.mrb[0].mxu0
      %v2210 = vadd.f32 0.0, %v2209
      %v2211 = vpop.f32.mrb[0].mxu0
      %2212 = vmatprep.mubr.bf16.mxu0 0
      %2213 = vmatmul.mubr.bf16.gmra.mrb[0].mxu0 %v2093
      %v2214 = vpop.f32.mrb[0].mxu0
      %v2215 = vadd.f32 0.0, %v2214
      %v2216 = vpop.f32.mrb[0].mxu0
      %v2217 = vpop.f32.mrb[0].mxu0
      %v2218 = vadd.f32 0.0, %v2217
      %v2219 = vpop.f32.mrb[0].mxu0
      %2220 = vmatprep.mubr.bf16.mxu0 0
      %2221 = vmatmul.mubr.bf16.gmra.mrb[0].mxu0 %v2096
      %v2222 = vpop.f32.mrb[0].mxu0
      %v2223 = vadd.f32 0.0, %v2222
      %v2224 = vpop.f32.mrb[0].mxu0
      %v2225 = vpop.f32.mrb[0].mxu0
      %v2226 = vadd.f32 0.0, %v2225
      %v2227 = vpop.f32.mrb[0].mxu0
      %2228 = vmatprep.mubr.bf16.mxu0 0
      %2229 = vmatmul.mubr.bf16.gmra.mrb[0].mxu0 %v2099
      %v2230 = vpop.f32.mrb[0].mxu0
      %v2231 = vadd.f32 0.0, %v2230
      %v2232 = vpop.f32.mrb[0].mxu0
      %v2233 = vpop.f32.mrb[0].mxu0
      %v2234 = vadd.f32 0.0, %v2233
      %v2235 = vpop.f32.mrb[0].mxu0
      %2236 = vmatprep.mubr.bf16.mxu0 0
      %2237 = vmatmul.mubr.bf16.gmra.mrb[0].mxu0 %v2102
      %v2238 = vpop.f32.mrb[0].mxu0
      %v2239 = vadd.f32 0.0, %v2238
      %v2240 = vpop.f32.mrb[0].mxu0
      %v2241 = vpop.f32.mrb[0].mxu0
      %v2242 = vadd.f32 0.0, %v2241
      %v2243 = vpop.f32.mrb[0].mxu0
      %2244 = vmatprep.mubr.bf16.mxu0 0
      %2245 = vmatmul.mubr.bf16.gmra.mrb[0].mxu0 %v2105
      %v2246 = vpop.f32.mrb[0].mxu0
      %v2247 = vadd.f32 0.0, %v2246
      %v2248 = vpop.f32.mrb[0].mxu0
      %v2249 = vpop.f32.mrb[0].mxu0
      %v2250 = vadd.f32 0.0, %v2249
      %v2251 = vpop.f32.mrb[0].mxu0
      %2252 = vmatprep.mubr.bf16.mxu0 0
      %2253 = vmatmul.mubr.bf16.gmra.mrb[0].mxu0 %v2108
      %v2254 = vpop.f32.mrb[0].mxu0
      %v2255 = vadd.f32 0.0, %v2254
      %v2256 = vpop.f32.mrb[0].mxu0
      %v2257 = vpop.f32.mrb[0].mxu0
      %v2258 = vadd.f32 0.0, %v2257
      %v2259 = vpop.f32.mrb[0].mxu0
      %2260 = vmatprep.mubr.bf16.mxu0 0
      %2261 = vmatmul.mubr.bf16.gmra.mrb[0].mxu0 %v2111
      %v2262 = vpop.f32.mrb[0].mxu0
      %v2263 = vadd.f32 0.0, %v2262
      %v2264 = vpop.f32.mrb[0].mxu0
      %v2265 = vpop.f32.mrb[0].mxu0
      %v2266 = vadd.f32 0.0, %v2265
      %v2267 = vpop.f32.mrb[0].mxu0
      %2268 = vmatprep.mubr.bf16.mxu0 0
      %2269 = vmatmul.mubr.bf16.gmra.mrb[0].mxu0 %v2114
      %v2270 = vpop.f32.mrb[0].mxu0
      %v2271 = vadd.f32 0.0, %v2270
      %v2272 = vpop.f32.mrb[0].mxu0
      %v2273 = vpop.f32.mrb[0].mxu0
      %v2274 = vadd.f32 0.0, %v2273
      %v2275 = vpop.f32.mrb[0].mxu0
      %2276 = vdwg.mxu0
      %v2277 = vadd.f32 %v1723, %v2151
      %v2278 = vadd.f32 %v1726, %v2154
      %v2279 = vadd.f32 %v1731, %v2159
      %v2280 = vadd.f32 %v1734, %v2162
      %v2281 = vadd.f32 %v1739, %v2167
      %v2282 = vadd.f32 %v1742, %v2170
      %v2283 = vadd.f32 %v1747, %v2175
      %v2284 = vadd.f32 %v1750, %v2178
      %v2285 = vadd.f32 %v1755, %v2183
      %v2286 = vadd.f32 %v1758, %v2186
      %v2287 = vadd.f32 %v1763, %v2191
      %v2288 = vadd.f32 %v1766, %v2194
      %v2289 = vadd.f32 %v1771, %v2199
      %v2290 = vadd.f32 %v1774, %v2202
      %v2291 = vadd.f32 %v1779, %v2207
      %v2292 = vadd.f32 %v1782, %v2210
      %v2293 = vadd.f32 %v1787, %v2215
      %v2294 = vadd.f32 %v1790, %v2218
      %v2295 = vadd.f32 %v1795, %v2223
      %v2296 = vadd.f32 %v1798, %v2226
      %v2297 = vadd.f32 %v1803, %v2231
      %v2298 = vadd.f32 %v1806, %v2234
      %v2299 = vadd.f32 %v1811, %v2239
      %v2300 = vadd.f32 %v1814, %v2242
      %v2301 = vadd.f32 %v1819, %v2247
      %v2302 = vadd.f32 %v1822, %v2250
      %v2303 = vadd.f32 %v1827, %v2255
      %v2304 = vadd.f32 %v1830, %v2258
      %v2305 = vadd.f32 %v1835, %v2263
      %v2306 = vadd.f32 %v1838, %v2266
      %v2307 = vadd.f32 %v1843, %v2271
      %v2308 = vadd.f32 %v1846, %v2274
      %v2309 = vld [vmem:[%s733] sm:$0xf]
      %v2310 = vld [vmem:[%s733 + $0x4] sm:$0xf]
      %v2311 = vld [vmem:[%s733 + $0xc] sm:$0xf]
      %v2312 = vld [vmem:[%s733 + $0x10] sm:$0xf]
      %v2313 = vld [vmem:[%s733 + $0x18] sm:$0xf]
      %v2314 = vld [vmem:[%s733 + $0x1c] sm:$0xf]
      %v2315 = vld [vmem:[%s733 + $0x24] sm:$0xf]
      %v2316 = vld [vmem:[%s733 + $0x28] sm:$0xf]
      %v2317 = vld [vmem:[%s733 + $0x30] sm:$0xf]
      %v2318 = vld [vmem:[%s733 + $0x34] sm:$0xf]
      %v2319 = vld [vmem:[%s733 + $0x3c] sm:$0xf]
      %v2320 = vld [vmem:[%s733 + $0x40] sm:$0xf]
      %v2321 = vld [vmem:[%s733 + $0x48] sm:$0xf]
      %v2322 = vld [vmem:[%s733 + $0x4c] sm:$0xf]
      %v2323 = vld [vmem:[%s733 + $0x54] sm:$0xf]
      %v2324 = vld [vmem:[%s733 + $0x58] sm:$0xf]
      %v2325 = vld [vmem:[%s733 + $0x60] sm:$0xf]
      %v2326 = vld [vmem:[%s733 + $0x64] sm:$0xf]
      %v2327 = vld [vmem:[%s733 + $0x6c] sm:$0xf]
      %v2328 = vld [vmem:[%s733 + $0x70] sm:$0xf]
      %v2329 = vld [vmem:[%s733 + $0x78] sm:$0xf]
      %v2330 = vld [vmem:[%s733 + $0x7c] sm:$0xf]
      %v2331 = vld [vmem:[%s733 + $0x84] sm:$0xf]
      %v2332 = vld [vmem:[%s733 + $0x88] sm:$0xf]
      %v2333 = vld [vmem:[%s733 + $0x90] sm:$0xf]
      %v2334 = vld [vmem:[%s733 + $0x94] sm:$0xf]
      %v2335 = vld [vmem:[%s733 + $0x9c] sm:$0xf]
      %v2336 = vld [vmem:[%s733 + $0xa0] sm:$0xf]
      %v2337 = vld [vmem:[%s733 + $0xa8] sm:$0xf]
      %v2338 = vld [vmem:[%s733 + $0xac] sm:$0xf]
      %v2339 = vld [vmem:[%s733 + $0xb4] sm:$0xf]
      %v2340 = vld [vmem:[%s733 + $0xb8] sm:$0xf]
      %v2341 = vld [vmem:[%s1 + $0x18] sm:$0xf]
      %v2342 = vld [vmem:[%s1 + $0x1c] sm:$0xf]
      %v2375 = vunpack.c.l.b16 %v2309
      %v2376 = vunpack.c.l.b16 %v2310
      %v2377 = vunpack.c.l.b16 %v2311
      %v2378 = vunpack.c.l.b16 %v2312
      %v2379 = vunpack.c.l.b16 %v2313
      %v2380 = vunpack.c.l.b16 %v2314
      %v2381 = vunpack.c.l.b16 %v2315
      %v2382 = vunpack.c.l.b16 %v2316
      %v2383 = vunpack.c.l.b16 %v2317
      %v2384 = vunpack.c.l.b16 %v2318
      %v2385 = vunpack.c.l.b16 %v2319
      %v2386 = vunpack.c.l.b16 %v2320
      %v2387 = vunpack.c.l.b16 %v2321
      %v2388 = vunpack.c.l.b16 %v2322
      %v2389 = vunpack.c.l.b16 %v2323
      %v2390 = vunpack.c.l.b16 %v2324
      %v2391 = vunpack.c.l.b16 %v2325
      %v2392 = vunpack.c.l.b16 %v2326
      %v2393 = vunpack.c.l.b16 %v2327
      %v2394 = vunpack.c.l.b16 %v2328
      %v2395 = vunpack.c.l.b16 %v2329
      %v2396 = vunpack.c.l.b16 %v2330
      %v2397 = vunpack.c.l.b16 %v2331
      %v2398 = vunpack.c.l.b16 %v2332
      %v2399 = vunpack.c.l.b16 %v2333
      %v2400 = vunpack.c.l.b16 %v2334
      %v2401 = vunpack.c.l.b16 %v2335
      %v2402 = vunpack.c.l.b16 %v2336
      %v2403 = vunpack.c.l.b16 %v2337
      %v2404 = vunpack.c.l.b16 %v2338
      %v2405 = vunpack.c.l.b16 %v2339
      %v2406 = vunpack.c.l.b16 %v2340
      %v2407 = vpack.c.b16 %v2376, %v2375
      %v2408 = vpack.c.b16 %v2378, %v2377
      %v2409 = vpack.c.b16 %v2380, %v2379
      %v2410 = vpack.c.b16 %v2382, %v2381
      %v2411 = vpack.c.b16 %v2384, %v2383
      %v2412 = vpack.c.b16 %v2386, %v2385
      %v2413 = vpack.c.b16 %v2388, %v2387
      %v2414 = vpack.c.b16 %v2390, %v2389
      %v2415 = vpack.c.b16 %v2392, %v2391
      %v2416 = vpack.c.b16 %v2394, %v2393
      %v2417 = vpack.c.b16 %v2396, %v2395
      %v2418 = vpack.c.b16 %v2398, %v2397
      %v2419 = vpack.c.b16 %v2400, %v2399
      %v2420 = vpack.c.b16 %v2402, %v2401
      %v2421 = vpack.c.b16 %v2404, %v2403
      %v2422 = vpack.c.b16 %v2406, %v2405
      %v2425 = vunpack.c.l.b16 %v2341
      %v2426 = vunpack.c.l.b16 %v2342
      %v2427 = vpack.c.b16 %v2426, %v2425
      %v2430 = vsel %vm1344, %v2407, 0
      %v2433 = vsel %vm1344, %v2408, 0
      %v2436 = vsel %vm1344, %v2409, 0
      %v2439 = vsel %vm1344, %v2410, 0
      %v2442 = vsel %vm1344, %v2411, 0
      %v2445 = vsel %vm1344, %v2412, 0
      %v2448 = vsel %vm1344, %v2413, 0
      %v2451 = vsel %vm1344, %v2414, 0
      %v2454 = vsel %vm1344, %v2415, 0
      %v2457 = vsel %vm1344, %v2416, 0
      %v2460 = vsel %vm1344, %v2417, 0
      %v2463 = vsel %vm1344, %v2418, 0
      %v2466 = vsel %vm1344, %v2419, 0
      %v2469 = vsel %vm1344, %v2420, 0
      %v2472 = vsel %vm1344, %v2421, 0
      %v2475 = vsel %vm1344, %v2422, 0
      %2477 = vmatprep.subr.bf16.mxu0 0
      %2478 = vmatpush1.bf16.msra.mxu0 %v2427
      %2479 = vmatprep.subr.bf16.mxu0 0
      %2480 = vmatpush1.bf16.msra.mxu0 0
      %2481 = vmatprep.subr.bf16.mxu0 0
      %2482 = vmatpush1.bf16.msra.mxu0 0
      %2483 = vmatprep.subr.bf16.mxu0 0
      %2484 = vmatpush1.bf16.msra.mxu0 0
      %2485 = vmatprep.subr.bf16.mxu0 0
      %2486 = vmatpush1.bf16.msra.mxu0 0
      %2487 = vmatprep.subr.bf16.mxu0 0
      %2488 = vmatpush1.bf16.msra.mxu0 0
      %2489 = vmatprep.subr.bf16.mxu0 0
      %2490 = vmatpush1.bf16.msra.mxu0 0
      %2491 = vmatprep.subr.bf16.mxu0 0
      %2492 = vmatpush1.bf16.msra.mxu0 0
      %2493 = vmatprep.subr.bf16.mxu0 0
      %2494 = vmatpush1.bf16.msra.mxu0 0
      %2495 = vmatprep.subr.bf16.mxu0 0
      %2496 = vmatpush1.bf16.msra.mxu0 0
      %2497 = vmatprep.subr.bf16.mxu0 0
      %2498 = vmatpush1.bf16.msra.mxu0 0
      %2499 = vmatprep.subr.bf16.mxu0 0
      %2500 = vmatpush1.bf16.msra.mxu0 0
      %2501 = vmatprep.subr.bf16.mxu0 0
      %2502 = vmatpush1.bf16.msra.mxu0 0
      %2503 = vmatprep.subr.bf16.mxu0 0
      %2504 = vmatpush1.bf16.msra.mxu0 0
      %2505 = vmatprep.subr.bf16.mxu0 0
      %2506 = vmatpush1.bf16.msra.mxu0 0
      %2507 = vmatprep.subr.bf16.mxu0 0
      %2508 = vmatpush1.bf16.msra.mxu0 0
      %2509 = vmatprep.mubr.bf16.mxu0 0
      %2510 = vmatmul.mubr.bf16.gmra.mrb[0].mxu0 %v2430
      %v2511 = vpop.f32.mrb[0].mxu0
      %v2512 = vadd.f32 0.0, %v2511
      %v2513 = vpop.f32.mrb[0].mxu0
      %v2514 = vpop.f32.mrb[0].mxu0
      %v2515 = vadd.f32 0.0, %v2514
      %v2516 = vpop.f32.mrb[0].mxu0
      %2517 = vmatprep.mubr.bf16.mxu0 0
      %2518 = vmatmul.mubr.bf16.gmra.mrb[0].mxu0 %v2433
      %v2519 = vpop.f32.mrb[0].mxu0
      %v2520 = vadd.f32 0.0, %v2519
      %v2521 = vpop.f32.mrb[0].mxu0
      %v2522 = vpop.f32.mrb[0].mxu0
      %v2523 = vadd.f32 0.0, %v2522
      %v2524 = vpop.f32.mrb[0].mxu0
      %2525 = vmatprep.mubr.bf16.mxu0 0
      %2526 = vmatmul.mubr.bf16.gmra.mrb[0].mxu0 %v2436
      %v2527 = vpop.f32.mrb[0].mxu0
      %v2528 = vadd.f32 0.0, %v2527
      %v2529 = vpop.f32.mrb[0].mxu0
      %v2530 = vpop.f32.mrb[0].mxu0
      %v2531 = vadd.f32 0.0, %v2530
      %v2532 = vpop.f32.mrb[0].mxu0
      %2533 = vmatprep.mubr.bf16.mxu0 0
      %2534 = vmatmul.mubr.bf16.gmra.mrb[0].mxu0 %v2439
      %v2535 = vpop.f32.mrb[0].mxu0
      %v2536 = vadd.f32 0.0, %v2535
      %v2537 = vpop.f32.mrb[0].mxu0
      %v2538 = vpop.f32.mrb[0].mxu0
      %v2539 = vadd.f32 0.0, %v2538
      %v2540 = vpop.f32.mrb[0].mxu0
      %2541 = vmatprep.mubr.bf16.mxu0 0
      %2542 = vmatmul.mubr.bf16.gmra.mrb[0].mxu0 %v2442
      %v2543 = vpop.f32.mrb[0].mxu0
      %v2544 = vadd.f32 0.0, %v2543
      %v2545 = vpop.f32.mrb[0].mxu0
      %v2546 = vpop.f32.mrb[0].mxu0
      %v2547 = vadd.f32 0.0, %v2546
      %v2548 = vpop.f32.mrb[0].mxu0
      %2549 = vmatprep.mubr.bf16.mxu0 0
      %2550 = vmatmul.mubr.bf16.gmra.mrb[0].mxu0 %v2445
      %v2551 = vpop.f32.mrb[0].mxu0
      %v2552 = vadd.f32 0.0, %v2551
      %v2553 = vpop.f32.mrb[0].mxu0
      %v2554 = vpop.f32.mrb[0].mxu0
      %v2555 = vadd.f32 0.0, %v2554
      %v2556 = vpop.f32.mrb[0].mxu0
      %2557 = vmatprep.mubr.bf16.mxu0 0
      %2558 = vmatmul.mubr.bf16.gmra.mrb[0].mxu0 %v2448
      %v2559 = vpop.f32.mrb[0].mxu0
      %v2560 = vadd.f32 0.0, %v2559
      %v2561 = vpop.f32.mrb[0].mxu0
      %v2562 = vpop.f32.mrb[0].mxu0
      %v2563 = vadd.f32 0.0, %v2562
      %v2564 = vpop.f32.mrb[0].mxu0
      %2565 = vmatprep.mubr.bf16.mxu0 0
      %2566 = vmatmul.mubr.bf16.gmra.mrb[0].mxu0 %v2451
      %v2567 = vpop.f32.mrb[0].mxu0
      %v2568 = vadd.f32 0.0, %v2567
      %v2569 = vpop.f32.mrb[0].mxu0
      %v2570 = vpop.f32.mrb[0].mxu0
      %v2571 = vadd.f32 0.0, %v2570
      %v2572 = vpop.f32.mrb[0].mxu0
      %2573 = vmatprep.mubr.bf16.mxu0 0
      %2574 = vmatmul.mubr.bf16.gmra.mrb[0].mxu0 %v2454
      %v2575 = vpop.f32.mrb[0].mxu0
      %v2576 = vadd.f32 0.0, %v2575
      %v2577 = vpop.f32.mrb[0].mxu0
      %v2578 = vpop.f32.mrb[0].mxu0
      %v2579 = vadd.f32 0.0, %v2578
      %v2580 = vpop.f32.mrb[0].mxu0
      %2581 = vmatprep.mubr.bf16.mxu0 0
      %2582 = vmatmul.mubr.bf16.gmra.mrb[0].mxu0 %v2457
      %v2583 = vpop.f32.mrb[0].mxu0
      %v2584 = vadd.f32 0.0, %v2583
      %v2585 = vpop.f32.mrb[0].mxu0
      %v2586 = vpop.f32.mrb[0].mxu0
      %v2587 = vadd.f32 0.0, %v2586
      %v2588 = vpop.f32.mrb[0].mxu0
      %2589 = vmatprep.mubr.bf16.mxu0 0
      %2590 = vmatmul.mubr.bf16.gmra.mrb[0].mxu0 %v2460
      %v2591 = vpop.f32.mrb[0].mxu0
      %v2592 = vadd.f32 0.0, %v2591
      %v2593 = vpop.f32.mrb[0].mxu0
      %v2594 = vpop.f32.mrb[0].mxu0
      %v2595 = vadd.f32 0.0, %v2594
      %v2596 = vpop.f32.mrb[0].mxu0
      %2597 = vmatprep.mubr.bf16.mxu0 0
      %2598 = vmatmul.mubr.bf16.gmra.mrb[0].mxu0 %v2463
      %v2599 = vpop.f32.mrb[0].mxu0
      %v2600 = vadd.f32 0.0, %v2599
      %v2601 = vpop.f32.mrb[0].mxu0
      %v2602 = vpop.f32.mrb[0].mxu0
      %v2603 = vadd.f32 0.0, %v2602
      %v2604 = vpop.f32.mrb[0].mxu0
      %2605 = vmatprep.mubr.bf16.mxu0 0
      %2606 = vmatmul.mubr.bf16.gmra.mrb[0].mxu0 %v2466
      %v2607 = vpop.f32.mrb[0].mxu0
      %v2608 = vadd.f32 0.0, %v2607
      %v2609 = vpop.f32.mrb[0].mxu0
      %v2610 = vpop.f32.mrb[0].mxu0
      %v2611 = vadd.f32 0.0, %v2610
      %v2612 = vpop.f32.mrb[0].mxu0
      %2613 = vmatprep.mubr.bf16.mxu0 0
      %2614 = vmatmul.mubr.bf16.gmra.mrb[0].mxu0 %v2469
      %v2615 = vpop.f32.mrb[0].mxu0
      %v2616 = vadd.f32 0.0, %v2615
      %v2617 = vpop.f32.mrb[0].mxu0
      %v2618 = vpop.f32.mrb[0].mxu0
      %v2619 = vadd.f32 0.0, %v2618
      %v2620 = vpop.f32.mrb[0].mxu0
      %2621 = vmatprep.mubr.bf16.mxu0 0
      %2622 = vmatmul.mubr.bf16.gmra.mrb[0].mxu0 %v2472
      %v2623 = vpop.f32.mrb[0].mxu0
      %v2624 = vadd.f32 0.0, %v2623
      %v2625 = vpop.f32.mrb[0].mxu0
      %v2626 = vpop.f32.mrb[0].mxu0
      %v2627 = vadd.f32 0.0, %v2626
      %v2628 = vpop.f32.mrb[0].mxu0
      %2629 = vmatprep.mubr.bf16.mxu0 0
      %2630 = vmatmul.mubr.bf16.gmra.mrb[0].mxu0 %v2475
      %v2631 = vpop.f32.mrb[0].mxu0
      %v2632 = vadd.f32 0.0, %v2631
      %v2633 = vpop.f32.mrb[0].mxu0
      %v2634 = vpop.f32.mrb[0].mxu0
      %v2635 = vadd.f32 0.0, %v2634
      %v2636 = vpop.f32.mrb[0].mxu0
      %2637 = vdwg.mxu0
      %v2638 = vadd.f32 %v2277, %v2512
      %v2639 = vadd.f32 %v2278, %v2515
      %v2640 = vadd.f32 %v2279, %v2520
      %v2641 = vadd.f32 %v2280, %v2523
      %v2642 = vadd.f32 %v2281, %v2528
      %v2643 = vadd.f32 %v2282, %v2531
      %v2644 = vadd.f32 %v2283, %v2536
      %v2645 = vadd.f32 %v2284, %v2539
      %v2646 = vadd.f32 %v2285, %v2544
      %v2647 = vadd.f32 %v2286, %v2547
      %v2648 = vadd.f32 %v2287, %v2552
      %v2649 = vadd.f32 %v2288, %v2555
      %v2650 = vadd.f32 %v2289, %v2560
      %v2651 = vadd.f32 %v2290, %v2563
      %v2652 = vadd.f32 %v2291, %v2568
      %v2653 = vadd.f32 %v2292, %v2571
      %v2654 = vadd.f32 %v2293, %v2576
      %v2655 = vadd.f32 %v2294, %v2579
      %v2656 = vadd.f32 %v2295, %v2584
      %v2657 = vadd.f32 %v2296, %v2587
      %v2658 = vadd.f32 %v2297, %v2592
      %v2659 = vadd.f32 %v2298, %v2595
      %v2660 = vadd.f32 %v2299, %v2600
      %v2661 = vadd.f32 %v2300, %v2603
      %v2662 = vadd.f32 %v2301, %v2608
      %v2663 = vadd.f32 %v2302, %v2611
      %v2664 = vadd.f32 %v2303, %v2616
      %v2665 = vadd.f32 %v2304, %v2619
      %v2666 = vadd.f32 %v2305, %v2624
      %v2667 = vadd.f32 %v2306, %v2627
      %v2668 = vadd.f32 %v2307, %v2632
      %v2669 = vadd.f32 %v2308, %v2635
      %v2670 = vld [vmem:[%s733] sm:$0xf]
      %v2671 = vld [vmem:[%s733 + $0x4] sm:$0xf]
      %v2672 = vld [vmem:[%s733 + $0x8] sm:$0x1]
      %v2673 = vld [vmem:[%s733 + $0xc] sm:$0xf]
      %v2674 = vld [vmem:[%s733 + $0x10] sm:$0xf]
      %v2675 = vld [vmem:[%s733 + $0x14] sm:$0x1]
      %v2676 = vld [vmem:[%s733 + $0x18] sm:$0xf]
      %v2677 = vld [vmem:[%s733 + $0x1c] sm:$0xf]
      %v2678 = vld [vmem:[%s733 + $0x20] sm:$0x1]
      %v2679 = vld [vmem:[%s733 + $0x24] sm:$0xf]
      %v2680 = vld [vmem:[%s733 + $0x28] sm:$0xf]
      %v2681 = vld [vmem:[%s733 + $0x2c] sm:$0x1]
      %v2682 = vld [vmem:[%s733 + $0x30] sm:$0xf]
      %v2683 = vld [vmem:[%s733 + $0x34] sm:$0xf]
      %v2684 = vld [vmem:[%s733 + $0x38] sm:$0x1]
      %v2685 = vld [vmem:[%s733 + $0x3c] sm:$0xf]
      %v2686 = vld [vmem:[%s733 + $0x40] sm:$0xf]
      %v2687 = vld [vmem:[%s733 + $0x44] sm:$0x1]
      %v2688 = vld [vmem:[%s733 + $0x48] sm:$0xf]
      %v2689 = vld [vmem:[%s733 + $0x4c] sm:$0xf]
      %v2690 = vld [vmem:[%s733 + $0x50] sm:$0x1]
      %v2691 = vld [vmem:[%s733 + $0x54] sm:$0xf]
      %v2692 = vld [vmem:[%s733 + $0x58] sm:$0xf]
      %v2693 = vld [vmem:[%s733 + $0x5c] sm:$0x1]
      %v2694 = vld [vmem:[%s733 + $0x60] sm:$0xf]
      %v2695 = vld [vmem:[%s733 + $0x64] sm:$0xf]
      %v2696 = vld [vmem:[%s733 + $0x68] sm:$0x1]
      %v2697 = vld [vmem:[%s733 + $0x6c] sm:$0xf]
      %v2698 = vld [vmem:[%s733 + $0x70] sm:$0xf]
      %v2699 = vld [vmem:[%s733 + $0x74] sm:$0x1]
      %v2700 = vld [vmem:[%s733 + $0x78] sm:$0xf]
      %v2701 = vld [vmem:[%s733 + $0x7c] sm:$0xf]
      %v2702 = vld [vmem:[%s733 + $0x80] sm:$0x1]
      %v2703 = vld [vmem:[%s733 + $0x84] sm:$0xf]
      %v2704 = vld [vmem:[%s733 + $0x88] sm:$0xf]
      %v2705 = vld [vmem:[%s733 + $0x8c] sm:$0x1]
      %v2706 = vld [vmem:[%s733 + $0x90] sm:$0xf]
      %v2707 = vld [vmem:[%s733 + $0x94] sm:$0xf]
      %v2708 = vld [vmem:[%s733 + $0x98] sm:$0x1]
      %v2709 = vld [vmem:[%s733 + $0x9c] sm:$0xf]
      %v2710 = vld [vmem:[%s733 + $0xa0] sm:$0xf]
      %v2711 = vld [vmem:[%s733 + $0xa4] sm:$0x1]
      %v2712 = vld [vmem:[%s733 + $0xa8] sm:$0xf]
      %v2713 = vld [vmem:[%s733 + $0xac] sm:$0xf]
      %v2714 = vld [vmem:[%s733 + $0xb0] sm:$0x1]
      %v2715 = vld [vmem:[%s733 + $0xb4] sm:$0xf]
      %v2716 = vld [vmem:[%s733 + $0xb8] sm:$0xf]
      %v2717 = vld [vmem:[%s733 + $0xbc] sm:$0x1]
      %v2719 = vshrl.u32 %v2670, 16
      %v2721 = vrot.slane %v2719, 4
      %v2722 = vshll.u32 %v2670, 16
      %v2724 = vrot.slane %v2722, 5
      %v2725 = vor.u32 %v2721, %v2724
      %v2726 = vrot.slane %v2725, 4
      %v2728 = vshll.u32 %v2671, 16
      %v2730 = vrot.slane %v2728, 5
      %v2731 = vsel %vm903, %v2726, %v2730
      %v2732 = vshrl.u32 %v2671, 16
      %v2734 = vrot.slane %v2732, 4
      %v2735 = vor.u32 %v2734, %v2730
      %v2736 = vrot.slane %v2735, 4
      %v2738 = vshll.u32 %v2672, 16
      %v2740 = vrot.slane %v2738, 5
      %v2741 = vsel %vm903, %v2736, %v2740
      %v2743 = vshrl.u32 %v2673, 16
      %v2745 = vrot.slane %v2743, 4
      %v2746 = vshll.u32 %v2673, 16
      %v2748 = vrot.slane %v2746, 5
      %v2749 = vor.u32 %v2745, %v2748
      %v2750 = vrot.slane %v2749, 4
      %v2752 = vshll.u32 %v2674, 16
      %v2754 = vrot.slane %v2752, 5
      %v2755 = vsel %vm903, %v2750, %v2754
      %v2756 = vshrl.u32 %v2674, 16
      %v2758 = vrot.slane %v2756, 4
      %v2759 = vor.u32 %v2758, %v2754
      %v2760 = vrot.slane %v2759, 4
      %v2762 = vshll.u32 %v2675, 16
      %v2764 = vrot.slane %v2762, 5
      %v2765 = vsel %vm903, %v2760, %v2764
      %v2767 = vshrl.u32 %v2676, 16
      %v2769 = vrot.slane %v2767, 4
      %v2770 = vshll.u32 %v2676, 16
      %v2772 = vrot.slane %v2770, 5
      %v2773 = vor.u32 %v2769, %v2772
      %v2774 = vrot.slane %v2773, 4
      %v2776 = vshll.u32 %v2677, 16
      %v2778 = vrot.slane %v2776, 5
      %v2779 = vsel %vm903, %v2774, %v2778
      %v2780 = vshrl.u32 %v2677, 16
      %v2782 = vrot.slane %v2780, 4
      %v2783 = vor.u32 %v2782, %v2778
      %v2784 = vrot.slane %v2783, 4
      %v2786 = vshll.u32 %v2678, 16
      %v2788 = vrot.slane %v2786, 5
      %v2789 = vsel %vm903, %v2784, %v2788
      %v2791 = vshrl.u32 %v2679, 16
      %v2793 = vrot.slane %v2791, 4
      %v2794 = vshll.u32 %v2679, 16
      %v2796 = vrot.slane %v2794, 5
      %v2797 = vor.u32 %v2793, %v2796
      %v2798 = vrot.slane %v2797, 4
      %v2800 = vshll.u32 %v2680, 16
      %v2802 = vrot.slane %v2800, 5
      %v2803 = vsel %vm903, %v2798, %v2802
      %v2804 = vshrl.u32 %v2680, 16
      %v2806 = vrot.slane %v2804, 4
      %v2807 = vor.u32 %v2806, %v2802
      %v2808 = vrot.slane %v2807, 4
      %v2810 = vshll.u32 %v2681, 16
      %v2812 = vrot.slane %v2810, 5
      %v2813 = vsel %vm903, %v2808, %v2812
      %v2815 = vshrl.u32 %v2682, 16
      %v2817 = vrot.slane %v2815, 4
      %v2818 = vshll.u32 %v2682, 16
      %v2820 = vrot.slane %v2818, 5
      %v2821 = vor.u32 %v2817, %v2820
      %v2822 = vrot.slane %v2821, 4
      %v2824 = vshll.u32 %v2683, 16
      %v2826 = vrot.slane %v2824, 5
      %v2827 = vsel %vm903, %v2822, %v2826
      %v2828 = vshrl.u32 %v2683, 16
      %v2830 = vrot.slane %v2828, 4
      %v2831 = vor.u32 %v2830, %v2826
      %v2832 = vrot.slane %v2831, 4
      %v2834 = vshll.u32 %v2684, 16
      %v2836 = vrot.slane %v2834, 5
      %v2837 = vsel %vm903, %v2832, %v2836
      %v2839 = vshrl.u32 %v2685, 16
      %v2841 = vrot.slane %v2839, 4
      %v2842 = vshll.u32 %v2685, 16
      %v2844 = vrot.slane %v2842, 5
      %v2845 = vor.u32 %v2841, %v2844
      %v2846 = vrot.slane %v2845, 4
      %v2848 = vshll.u32 %v2686, 16
      %v2850 = vrot.slane %v2848, 5
      %v2851 = vsel %vm903, %v2846, %v2850
      %v2852 = vshrl.u32 %v2686, 16
      %v2854 = vrot.slane %v2852, 4
      %v2855 = vor.u32 %v2854, %v2850
      %v2856 = vrot.slane %v2855, 4
      %v2858 = vshll.u32 %v2687, 16
      %v2860 = vrot.slane %v2858, 5
      %v2861 = vsel %vm903, %v2856, %v2860
      %v2863 = vshrl.u32 %v2688, 16
      %v2865 = vrot.slane %v2863, 4
      %v2866 = vshll.u32 %v2688, 16
      %v2868 = vrot.slane %v2866, 5
      %v2869 = vor.u32 %v2865, %v2868
      %v2870 = vrot.slane %v2869, 4
      %v2872 = vshll.u32 %v2689, 16
      %v2874 = vrot.slane %v2872, 5
      %v2875 = vsel %vm903, %v2870, %v2874
      %v2876 = vshrl.u32 %v2689, 16
      %v2878 = vrot.slane %v2876, 4
      %v2879 = vor.u32 %v2878, %v2874
      %v2880 = vrot.slane %v2879, 4
      %v2882 = vshll.u32 %v2690, 16
      %v2884 = vrot.slane %v2882, 5
      %v2885 = vsel %vm903, %v2880, %v2884
      %v2887 = vshrl.u32 %v2691, 16
      %v2889 = vrot.slane %v2887, 4
      %v2890 = vshll.u32 %v2691, 16
      %v2892 = vrot.slane %v2890, 5
      %v2893 = vor.u32 %v2889, %v2892
      %v2894 = vrot.slane %v2893, 4
      %v2896 = vshll.u32 %v2692, 16
      %v2898 = vrot.slane %v2896, 5
      %v2899 = vsel %vm903, %v2894, %v2898
      %v2900 = vshrl.u32 %v2692, 16
      %v2902 = vrot.slane %v2900, 4
      %v2903 = vor.u32 %v2902, %v2898
      %v2904 = vrot.slane %v2903, 4
      %v2906 = vshll.u32 %v2693, 16
      %v2908 = vrot.slane %v2906, 5
      %v2909 = vsel %vm903, %v2904, %v2908
      %v2911 = vshrl.u32 %v2694, 16
      %v2913 = vrot.slane %v2911, 4
      %v2914 = vshll.u32 %v2694, 16
      %v2916 = vrot.slane %v2914, 5
      %v2917 = vor.u32 %v2913, %v2916
      %v2918 = vrot.slane %v2917, 4
      %v2920 = vshll.u32 %v2695, 16
      %v2922 = vrot.slane %v2920, 5
      %v2923 = vsel %vm903, %v2918, %v2922
      %v2924 = vshrl.u32 %v2695, 16
      %v2926 = vrot.slane %v2924, 4
      %v2927 = vor.u32 %v2926, %v2922
      %v2928 = vrot.slane %v2927, 4
      %v2930 = vshll.u32 %v2696, 16
      %v2932 = vrot.slane %v2930, 5
      %v2933 = vsel %vm903, %v2928, %v2932
      %v2935 = vshrl.u32 %v2697, 16
      %v2937 = vrot.slane %v2935, 4
      %v2938 = vshll.u32 %v2697, 16
      %v2940 = vrot.slane %v2938, 5
      %v2941 = vor.u32 %v2937, %v2940
      %v2942 = vrot.slane %v2941, 4
      %v2944 = vshll.u32 %v2698, 16
      %v2946 = vrot.slane %v2944, 5
      %v2947 = vsel %vm903, %v2942, %v2946
      %v2948 = vshrl.u32 %v2698, 16
      %v2950 = vrot.slane %v2948, 4
      %v2951 = vor.u32 %v2950, %v2946
      %v2952 = vrot.slane %v2951, 4
      %v2954 = vshll.u32 %v2699, 16
      %v2956 = vrot.slane %v2954, 5
      %v2957 = vsel %vm903, %v2952, %v2956
      %v2959 = vshrl.u32 %v2700, 16
      %v2961 = vrot.slane %v2959, 4
      %v2962 = vshll.u32 %v2700, 16
      %v2964 = vrot.slane %v2962, 5
      %v2965 = vor.u32 %v2961, %v2964
      %v2966 = vrot.slane %v2965, 4
      %v2968 = vshll.u32 %v2701, 16
      %v2970 = vrot.slane %v2968, 5
      %v2971 = vsel %vm903, %v2966, %v2970
      %v2972 = vshrl.u32 %v2701, 16
      %v2974 = vrot.slane %v2972, 4
      %v2975 = vor.u32 %v2974, %v2970
      %v2976 = vrot.slane %v2975, 4
      %v2978 = vshll.u32 %v2702, 16
      %v2980 = vrot.slane %v2978, 5
      %v2981 = vsel %vm903, %v2976, %v2980
      %v2983 = vshrl.u32 %v2703, 16
      %v2985 = vrot.slane %v2983, 4
      %v2986 = vshll.u32 %v2703, 16
      %v2988 = vrot.slane %v2986, 5
      %v2989 = vor.u32 %v2985, %v2988
      %v2990 = vrot.slane %v2989, 4
      %v2992 = vshll.u32 %v2704, 16
      %v2994 = vrot.slane %v2992, 5
      %v2995 = vsel %vm903, %v2990, %v2994
      %v2996 = vshrl.u32 %v2704, 16
      %v2998 = vrot.slane %v2996, 4
      %v2999 = vor.u32 %v2998, %v2994
      %v3000 = vrot.slane %v2999, 4
      %v3002 = vshll.u32 %v2705, 16
      %v3004 = vrot.slane %v3002, 5
      %v3005 = vsel %vm903, %v3000, %v3004
      %v3007 = vshrl.u32 %v2706, 16
      %v3009 = vrot.slane %v3007, 4
      %v3010 = vshll.u32 %v2706, 16
      %v3012 = vrot.slane %v3010, 5
      %v3013 = vor.u32 %v3009, %v3012
      %v3014 = vrot.slane %v3013, 4
      %v3016 = vshll.u32 %v2707, 16
      %v3018 = vrot.slane %v3016, 5
      %v3019 = vsel %vm903, %v3014, %v3018
      %v3020 = vshrl.u32 %v2707, 16
      %v3022 = vrot.slane %v3020, 4
      %v3023 = vor.u32 %v3022, %v3018
      %v3024 = vrot.slane %v3023, 4
      %v3026 = vshll.u32 %v2708, 16
      %v3028 = vrot.slane %v3026, 5
      %v3029 = vsel %vm903, %v3024, %v3028
      %v3031 = vshrl.u32 %v2709, 16
      %v3033 = vrot.slane %v3031, 4
      %v3034 = vshll.u32 %v2709, 16
      %v3036 = vrot.slane %v3034, 5
      %v3037 = vor.u32 %v3033, %v3036
      %v3038 = vrot.slane %v3037, 4
      %v3040 = vshll.u32 %v2710, 16
      %v3042 = vrot.slane %v3040, 5
      %v3043 = vsel %vm903, %v3038, %v3042
      %v3044 = vshrl.u32 %v2710, 16
      %v3046 = vrot.slane %v3044, 4
      %v3047 = vor.u32 %v3046, %v3042
      %v3048 = vrot.slane %v3047, 4
      %v3050 = vshll.u32 %v2711, 16
      %v3052 = vrot.slane %v3050, 5
      %v3053 = vsel %vm903, %v3048, %v3052
      %v3055 = vshrl.u32 %v2712, 16
      %v3057 = vrot.slane %v3055, 4
      %v3058 = vshll.u32 %v2712, 16
      %v3060 = vrot.slane %v3058, 5
      %v3061 = vor.u32 %v3057, %v3060
      %v3062 = vrot.slane %v3061, 4
      %v3064 = vshll.u32 %v2713, 16
      %v3066 = vrot.slane %v3064, 5
      %v3067 = vsel %vm903, %v3062, %v3066
      %v3068 = vshrl.u32 %v2713, 16
      %v3070 = vrot.slane %v3068, 4
      %v3071 = vor.u32 %v3070, %v3066
      %v3072 = vrot.slane %v3071, 4
      %v3074 = vshll.u32 %v2714, 16
      %v3076 = vrot.slane %v3074, 5
      %v3077 = vsel %vm903, %v3072, %v3076
      %v3079 = vshrl.u32 %v2715, 16
      %v3081 = vrot.slane %v3079, 4
      %v3082 = vshll.u32 %v2715, 16
      %v3084 = vrot.slane %v3082, 5
      %v3085 = vor.u32 %v3081, %v3084
      %v3086 = vrot.slane %v3085, 4
      %v3088 = vshll.u32 %v2716, 16
      %v3090 = vrot.slane %v3088, 5
      %v3091 = vsel %vm903, %v3086, %v3090
      %v3092 = vshrl.u32 %v2716, 16
      %v3094 = vrot.slane %v3092, 4
      %v3095 = vor.u32 %v3094, %v3090
      %v3096 = vrot.slane %v3095, 4
      %v3098 = vshll.u32 %v2717, 16
      %v3100 = vrot.slane %v3098, 5
      %v3101 = vsel %vm903, %v3096, %v3100
      %v3102 = vld [vmem:[%s1 + $0x20] sm:$0xf]
      %v3103 = vld [vmem:[%s1 + $0x24] sm:$0xf]
      %v3104 = vunpack.c.l.b16 %v2731
      %v3105 = vunpack.c.l.b16 %v2741
      %v3106 = vunpack.c.l.b16 %v2755
      %v3107 = vunpack.c.l.b16 %v2765
      %v3108 = vunpack.c.l.b16 %v2779
      %v3109 = vunpack.c.l.b16 %v2789
      %v3110 = vunpack.c.l.b16 %v2803
      %v3111 = vunpack.c.l.b16 %v2813
      %v3112 = vunpack.c.l.b16 %v2827
      %v3113 = vunpack.c.l.b16 %v2837
      %v3114 = vunpack.c.l.b16 %v2851
      %v3115 = vunpack.c.l.b16 %v2861
      %v3116 = vunpack.c.l.b16 %v2875
      %v3117 = vunpack.c.l.b16 %v2885
      %v3118 = vunpack.c.l.b16 %v2899
      %v3119 = vunpack.c.l.b16 %v2909
      %v3120 = vunpack.c.l.b16 %v2923
      %v3121 = vunpack.c.l.b16 %v2933
      %v3122 = vunpack.c.l.b16 %v2947
      %v3123 = vunpack.c.l.b16 %v2957
      %v3124 = vunpack.c.l.b16 %v2971
      %v3125 = vunpack.c.l.b16 %v2981
      %v3126 = vunpack.c.l.b16 %v2995
      %v3127 = vunpack.c.l.b16 %v3005
      %v3128 = vunpack.c.l.b16 %v3019
      %v3129 = vunpack.c.l.b16 %v3029
      %v3130 = vunpack.c.l.b16 %v3043
      %v3131 = vunpack.c.l.b16 %v3053
      %v3132 = vunpack.c.l.b16 %v3067
      %v3133 = vunpack.c.l.b16 %v3077
      %v3134 = vunpack.c.l.b16 %v3091
      %v3135 = vunpack.c.l.b16 %v3101
      %v3136 = vpack.c.b16 %v3105, %v3104
      %v3137 = vpack.c.b16 %v3107, %v3106
      %v3138 = vpack.c.b16 %v3109, %v3108
      %v3139 = vpack.c.b16 %v3111, %v3110
      %v3140 = vpack.c.b16 %v3113, %v3112
      %v3141 = vpack.c.b16 %v3115, %v3114
      %v3142 = vpack.c.b16 %v3117, %v3116
      %v3143 = vpack.c.b16 %v3119, %v3118
      %v3144 = vpack.c.b16 %v3121, %v3120
      %v3145 = vpack.c.b16 %v3123, %v3122
      %v3146 = vpack.c.b16 %v3125, %v3124
      %v3147 = vpack.c.b16 %v3127, %v3126
      %v3148 = vpack.c.b16 %v3129, %v3128
      %v3149 = vpack.c.b16 %v3131, %v3130
      %v3150 = vpack.c.b16 %v3133, %v3132
      %v3151 = vpack.c.b16 %v3135, %v3134
      %v3154 = vunpack.c.l.b16 %v3102
      %v3155 = vunpack.c.l.b16 %v3103
      %v3156 = vpack.c.b16 %v3155, %v3154
      %v3159 = vsel %vm1344, %v3136, 0
      %v3162 = vsel %vm1344, %v3137, 0
      %v3165 = vsel %vm1344, %v3138, 0
      %v3168 = vsel %vm1344, %v3139, 0
      %v3171 = vsel %vm1344, %v3140, 0
      %v3174 = vsel %vm1344, %v3141, 0
      %v3177 = vsel %vm1344, %v3142, 0
      %v3180 = vsel %vm1344, %v3143, 0
      %v3183 = vsel %vm1344, %v3144, 0
      %v3186 = vsel %vm1344, %v3145, 0
      %v3189 = vsel %vm1344, %v3146, 0
      %v3192 = vsel %vm1344, %v3147, 0
      %v3195 = vsel %vm1344, %v3148, 0
      %v3198 = vsel %vm1344, %v3149, 0
      %v3201 = vsel %vm1344, %v3150, 0
      %v3204 = vsel %vm1344, %v3151, 0
      %3206 = vmatprep.subr.bf16.mxu0 0
      %3207 = vmatpush1.bf16.msra.mxu0 %v3156
      %3208 = vmatprep.subr.bf16.mxu0 0
      %3209 = vmatpush1.bf16.msra.mxu0 0
      %3210 = vmatprep.subr.bf16.mxu0 0
      %3211 = vmatpush1.bf16.msra.mxu0 0
      %3212 = vmatprep.subr.bf16.mxu0 0
      %3213 = vmatpush1.bf16.msra.mxu0 0
      %3214 = vmatprep.subr.bf16.mxu0 0
      %3215 = vmatpush1.bf16.msra.mxu0 0
      %3216 = vmatprep.subr.bf16.mxu0 0
      %3217 = vmatpush1.bf16.msra.mxu0 0
      %3218 = vmatprep.subr.bf16.mxu0 0
      %3219 = vmatpush1.bf16.msra.mxu0 0
      %3220 = vmatprep.subr.bf16.mxu0 0
      %3221 = vmatpush1.bf16.msra.mxu0 0
      %3222 = vmatprep.subr.bf16.mxu0 0
      %3223 = vmatpush1.bf16.msra.mxu0 0
      %3224 = vmatprep.subr.bf16.mxu0 0
      %3225 = vmatpush1.bf16.msra.mxu0 0
      %3226 = vmatprep.subr.bf16.mxu0 0
      %3227 = vmatpush1.bf16.msra.mxu0 0
      %3228 = vmatprep.subr.bf16.mxu0 0
      %3229 = vmatpush1.bf16.msra.mxu0 0
      %3230 = vmatprep.subr.bf16.mxu0 0
      %3231 = vmatpush1.bf16.msra.mxu0 0
      %3232 = vmatprep.subr.bf16.mxu0 0
      %3233 = vmatpush1.bf16.msra.mxu0 0
      %3234 = vmatprep.subr.bf16.mxu0 0
      %3235 = vmatpush1.bf16.msra.mxu0 0
      %3236 = vmatprep.subr.bf16.mxu0 0
      %3237 = vmatpush1.bf16.msra.mxu0 0
      %3238 = vmatprep.mubr.bf16.mxu0 0
      %3239 = vmatmul.mubr.bf16.gmra.mrb[0].mxu0 %v3159
      %v3240 = vpop.f32.mrb[0].mxu0
      %v3241 = vadd.f32 0.0, %v3240
      %v3242 = vpop.f32.mrb[0].mxu0
      %v3243 = vpop.f32.mrb[0].mxu0
      %v3244 = vadd.f32 0.0, %v3243
      %v3245 = vpop.f32.mrb[0].mxu0
      %3246 = vmatprep.mubr.bf16.mxu0 0
      %3247 = vmatmul.mubr.bf16.gmra.mrb[0].mxu0 %v3162
      %v3248 = vpop.f32.mrb[0].mxu0
      %v3249 = vadd.f32 0.0, %v3248
      %v3250 = vpop.f32.mrb[0].mxu0
      %v3251 = vpop.f32.mrb[0].mxu0
      %v3252 = vadd.f32 0.0, %v3251
      %v3253 = vpop.f32.mrb[0].mxu0
      %3254 = vmatprep.mubr.bf16.mxu0 0
      %3255 = vmatmul.mubr.bf16.gmra.mrb[0].mxu0 %v3165
      %v3256 = vpop.f32.mrb[0].mxu0
      %v3257 = vadd.f32 0.0, %v3256
      %v3258 = vpop.f32.mrb[0].mxu0
      %v3259 = vpop.f32.mrb[0].mxu0
      %v3260 = vadd.f32 0.0, %v3259
      %v3261 = vpop.f32.mrb[0].mxu0
      %3262 = vmatprep.mubr.bf16.mxu0 0
      %3263 = vmatmul.mubr.bf16.gmra.mrb[0].mxu0 %v3168
      %v3264 = vpop.f32.mrb[0].mxu0
      %v3265 = vadd.f32 0.0, %v3264
      %v3266 = vpop.f32.mrb[0].mxu0
      %v3267 = vpop.f32.mrb[0].mxu0
      %v3268 = vadd.f32 0.0, %v3267
      %v3269 = vpop.f32.mrb[0].mxu0
      %3270 = vmatprep.mubr.bf16.mxu0 0
      %3271 = vmatmul.mubr.bf16.gmra.mrb[0].mxu0 %v3171
      %v3272 = vpop.f32.mrb[0].mxu0
      %v3273 = vadd.f32 0.0, %v3272
      %v3274 = vpop.f32.mrb[0].mxu0
      %v3275 = vpop.f32.mrb[0].mxu0
      %v3276 = vadd.f32 0.0, %v3275
      %v3277 = vpop.f32.mrb[0].mxu0
      %3278 = vmatprep.mubr.bf16.mxu0 0
      %3279 = vmatmul.mubr.bf16.gmra.mrb[0].mxu0 %v3174
      %v3280 = vpop.f32.mrb[0].mxu0
      %v3281 = vadd.f32 0.0, %v3280
      %v3282 = vpop.f32.mrb[0].mxu0
      %v3283 = vpop.f32.mrb[0].mxu0
      %v3284 = vadd.f32 0.0, %v3283
      %v3285 = vpop.f32.mrb[0].mxu0
      %3286 = vmatprep.mubr.bf16.mxu0 0
      %3287 = vmatmul.mubr.bf16.gmra.mrb[0].mxu0 %v3177
      %v3288 = vpop.f32.mrb[0].mxu0
      %v3289 = vadd.f32 0.0, %v3288
      %v3290 = vpop.f32.mrb[0].mxu0
      %v3291 = vpop.f32.mrb[0].mxu0
      %v3292 = vadd.f32 0.0, %v3291
      %v3293 = vpop.f32.mrb[0].mxu0
      %3294 = vmatprep.mubr.bf16.mxu0 0
      %3295 = vmatmul.mubr.bf16.gmra.mrb[0].mxu0 %v3180
      %v3296 = vpop.f32.mrb[0].mxu0
      %v3297 = vadd.f32 0.0, %v3296
      %v3298 = vpop.f32.mrb[0].mxu0
      %v3299 = vpop.f32.mrb[0].mxu0
      %v3300 = vadd.f32 0.0, %v3299
      %v3301 = vpop.f32.mrb[0].mxu0
      %3302 = vmatprep.mubr.bf16.mxu0 0
      %3303 = vmatmul.mubr.bf16.gmra.mrb[0].mxu0 %v3183
      %v3304 = vpop.f32.mrb[0].mxu0
      %v3305 = vadd.f32 0.0, %v3304
      %v3306 = vpop.f32.mrb[0].mxu0
      %v3307 = vpop.f32.mrb[0].mxu0
      %v3308 = vadd.f32 0.0, %v3307
      %v3309 = vpop.f32.mrb[0].mxu0
      %3310 = vmatprep.mubr.bf16.mxu0 0
      %3311 = vmatmul.mubr.bf16.gmra.mrb[0].mxu0 %v3186
      %v3312 = vpop.f32.mrb[0].mxu0
      %v3313 = vadd.f32 0.0, %v3312
      %v3314 = vpop.f32.mrb[0].mxu0
      %v3315 = vpop.f32.mrb[0].mxu0
      %v3316 = vadd.f32 0.0, %v3315
      %v3317 = vpop.f32.mrb[0].mxu0
      %3318 = vmatprep.mubr.bf16.mxu0 0
      %3319 = vmatmul.mubr.bf16.gmra.mrb[0].mxu0 %v3189
      %v3320 = vpop.f32.mrb[0].mxu0
      %v3321 = vadd.f32 0.0, %v3320
      %v3322 = vpop.f32.mrb[0].mxu0
      %v3323 = vpop.f32.mrb[0].mxu0
      %v3324 = vadd.f32 0.0, %v3323
      %v3325 = vpop.f32.mrb[0].mxu0
      %3326 = vmatprep.mubr.bf16.mxu0 0
      %3327 = vmatmul.mubr.bf16.gmra.mrb[0].mxu0 %v3192
      %v3328 = vpop.f32.mrb[0].mxu0
      %v3329 = vadd.f32 0.0, %v3328
      %v3330 = vpop.f32.mrb[0].mxu0
      %v3331 = vpop.f32.mrb[0].mxu0
      %v3332 = vadd.f32 0.0, %v3331
      %v3333 = vpop.f32.mrb[0].mxu0
      %3334 = vmatprep.mubr.bf16.mxu0 0
      %3335 = vmatmul.mubr.bf16.gmra.mrb[0].mxu0 %v3195
      %v3336 = vpop.f32.mrb[0].mxu0
      %v3337 = vadd.f32 0.0, %v3336
      %v3338 = vpop.f32.mrb[0].mxu0
      %v3339 = vpop.f32.mrb[0].mxu0
      %v3340 = vadd.f32 0.0, %v3339
      %v3341 = vpop.f32.mrb[0].mxu0
      %3342 = vmatprep.mubr.bf16.mxu0 0
      %3343 = vmatmul.mubr.bf16.gmra.mrb[0].mxu0 %v3198
      %v3344 = vpop.f32.mrb[0].mxu0
      %v3345 = vadd.f32 0.0, %v3344
      %v3346 = vpop.f32.mrb[0].mxu0
      %v3347 = vpop.f32.mrb[0].mxu0
      %v3348 = vadd.f32 0.0, %v3347
      %v3349 = vpop.f32.mrb[0].mxu0
      %3350 = vmatprep.mubr.bf16.mxu0 0
      %3351 = vmatmul.mubr.bf16.gmra.mrb[0].mxu0 %v3201
      %v3352 = vpop.f32.mrb[0].mxu0
      %v3353 = vadd.f32 0.0, %v3352
      %v3354 = vpop.f32.mrb[0].mxu0
      %v3355 = vpop.f32.mrb[0].mxu0
      %v3356 = vadd.f32 0.0, %v3355
      %v3357 = vpop.f32.mrb[0].mxu0
      %3358 = vmatprep.mubr.bf16.mxu0 0
      %3359 = vmatmul.mubr.bf16.gmra.mrb[0].mxu0 %v3204
      %v3360 = vpop.f32.mrb[0].mxu0
      %v3361 = vadd.f32 0.0, %v3360
      %v3362 = vpop.f32.mrb[0].mxu0
      %v3363 = vpop.f32.mrb[0].mxu0
      %v3364 = vadd.f32 0.0, %v3363
      %v3365 = vpop.f32.mrb[0].mxu0
      %3366 = vdwg.mxu0
      %v3367 = vadd.f32 %v2638, %v3241
      %v3368 = vadd.f32 %v2639, %v3244
      %v3369 = vadd.f32 %v2640, %v3249
      %v3370 = vadd.f32 %v2641, %v3252
      %v3371 = vadd.f32 %v2642, %v3257
      %v3372 = vadd.f32 %v2643, %v3260
      %v3373 = vadd.f32 %v2644, %v3265
      %v3374 = vadd.f32 %v2645, %v3268
      %v3375 = vadd.f32 %v2646, %v3273
      %v3376 = vadd.f32 %v2647, %v3276
      %v3377 = vadd.f32 %v2648, %v3281
      %v3378 = vadd.f32 %v2649, %v3284
      %v3379 = vadd.f32 %v2650, %v3289
      %v3380 = vadd.f32 %v2651, %v3292
      %v3381 = vadd.f32 %v2652, %v3297
      %v3382 = vadd.f32 %v2653, %v3300
      %v3383 = vadd.f32 %v2654, %v3305
      %v3384 = vadd.f32 %v2655, %v3308
      %v3385 = vadd.f32 %v2656, %v3313
      %v3386 = vadd.f32 %v2657, %v3316
      %v3387 = vadd.f32 %v2658, %v3321
      %v3388 = vadd.f32 %v2659, %v3324
      %v3389 = vadd.f32 %v2660, %v3329
      %v3390 = vadd.f32 %v2661, %v3332
      %v3391 = vadd.f32 %v2662, %v3337
      %v3392 = vadd.f32 %v2663, %v3340
      %v3393 = vadd.f32 %v2664, %v3345
      %v3394 = vadd.f32 %v2665, %v3348
      %v3395 = vadd.f32 %v2666, %v3353
      %v3396 = vadd.f32 %v2667, %v3356
      %v3397 = vadd.f32 %v2668, %v3361
      %v3398 = vadd.f32 %v2669, %v3364
      %v3399 = vld [vmem:[%s733] sm:$0xe]
      %v3400 = vld [vmem:[%s733 + $0xc] sm:$0xe]
      %v3401 = vld [vmem:[%s733 + $0x18] sm:$0xe]
      %v3402 = vld [vmem:[%s733 + $0x24] sm:$0xe]
      %v3403 = vld [vmem:[%s733 + $0x30] sm:$0xe]
      %v3404 = vld [vmem:[%s733 + $0x3c] sm:$0xe]
      %v3405 = vld [vmem:[%s733 + $0x48] sm:$0xe]
      %v3406 = vld [vmem:[%s733 + $0x54] sm:$0xe]
      %v3407 = vld [vmem:[%s733 + $0x60] sm:$0xe]
      %v3408 = vld [vmem:[%s733 + $0x6c] sm:$0xe]
      %v3409 = vld [vmem:[%s733 + $0x78] sm:$0xe]
      %v3410 = vld [vmem:[%s733 + $0x84] sm:$0xe]
      %v3411 = vld [vmem:[%s733 + $0x90] sm:$0xe]
      %v3412 = vld [vmem:[%s733 + $0x9c] sm:$0xe]
      %v3413 = vld [vmem:[%s733 + $0xa8] sm:$0xe]
      %v3414 = vld [vmem:[%s733 + $0xb4] sm:$0xe]
      %v3463 = vrot.slane %v3399, 5
      %v3464 = vrot.slane %v3463, 4
      %v3465 = vrot.slane %v2671, 5
      %v3466 = vsel %vm1899, %v3464, %v3465
      %v3467 = vrot.slane %v3465, 4
      %v3468 = vrot.slane %v2672, 5
      %v3469 = vsel %vm1899, %v3467, %v3468
      %v3470 = vrot.slane %v3400, 5
      %v3471 = vrot.slane %v3470, 4
      %v3472 = vrot.slane %v2674, 5
      %v3473 = vsel %vm1899, %v3471, %v3472
      %v3474 = vrot.slane %v3472, 4
      %v3475 = vrot.slane %v2675, 5
      %v3476 = vsel %vm1899, %v3474, %v3475
      %v3477 = vrot.slane %v3401, 5
      %v3478 = vrot.slane %v3477, 4
      %v3479 = vrot.slane %v2677, 5
      %v3480 = vsel %vm1899, %v3478, %v3479
      %v3481 = vrot.slane %v3479, 4
      %v3482 = vrot.slane %v2678, 5
      %v3483 = vsel %vm1899, %v3481, %v3482
      %v3484 = vrot.slane %v3402, 5
      %v3485 = vrot.slane %v3484, 4
      %v3486 = vrot.slane %v2680, 5
      %v3487 = vsel %vm1899, %v3485, %v3486
      %v3488 = vrot.slane %v3486, 4
      %v3489 = vrot.slane %v2681, 5
      %v3490 = vsel %vm1899, %v3488, %v3489
      %v3491 = vrot.slane %v3403, 5
      %v3492 = vrot.slane %v3491, 4
      %v3493 = vrot.slane %v2683, 5
      %v3494 = vsel %vm1899, %v3492, %v3493
      %v3495 = vrot.slane %v3493, 4
      %v3496 = vrot.slane %v2684, 5
      %v3497 = vsel %vm1899, %v3495, %v3496
      %v3498 = vrot.slane %v3404, 5
      %v3499 = vrot.slane %v3498, 4
      %v3500 = vrot.slane %v2686, 5
      %v3501 = vsel %vm1899, %v3499, %v3500
      %v3502 = vrot.slane %v3500, 4
      %v3503 = vrot.slane %v2687, 5
      %v3504 = vsel %vm1899, %v3502, %v3503
      %v3505 = vrot.slane %v3405, 5
      %v3506 = vrot.slane %v3505, 4
      %v3507 = vrot.slane %v2689, 5
      %v3508 = vsel %vm1899, %v3506, %v3507
      %v3509 = vrot.slane %v3507, 4
      %v3510 = vrot.slane %v2690, 5
      %v3511 = vsel %vm1899, %v3509, %v3510
      %v3512 = vrot.slane %v3406, 5
      %v3513 = vrot.slane %v3512, 4
      %v3514 = vrot.slane %v2692, 5
      %v3515 = vsel %vm1899, %v3513, %v3514
      %v3516 = vrot.slane %v3514, 4
      %v3517 = vrot.slane %v2693, 5
      %v3518 = vsel %vm1899, %v3516, %v3517
      %v3519 = vrot.slane %v3407, 5
      %v3520 = vrot.slane %v3519, 4
      %v3521 = vrot.slane %v2695, 5
      %v3522 = vsel %vm1899, %v3520, %v3521
      %v3523 = vrot.slane %v3521, 4
      %v3524 = vrot.slane %v2696, 5
      %v3525 = vsel %vm1899, %v3523, %v3524
      %v3526 = vrot.slane %v3408, 5
      %v3527 = vrot.slane %v3526, 4
      %v3528 = vrot.slane %v2698, 5
      %v3529 = vsel %vm1899, %v3527, %v3528
      %v3530 = vrot.slane %v3528, 4
      %v3531 = vrot.slane %v2699, 5
      %v3532 = vsel %vm1899, %v3530, %v3531
      %v3533 = vrot.slane %v3409, 5
      %v3534 = vrot.slane %v3533, 4
      %v3535 = vrot.slane %v2701, 5
      %v3536 = vsel %vm1899, %v3534, %v3535
      %v3537 = vrot.slane %v3535, 4
      %v3538 = vrot.slane %v2702, 5
      %v3539 = vsel %vm1899, %v3537, %v3538
      %v3540 = vrot.slane %v3410, 5
      %v3541 = vrot.slane %v3540, 4
      %v3542 = vrot.slane %v2704, 5
      %v3543 = vsel %vm1899, %v3541, %v3542
      %v3544 = vrot.slane %v3542, 4
      %v3545 = vrot.slane %v2705, 5
      %v3546 = vsel %vm1899, %v3544, %v3545
      %v3547 = vrot.slane %v3411, 5
      %v3548 = vrot.slane %v3547, 4
      %v3549 = vrot.slane %v2707, 5
      %v3550 = vsel %vm1899, %v3548, %v3549
      %v3551 = vrot.slane %v3549, 4
      %v3552 = vrot.slane %v2708, 5
      %v3553 = vsel %vm1899, %v3551, %v3552
      %v3554 = vrot.slane %v3412, 5
      %v3555 = vrot.slane %v3554, 4
      %v3556 = vrot.slane %v2710, 5
      %v3557 = vsel %vm1899, %v3555, %v3556
      %v3558 = vrot.slane %v3556, 4
      %v3559 = vrot.slane %v2711, 5
      %v3560 = vsel %vm1899, %v3558, %v3559
      %v3561 = vrot.slane %v3413, 5
      %v3562 = vrot.slane %v3561, 4
      %v3563 = vrot.slane %v2713, 5
      %v3564 = vsel %vm1899, %v3562, %v3563
      %v3565 = vrot.slane %v3563, 4
      %v3566 = vrot.slane %v2714, 5
      %v3567 = vsel %vm1899, %v3565, %v3566
      %v3568 = vrot.slane %v3414, 5
      %v3569 = vrot.slane %v3568, 4
      %v3570 = vrot.slane %v2716, 5
      %v3571 = vsel %vm1899, %v3569, %v3570
      %v3572 = vrot.slane %v3570, 4
      %v3573 = vrot.slane %v2717, 5
      %v3574 = vsel %vm1899, %v3572, %v3573
      %v3575 = vld [vmem:[%s1 + $0x28] sm:$0xf]
      %v3576 = vld [vmem:[%s1 + $0x2c] sm:$0xf]
      %v3577 = vunpack.c.l.b16 %v3466
      %v3578 = vunpack.c.l.b16 %v3469
      %v3579 = vunpack.c.l.b16 %v3473
      %v3580 = vunpack.c.l.b16 %v3476
      %v3581 = vunpack.c.l.b16 %v3480
      %v3582 = vunpack.c.l.b16 %v3483
      %v3583 = vunpack.c.l.b16 %v3487
      %v3584 = vunpack.c.l.b16 %v3490
      %v3585 = vunpack.c.l.b16 %v3494
      %v3586 = vunpack.c.l.b16 %v3497
      %v3587 = vunpack.c.l.b16 %v3501
      %v3588 = vunpack.c.l.b16 %v3504
      %v3589 = vunpack.c.l.b16 %v3508
      %v3590 = vunpack.c.l.b16 %v3511
      %v3591 = vunpack.c.l.b16 %v3515
      %v3592 = vunpack.c.l.b16 %v3518
      %v3593 = vunpack.c.l.b16 %v3522
      %v3594 = vunpack.c.l.b16 %v3525
      %v3595 = vunpack.c.l.b16 %v3529
      %v3596 = vunpack.c.l.b16 %v3532
      %v3597 = vunpack.c.l.b16 %v3536
      %v3598 = vunpack.c.l.b16 %v3539
      %v3599 = vunpack.c.l.b16 %v3543
      %v3600 = vunpack.c.l.b16 %v3546
      %v3601 = vunpack.c.l.b16 %v3550
      %v3602 = vunpack.c.l.b16 %v3553
      %v3603 = vunpack.c.l.b16 %v3557
      %v3604 = vunpack.c.l.b16 %v3560
      %v3605 = vunpack.c.l.b16 %v3564
      %v3606 = vunpack.c.l.b16 %v3567
      %v3607 = vunpack.c.l.b16 %v3571
      %v3608 = vunpack.c.l.b16 %v3574
      %v3609 = vpack.c.b16 %v3578, %v3577
      %v3610 = vpack.c.b16 %v3580, %v3579
      %v3611 = vpack.c.b16 %v3582, %v3581
      %v3612 = vpack.c.b16 %v3584, %v3583
      %v3613 = vpack.c.b16 %v3586, %v3585
      %v3614 = vpack.c.b16 %v3588, %v3587
      %v3615 = vpack.c.b16 %v3590, %v3589
      %v3616 = vpack.c.b16 %v3592, %v3591
      %v3617 = vpack.c.b16 %v3594, %v3593
      %v3618 = vpack.c.b16 %v3596, %v3595
      %v3619 = vpack.c.b16 %v3598, %v3597
      %v3620 = vpack.c.b16 %v3600, %v3599
      %v3621 = vpack.c.b16 %v3602, %v3601
      %v3622 = vpack.c.b16 %v3604, %v3603
      %v3623 = vpack.c.b16 %v3606, %v3605
      %v3624 = vpack.c.b16 %v3608, %v3607
      %v3627 = vunpack.c.l.b16 %v3575
      %v3628 = vunpack.c.l.b16 %v3576
      %v3629 = vpack.c.b16 %v3628, %v3627
      %v3632 = vsel %vm1344, %v3609, 0
      %v3635 = vsel %vm1344, %v3610, 0
      %v3638 = vsel %vm1344, %v3611, 0
      %v3641 = vsel %vm1344, %v3612, 0
      %v3644 = vsel %vm1344, %v3613, 0
      %v3647 = vsel %vm1344, %v3614, 0
      %v3650 = vsel %vm1344, %v3615, 0
      %v3653 = vsel %vm1344, %v3616, 0
      %v3656 = vsel %vm1344, %v3617, 0
      %v3659 = vsel %vm1344, %v3618, 0
      %v3662 = vsel %vm1344, %v3619, 0
      %v3665 = vsel %vm1344, %v3620, 0
      %v3668 = vsel %vm1344, %v3621, 0
      %v3671 = vsel %vm1344, %v3622, 0
      %v3674 = vsel %vm1344, %v3623, 0
      %v3677 = vsel %vm1344, %v3624, 0
      %3679 = vmatprep.subr.bf16.mxu0 0
      %3680 = vmatpush1.bf16.msra.mxu0 %v3629
      %3681 = vmatprep.subr.bf16.mxu0 0
      %3682 = vmatpush1.bf16.msra.mxu0 0
      %3683 = vmatprep.subr.bf16.mxu0 0
      %3684 = vmatpush1.bf16.msra.mxu0 0
      %3685 = vmatprep.subr.bf16.mxu0 0
      %3686 = vmatpush1.bf16.msra.mxu0 0
      %3687 = vmatprep.subr.bf16.mxu0 0
      %3688 = vmatpush1.bf16.msra.mxu0 0
      %3689 = vmatprep.subr.bf16.mxu0 0
      %3690 = vmatpush1.bf16.msra.mxu0 0
      %3691 = vmatprep.subr.bf16.mxu0 0
      %3692 = vmatpush1.bf16.msra.mxu0 0
      %3693 = vmatprep.subr.bf16.mxu0 0
      %3694 = vmatpush1.bf16.msra.mxu0 0
      %3695 = vmatprep.subr.bf16.mxu0 0
      %3696 = vmatpush1.bf16.msra.mxu0 0
      %3697 = vmatprep.subr.bf16.mxu0 0
      %3698 = vmatpush1.bf16.msra.mxu0 0
      %3699 = vmatprep.subr.bf16.mxu0 0
      %3700 = vmatpush1.bf16.msra.mxu0 0
      %3701 = vmatprep.subr.bf16.mxu0 0
      %3702 = vmatpush1.bf16.msra.mxu0 0
      %3703 = vmatprep.subr.bf16.mxu0 0
      %3704 = vmatpush1.bf16.msra.mxu0 0
      %3705 = vmatprep.subr.bf16.mxu0 0
      %3706 = vmatpush1.bf16.msra.mxu0 0
      %3707 = vmatprep.subr.bf16.mxu0 0
      %3708 = vmatpush1.bf16.msra.mxu0 0
      %3709 = vmatprep.subr.bf16.mxu0 0
      %3710 = vmatpush1.bf16.msra.mxu0 0
      %3711 = vmatprep.mubr.bf16.mxu0 0
      %3712 = vmatmul.mubr.bf16.gmra.mrb[0].mxu0 %v3632
      %v3713 = vpop.f32.mrb[0].mxu0
      %v3714 = vadd.f32 0.0, %v3713
      %v3715 = vpop.f32.mrb[0].mxu0
      %v3716 = vpop.f32.mrb[0].mxu0
      %v3717 = vadd.f32 0.0, %v3716
      %v3718 = vpop.f32.mrb[0].mxu0
      %3719 = vmatprep.mubr.bf16.mxu0 0
      %3720 = vmatmul.mubr.bf16.gmra.mrb[0].mxu0 %v3635
      %v3721 = vpop.f32.mrb[0].mxu0
      %v3722 = vadd.f32 0.0, %v3721
      %v3723 = vpop.f32.mrb[0].mxu0
      %v3724 = vpop.f32.mrb[0].mxu0
      %v3725 = vadd.f32 0.0, %v3724
      %v3726 = vpop.f32.mrb[0].mxu0
      %3727 = vmatprep.mubr.bf16.mxu0 0
      %3728 = vmatmul.mubr.bf16.gmra.mrb[0].mxu0 %v3638
      %v3729 = vpop.f32.mrb[0].mxu0
      %v3730 = vadd.f32 0.0, %v3729
      %v3731 = vpop.f32.mrb[0].mxu0
      %v3732 = vpop.f32.mrb[0].mxu0
      %v3733 = vadd.f32 0.0, %v3732
      %v3734 = vpop.f32.mrb[0].mxu0
      %3735 = vmatprep.mubr.bf16.mxu0 0
      %3736 = vmatmul.mubr.bf16.gmra.mrb[0].mxu0 %v3641
      %v3737 = vpop.f32.mrb[0].mxu0
      %v3738 = vadd.f32 0.0, %v3737
      %v3739 = vpop.f32.mrb[0].mxu0
      %v3740 = vpop.f32.mrb[0].mxu0
      %v3741 = vadd.f32 0.0, %v3740
      %v3742 = vpop.f32.mrb[0].mxu0
      %3743 = vmatprep.mubr.bf16.mxu0 0
      %3744 = vmatmul.mubr.bf16.gmra.mrb[0].mxu0 %v3644
      %v3745 = vpop.f32.mrb[0].mxu0
      %v3746 = vadd.f32 0.0, %v3745
      %v3747 = vpop.f32.mrb[0].mxu0
      %v3748 = vpop.f32.mrb[0].mxu0
      %v3749 = vadd.f32 0.0, %v3748
      %v3750 = vpop.f32.mrb[0].mxu0
      %3751 = vmatprep.mubr.bf16.mxu0 0
      %3752 = vmatmul.mubr.bf16.gmra.mrb[0].mxu0 %v3647
      %v3753 = vpop.f32.mrb[0].mxu0
      %v3754 = vadd.f32 0.0, %v3753
      %v3755 = vpop.f32.mrb[0].mxu0
      %v3756 = vpop.f32.mrb[0].mxu0
      %v3757 = vadd.f32 0.0, %v3756
      %v3758 = vpop.f32.mrb[0].mxu0
      %3759 = vmatprep.mubr.bf16.mxu0 0
      %3760 = vmatmul.mubr.bf16.gmra.mrb[0].mxu0 %v3650
      %v3761 = vpop.f32.mrb[0].mxu0
      %v3762 = vadd.f32 0.0, %v3761
      %v3763 = vpop.f32.mrb[0].mxu0
      %v3764 = vpop.f32.mrb[0].mxu0
      %v3765 = vadd.f32 0.0, %v3764
      %v3766 = vpop.f32.mrb[0].mxu0
      %3767 = vmatprep.mubr.bf16.mxu0 0
      %3768 = vmatmul.mubr.bf16.gmra.mrb[0].mxu0 %v3653
      %v3769 = vpop.f32.mrb[0].mxu0
      %v3770 = vadd.f32 0.0, %v3769
      %v3771 = vpop.f32.mrb[0].mxu0
      %v3772 = vpop.f32.mrb[0].mxu0
      %v3773 = vadd.f32 0.0, %v3772
      %v3774 = vpop.f32.mrb[0].mxu0
      %3775 = vmatprep.mubr.bf16.mxu0 0
      %3776 = vmatmul.mubr.bf16.gmra.mrb[0].mxu0 %v3656
      %v3777 = vpop.f32.mrb[0].mxu0
      %v3778 = vadd.f32 0.0, %v3777
      %v3779 = vpop.f32.mrb[0].mxu0
      %v3780 = vpop.f32.mrb[0].mxu0
      %v3781 = vadd.f32 0.0, %v3780
      %v3782 = vpop.f32.mrb[0].mxu0
      %3783 = vmatprep.mubr.bf16.mxu0 0
      %3784 = vmatmul.mubr.bf16.gmra.mrb[0].mxu0 %v3659
      %v3785 = vpop.f32.mrb[0].mxu0
      %v3786 = vadd.f32 0.0, %v3785
      %v3787 = vpop.f32.mrb[0].mxu0
      %v3788 = vpop.f32.mrb[0].mxu0
      %v3789 = vadd.f32 0.0, %v3788
      %v3790 = vpop.f32.mrb[0].mxu0
      %3791 = vmatprep.mubr.bf16.mxu0 0
      %3792 = vmatmul.mubr.bf16.gmra.mrb[0].mxu0 %v3662
      %v3793 = vpop.f32.mrb[0].mxu0
      %v3794 = vadd.f32 0.0, %v3793
      %v3795 = vpop.f32.mrb[0].mxu0
      %v3796 = vpop.f32.mrb[0].mxu0
      %v3797 = vadd.f32 0.0, %v3796
      %v3798 = vpop.f32.mrb[0].mxu0
      %3799 = vmatprep.mubr.bf16.mxu0 0
      %3800 = vmatmul.mubr.bf16.gmra.mrb[0].mxu0 %v3665
      %v3801 = vpop.f32.mrb[0].mxu0
      %v3802 = vadd.f32 0.0, %v3801
      %v3803 = vpop.f32.mrb[0].mxu0
      %v3804 = vpop.f32.mrb[0].mxu0
      %v3805 = vadd.f32 0.0, %v3804
      %v3806 = vpop.f32.mrb[0].mxu0
      %3807 = vmatprep.mubr.bf16.mxu0 0
      %3808 = vmatmul.mubr.bf16.gmra.mrb[0].mxu0 %v3668
      %v3809 = vpop.f32.mrb[0].mxu0
      %v3810 = vadd.f32 0.0, %v3809
      %v3811 = vpop.f32.mrb[0].mxu0
      %v3812 = vpop.f32.mrb[0].mxu0
      %v3813 = vadd.f32 0.0, %v3812
      %v3814 = vpop.f32.mrb[0].mxu0
      %3815 = vmatprep.mubr.bf16.mxu0 0
      %3816 = vmatmul.mubr.bf16.gmra.mrb[0].mxu0 %v3671
      %v3817 = vpop.f32.mrb[0].mxu0
      %v3818 = vadd.f32 0.0, %v3817
      %v3819 = vpop.f32.mrb[0].mxu0
      %v3820 = vpop.f32.mrb[0].mxu0
      %v3821 = vadd.f32 0.0, %v3820
      %v3822 = vpop.f32.mrb[0].mxu0
      %3823 = vmatprep.mubr.bf16.mxu0 0
      %3824 = vmatmul.mubr.bf16.gmra.mrb[0].mxu0 %v3674
      %v3825 = vpop.f32.mrb[0].mxu0
      %v3826 = vadd.f32 0.0, %v3825
      %v3827 = vpop.f32.mrb[0].mxu0
      %v3828 = vpop.f32.mrb[0].mxu0
      %v3829 = vadd.f32 0.0, %v3828
      %v3830 = vpop.f32.mrb[0].mxu0
      %3831 = vmatprep.mubr.bf16.mxu0 0
      %3832 = vmatmul.mubr.bf16.gmra.mrb[0].mxu0 %v3677
      %v3833 = vpop.f32.mrb[0].mxu0
      %v3834 = vadd.f32 0.0, %v3833
      %v3835 = vpop.f32.mrb[0].mxu0
      %v3836 = vpop.f32.mrb[0].mxu0
      %v3837 = vadd.f32 0.0, %v3836
      %v3838 = vpop.f32.mrb[0].mxu0
      %3839 = vdwg.mxu0
      %v3840 = vadd.f32 %v3367, %v3714
      %v3841 = vadd.f32 %v3368, %v3717
      %v3842 = vadd.f32 %v3369, %v3722
      %v3843 = vadd.f32 %v3370, %v3725
      %v3844 = vadd.f32 %v3371, %v3730
      %v3845 = vadd.f32 %v3372, %v3733
      %v3846 = vadd.f32 %v3373, %v3738
      %v3847 = vadd.f32 %v3374, %v3741
      %v3848 = vadd.f32 %v3375, %v3746
      %v3849 = vadd.f32 %v3376, %v3749
      %v3850 = vadd.f32 %v3377, %v3754
      %v3851 = vadd.f32 %v3378, %v3757
      %v3852 = vadd.f32 %v3379, %v3762
      %v3853 = vadd.f32 %v3380, %v3765
      %v3854 = vadd.f32 %v3381, %v3770
      %v3855 = vadd.f32 %v3382, %v3773
      %v3856 = vadd.f32 %v3383, %v3778
      %v3857 = vadd.f32 %v3384, %v3781
      %v3858 = vadd.f32 %v3385, %v3786
      %v3859 = vadd.f32 %v3386, %v3789
      %v3860 = vadd.f32 %v3387, %v3794
      %v3861 = vadd.f32 %v3388, %v3797
      %v3862 = vadd.f32 %v3389, %v3802
      %v3863 = vadd.f32 %v3390, %v3805
      %v3864 = vadd.f32 %v3391, %v3810
      %v3865 = vadd.f32 %v3392, %v3813
      %v3866 = vadd.f32 %v3393, %v3818
      %v3867 = vadd.f32 %v3394, %v3821
      %v3868 = vadd.f32 %v3395, %v3826
      %v3869 = vadd.f32 %v3396, %v3829
      %v3870 = vadd.f32 %v3397, %v3834
      %v3871 = vadd.f32 %v3398, %v3837
      %s3872 = scalar_lea.vmem [#allocation2], 24
      %v3873 = vld [vmem:[%s3872] sm:$0xf]
      %v3874 = vld [vmem:[%s3872 + $0x4] sm:$0xf]
      %v3875 = vld [vmem:[%s3872 + $0xc] sm:$0xf]
      %v3876 = vld [vmem:[%s3872 + $0x10] sm:$0xf]
      %v3877 = vld [vmem:[%s3872 + $0x18] sm:$0xf]
      %v3878 = vld [vmem:[%s3872 + $0x1c] sm:$0xf]
      %v3879 = vld [vmem:[%s3872 + $0x24] sm:$0xf]
      %v3880 = vld [vmem:[%s3872 + $0x28] sm:$0xf]
      %v3881 = vld [vmem:[%s3872 + $0x30] sm:$0xf]
      %v3882 = vld [vmem:[%s3872 + $0x34] sm:$0xf]
      %v3883 = vld [vmem:[%s3872 + $0x3c] sm:$0xf]
      %v3884 = vld [vmem:[%s3872 + $0x40] sm:$0xf]
      %v3885 = vld [vmem:[%s3872 + $0x48] sm:$0xf]
      %v3886 = vld [vmem:[%s3872 + $0x4c] sm:$0xf]
      %v3887 = vld [vmem:[%s3872 + $0x54] sm:$0xf]
      %v3888 = vld [vmem:[%s3872 + $0x58] sm:$0xf]
      %v3889 = vld [vmem:[%s3872 + $0x60] sm:$0xf]
      %v3890 = vld [vmem:[%s3872 + $0x64] sm:$0xf]
      %v3891 = vld [vmem:[%s3872 + $0x6c] sm:$0xf]
      %v3892 = vld [vmem:[%s3872 + $0x70] sm:$0xf]
      %v3893 = vld [vmem:[%s3872 + $0x78] sm:$0xf]
      %v3894 = vld [vmem:[%s3872 + $0x7c] sm:$0xf]
      %v3895 = vld [vmem:[%s3872 + $0x84] sm:$0xf]
      %v3896 = vld [vmem:[%s3872 + $0x88] sm:$0xf]
      %v3897 = vld [vmem:[%s3872 + $0x90] sm:$0xf]
      %v3898 = vld [vmem:[%s3872 + $0x94] sm:$0xf]
      %v3899 = vld [vmem:[%s3872 + $0x9c] sm:$0xf]
      %v3900 = vld [vmem:[%s3872 + $0xa0] sm:$0xf]
      %v3901 = vld [vmem:[%s3872 + $0xa8] sm:$0xf]
      %v3902 = vld [vmem:[%s3872 + $0xac] sm:$0xf]
      %v3903 = vld [vmem:[%s3872 + $0xb4] sm:$0xf]
      %v3904 = vld [vmem:[%s3872 + $0xb8] sm:$0xf]
      %v3905 = vld [vmem:[%s1 + $0x30] sm:$0xf]
      %v3906 = vld [vmem:[%s1 + $0x34] sm:$0xf]
      %v3939 = vunpack.c.l.b16 %v3873
      %v3940 = vunpack.c.l.b16 %v3874
      %v3941 = vunpack.c.l.b16 %v3875
      %v3942 = vunpack.c.l.b16 %v3876
      %v3943 = vunpack.c.l.b16 %v3877
      %v3944 = vunpack.c.l.b16 %v3878
      %v3945 = vunpack.c.l.b16 %v3879
      %v3946 = vunpack.c.l.b16 %v3880
      %v3947 = vunpack.c.l.b16 %v3881
      %v3948 = vunpack.c.l.b16 %v3882
      %v3949 = vunpack.c.l.b16 %v3883
      %v3950 = vunpack.c.l.b16 %v3884
      %v3951 = vunpack.c.l.b16 %v3885
      %v3952 = vunpack.c.l.b16 %v3886
      %v3953 = vunpack.c.l.b16 %v3887
      %v3954 = vunpack.c.l.b16 %v3888
      %v3955 = vunpack.c.l.b16 %v3889
      %v3956 = vunpack.c.l.b16 %v3890
      %v3957 = vunpack.c.l.b16 %v3891
      %v3958 = vunpack.c.l.b16 %v3892
      %v3959 = vunpack.c.l.b16 %v3893
      %v3960 = vunpack.c.l.b16 %v3894
      %v3961 = vunpack.c.l.b16 %v3895
      %v3962 = vunpack.c.l.b16 %v3896
      %v3963 = vunpack.c.l.b16 %v3897
      %v3964 = vunpack.c.l.b16 %v3898
      %v3965 = vunpack.c.l.b16 %v3899
      %v3966 = vunpack.c.l.b16 %v3900
      %v3967 = vunpack.c.l.b16 %v3901
      %v3968 = vunpack.c.l.b16 %v3902
      %v3969 = vunpack.c.l.b16 %v3903
      %v3970 = vunpack.c.l.b16 %v3904
      %v3971 = vpack.c.b16 %v3940, %v3939
      %v3972 = vpack.c.b16 %v3942, %v3941
      %v3973 = vpack.c.b16 %v3944, %v3943
      %v3974 = vpack.c.b16 %v3946, %v3945
      %v3975 = vpack.c.b16 %v3948, %v3947
      %v3976 = vpack.c.b16 %v3950, %v3949
      %v3977 = vpack.c.b16 %v3952, %v3951
      %v3978 = vpack.c.b16 %v3954, %v3953
      %v3979 = vpack.c.b16 %v3956, %v3955
      %v3980 = vpack.c.b16 %v3958, %v3957
      %v3981 = vpack.c.b16 %v3960, %v3959
      %v3982 = vpack.c.b16 %v3962, %v3961
      %v3983 = vpack.c.b16 %v3964, %v3963
      %v3984 = vpack.c.b16 %v3966, %v3965
      %v3985 = vpack.c.b16 %v3968, %v3967
      %v3986 = vpack.c.b16 %v3970, %v3969
      %v3989 = vunpack.c.l.b16 %v3905
      %v3990 = vunpack.c.l.b16 %v3906
      %v3991 = vpack.c.b16 %v3990, %v3989
      %v3994 = vsel %vm1344, %v3971, 0
      %v3997 = vsel %vm1344, %v3972, 0
      %v4000 = vsel %vm1344, %v3973, 0
      %v4003 = vsel %vm1344, %v3974, 0
      %v4006 = vsel %vm1344, %v3975, 0
      %v4009 = vsel %vm1344, %v3976, 0
      %v4012 = vsel %vm1344, %v3977, 0
      %v4015 = vsel %vm1344, %v3978, 0
      %v4018 = vsel %vm1344, %v3979, 0
      %v4021 = vsel %vm1344, %v3980, 0
      %v4024 = vsel %vm1344, %v3981, 0
      %v4027 = vsel %vm1344, %v3982, 0
      %v4030 = vsel %vm1344, %v3983, 0
      %v4033 = vsel %vm1344, %v3984, 0
      %v4036 = vsel %vm1344, %v3985, 0
      %v4039 = vsel %vm1344, %v3986, 0
      %4041 = vmatprep.subr.bf16.mxu0 0
      %4042 = vmatpush1.bf16.msra.mxu0 %v3991
      %4043 = vmatprep.subr.bf16.mxu0 0
      %4044 = vmatpush1.bf16.msra.mxu0 0
      %4045 = vmatprep.subr.bf16.mxu0 0
      %4046 = vmatpush1.bf16.msra.mxu0 0
      %4047 = vmatprep.subr.bf16.mxu0 0
      %4048 = vmatpush1.bf16.msra.mxu0 0
      %4049 = vmatprep.subr.bf16.mxu0 0
      %4050 = vmatpush1.bf16.msra.mxu0 0
      %4051 = vmatprep.subr.bf16.mxu0 0
      %4052 = vmatpush1.bf16.msra.mxu0 0
      %4053 = vmatprep.subr.bf16.mxu0 0
      %4054 = vmatpush1.bf16.msra.mxu0 0
      %4055 = vmatprep.subr.bf16.mxu0 0
      %4056 = vmatpush1.bf16.msra.mxu0 0
      %4057 = vmatprep.subr.bf16.mxu0 0
      %4058 = vmatpush1.bf16.msra.mxu0 0
      %4059 = vmatprep.subr.bf16.mxu0 0
      %4060 = vmatpush1.bf16.msra.mxu0 0
      %4061 = vmatprep.subr.bf16.mxu0 0
      %4062 = vmatpush1.bf16.msra.mxu0 0
      %4063 = vmatprep.subr.bf16.mxu0 0
      %4064 = vmatpush1.bf16.msra.mxu0 0
      %4065 = vmatprep.subr.bf16.mxu0 0
      %4066 = vmatpush1.bf16.msra.mxu0 0
      %4067 = vmatprep.subr.bf16.mxu0 0
      %4068 = vmatpush1.bf16.msra.mxu0 0
      %4069 = vmatprep.subr.bf16.mxu0 0
      %4070 = vmatpush1.bf16.msra.mxu0 0
      %4071 = vmatprep.subr.bf16.mxu0 0
      %4072 = vmatpush1.bf16.msra.mxu0 0
      %4073 = vmatprep.mubr.bf16.mxu0 0
      %4074 = vmatmul.mubr.bf16.gmra.mrb[0].mxu0 %v3994
      %v4075 = vpop.f32.mrb[0].mxu0
      %v4076 = vadd.f32 0.0, %v4075
      %v4077 = vpop.f32.mrb[0].mxu0
      %v4078 = vpop.f32.mrb[0].mxu0
      %v4079 = vadd.f32 0.0, %v4078
      %v4080 = vpop.f32.mrb[0].mxu0
      %4081 = vmatprep.mubr.bf16.mxu0 0
      %4082 = vmatmul.mubr.bf16.gmra.mrb[0].mxu0 %v3997
      %v4083 = vpop.f32.mrb[0].mxu0
      %v4084 = vadd.f32 0.0, %v4083
      %v4085 = vpop.f32.mrb[0].mxu0
      %v4086 = vpop.f32.mrb[0].mxu0
      %v4087 = vadd.f32 0.0, %v4086
      %v4088 = vpop.f32.mrb[0].mxu0
      %4089 = vmatprep.mubr.bf16.mxu0 0
      %4090 = vmatmul.mubr.bf16.gmra.mrb[0].mxu0 %v4000
      %v4091 = vpop.f32.mrb[0].mxu0
      %v4092 = vadd.f32 0.0, %v4091
      %v4093 = vpop.f32.mrb[0].mxu0
      %v4094 = vpop.f32.mrb[0].mxu0
      %v4095 = vadd.f32 0.0, %v4094
      %v4096 = vpop.f32.mrb[0].mxu0
      %4097 = vmatprep.mubr.bf16.mxu0 0
      %4098 = vmatmul.mubr.bf16.gmra.mrb[0].mxu0 %v4003
      %v4099 = vpop.f32.mrb[0].mxu0
      %v4100 = vadd.f32 0.0, %v4099
      %v4101 = vpop.f32.mrb[0].mxu0
      %v4102 = vpop.f32.mrb[0].mxu0
      %v4103 = vadd.f32 0.0, %v4102
      %v4104 = vpop.f32.mrb[0].mxu0
      %4105 = vmatprep.mubr.bf16.mxu0 0
      %4106 = vmatmul.mubr.bf16.gmra.mrb[0].mxu0 %v4006
      %v4107 = vpop.f32.mrb[0].mxu0
      %v4108 = vadd.f32 0.0, %v4107
      %v4109 = vpop.f32.mrb[0].mxu0
      %v4110 = vpop.f32.mrb[0].mxu0
      %v4111 = vadd.f32 0.0, %v4110
      %v4112 = vpop.f32.mrb[0].mxu0
      %4113 = vmatprep.mubr.bf16.mxu0 0
      %4114 = vmatmul.mubr.bf16.gmra.mrb[0].mxu0 %v4009
      %v4115 = vpop.f32.mrb[0].mxu0
      %v4116 = vadd.f32 0.0, %v4115
      %v4117 = vpop.f32.mrb[0].mxu0
      %v4118 = vpop.f32.mrb[0].mxu0
      %v4119 = vadd.f32 0.0, %v4118
      %v4120 = vpop.f32.mrb[0].mxu0
      %4121 = vmatprep.mubr.bf16.mxu0 0
      %4122 = vmatmul.mubr.bf16.gmra.mrb[0].mxu0 %v4012
      %v4123 = vpop.f32.mrb[0].mxu0
      %v4124 = vadd.f32 0.0, %v4123
      %v4125 = vpop.f32.mrb[0].mxu0
      %v4126 = vpop.f32.mrb[0].mxu0
      %v4127 = vadd.f32 0.0, %v4126
      %v4128 = vpop.f32.mrb[0].mxu0
      %4129 = vmatprep.mubr.bf16.mxu0 0
      %4130 = vmatmul.mubr.bf16.gmra.mrb[0].mxu0 %v4015
      %v4131 = vpop.f32.mrb[0].mxu0
      %v4132 = vadd.f32 0.0, %v4131
      %v4133 = vpop.f32.mrb[0].mxu0
      %v4134 = vpop.f32.mrb[0].mxu0
      %v4135 = vadd.f32 0.0, %v4134
      %v4136 = vpop.f32.mrb[0].mxu0
      %4137 = vmatprep.mubr.bf16.mxu0 0
      %4138 = vmatmul.mubr.bf16.gmra.mrb[0].mxu0 %v4018
      %v4139 = vpop.f32.mrb[0].mxu0
      %v4140 = vadd.f32 0.0, %v4139
      %v4141 = vpop.f32.mrb[0].mxu0
      %v4142 = vpop.f32.mrb[0].mxu0
      %v4143 = vadd.f32 0.0, %v4142
      %v4144 = vpop.f32.mrb[0].mxu0
      %4145 = vmatprep.mubr.bf16.mxu0 0
      %4146 = vmatmul.mubr.bf16.gmra.mrb[0].mxu0 %v4021
      %v4147 = vpop.f32.mrb[0].mxu0
      %v4148 = vadd.f32 0.0, %v4147
      %v4149 = vpop.f32.mrb[0].mxu0
      %v4150 = vpop.f32.mrb[0].mxu0
      %v4151 = vadd.f32 0.0, %v4150
      %v4152 = vpop.f32.mrb[0].mxu0
      %4153 = vmatprep.mubr.bf16.mxu0 0
      %4154 = vmatmul.mubr.bf16.gmra.mrb[0].mxu0 %v4024
      %v4155 = vpop.f32.mrb[0].mxu0
      %v4156 = vadd.f32 0.0, %v4155
      %v4157 = vpop.f32.mrb[0].mxu0
      %v4158 = vpop.f32.mrb[0].mxu0
      %v4159 = vadd.f32 0.0, %v4158
      %v4160 = vpop.f32.mrb[0].mxu0
      %4161 = vmatprep.mubr.bf16.mxu0 0
      %4162 = vmatmul.mubr.bf16.gmra.mrb[0].mxu0 %v4027
      %v4163 = vpop.f32.mrb[0].mxu0
      %v4164 = vadd.f32 0.0, %v4163
      %v4165 = vpop.f32.mrb[0].mxu0
      %v4166 = vpop.f32.mrb[0].mxu0
      %v4167 = vadd.f32 0.0, %v4166
      %v4168 = vpop.f32.mrb[0].mxu0
      %4169 = vmatprep.mubr.bf16.mxu0 0
      %4170 = vmatmul.mubr.bf16.gmra.mrb[0].mxu0 %v4030
      %v4171 = vpop.f32.mrb[0].mxu0
      %v4172 = vadd.f32 0.0, %v4171
      %v4173 = vpop.f32.mrb[0].mxu0
      %v4174 = vpop.f32.mrb[0].mxu0
      %v4175 = vadd.f32 0.0, %v4174
      %v4176 = vpop.f32.mrb[0].mxu0
      %4177 = vmatprep.mubr.bf16.mxu0 0
      %4178 = vmatmul.mubr.bf16.gmra.mrb[0].mxu0 %v4033
      %v4179 = vpop.f32.mrb[0].mxu0
      %v4180 = vadd.f32 0.0, %v4179
      %v4181 = vpop.f32.mrb[0].mxu0
      %v4182 = vpop.f32.mrb[0].mxu0
      %v4183 = vadd.f32 0.0, %v4182
      %v4184 = vpop.f32.mrb[0].mxu0
      %4185 = vmatprep.mubr.bf16.mxu0 0
      %4186 = vmatmul.mubr.bf16.gmra.mrb[0].mxu0 %v4036
      %v4187 = vpop.f32.mrb[0].mxu0
      %v4188 = vadd.f32 0.0, %v4187
      %v4189 = vpop.f32.mrb[0].mxu0
      %v4190 = vpop.f32.mrb[0].mxu0
      %v4191 = vadd.f32 0.0, %v4190
      %v4192 = vpop.f32.mrb[0].mxu0
      %4193 = vmatprep.mubr.bf16.mxu0 0
      %4194 = vmatmul.mubr.bf16.gmra.mrb[0].mxu0 %v4039
      %v4195 = vpop.f32.mrb[0].mxu0
      %v4196 = vadd.f32 0.0, %v4195
      %v4197 = vpop.f32.mrb[0].mxu0
      %v4198 = vpop.f32.mrb[0].mxu0
      %v4199 = vadd.f32 0.0, %v4198
      %v4200 = vpop.f32.mrb[0].mxu0
      %4201 = vdwg.mxu0
      %v4202 = vadd.f32 %v3840, %v4076
      %v4203 = vadd.f32 %v3841, %v4079
      %v4204 = vadd.f32 %v3842, %v4084
      %v4205 = vadd.f32 %v3843, %v4087
      %v4206 = vadd.f32 %v3844, %v4092
      %v4207 = vadd.f32 %v3845, %v4095
      %v4208 = vadd.f32 %v3846, %v4100
      %v4209 = vadd.f32 %v3847, %v4103
      %v4210 = vadd.f32 %v3848, %v4108
      %v4211 = vadd.f32 %v3849, %v4111
      %v4212 = vadd.f32 %v3850, %v4116
      %v4213 = vadd.f32 %v3851, %v4119
      %v4214 = vadd.f32 %v3852, %v4124
      %v4215 = vadd.f32 %v3853, %v4127
      %v4216 = vadd.f32 %v3854, %v4132
      %v4217 = vadd.f32 %v3855, %v4135
      %v4218 = vadd.f32 %v3856, %v4140
      %v4219 = vadd.f32 %v3857, %v4143
      %v4220 = vadd.f32 %v3858, %v4148
      %v4221 = vadd.f32 %v3859, %v4151
      %v4222 = vadd.f32 %v3860, %v4156
      %v4223 = vadd.f32 %v3861, %v4159
      %v4224 = vadd.f32 %v3862, %v4164
      %v4225 = vadd.f32 %v3863, %v4167
      %v4226 = vadd.f32 %v3864, %v4172
      %v4227 = vadd.f32 %v3865, %v4175
      %v4228 = vadd.f32 %v3866, %v4180
      %v4229 = vadd.f32 %v3867, %v4183
      %v4230 = vadd.f32 %v3868, %v4188
      %v4231 = vadd.f32 %v3869, %v4191
      %v4232 = vadd.f32 %v3870, %v4196
      %v4233 = vadd.f32 %v3871, %v4199
      %v4234 = vld [vmem:[%s3872] sm:$0xf]
      %v4235 = vld [vmem:[%s3872 + $0x4] sm:$0xf]
      %v4236 = vld [vmem:[%s3872 + $0x8] sm:$0x1]
      %v4237 = vld [vmem:[%s3872 + $0xc] sm:$0xf]
      %v4238 = vld [vmem:[%s3872 + $0x10] sm:$0xf]
      %v4239 = vld [vmem:[%s3872 + $0x14] sm:$0x1]
      %v4240 = vld [vmem:[%s3872 + $0x18] sm:$0xf]
      %v4241 = vld [vmem:[%s3872 + $0x1c] sm:$0xf]
      %v4242 = vld [vmem:[%s3872 + $0x20] sm:$0x1]
      %v4243 = vld [vmem:[%s3872 + $0x24] sm:$0xf]
      %v4244 = vld [vmem:[%s3872 + $0x28] sm:$0xf]
      %v4245 = vld [vmem:[%s3872 + $0x2c] sm:$0x1]
      %v4246 = vld [vmem:[%s3872 + $0x30] sm:$0xf]
      %v4247 = vld [vmem:[%s3872 + $0x34] sm:$0xf]
      %v4248 = vld [vmem:[%s3872 + $0x38] sm:$0x1]
      %v4249 = vld [vmem:[%s3872 + $0x3c] sm:$0xf]
      %v4250 = vld [vmem:[%s3872 + $0x40] sm:$0xf]
      %v4251 = vld [vmem:[%s3872 + $0x44] sm:$0x1]
      %v4252 = vld [vmem:[%s3872 + $0x48] sm:$0xf]
      %v4253 = vld [vmem:[%s3872 + $0x4c] sm:$0xf]
      %v4254 = vld [vmem:[%s3872 + $0x50] sm:$0x1]
      %v4255 = vld [vmem:[%s3872 + $0x54] sm:$0xf]
      %v4256 = vld [vmem:[%s3872 + $0x58] sm:$0xf]
      %v4257 = vld [vmem:[%s3872 + $0x5c] sm:$0x1]
      %v4258 = vld [vmem:[%s3872 + $0x60] sm:$0xf]
      %v4259 = vld [vmem:[%s3872 + $0x64] sm:$0xf]
      %v4260 = vld [vmem:[%s3872 + $0x68] sm:$0x1]
      %v4261 = vld [vmem:[%s3872 + $0x6c] sm:$0xf]
      %v4262 = vld [vmem:[%s3872 + $0x70] sm:$0xf]
      %v4263 = vld [vmem:[%s3872 + $0x74] sm:$0x1]
      %v4264 = vld [vmem:[%s3872 + $0x78] sm:$0xf]
      %v4265 = vld [vmem:[%s3872 + $0x7c] sm:$0xf]
      %v4266 = vld [vmem:[%s3872 + $0x80] sm:$0x1]
      %v4267 = vld [vmem:[%s3872 + $0x84] sm:$0xf]
      %v4268 = vld [vmem:[%s3872 + $0x88] sm:$0xf]
      %v4269 = vld [vmem:[%s3872 + $0x8c] sm:$0x1]
      %v4270 = vld [vmem:[%s3872 + $0x90] sm:$0xf]
      %v4271 = vld [vmem:[%s3872 + $0x94] sm:$0xf]
      %v4272 = vld [vmem:[%s3872 + $0x98] sm:$0x1]
      %v4273 = vld [vmem:[%s3872 + $0x9c] sm:$0xf]
      %v4274 = vld [vmem:[%s3872 + $0xa0] sm:$0xf]
      %v4275 = vld [vmem:[%s3872 + $0xa4] sm:$0x1]
      %v4276 = vld [vmem:[%s3872 + $0xa8] sm:$0xf]
      %v4277 = vld [vmem:[%s3872 + $0xac] sm:$0xf]
      %v4278 = vld [vmem:[%s3872 + $0xb0] sm:$0x1]
      %v4279 = vld [vmem:[%s3872 + $0xb4] sm:$0xf]
      %v4280 = vld [vmem:[%s3872 + $0xb8] sm:$0xf]
      %v4281 = vld [vmem:[%s3872 + $0xbc] sm:$0x1]
      %v4283 = vshrl.u32 %v4234, 16
      %v4285 = vrot.slane %v4283, 4
      %v4286 = vshll.u32 %v4234, 16
      %v4288 = vrot.slane %v4286, 5
      %v4289 = vor.u32 %v4285, %v4288
      %v4290 = vrot.slane %v4289, 4
      %v4292 = vshll.u32 %v4235, 16
      %v4294 = vrot.slane %v4292, 5
      %v4295 = vsel %vm903, %v4290, %v4294
      %v4296 = vshrl.u32 %v4235, 16
      %v4298 = vrot.slane %v4296, 4
      %v4299 = vor.u32 %v4298, %v4294
      %v4300 = vrot.slane %v4299, 4
      %v4302 = vshll.u32 %v4236, 16
      %v4304 = vrot.slane %v4302, 5
      %v4305 = vsel %vm903, %v4300, %v4304
      %v4307 = vshrl.u32 %v4237, 16
      %v4309 = vrot.slane %v4307, 4
      %v4310 = vshll.u32 %v4237, 16
      %v4312 = vrot.slane %v4310, 5
      %v4313 = vor.u32 %v4309, %v4312
      %v4314 = vrot.slane %v4313, 4
      %v4316 = vshll.u32 %v4238, 16
      %v4318 = vrot.slane %v4316, 5
      %v4319 = vsel %vm903, %v4314, %v4318
      %v4320 = vshrl.u32 %v4238, 16
      %v4322 = vrot.slane %v4320, 4
      %v4323 = vor.u32 %v4322, %v4318
      %v4324 = vrot.slane %v4323, 4
      %v4326 = vshll.u32 %v4239, 16
      %v4328 = vrot.slane %v4326, 5
      %v4329 = vsel %vm903, %v4324, %v4328
      %v4331 = vshrl.u32 %v4240, 16
      %v4333 = vrot.slane %v4331, 4
      %v4334 = vshll.u32 %v4240, 16
      %v4336 = vrot.slane %v4334, 5
      %v4337 = vor.u32 %v4333, %v4336
      %v4338 = vrot.slane %v4337, 4
      %v4340 = vshll.u32 %v4241, 16
      %v4342 = vrot.slane %v4340, 5
      %v4343 = vsel %vm903, %v4338, %v4342
      %v4344 = vshrl.u32 %v4241, 16
      %v4346 = vrot.slane %v4344, 4
      %v4347 = vor.u32 %v4346, %v4342
      %v4348 = vrot.slane %v4347, 4
      %v4350 = vshll.u32 %v4242, 16
      %v4352 = vrot.slane %v4350, 5
      %v4353 = vsel %vm903, %v4348, %v4352
      %v4355 = vshrl.u32 %v4243, 16
      %v4357 = vrot.slane %v4355, 4
      %v4358 = vshll.u32 %v4243, 16
      %v4360 = vrot.slane %v4358, 5
      %v4361 = vor.u32 %v4357, %v4360
      %v4362 = vrot.slane %v4361, 4
      %v4364 = vshll.u32 %v4244, 16
      %v4366 = vrot.slane %v4364, 5
      %v4367 = vsel %vm903, %v4362, %v4366
      %v4368 = vshrl.u32 %v4244, 16
      %v4370 = vrot.slane %v4368, 4
      %v4371 = vor.u32 %v4370, %v4366
      %v4372 = vrot.slane %v4371, 4
      %v4374 = vshll.u32 %v4245, 16
      %v4376 = vrot.slane %v4374, 5
      %v4377 = vsel %vm903, %v4372, %v4376
      %v4379 = vshrl.u32 %v4246, 16
      %v4381 = vrot.slane %v4379, 4
      %v4382 = vshll.u32 %v4246, 16
      %v4384 = vrot.slane %v4382, 5
      %v4385 = vor.u32 %v4381, %v4384
      %v4386 = vrot.slane %v4385, 4
      %v4388 = vshll.u32 %v4247, 16
      %v4390 = vrot.slane %v4388, 5
      %v4391 = vsel %vm903, %v4386, %v4390
      %v4392 = vshrl.u32 %v4247, 16
      %v4394 = vrot.slane %v4392, 4
      %v4395 = vor.u32 %v4394, %v4390
      %v4396 = vrot.slane %v4395, 4
      %v4398 = vshll.u32 %v4248, 16
      %v4400 = vrot.slane %v4398, 5
      %v4401 = vsel %vm903, %v4396, %v4400
      %v4403 = vshrl.u32 %v4249, 16
      %v4405 = vrot.slane %v4403, 4
      %v4406 = vshll.u32 %v4249, 16
      %v4408 = vrot.slane %v4406, 5
      %v4409 = vor.u32 %v4405, %v4408
      %v4410 = vrot.slane %v4409, 4
      %v4412 = vshll.u32 %v4250, 16
      %v4414 = vrot.slane %v4412, 5
      %v4415 = vsel %vm903, %v4410, %v4414
      %v4416 = vshrl.u32 %v4250, 16
      %v4418 = vrot.slane %v4416, 4
      %v4419 = vor.u32 %v4418, %v4414
      %v4420 = vrot.slane %v4419, 4
      %v4422 = vshll.u32 %v4251, 16
      %v4424 = vrot.slane %v4422, 5
      %v4425 = vsel %vm903, %v4420, %v4424
      %v4427 = vshrl.u32 %v4252, 16
      %v4429 = vrot.slane %v4427, 4
      %v4430 = vshll.u32 %v4252, 16
      %v4432 = vrot.slane %v4430, 5
      %v4433 = vor.u32 %v4429, %v4432
      %v4434 = vrot.slane %v4433, 4
      %v4436 = vshll.u32 %v4253, 16
      %v4438 = vrot.slane %v4436, 5
      %v4439 = vsel %vm903, %v4434, %v4438
      %v4440 = vshrl.u32 %v4253, 16
      %v4442 = vrot.slane %v4440, 4
      %v4443 = vor.u32 %v4442, %v4438
      %v4444 = vrot.slane %v4443, 4
      %v4446 = vshll.u32 %v4254, 16
      %v4448 = vrot.slane %v4446, 5
      %v4449 = vsel %vm903, %v4444, %v4448
      %v4451 = vshrl.u32 %v4255, 16
      %v4453 = vrot.slane %v4451, 4
      %v4454 = vshll.u32 %v4255, 16
      %v4456 = vrot.slane %v4454, 5
      %v4457 = vor.u32 %v4453, %v4456
      %v4458 = vrot.slane %v4457, 4
      %v4460 = vshll.u32 %v4256, 16
      %v4462 = vrot.slane %v4460, 5
      %v4463 = vsel %vm903, %v4458, %v4462
      %v4464 = vshrl.u32 %v4256, 16
      %v4466 = vrot.slane %v4464, 4
      %v4467 = vor.u32 %v4466, %v4462
      %v4468 = vrot.slane %v4467, 4
      %v4470 = vshll.u32 %v4257, 16
      %v4472 = vrot.slane %v4470, 5
      %v4473 = vsel %vm903, %v4468, %v4472
      %v4475 = vshrl.u32 %v4258, 16
      %v4477 = vrot.slane %v4475, 4
      %v4478 = vshll.u32 %v4258, 16
      %v4480 = vrot.slane %v4478, 5
      %v4481 = vor.u32 %v4477, %v4480
      %v4482 = vrot.slane %v4481, 4
      %v4484 = vshll.u32 %v4259, 16
      %v4486 = vrot.slane %v4484, 5
      %v4487 = vsel %vm903, %v4482, %v4486
      %v4488 = vshrl.u32 %v4259, 16
      %v4490 = vrot.slane %v4488, 4
      %v4491 = vor.u32 %v4490, %v4486
      %v4492 = vrot.slane %v4491, 4
      %v4494 = vshll.u32 %v4260, 16
      %v4496 = vrot.slane %v4494, 5
      %v4497 = vsel %vm903, %v4492, %v4496
      %v4499 = vshrl.u32 %v4261, 16
      %v4501 = vrot.slane %v4499, 4
      %v4502 = vshll.u32 %v4261, 16
      %v4504 = vrot.slane %v4502, 5
      %v4505 = vor.u32 %v4501, %v4504
      %v4506 = vrot.slane %v4505, 4
      %v4508 = vshll.u32 %v4262, 16
      %v4510 = vrot.slane %v4508, 5
      %v4511 = vsel %vm903, %v4506, %v4510
      %v4512 = vshrl.u32 %v4262, 16
      %v4514 = vrot.slane %v4512, 4
      %v4515 = vor.u32 %v4514, %v4510
      %v4516 = vrot.slane %v4515, 4
      %v4518 = vshll.u32 %v4263, 16
      %v4520 = vrot.slane %v4518, 5
      %v4521 = vsel %vm903, %v4516, %v4520
      %v4523 = vshrl.u32 %v4264, 16
      %v4525 = vrot.slane %v4523, 4
      %v4526 = vshll.u32 %v4264, 16
      %v4528 = vrot.slane %v4526, 5
      %v4529 = vor.u32 %v4525, %v4528
      %v4530 = vrot.slane %v4529, 4
      %v4532 = vshll.u32 %v4265, 16
      %v4534 = vrot.slane %v4532, 5
      %v4535 = vsel %vm903, %v4530, %v4534
      %v4536 = vshrl.u32 %v4265, 16
      %v4538 = vrot.slane %v4536, 4
      %v4539 = vor.u32 %v4538, %v4534
      %v4540 = vrot.slane %v4539, 4
      %v4542 = vshll.u32 %v4266, 16
      %v4544 = vrot.slane %v4542, 5
      %v4545 = vsel %vm903, %v4540, %v4544
      %v4547 = vshrl.u32 %v4267, 16
      %v4549 = vrot.slane %v4547, 4
      %v4550 = vshll.u32 %v4267, 16
      %v4552 = vrot.slane %v4550, 5
      %v4553 = vor.u32 %v4549, %v4552
      %v4554 = vrot.slane %v4553, 4
      %v4556 = vshll.u32 %v4268, 16
      %v4558 = vrot.slane %v4556, 5
      %v4559 = vsel %vm903, %v4554, %v4558
      %v4560 = vshrl.u32 %v4268, 16
      %v4562 = vrot.slane %v4560, 4
      %v4563 = vor.u32 %v4562, %v4558
      %v4564 = vrot.slane %v4563, 4
      %v4566 = vshll.u32 %v4269, 16
      %v4568 = vrot.slane %v4566, 5
      %v4569 = vsel %vm903, %v4564, %v4568
      %v4571 = vshrl.u32 %v4270, 16
      %v4573 = vrot.slane %v4571, 4
      %v4574 = vshll.u32 %v4270, 16
      %v4576 = vrot.slane %v4574, 5
      %v4577 = vor.u32 %v4573, %v4576
      %v4578 = vrot.slane %v4577, 4
      %v4580 = vshll.u32 %v4271, 16
      %v4582 = vrot.slane %v4580, 5
      %v4583 = vsel %vm903, %v4578, %v4582
      %v4584 = vshrl.u32 %v4271, 16
      %v4586 = vrot.slane %v4584, 4
      %v4587 = vor.u32 %v4586, %v4582
      %v4588 = vrot.slane %v4587, 4
      %v4590 = vshll.u32 %v4272, 16
      %v4592 = vrot.slane %v4590, 5
      %v4593 = vsel %vm903, %v4588, %v4592
      %v4595 = vshrl.u32 %v4273, 16
      %v4597 = vrot.slane %v4595, 4
      %v4598 = vshll.u32 %v4273, 16
      %v4600 = vrot.slane %v4598, 5
      %v4601 = vor.u32 %v4597, %v4600
      %v4602 = vrot.slane %v4601, 4
      %v4604 = vshll.u32 %v4274, 16
      %v4606 = vrot.slane %v4604, 5
      %v4607 = vsel %vm903, %v4602, %v4606
      %v4608 = vshrl.u32 %v4274, 16
      %v4610 = vrot.slane %v4608, 4
      %v4611 = vor.u32 %v4610, %v4606
      %v4612 = vrot.slane %v4611, 4
      %v4614 = vshll.u32 %v4275, 16
      %v4616 = vrot.slane %v4614, 5
      %v4617 = vsel %vm903, %v4612, %v4616
      %v4619 = vshrl.u32 %v4276, 16
      %v4621 = vrot.slane %v4619, 4
      %v4622 = vshll.u32 %v4276, 16
      %v4624 = vrot.slane %v4622, 5
      %v4625 = vor.u32 %v4621, %v4624
      %v4626 = vrot.slane %v4625, 4
      %v4628 = vshll.u32 %v4277, 16
      %v4630 = vrot.slane %v4628, 5
      %v4631 = vsel %vm903, %v4626, %v4630
      %v4632 = vshrl.u32 %v4277, 16
      %v4634 = vrot.slane %v4632, 4
      %v4635 = vor.u32 %v4634, %v4630
      %v4636 = vrot.slane %v4635, 4
      %v4638 = vshll.u32 %v4278, 16
      %v4640 = vrot.slane %v4638, 5
      %v4641 = vsel %vm903, %v4636, %v4640
      %v4643 = vshrl.u32 %v4279, 16
      %v4645 = vrot.slane %v4643, 4
      %v4646 = vshll.u32 %v4279, 16
      %v4648 = vrot.slane %v4646, 5
      %v4649 = vor.u32 %v4645, %v4648
      %v4650 = vrot.slane %v4649, 4
      %v4652 = vshll.u32 %v4280, 16
      %v4654 = vrot.slane %v4652, 5
      %v4655 = vsel %vm903, %v4650, %v4654
      %v4656 = vshrl.u32 %v4280, 16
      %v4658 = vrot.slane %v4656, 4
      %v4659 = vor.u32 %v4658, %v4654
      %v4660 = vrot.slane %v4659, 4
      %v4662 = vshll.u32 %v4281, 16
      %v4664 = vrot.slane %v4662, 5
      %v4665 = vsel %vm903, %v4660, %v4664
      %v4666 = vld [vmem:[%s1 + $0x38] sm:$0xf]
      %v4667 = vld [vmem:[%s1 + $0x3c] sm:$0xf]
      %v4668 = vunpack.c.l.b16 %v4295
      %v4669 = vunpack.c.l.b16 %v4305
      %v4670 = vunpack.c.l.b16 %v4319
      %v4671 = vunpack.c.l.b16 %v4329
      %v4672 = vunpack.c.l.b16 %v4343
      %v4673 = vunpack.c.l.b16 %v4353
      %v4674 = vunpack.c.l.b16 %v4367
      %v4675 = vunpack.c.l.b16 %v4377
      %v4676 = vunpack.c.l.b16 %v4391
      %v4677 = vunpack.c.l.b16 %v4401
      %v4678 = vunpack.c.l.b16 %v4415
      %v4679 = vunpack.c.l.b16 %v4425
      %v4680 = vunpack.c.l.b16 %v4439
      %v4681 = vunpack.c.l.b16 %v4449
      %v4682 = vunpack.c.l.b16 %v4463
      %v4683 = vunpack.c.l.b16 %v4473
      %v4684 = vunpack.c.l.b16 %v4487
      %v4685 = vunpack.c.l.b16 %v4497
      %v4686 = vunpack.c.l.b16 %v4511
      %v4687 = vunpack.c.l.b16 %v4521
      %v4688 = vunpack.c.l.b16 %v4535
      %v4689 = vunpack.c.l.b16 %v4545
      %v4690 = vunpack.c.l.b16 %v4559
      %v4691 = vunpack.c.l.b16 %v4569
      %v4692 = vunpack.c.l.b16 %v4583
      %v4693 = vunpack.c.l.b16 %v4593
      %v4694 = vunpack.c.l.b16 %v4607
      %v4695 = vunpack.c.l.b16 %v4617
      %v4696 = vunpack.c.l.b16 %v4631
      %v4697 = vunpack.c.l.b16 %v4641
      %v4698 = vunpack.c.l.b16 %v4655
      %v4699 = vunpack.c.l.b16 %v4665
      %v4700 = vpack.c.b16 %v4669, %v4668
      %v4701 = vpack.c.b16 %v4671, %v4670
      %v4702 = vpack.c.b16 %v4673, %v4672
      %v4703 = vpack.c.b16 %v4675, %v4674
      %v4704 = vpack.c.b16 %v4677, %v4676
      %v4705 = vpack.c.b16 %v4679, %v4678
      %v4706 = vpack.c.b16 %v4681, %v4680
      %v4707 = vpack.c.b16 %v4683, %v4682
      %v4708 = vpack.c.b16 %v4685, %v4684
      %v4709 = vpack.c.b16 %v4687, %v4686
      %v4710 = vpack.c.b16 %v4689, %v4688
      %v4711 = vpack.c.b16 %v4691, %v4690
      %v4712 = vpack.c.b16 %v4693, %v4692
      %v4713 = vpack.c.b16 %v4695, %v4694
      %v4714 = vpack.c.b16 %v4697, %v4696
      %v4715 = vpack.c.b16 %v4699, %v4698
      %v4718 = vunpack.c.l.b16 %v4666
      %v4719 = vunpack.c.l.b16 %v4667
      %v4720 = vpack.c.b16 %v4719, %v4718
      %v4723 = vsel %vm1344, %v4700, 0
      %v4726 = vsel %vm1344, %v4701, 0
      %v4729 = vsel %vm1344, %v4702, 0
      %v4732 = vsel %vm1344, %v4703, 0
      %v4735 = vsel %vm1344, %v4704, 0
      %v4738 = vsel %vm1344, %v4705, 0
      %v4741 = vsel %vm1344, %v4706, 0
      %v4744 = vsel %vm1344, %v4707, 0
      %v4747 = vsel %vm1344, %v4708, 0
      %v4750 = vsel %vm1344, %v4709, 0
      %v4753 = vsel %vm1344, %v4710, 0
      %v4756 = vsel %vm1344, %v4711, 0
      %v4759 = vsel %vm1344, %v4712, 0
      %v4762 = vsel %vm1344, %v4713, 0
      %v4765 = vsel %vm1344, %v4714, 0
      %v4768 = vsel %vm1344, %v4715, 0
      %4770 = vmatprep.subr.bf16.mxu0 0
      %4771 = vmatpush1.bf16.msra.mxu0 %v4720
      %4772 = vmatprep.subr.bf16.mxu0 0
      %4773 = vmatpush1.bf16.msra.mxu0 0
      %4774 = vmatprep.subr.bf16.mxu0 0
      %4775 = vmatpush1.bf16.msra.mxu0 0
      %4776 = vmatprep.subr.bf16.mxu0 0
      %4777 = vmatpush1.bf16.msra.mxu0 0
      %4778 = vmatprep.subr.bf16.mxu0 0
      %4779 = vmatpush1.bf16.msra.mxu0 0
      %4780 = vmatprep.subr.bf16.mxu0 0
      %4781 = vmatpush1.bf16.msra.mxu0 0
      %4782 = vmatprep.subr.bf16.mxu0 0
      %4783 = vmatpush1.bf16.msra.mxu0 0
      %4784 = vmatprep.subr.bf16.mxu0 0
      %4785 = vmatpush1.bf16.msra.mxu0 0
      %4786 = vmatprep.subr.bf16.mxu0 0
      %4787 = vmatpush1.bf16.msra.mxu0 0
      %4788 = vmatprep.subr.bf16.mxu0 0
      %4789 = vmatpush1.bf16.msra.mxu0 0
      %4790 = vmatprep.subr.bf16.mxu0 0
      %4791 = vmatpush1.bf16.msra.mxu0 0
      %4792 = vmatprep.subr.bf16.mxu0 0
      %4793 = vmatpush1.bf16.msra.mxu0 0
      %4794 = vmatprep.subr.bf16.mxu0 0
      %4795 = vmatpush1.bf16.msra.mxu0 0
      %4796 = vmatprep.subr.bf16.mxu0 0
      %4797 = vmatpush1.bf16.msra.mxu0 0
      %4798 = vmatprep.subr.bf16.mxu0 0
      %4799 = vmatpush1.bf16.msra.mxu0 0
      %4800 = vmatprep.subr.bf16.mxu0 0
      %4801 = vmatpush1.bf16.msra.mxu0 0
      %4802 = vmatprep.mubr.bf16.mxu0 0
      %4803 = vmatmul.mubr.bf16.gmra.mrb[0].mxu0 %v4723
      %v4804 = vpop.f32.mrb[0].mxu0
      %v4805 = vadd.f32 0.0, %v4804
      %v4806 = vpop.f32.mrb[0].mxu0
      %v4807 = vpop.f32.mrb[0].mxu0
      %v4808 = vadd.f32 0.0, %v4807
      %v4809 = vpop.f32.mrb[0].mxu0
      %4810 = vmatprep.mubr.bf16.mxu0 0
      %4811 = vmatmul.mubr.bf16.gmra.mrb[0].mxu0 %v4726
      %v4812 = vpop.f32.mrb[0].mxu0
      %v4813 = vadd.f32 0.0, %v4812
      %v4814 = vpop.f32.mrb[0].mxu0
      %v4815 = vpop.f32.mrb[0].mxu0
      %v4816 = vadd.f32 0.0, %v4815
      %v4817 = vpop.f32.mrb[0].mxu0
      %4818 = vmatprep.mubr.bf16.mxu0 0
      %4819 = vmatmul.mubr.bf16.gmra.mrb[0].mxu0 %v4729
      %v4820 = vpop.f32.mrb[0].mxu0
      %v4821 = vadd.f32 0.0, %v4820
      %v4822 = vpop.f32.mrb[0].mxu0
      %v4823 = vpop.f32.mrb[0].mxu0
      %v4824 = vadd.f32 0.0, %v4823
      %v4825 = vpop.f32.mrb[0].mxu0
      %4826 = vmatprep.mubr.bf16.mxu0 0
      %4827 = vmatmul.mubr.bf16.gmra.mrb[0].mxu0 %v4732
      %v4828 = vpop.f32.mrb[0].mxu0
      %v4829 = vadd.f32 0.0, %v4828
      %v4830 = vpop.f32.mrb[0].mxu0
      %v4831 = vpop.f32.mrb[0].mxu0
      %v4832 = vadd.f32 0.0, %v4831
      %v4833 = vpop.f32.mrb[0].mxu0
      %4834 = vmatprep.mubr.bf16.mxu0 0
      %4835 = vmatmul.mubr.bf16.gmra.mrb[0].mxu0 %v4735
      %v4836 = vpop.f32.mrb[0].mxu0
      %v4837 = vadd.f32 0.0, %v4836
      %v4838 = vpop.f32.mrb[0].mxu0
      %v4839 = vpop.f32.mrb[0].mxu0
      %v4840 = vadd.f32 0.0, %v4839
      %v4841 = vpop.f32.mrb[0].mxu0
      %4842 = vmatprep.mubr.bf16.mxu0 0
      %4843 = vmatmul.mubr.bf16.gmra.mrb[0].mxu0 %v4738
      %v4844 = vpop.f32.mrb[0].mxu0
      %v4845 = vadd.f32 0.0, %v4844
      %v4846 = vpop.f32.mrb[0].mxu0
      %v4847 = vpop.f32.mrb[0].mxu0
      %v4848 = vadd.f32 0.0, %v4847
      %v4849 = vpop.f32.mrb[0].mxu0
      %4850 = vmatprep.mubr.bf16.mxu0 0
      %4851 = vmatmul.mubr.bf16.gmra.mrb[0].mxu0 %v4741
      %v4852 = vpop.f32.mrb[0].mxu0
      %v4853 = vadd.f32 0.0, %v4852
      %v4854 = vpop.f32.mrb[0].mxu0
      %v4855 = vpop.f32.mrb[0].mxu0
      %v4856 = vadd.f32 0.0, %v4855
      %v4857 = vpop.f32.mrb[0].mxu0
      %4858 = vmatprep.mubr.bf16.mxu0 0
      %4859 = vmatmul.mubr.bf16.gmra.mrb[0].mxu0 %v4744
      %v4860 = vpop.f32.mrb[0].mxu0
      %v4861 = vadd.f32 0.0, %v4860
      %v4862 = vpop.f32.mrb[0].mxu0
      %v4863 = vpop.f32.mrb[0].mxu0
      %v4864 = vadd.f32 0.0, %v4863
      %v4865 = vpop.f32.mrb[0].mxu0
      %4866 = vmatprep.mubr.bf16.mxu0 0
      %4867 = vmatmul.mubr.bf16.gmra.mrb[0].mxu0 %v4747
      %v4868 = vpop.f32.mrb[0].mxu0
      %v4869 = vadd.f32 0.0, %v4868
      %v4870 = vpop.f32.mrb[0].mxu0
      %v4871 = vpop.f32.mrb[0].mxu0
      %v4872 = vadd.f32 0.0, %v4871
      %v4873 = vpop.f32.mrb[0].mxu0
      %4874 = vmatprep.mubr.bf16.mxu0 0
      %4875 = vmatmul.mubr.bf16.gmra.mrb[0].mxu0 %v4750
      %v4876 = vpop.f32.mrb[0].mxu0
      %v4877 = vadd.f32 0.0, %v4876
      %v4878 = vpop.f32.mrb[0].mxu0
      %v4879 = vpop.f32.mrb[0].mxu0
      %v4880 = vadd.f32 0.0, %v4879
      %v4881 = vpop.f32.mrb[0].mxu0
      %4882 = vmatprep.mubr.bf16.mxu0 0
      %4883 = vmatmul.mubr.bf16.gmra.mrb[0].mxu0 %v4753
      %v4884 = vpop.f32.mrb[0].mxu0
      %v4885 = vadd.f32 0.0, %v4884
      %v4886 = vpop.f32.mrb[0].mxu0
      %v4887 = vpop.f32.mrb[0].mxu0
      %v4888 = vadd.f32 0.0, %v4887
      %v4889 = vpop.f32.mrb[0].mxu0
      %4890 = vmatprep.mubr.bf16.mxu0 0
      %4891 = vmatmul.mubr.bf16.gmra.mrb[0].mxu0 %v4756
      %v4892 = vpop.f32.mrb[0].mxu0
      %v4893 = vadd.f32 0.0, %v4892
      %v4894 = vpop.f32.mrb[0].mxu0
      %v4895 = vpop.f32.mrb[0].mxu0
      %v4896 = vadd.f32 0.0, %v4895
      %v4897 = vpop.f32.mrb[0].mxu0
      %4898 = vmatprep.mubr.bf16.mxu0 0
      %4899 = vmatmul.mubr.bf16.gmra.mrb[0].mxu0 %v4759
      %v4900 = vpop.f32.mrb[0].mxu0
      %v4901 = vadd.f32 0.0, %v4900
      %v4902 = vpop.f32.mrb[0].mxu0
      %v4903 = vpop.f32.mrb[0].mxu0
      %v4904 = vadd.f32 0.0, %v4903
      %v4905 = vpop.f32.mrb[0].mxu0
      %4906 = vmatprep.mubr.bf16.mxu0 0
      %4907 = vmatmul.mubr.bf16.gmra.mrb[0].mxu0 %v4762
      %v4908 = vpop.f32.mrb[0].mxu0
      %v4909 = vadd.f32 0.0, %v4908
      %v4910 = vpop.f32.mrb[0].mxu0
      %v4911 = vpop.f32.mrb[0].mxu0
      %v4912 = vadd.f32 0.0, %v4911
      %v4913 = vpop.f32.mrb[0].mxu0
      %4914 = vmatprep.mubr.bf16.mxu0 0
      %4915 = vmatmul.mubr.bf16.gmra.mrb[0].mxu0 %v4765
      %v4916 = vpop.f32.mrb[0].mxu0
      %v4917 = vadd.f32 0.0, %v4916
      %v4918 = vpop.f32.mrb[0].mxu0
      %v4919 = vpop.f32.mrb[0].mxu0
      %v4920 = vadd.f32 0.0, %v4919
      %v4921 = vpop.f32.mrb[0].mxu0
      %4922 = vmatprep.mubr.bf16.mxu0 0
      %4923 = vmatmul.mubr.bf16.gmra.mrb[0].mxu0 %v4768
      %v4924 = vpop.f32.mrb[0].mxu0
      %v4925 = vadd.f32 0.0, %v4924
      %v4926 = vpop.f32.mrb[0].mxu0
      %v4927 = vpop.f32.mrb[0].mxu0
      %v4928 = vadd.f32 0.0, %v4927
      %v4929 = vpop.f32.mrb[0].mxu0
      %4930 = vdwg.mxu0
      %v4931 = vadd.f32 %v4202, %v4805
      %v4932 = vadd.f32 %v4203, %v4808
      %v4933 = vadd.f32 %v4204, %v4813
      %v4934 = vadd.f32 %v4205, %v4816
      %v4935 = vadd.f32 %v4206, %v4821
      %v4936 = vadd.f32 %v4207, %v4824
      %v4937 = vadd.f32 %v4208, %v4829
      %v4938 = vadd.f32 %v4209, %v4832
      %v4939 = vadd.f32 %v4210, %v4837
      %v4940 = vadd.f32 %v4211, %v4840
      %v4941 = vadd.f32 %v4212, %v4845
      %v4942 = vadd.f32 %v4213, %v4848
      %v4943 = vadd.f32 %v4214, %v4853
      %v4944 = vadd.f32 %v4215, %v4856
      %v4945 = vadd.f32 %v4216, %v4861
      %v4946 = vadd.f32 %v4217, %v4864
      %v4947 = vadd.f32 %v4218, %v4869
      %v4948 = vadd.f32 %v4219, %v4872
      %v4949 = vadd.f32 %v4220, %v4877
      %v4950 = vadd.f32 %v4221, %v4880
      %v4951 = vadd.f32 %v4222, %v4885
      %v4952 = vadd.f32 %v4223, %v4888
      %v4953 = vadd.f32 %v4224, %v4893
      %v4954 = vadd.f32 %v4225, %v4896
      %v4955 = vadd.f32 %v4226, %v4901
      %v4956 = vadd.f32 %v4227, %v4904
      %v4957 = vadd.f32 %v4228, %v4909
      %v4958 = vadd.f32 %v4229, %v4912
      %v4959 = vadd.f32 %v4230, %v4917
      %v4960 = vadd.f32 %v4231, %v4920
      %v4961 = vadd.f32 %v4232, %v4925
      %v4962 = vadd.f32 %v4233, %v4928
      %v4963 = vld [vmem:[%s3872] sm:$0xe]
      %v4964 = vld [vmem:[%s3872 + $0xc] sm:$0xe]
      %v4965 = vld [vmem:[%s3872 + $0x18] sm:$0xe]
      %v4966 = vld [vmem:[%s3872 + $0x24] sm:$0xe]
      %v4967 = vld [vmem:[%s3872 + $0x30] sm:$0xe]
      %v4968 = vld [vmem:[%s3872 + $0x3c] sm:$0xe]
      %v4969 = vld [vmem:[%s3872 + $0x48] sm:$0xe]
      %v4970 = vld [vmem:[%s3872 + $0x54] sm:$0xe]
      %v4971 = vld [vmem:[%s3872 + $0x60] sm:$0xe]
      %v4972 = vld [vmem:[%s3872 + $0x6c] sm:$0xe]
      %v4973 = vld [vmem:[%s3872 + $0x78] sm:$0xe]
      %v4974 = vld [vmem:[%s3872 + $0x84] sm:$0xe]
      %v4975 = vld [vmem:[%s3872 + $0x90] sm:$0xe]
      %v4976 = vld [vmem:[%s3872 + $0x9c] sm:$0xe]
      %v4977 = vld [vmem:[%s3872 + $0xa8] sm:$0xe]
      %v4978 = vld [vmem:[%s3872 + $0xb4] sm:$0xe]
      %v5027 = vrot.slane %v4963, 5
      %v5028 = vrot.slane %v5027, 4
      %v5029 = vrot.slane %v4235, 5
      %v5030 = vsel %vm1899, %v5028, %v5029
      %v5031 = vrot.slane %v5029, 4
      %v5032 = vrot.slane %v4236, 5
      %v5033 = vsel %vm1899, %v5031, %v5032
      %v5034 = vrot.slane %v4964, 5
      %v5035 = vrot.slane %v5034, 4
      %v5036 = vrot.slane %v4238, 5
      %v5037 = vsel %vm1899, %v5035, %v5036
      %v5038 = vrot.slane %v5036, 4
      %v5039 = vrot.slane %v4239, 5
      %v5040 = vsel %vm1899, %v5038, %v5039
      %v5041 = vrot.slane %v4965, 5
      %v5042 = vrot.slane %v5041, 4
      %v5043 = vrot.slane %v4241, 5
      %v5044 = vsel %vm1899, %v5042, %v5043
      %v5045 = vrot.slane %v5043, 4
      %v5046 = vrot.slane %v4242, 5
      %v5047 = vsel %vm1899, %v5045, %v5046
      %v5048 = vrot.slane %v4966, 5
      %v5049 = vrot.slane %v5048, 4
      %v5050 = vrot.slane %v4244, 5
      %v5051 = vsel %vm1899, %v5049, %v5050
      %v5052 = vrot.slane %v5050, 4
      %v5053 = vrot.slane %v4245, 5
      %v5054 = vsel %vm1899, %v5052, %v5053
      %v5055 = vrot.slane %v4967, 5
      %v5056 = vrot.slane %v5055, 4
      %v5057 = vrot.slane %v4247, 5
      %v5058 = vsel %vm1899, %v5056, %v5057
      %v5059 = vrot.slane %v5057, 4
      %v5060 = vrot.slane %v4248, 5
      %v5061 = vsel %vm1899, %v5059, %v5060
      %v5062 = vrot.slane %v4968, 5
      %v5063 = vrot.slane %v5062, 4
      %v5064 = vrot.slane %v4250, 5
      %v5065 = vsel %vm1899, %v5063, %v5064
      %v5066 = vrot.slane %v5064, 4
      %v5067 = vrot.slane %v4251, 5
      %v5068 = vsel %vm1899, %v5066, %v5067
      %v5069 = vrot.slane %v4969, 5
      %v5070 = vrot.slane %v5069, 4
      %v5071 = vrot.slane %v4253, 5
      %v5072 = vsel %vm1899, %v5070, %v5071
      %v5073 = vrot.slane %v5071, 4
      %v5074 = vrot.slane %v4254, 5
      %v5075 = vsel %vm1899, %v5073, %v5074
      %v5076 = vrot.slane %v4970, 5
      %v5077 = vrot.slane %v5076, 4
      %v5078 = vrot.slane %v4256, 5
      %v5079 = vsel %vm1899, %v5077, %v5078
      %v5080 = vrot.slane %v5078, 4
      %v5081 = vrot.slane %v4257, 5
      %v5082 = vsel %vm1899, %v5080, %v5081
      %v5083 = vrot.slane %v4971, 5
      %v5084 = vrot.slane %v5083, 4
      %v5085 = vrot.slane %v4259, 5
      %v5086 = vsel %vm1899, %v5084, %v5085
      %v5087 = vrot.slane %v5085, 4
      %v5088 = vrot.slane %v4260, 5
      %v5089 = vsel %vm1899, %v5087, %v5088
      %v5090 = vrot.slane %v4972, 5
      %v5091 = vrot.slane %v5090, 4
      %v5092 = vrot.slane %v4262, 5
      %v5093 = vsel %vm1899, %v5091, %v5092
      %v5094 = vrot.slane %v5092, 4
      %v5095 = vrot.slane %v4263, 5
      %v5096 = vsel %vm1899, %v5094, %v5095
      %v5097 = vrot.slane %v4973, 5
      %v5098 = vrot.slane %v5097, 4
      %v5099 = vrot.slane %v4265, 5
      %v5100 = vsel %vm1899, %v5098, %v5099
      %v5101 = vrot.slane %v5099, 4
      %v5102 = vrot.slane %v4266, 5
      %v5103 = vsel %vm1899, %v5101, %v5102
      %v5104 = vrot.slane %v4974, 5
      %v5105 = vrot.slane %v5104, 4
      %v5106 = vrot.slane %v4268, 5
      %v5107 = vsel %vm1899, %v5105, %v5106
      %v5108 = vrot.slane %v5106, 4
      %v5109 = vrot.slane %v4269, 5
      %v5110 = vsel %vm1899, %v5108, %v5109
      %v5111 = vrot.slane %v4975, 5
      %v5112 = vrot.slane %v5111, 4
      %v5113 = vrot.slane %v4271, 5
      %v5114 = vsel %vm1899, %v5112, %v5113
      %v5115 = vrot.slane %v5113, 4
      %v5116 = vrot.slane %v4272, 5
      %v5117 = vsel %vm1899, %v5115, %v5116
      %v5118 = vrot.slane %v4976, 5
      %v5119 = vrot.slane %v5118, 4
      %v5120 = vrot.slane %v4274, 5
      %v5121 = vsel %vm1899, %v5119, %v5120
      %v5122 = vrot.slane %v5120, 4
      %v5123 = vrot.slane %v4275, 5
      %v5124 = vsel %vm1899, %v5122, %v5123
      %v5125 = vrot.slane %v4977, 5
      %v5126 = vrot.slane %v5125, 4
      %v5127 = vrot.slane %v4277, 5
      %v5128 = vsel %vm1899, %v5126, %v5127
      %v5129 = vrot.slane %v5127, 4
      %v5130 = vrot.slane %v4278, 5
      %v5131 = vsel %vm1899, %v5129, %v5130
      %v5132 = vrot.slane %v4978, 5
      %v5133 = vrot.slane %v5132, 4
      %v5134 = vrot.slane %v4280, 5
      %v5135 = vsel %vm1899, %v5133, %v5134
      %v5136 = vrot.slane %v5134, 4
      %v5137 = vrot.slane %v4281, 5
      %v5138 = vsel %vm1899, %v5136, %v5137
      %v5139 = vld [vmem:[%s1 + $0x40] sm:$0xf]
      %v5140 = vld [vmem:[%s1 + $0x44] sm:$0xf]
      %v5141 = vunpack.c.l.b16 %v5030
      %v5142 = vunpack.c.l.b16 %v5033
      %v5143 = vunpack.c.l.b16 %v5037
      %v5144 = vunpack.c.l.b16 %v5040
      %v5145 = vunpack.c.l.b16 %v5044
      %v5146 = vunpack.c.l.b16 %v5047
      %v5147 = vunpack.c.l.b16 %v5051
      %v5148 = vunpack.c.l.b16 %v5054
      %v5149 = vunpack.c.l.b16 %v5058
      %v5150 = vunpack.c.l.b16 %v5061
      %v5151 = vunpack.c.l.b16 %v5065
      %v5152 = vunpack.c.l.b16 %v5068
      %v5153 = vunpack.c.l.b16 %v5072
      %v5154 = vunpack.c.l.b16 %v5075
      %v5155 = vunpack.c.l.b16 %v5079
      %v5156 = vunpack.c.l.b16 %v5082
      %v5157 = vunpack.c.l.b16 %v5086
      %v5158 = vunpack.c.l.b16 %v5089
      %v5159 = vunpack.c.l.b16 %v5093
      %v5160 = vunpack.c.l.b16 %v5096
      %v5161 = vunpack.c.l.b16 %v5100
      %v5162 = vunpack.c.l.b16 %v5103
      %v5163 = vunpack.c.l.b16 %v5107
      %v5164 = vunpack.c.l.b16 %v5110
      %v5165 = vunpack.c.l.b16 %v5114
      %v5166 = vunpack.c.l.b16 %v5117
      %v5167 = vunpack.c.l.b16 %v5121
      %v5168 = vunpack.c.l.b16 %v5124
      %v5169 = vunpack.c.l.b16 %v5128
      %v5170 = vunpack.c.l.b16 %v5131
      %v5171 = vunpack.c.l.b16 %v5135
      %v5172 = vunpack.c.l.b16 %v5138
      %v5173 = vpack.c.b16 %v5142, %v5141
      %v5174 = vpack.c.b16 %v5144, %v5143
      %v5175 = vpack.c.b16 %v5146, %v5145
      %v5176 = vpack.c.b16 %v5148, %v5147
      %v5177 = vpack.c.b16 %v5150, %v5149
      %v5178 = vpack.c.b16 %v5152, %v5151
      %v5179 = vpack.c.b16 %v5154, %v5153
      %v5180 = vpack.c.b16 %v5156, %v5155
      %v5181 = vpack.c.b16 %v5158, %v5157
      %v5182 = vpack.c.b16 %v5160, %v5159
      %v5183 = vpack.c.b16 %v5162, %v5161
      %v5184 = vpack.c.b16 %v5164, %v5163
      %v5185 = vpack.c.b16 %v5166, %v5165
      %v5186 = vpack.c.b16 %v5168, %v5167
      %v5187 = vpack.c.b16 %v5170, %v5169
      %v5188 = vpack.c.b16 %v5172, %v5171
      %v5191 = vunpack.c.l.b16 %v5139
      %v5192 = vunpack.c.l.b16 %v5140
      %v5193 = vpack.c.b16 %v5192, %v5191
      %v5196 = vsel %vm1344, %v5173, 0
      %v5199 = vsel %vm1344, %v5174, 0
      %v5202 = vsel %vm1344, %v5175, 0
      %v5205 = vsel %vm1344, %v5176, 0
      %v5208 = vsel %vm1344, %v5177, 0
      %v5211 = vsel %vm1344, %v5178, 0
      %v5214 = vsel %vm1344, %v5179, 0
      %v5217 = vsel %vm1344, %v5180, 0
      %v5220 = vsel %vm1344, %v5181, 0
      %v5223 = vsel %vm1344, %v5182, 0
      %v5226 = vsel %vm1344, %v5183, 0
      %v5229 = vsel %vm1344, %v5184, 0
      %v5232 = vsel %vm1344, %v5185, 0
      %v5235 = vsel %vm1344, %v5186, 0
      %v5238 = vsel %vm1344, %v5187, 0
      %v5241 = vsel %vm1344, %v5188, 0
      %5243 = vmatprep.subr.bf16.mxu0 0
      %5244 = vmatpush1.bf16.msra.mxu0 %v5193
      %5245 = vmatprep.subr.bf16.mxu0 0
      %5246 = vmatpush1.bf16.msra.mxu0 0
      %5247 = vmatprep.subr.bf16.mxu0 0
      %5248 = vmatpush1.bf16.msra.mxu0 0
      %5249 = vmatprep.subr.bf16.mxu0 0
      %5250 = vmatpush1.bf16.msra.mxu0 0
      %5251 = vmatprep.subr.bf16.mxu0 0
      %5252 = vmatpush1.bf16.msra.mxu0 0
      %5253 = vmatprep.subr.bf16.mxu0 0
      %5254 = vmatpush1.bf16.msra.mxu0 0
      %5255 = vmatprep.subr.bf16.mxu0 0
      %5256 = vmatpush1.bf16.msra.mxu0 0
      %5257 = vmatprep.subr.bf16.mxu0 0
      %5258 = vmatpush1.bf16.msra.mxu0 0
      %5259 = vmatprep.subr.bf16.mxu0 0
      %5260 = vmatpush1.bf16.msra.mxu0 0
      %5261 = vmatprep.subr.bf16.mxu0 0
      %5262 = vmatpush1.bf16.msra.mxu0 0
      %5263 = vmatprep.subr.bf16.mxu0 0
      %5264 = vmatpush1.bf16.msra.mxu0 0
      %5265 = vmatprep.subr.bf16.mxu0 0
      %5266 = vmatpush1.bf16.msra.mxu0 0
      %5267 = vmatprep.subr.bf16.mxu0 0
      %5268 = vmatpush1.bf16.msra.mxu0 0
      %5269 = vmatprep.subr.bf16.mxu0 0
      %5270 = vmatpush1.bf16.msra.mxu0 0
      %5271 = vmatprep.subr.bf16.mxu0 0
      %5272 = vmatpush1.bf16.msra.mxu0 0
      %5273 = vmatprep.subr.bf16.mxu0 0
      %5274 = vmatpush1.bf16.msra.mxu0 0
      %5275 = vmatprep.mubr.bf16.mxu0 0
      %5276 = vmatmul.mubr.bf16.gmra.mrb[0].mxu0 %v5196
      %v5277 = vpop.f32.mrb[0].mxu0
      %v5278 = vadd.f32 0.0, %v5277
      %v5279 = vpop.f32.mrb[0].mxu0
      %v5280 = vpop.f32.mrb[0].mxu0
      %v5281 = vadd.f32 0.0, %v5280
      %v5282 = vpop.f32.mrb[0].mxu0
      %5283 = vmatprep.mubr.bf16.mxu0 0
      %5284 = vmatmul.mubr.bf16.gmra.mrb[0].mxu0 %v5199
      %v5285 = vpop.f32.mrb[0].mxu0
      %v5286 = vadd.f32 0.0, %v5285
      %v5287 = vpop.f32.mrb[0].mxu0
      %v5288 = vpop.f32.mrb[0].mxu0
      %v5289 = vadd.f32 0.0, %v5288
      %v5290 = vpop.f32.mrb[0].mxu0
      %5291 = vmatprep.mubr.bf16.mxu0 0
      %5292 = vmatmul.mubr.bf16.gmra.mrb[0].mxu0 %v5202
      %v5293 = vpop.f32.mrb[0].mxu0
      %v5294 = vadd.f32 0.0, %v5293
      %v5295 = vpop.f32.mrb[0].mxu0
      %v5296 = vpop.f32.mrb[0].mxu0
      %v5297 = vadd.f32 0.0, %v5296
      %v5298 = vpop.f32.mrb[0].mxu0
      %5299 = vmatprep.mubr.bf16.mxu0 0
      %5300 = vmatmul.mubr.bf16.gmra.mrb[0].mxu0 %v5205
      %v5301 = vpop.f32.mrb[0].mxu0
      %v5302 = vadd.f32 0.0, %v5301
      %v5303 = vpop.f32.mrb[0].mxu0
      %v5304 = vpop.f32.mrb[0].mxu0
      %v5305 = vadd.f32 0.0, %v5304
      %v5306 = vpop.f32.mrb[0].mxu0
      %5307 = vmatprep.mubr.bf16.mxu0 0
      %5308 = vmatmul.mubr.bf16.gmra.mrb[0].mxu0 %v5208
      %v5309 = vpop.f32.mrb[0].mxu0
      %v5310 = vadd.f32 0.0, %v5309
      %v5311 = vpop.f32.mrb[0].mxu0
      %v5312 = vpop.f32.mrb[0].mxu0
      %v5313 = vadd.f32 0.0, %v5312
      %v5314 = vpop.f32.mrb[0].mxu0
      %5315 = vmatprep.mubr.bf16.mxu0 0
      %5316 = vmatmul.mubr.bf16.gmra.mrb[0].mxu0 %v5211
      %v5317 = vpop.f32.mrb[0].mxu0
      %v5318 = vadd.f32 0.0, %v5317
      %v5319 = vpop.f32.mrb[0].mxu0
      %v5320 = vpop.f32.mrb[0].mxu0
      %v5321 = vadd.f32 0.0, %v5320
      %v5322 = vpop.f32.mrb[0].mxu0
      %5323 = vmatprep.mubr.bf16.mxu0 0
      %5324 = vmatmul.mubr.bf16.gmra.mrb[0].mxu0 %v5214
      %v5325 = vpop.f32.mrb[0].mxu0
      %v5326 = vadd.f32 0.0, %v5325
      %v5327 = vpop.f32.mrb[0].mxu0
      %v5328 = vpop.f32.mrb[0].mxu0
      %v5329 = vadd.f32 0.0, %v5328
      %v5330 = vpop.f32.mrb[0].mxu0
      %5331 = vmatprep.mubr.bf16.mxu0 0
      %5332 = vmatmul.mubr.bf16.gmra.mrb[0].mxu0 %v5217
      %v5333 = vpop.f32.mrb[0].mxu0
      %v5334 = vadd.f32 0.0, %v5333
      %v5335 = vpop.f32.mrb[0].mxu0
      %v5336 = vpop.f32.mrb[0].mxu0
      %v5337 = vadd.f32 0.0, %v5336
      %v5338 = vpop.f32.mrb[0].mxu0
      %5339 = vmatprep.mubr.bf16.mxu0 0
      %5340 = vmatmul.mubr.bf16.gmra.mrb[0].mxu0 %v5220
      %v5341 = vpop.f32.mrb[0].mxu0
      %v5342 = vadd.f32 0.0, %v5341
      %v5343 = vpop.f32.mrb[0].mxu0
      %v5344 = vpop.f32.mrb[0].mxu0
      %v5345 = vadd.f32 0.0, %v5344
      %v5346 = vpop.f32.mrb[0].mxu0
      %5347 = vmatprep.mubr.bf16.mxu0 0
      %5348 = vmatmul.mubr.bf16.gmra.mrb[0].mxu0 %v5223
      %v5349 = vpop.f32.mrb[0].mxu0
      %v5350 = vadd.f32 0.0, %v5349
      %v5351 = vpop.f32.mrb[0].mxu0
      %v5352 = vpop.f32.mrb[0].mxu0
      %v5353 = vadd.f32 0.0, %v5352
      %v5354 = vpop.f32.mrb[0].mxu0
      %5355 = vmatprep.mubr.bf16.mxu0 0
      %5356 = vmatmul.mubr.bf16.gmra.mrb[0].mxu0 %v5226
      %v5357 = vpop.f32.mrb[0].mxu0
      %v5358 = vadd.f32 0.0, %v5357
      %v5359 = vpop.f32.mrb[0].mxu0
      %v5360 = vpop.f32.mrb[0].mxu0
      %v5361 = vadd.f32 0.0, %v5360
      %v5362 = vpop.f32.mrb[0].mxu0
      %5363 = vmatprep.mubr.bf16.mxu0 0
      %5364 = vmatmul.mubr.bf16.gmra.mrb[0].mxu0 %v5229
      %v5365 = vpop.f32.mrb[0].mxu0
      %v5366 = vadd.f32 0.0, %v5365
      %v5367 = vpop.f32.mrb[0].mxu0
      %v5368 = vpop.f32.mrb[0].mxu0
      %v5369 = vadd.f32 0.0, %v5368
      %v5370 = vpop.f32.mrb[0].mxu0
      %5371 = vmatprep.mubr.bf16.mxu0 0
      %5372 = vmatmul.mubr.bf16.gmra.mrb[0].mxu0 %v5232
      %v5373 = vpop.f32.mrb[0].mxu0
      %v5374 = vadd.f32 0.0, %v5373
      %v5375 = vpop.f32.mrb[0].mxu0
      %v5376 = vpop.f32.mrb[0].mxu0
      %v5377 = vadd.f32 0.0, %v5376
      %v5378 = vpop.f32.mrb[0].mxu0
      %5379 = vmatprep.mubr.bf16.mxu0 0
      %5380 = vmatmul.mubr.bf16.gmra.mrb[0].mxu0 %v5235
      %v5381 = vpop.f32.mrb[0].mxu0
      %v5382 = vadd.f32 0.0, %v5381
      %v5383 = vpop.f32.mrb[0].mxu0
      %v5384 = vpop.f32.mrb[0].mxu0
      %v5385 = vadd.f32 0.0, %v5384
      %v5386 = vpop.f32.mrb[0].mxu0
      %5387 = vmatprep.mubr.bf16.mxu0 0
      %5388 = vmatmul.mubr.bf16.gmra.mrb[0].mxu0 %v5238
      %v5389 = vpop.f32.mrb[0].mxu0
      %v5390 = vadd.f32 0.0, %v5389
      %v5391 = vpop.f32.mrb[0].mxu0
      %v5392 = vpop.f32.mrb[0].mxu0
      %v5393 = vadd.f32 0.0, %v5392
      %v5394 = vpop.f32.mrb[0].mxu0
      %5395 = vmatprep.mubr.bf16.mxu0 0
      %5396 = vmatmul.mubr.bf16.gmra.mrb[0].mxu0 %v5241
      %v5397 = vpop.f32.mrb[0].mxu0
      %v5398 = vadd.f32 0.0, %v5397
      %v5399 = vpop.f32.mrb[0].mxu0
      %v5400 = vpop.f32.mrb[0].mxu0
      %v5401 = vadd.f32 0.0, %v5400
      %v5402 = vpop.f32.mrb[0].mxu0
      %5403 = vdwg.mxu0
      %v5404 = vadd.f32 %v4931, %v5278
      %v5405 = vadd.f32 %v4932, %v5281
      %v5406 = vadd.f32 %v4933, %v5286
      %v5407 = vadd.f32 %v4934, %v5289
      %v5408 = vadd.f32 %v4935, %v5294
      %v5409 = vadd.f32 %v4936, %v5297
      %v5410 = vadd.f32 %v4937, %v5302
      %v5411 = vadd.f32 %v4938, %v5305
      %v5412 = vadd.f32 %v4939, %v5310
      %v5413 = vadd.f32 %v4940, %v5313
      %v5414 = vadd.f32 %v4941, %v5318
      %v5415 = vadd.f32 %v4942, %v5321
      %v5416 = vadd.f32 %v4943, %v5326
      %v5417 = vadd.f32 %v4944, %v5329
      %v5418 = vadd.f32 %v4945, %v5334
      %v5419 = vadd.f32 %v4946, %v5337
      %v5420 = vadd.f32 %v4947, %v5342
      %v5421 = vadd.f32 %v4948, %v5345
      %v5422 = vadd.f32 %v4949, %v5350
      %v5423 = vadd.f32 %v4950, %v5353
      %v5424 = vadd.f32 %v4951, %v5358
      %v5425 = vadd.f32 %v4952, %v5361
      %v5426 = vadd.f32 %v4953, %v5366
      %v5427 = vadd.f32 %v4954, %v5369
      %v5428 = vadd.f32 %v4955, %v5374
      %v5429 = vadd.f32 %v4956, %v5377
      %v5430 = vadd.f32 %v4957, %v5382
      %v5431 = vadd.f32 %v4958, %v5385
      %v5432 = vadd.f32 %v4959, %v5390
      %v5433 = vadd.f32 %v4960, %v5393
      %v5434 = vadd.f32 %v4961, %v5398
      %v5435 = vadd.f32 %v4962, %v5401
      %v5436 = vld [vmem:[%s2] sm:$0x1]
      %v5438 = vlaneseq
      %v5439 = vshrl.u32 %v5438, 7
      %v5440 = vsub.s32 0, %v5439
      %v5441 = vrot.slane %v5436, %v5440
      %v5443 = vadd.f32 %v5404, %v5441
      %v5444 = vadd.f32 %v5405, %v5441
      %v5445 = vadd.f32 %v5406, %v5441
      %v5446 = vadd.f32 %v5407, %v5441
      %v5447 = vadd.f32 %v5408, %v5441
      %v5448 = vadd.f32 %v5409, %v5441
      %v5449 = vadd.f32 %v5410, %v5441
      %v5450 = vadd.f32 %v5411, %v5441
      %v5451 = vadd.f32 %v5412, %v5441
      %v5452 = vadd.f32 %v5413, %v5441
      %v5453 = vadd.f32 %v5414, %v5441
      %v5454 = vadd.f32 %v5415, %v5441
      %v5455 = vadd.f32 %v5416, %v5441
      %v5456 = vadd.f32 %v5417, %v5441
      %v5457 = vadd.f32 %v5418, %v5441
      %v5458 = vadd.f32 %v5419, %v5441
      %v5459 = vadd.f32 %v5420, %v5441
      %v5460 = vadd.f32 %v5421, %v5441
      %v5461 = vadd.f32 %v5422, %v5441
      %v5462 = vadd.f32 %v5423, %v5441
      %v5463 = vadd.f32 %v5424, %v5441
      %v5464 = vadd.f32 %v5425, %v5441
      %v5465 = vadd.f32 %v5426, %v5441
      %v5466 = vadd.f32 %v5427, %v5441
      %v5467 = vadd.f32 %v5428, %v5441
      %v5468 = vadd.f32 %v5429, %v5441
      %v5469 = vadd.f32 %v5430, %v5441
      %v5470 = vadd.f32 %v5431, %v5441
      %v5471 = vadd.f32 %v5432, %v5441
      %v5472 = vadd.f32 %v5433, %v5441
      %v5473 = vadd.f32 %v5434, %v5441
      %v5474 = vadd.f32 %v5435, %v5441
      %v5475 = vmax.f32 %v5443, 0.0
      %v5476 = vmax.f32 %v5444, 0.0
      %v5477 = vmax.f32 %v5445, 0.0
      %v5478 = vmax.f32 %v5446, 0.0
      %v5479 = vmax.f32 %v5447, 0.0
      %v5480 = vmax.f32 %v5448, 0.0
      %v5481 = vmax.f32 %v5449, 0.0
      %v5482 = vmax.f32 %v5450, 0.0
      %v5483 = vmax.f32 %v5451, 0.0
      %v5484 = vmax.f32 %v5452, 0.0
      %v5485 = vmax.f32 %v5453, 0.0
      %v5486 = vmax.f32 %v5454, 0.0
      %v5487 = vmax.f32 %v5455, 0.0
      %v5488 = vmax.f32 %v5456, 0.0
      %v5489 = vmax.f32 %v5457, 0.0
      %v5490 = vmax.f32 %v5458, 0.0
      %v5491 = vmax.f32 %v5459, 0.0
      %v5492 = vmax.f32 %v5460, 0.0
      %v5493 = vmax.f32 %v5461, 0.0
      %v5494 = vmax.f32 %v5462, 0.0
      %v5495 = vmax.f32 %v5463, 0.0
      %v5496 = vmax.f32 %v5464, 0.0
      %v5497 = vmax.f32 %v5465, 0.0
      %v5498 = vmax.f32 %v5466, 0.0
      %v5499 = vmax.f32 %v5467, 0.0
      %v5500 = vmax.f32 %v5468, 0.0
      %v5501 = vmax.f32 %v5469, 0.0
      %v5502 = vmax.f32 %v5470, 0.0
      %v5503 = vmax.f32 %v5471, 0.0
      %v5504 = vmax.f32 %v5472, 0.0
      %v5505 = vmax.f32 %v5473, 0.0
      %v5506 = vmax.f32 %v5474, 0.0
      %5507 = vst.msk [vmem:[#allocation3] sm:$0xf] %vm226, 0
      %5508 = vst.msk [vmem:[#allocation3 + $0x4] sm:$0xf] %vm226, 0
      %5509 = vst.msk [vmem:[#allocation3 + $0x8] sm:$0x1] %vm229, 0
      %5510 = vst.msk [vmem:[#allocation3 + $0xc] sm:$0xf] %vm226, 0
      %5511 = vst.msk [vmem:[#allocation3 + $0x10] sm:$0xf] %vm226, 0
      %5512 = vst.msk [vmem:[#allocation3 + $0x14] sm:$0x1] %vm229, 0
      %5513 = vst.msk [vmem:[#allocation3 + $0x18] sm:$0xf] %vm226, 0
      %5514 = vst.msk [vmem:[#allocation3 + $0x1c] sm:$0xf] %vm226, 0
      %5515 = vst.msk [vmem:[#allocation3 + $0x20] sm:$0x1] %vm229, 0
      %5516 = vst.msk [vmem:[#allocation3 + $0x24] sm:$0xf] %vm226, 0
      %5517 = vst.msk [vmem:[#allocation3 + $0x28] sm:$0xf] %vm226, 0
      %5518 = vst.msk [vmem:[#allocation3 + $0x2c] sm:$0x1] %vm229, 0
      %5519 = vst.msk [vmem:[#allocation3 + $0x30] sm:$0xf] %vm226, 0
      %5520 = vst.msk [vmem:[#allocation3 + $0x34] sm:$0xf] %vm226, 0
      %5521 = vst.msk [vmem:[#allocation3 + $0x38] sm:$0x1] %vm229, 0
      %5522 = vst.msk [vmem:[#allocation3 + $0x3c] sm:$0xf] %vm226, 0
      %5523 = vst.msk [vmem:[#allocation3 + $0x40] sm:$0xf] %vm226, 0
      %5524 = vst.msk [vmem:[#allocation3 + $0x44] sm:$0x1] %vm229, 0
      %5525 = vst.msk [vmem:[#allocation3 + $0x48] sm:$0xf] %vm226, 0
      %5526 = vst.msk [vmem:[#allocation3 + $0x4c] sm:$0xf] %vm226, 0
      %5527 = vst.msk [vmem:[#allocation3 + $0x50] sm:$0x1] %vm229, 0
      %5528 = vst.msk [vmem:[#allocation3 + $0x54] sm:$0xf] %vm226, 0
      %5529 = vst.msk [vmem:[#allocation3 + $0x58] sm:$0xf] %vm226, 0
      %5530 = vst.msk [vmem:[#allocation3 + $0x5c] sm:$0x1] %vm229, 0
      %5531 = vst.msk [vmem:[#allocation3 + $0x60] sm:$0xf] %vm226, 0
      %5532 = vst.msk [vmem:[#allocation3 + $0x64] sm:$0xf] %vm226, 0
      %5533 = vst.msk [vmem:[#allocation3 + $0x68] sm:$0x1] %vm229, 0
      %5534 = vst.msk [vmem:[#allocation3 + $0x6c] sm:$0xf] %vm226, 0
      %5535 = vst.msk [vmem:[#allocation3 + $0x70] sm:$0xf] %vm226, 0
      %5536 = vst.msk [vmem:[#allocation3 + $0x74] sm:$0x1] %vm229, 0
      %5537 = vst.msk [vmem:[#allocation3 + $0x78] sm:$0xf] %vm226, 0
      %5538 = vst.msk [vmem:[#allocation3 + $0x7c] sm:$0xf] %vm226, 0
      %5539 = vst.msk [vmem:[#allocation3 + $0x80] sm:$0x1] %vm229, 0
      %5540 = vst.msk [vmem:[#allocation3 + $0x84] sm:$0xf] %vm226, 0
      %5541 = vst.msk [vmem:[#allocation3 + $0x88] sm:$0xf] %vm226, 0
      %5542 = vst.msk [vmem:[#allocation3 + $0x8c] sm:$0x1] %vm229, 0
      %5543 = vst.msk [vmem:[#allocation3 + $0x90] sm:$0xf] %vm226, 0
      %5544 = vst.msk [vmem:[#allocation3 + $0x94] sm:$0xf] %vm226, 0
      %5545 = vst.msk [vmem:[#allocation3 + $0x98] sm:$0x1] %vm229, 0
      %5546 = vst.msk [vmem:[#allocation3 + $0x9c] sm:$0xf] %vm226, 0
      %5547 = vst.msk [vmem:[#allocation3 + $0xa0] sm:$0xf] %vm226, 0
      %5548 = vst.msk [vmem:[#allocation3 + $0xa4] sm:$0x1] %vm229, 0
      %5549 = vst.msk [vmem:[#allocation3 + $0xa8] sm:$0xf] %vm226, 0
      %5550 = vst.msk [vmem:[#allocation3 + $0xac] sm:$0xf] %vm226, 0
      %5551 = vst.msk [vmem:[#allocation3 + $0xb0] sm:$0x1] %vm229, 0
      %5552 = vst.msk [vmem:[#allocation3 + $0xb4] sm:$0xf] %vm226, 0
      %5553 = vst.msk [vmem:[#allocation3 + $0xb8] sm:$0xf] %vm226, 0
      %5554 = vst.msk [vmem:[#allocation3 + $0xbc] sm:$0x1] %vm229, 0
      %5555 = vst.msk [vmem:[#allocation3 + $0xc0] sm:$0xf] %vm226, 0
      %5556 = vst.msk [vmem:[#allocation3 + $0xc4] sm:$0xf] %vm226, 0
      %5557 = vst.msk [vmem:[#allocation3 + $0xc8] sm:$0x1] %vm229, 0
      %5558 = vst.msk [vmem:[#allocation3 + $0xcc] sm:$0xf] %vm226, 0
      %5559 = vst.msk [vmem:[#allocation3 + $0xd0] sm:$0xf] %vm226, 0
      %5560 = vst.msk [vmem:[#allocation3 + $0xd4] sm:$0x1] %vm229, 0
      %v5561 = vpack.c.bf16 %v5476, %v5475
      %v5562 = vpack.c.bf16 %v5478, %v5477
      %v5563 = vpack.c.bf16 %v5480, %v5479
      %v5564 = vpack.c.bf16 %v5482, %v5481
      %v5565 = vpack.c.bf16 %v5484, %v5483
      %v5566 = vpack.c.bf16 %v5486, %v5485
      %v5567 = vpack.c.bf16 %v5488, %v5487
      %v5568 = vpack.c.bf16 %v5490, %v5489
      %v5569 = vpack.c.bf16 %v5492, %v5491
      %v5570 = vpack.c.bf16 %v5494, %v5493
      %v5571 = vpack.c.bf16 %v5496, %v5495
      %v5572 = vpack.c.bf16 %v5498, %v5497
      %v5573 = vpack.c.bf16 %v5500, %v5499
      %v5574 = vpack.c.bf16 %v5502, %v5501
      %v5575 = vpack.c.bf16 %v5504, %v5503
      %v5576 = vpack.c.bf16 %v5506, %v5505
      %v5593 = vunpack.c.l.b16 %v5561
      %v5594 = vunpack.c.h.b16 %v5561
      %v5595 = vunpack.c.l.b16 %v5562
      %v5596 = vunpack.c.h.b16 %v5562
      %v5597 = vunpack.c.l.b16 %v5563
      %v5598 = vunpack.c.h.b16 %v5563
      %v5599 = vunpack.c.l.b16 %v5564
      %v5600 = vunpack.c.h.b16 %v5564
      %v5601 = vunpack.c.l.b16 %v5565
      %v5602 = vunpack.c.h.b16 %v5565
      %v5603 = vunpack.c.l.b16 %v5566
      %v5604 = vunpack.c.h.b16 %v5566
      %v5605 = vunpack.c.l.b16 %v5567
      %v5606 = vunpack.c.h.b16 %v5567
      %v5607 = vunpack.c.l.b16 %v5568
      %v5608 = vunpack.c.h.b16 %v5568
      %v5609 = vunpack.c.l.b16 %v5569
      %v5610 = vunpack.c.h.b16 %v5569
      %v5611 = vunpack.c.l.b16 %v5570
      %v5612 = vunpack.c.h.b16 %v5570
      %v5613 = vunpack.c.l.b16 %v5571
      %v5614 = vunpack.c.h.b16 %v5571
      %v5615 = vunpack.c.l.b16 %v5572
      %v5616 = vunpack.c.h.b16 %v5572
      %v5617 = vunpack.c.l.b16 %v5573
      %v5618 = vunpack.c.h.b16 %v5573
      %v5619 = vunpack.c.l.b16 %v5574
      %v5620 = vunpack.c.h.b16 %v5574
      %v5621 = vunpack.c.l.b16 %v5575
      %v5622 = vunpack.c.h.b16 %v5575
      %v5623 = vunpack.c.l.b16 %v5576
      %v5624 = vunpack.c.h.b16 %v5576
      %v5625 = vpack.c.b16 %v5593, %v5593
      %v5626 = vpack.c.b16 %v5594, %v5594
      %v5627 = vpack.c.b16 %v5595, %v5595
      %v5628 = vpack.c.b16 %v5596, %v5596
      %v5629 = vpack.c.b16 %v5597, %v5597
      %v5630 = vpack.c.b16 %v5598, %v5598
      %v5631 = vpack.c.b16 %v5599, %v5599
      %v5632 = vpack.c.b16 %v5600, %v5600
      %v5633 = vpack.c.b16 %v5601, %v5601
      %v5634 = vpack.c.b16 %v5602, %v5602
      %v5635 = vpack.c.b16 %v5603, %v5603
      %v5636 = vpack.c.b16 %v5604, %v5604
      %v5637 = vpack.c.b16 %v5605, %v5605
      %v5638 = vpack.c.b16 %v5606, %v5606
      %v5639 = vpack.c.b16 %v5607, %v5607
      %v5640 = vpack.c.b16 %v5608, %v5608
      %v5641 = vpack.c.b16 %v5609, %v5609
      %v5642 = vpack.c.b16 %v5610, %v5610
      %v5643 = vpack.c.b16 %v5611, %v5611
      %v5644 = vpack.c.b16 %v5612, %v5612
      %v5645 = vpack.c.b16 %v5613, %v5613
      %v5646 = vpack.c.b16 %v5614, %v5614
      %v5647 = vpack.c.b16 %v5615, %v5615
      %v5648 = vpack.c.b16 %v5616, %v5616
      %v5649 = vpack.c.b16 %v5617, %v5617
      %v5650 = vpack.c.b16 %v5618, %v5618
      %v5651 = vpack.c.b16 %v5619, %v5619
      %v5652 = vpack.c.b16 %v5620, %v5620
      %v5653 = vpack.c.b16 %v5621, %v5621
      %v5654 = vpack.c.b16 %v5622, %v5622
      %v5655 = vpack.c.b16 %v5623, %v5623
      %v5656 = vpack.c.b16 %v5624, %v5624
      %v5658 = vshrl.u32 %v5625, 16
      %v5660 = vrot.slane %v5658, 7
      %v5661 = vshll.u32 %v5625, 16
      %v5663 = vor.u32 %v5660, %v5661
      %v5664 = vrot.slane %v5660, 4
      %v5666 = vshrl.u32 %v5626, 16
      %v5668 = vrot.slane %v5666, 7
      %v5669 = vshll.u32 %v5626, 16
      %v5671 = vor.u32 %v5668, %v5669
      %v5672 = vsel %vm412, %v5664, %v5671
      %v5673 = vrot.slane %v5668, 4
      %v5675 = vshrl.u32 %v5627, 16
      %v5677 = vrot.slane %v5675, 7
      %v5678 = vshll.u32 %v5627, 16
      %v5680 = vor.u32 %v5677, %v5678
      %v5681 = vrot.slane %v5677, 4
      %v5683 = vshrl.u32 %v5628, 16
      %v5685 = vrot.slane %v5683, 7
      %v5686 = vshll.u32 %v5628, 16
      %v5688 = vor.u32 %v5685, %v5686
      %v5689 = vsel %vm412, %v5681, %v5688
      %v5690 = vrot.slane %v5685, 4
      %v5692 = vshrl.u32 %v5629, 16
      %v5694 = vrot.slane %v5692, 7
      %v5695 = vshll.u32 %v5629, 16
      %v5697 = vor.u32 %v5694, %v5695
      %v5698 = vrot.slane %v5694, 4
      %v5700 = vshrl.u32 %v5630, 16
      %v5702 = vrot.slane %v5700, 7
      %v5703 = vshll.u32 %v5630, 16
      %v5705 = vor.u32 %v5702, %v5703
      %v5706 = vsel %vm412, %v5698, %v5705
      %v5707 = vrot.slane %v5702, 4
      %v5709 = vshrl.u32 %v5631, 16
      %v5711 = vrot.slane %v5709, 7
      %v5712 = vshll.u32 %v5631, 16
      %v5714 = vor.u32 %v5711, %v5712
      %v5715 = vrot.slane %v5711, 4
      %v5717 = vshrl.u32 %v5632, 16
      %v5719 = vrot.slane %v5717, 7
      %v5720 = vshll.u32 %v5632, 16
      %v5722 = vor.u32 %v5719, %v5720
      %v5723 = vsel %vm412, %v5715, %v5722
      %v5724 = vrot.slane %v5719, 4
      %v5726 = vshrl.u32 %v5633, 16
      %v5728 = vrot.slane %v5726, 7
      %v5729 = vshll.u32 %v5633, 16
      %v5731 = vor.u32 %v5728, %v5729
      %v5732 = vrot.slane %v5728, 4
      %v5734 = vshrl.u32 %v5634, 16
      %v5736 = vrot.slane %v5734, 7
      %v5737 = vshll.u32 %v5634, 16
      %v5739 = vor.u32 %v5736, %v5737
      %v5740 = vsel %vm412, %v5732, %v5739
      %v5741 = vrot.slane %v5736, 4
      %v5743 = vshrl.u32 %v5635, 16
      %v5745 = vrot.slane %v5743, 7
      %v5746 = vshll.u32 %v5635, 16
      %v5748 = vor.u32 %v5745, %v5746
      %v5749 = vrot.slane %v5745, 4
      %v5751 = vshrl.u32 %v5636, 16
      %v5753 = vrot.slane %v5751, 7
      %v5754 = vshll.u32 %v5636, 16
      %v5756 = vor.u32 %v5753, %v5754
      %v5757 = vsel %vm412, %v5749, %v5756
      %v5758 = vrot.slane %v5753, 4
      %v5760 = vshrl.u32 %v5637, 16
      %v5762 = vrot.slane %v5760, 7
      %v5763 = vshll.u32 %v5637, 16
      %v5765 = vor.u32 %v5762, %v5763
      %v5766 = vrot.slane %v5762, 4
      %v5768 = vshrl.u32 %v5638, 16
      %v5770 = vrot.slane %v5768, 7
      %v5771 = vshll.u32 %v5638, 16
      %v5773 = vor.u32 %v5770, %v5771
      %v5774 = vsel %vm412, %v5766, %v5773
      %v5775 = vrot.slane %v5770, 4
      %v5777 = vshrl.u32 %v5639, 16
      %v5779 = vrot.slane %v5777, 7
      %v5780 = vshll.u32 %v5639, 16
      %v5782 = vor.u32 %v5779, %v5780
      %v5783 = vrot.slane %v5779, 4
      %v5785 = vshrl.u32 %v5640, 16
      %v5787 = vrot.slane %v5785, 7
      %v5788 = vshll.u32 %v5640, 16
      %v5790 = vor.u32 %v5787, %v5788
      %v5791 = vsel %vm412, %v5783, %v5790
      %v5792 = vrot.slane %v5787, 4
      %v5794 = vshrl.u32 %v5641, 16
      %v5796 = vrot.slane %v5794, 7
      %v5797 = vshll.u32 %v5641, 16
      %v5799 = vor.u32 %v5796, %v5797
      %v5800 = vrot.slane %v5796, 4
      %v5802 = vshrl.u32 %v5642, 16
      %v5804 = vrot.slane %v5802, 7
      %v5805 = vshll.u32 %v5642, 16
      %v5807 = vor.u32 %v5804, %v5805
      %v5808 = vsel %vm412, %v5800, %v5807
      %v5809 = vrot.slane %v5804, 4
      %v5811 = vshrl.u32 %v5643, 16
      %v5813 = vrot.slane %v5811, 7
      %v5814 = vshll.u32 %v5643, 16
      %v5816 = vor.u32 %v5813, %v5814
      %v5817 = vrot.slane %v5813, 4
      %v5819 = vshrl.u32 %v5644, 16
      %v5821 = vrot.slane %v5819, 7
      %v5822 = vshll.u32 %v5644, 16
      %v5824 = vor.u32 %v5821, %v5822
      %v5825 = vsel %vm412, %v5817, %v5824
      %v5826 = vrot.slane %v5821, 4
      %v5828 = vshrl.u32 %v5645, 16
      %v5830 = vrot.slane %v5828, 7
      %v5831 = vshll.u32 %v5645, 16
      %v5833 = vor.u32 %v5830, %v5831
      %v5834 = vrot.slane %v5830, 4
      %v5836 = vshrl.u32 %v5646, 16
      %v5838 = vrot.slane %v5836, 7
      %v5839 = vshll.u32 %v5646, 16
      %v5841 = vor.u32 %v5838, %v5839
      %v5842 = vsel %vm412, %v5834, %v5841
      %v5843 = vrot.slane %v5838, 4
      %v5845 = vshrl.u32 %v5647, 16
      %v5847 = vrot.slane %v5845, 7
      %v5848 = vshll.u32 %v5647, 16
      %v5850 = vor.u32 %v5847, %v5848
      %v5851 = vrot.slane %v5847, 4
      %v5853 = vshrl.u32 %v5648, 16
      %v5855 = vrot.slane %v5853, 7
      %v5856 = vshll.u32 %v5648, 16
      %v5858 = vor.u32 %v5855, %v5856
      %v5859 = vsel %vm412, %v5851, %v5858
      %v5860 = vrot.slane %v5855, 4
      %v5862 = vshrl.u32 %v5649, 16
      %v5864 = vrot.slane %v5862, 7
      %v5865 = vshll.u32 %v5649, 16
      %v5867 = vor.u32 %v5864, %v5865
      %v5868 = vrot.slane %v5864, 4
      %v5870 = vshrl.u32 %v5650, 16
      %v5872 = vrot.slane %v5870, 7
      %v5873 = vshll.u32 %v5650, 16
      %v5875 = vor.u32 %v5872, %v5873
      %v5876 = vsel %vm412, %v5868, %v5875
      %v5877 = vrot.slane %v5872, 4
      %v5879 = vshrl.u32 %v5651, 16
      %v5881 = vrot.slane %v5879, 7
      %v5882 = vshll.u32 %v5651, 16
      %v5884 = vor.u32 %v5881, %v5882
      %v5885 = vrot.slane %v5881, 4
      %v5887 = vshrl.u32 %v5652, 16
      %v5889 = vrot.slane %v5887, 7
      %v5890 = vshll.u32 %v5652, 16
      %v5892 = vor.u32 %v5889, %v5890
      %v5893 = vsel %vm412, %v5885, %v5892
      %v5894 = vrot.slane %v5889, 4
      %v5896 = vshrl.u32 %v5653, 16
      %v5898 = vrot.slane %v5896, 7
      %v5899 = vshll.u32 %v5653, 16
      %v5901 = vor.u32 %v5898, %v5899
      %v5902 = vrot.slane %v5898, 4
      %v5904 = vshrl.u32 %v5654, 16
      %v5906 = vrot.slane %v5904, 7
      %v5907 = vshll.u32 %v5654, 16
      %v5909 = vor.u32 %v5906, %v5907
      %v5910 = vsel %vm412, %v5902, %v5909
      %v5911 = vrot.slane %v5906, 4
      %v5913 = vshrl.u32 %v5655, 16
      %v5915 = vrot.slane %v5913, 7
      %v5916 = vshll.u32 %v5655, 16
      %v5918 = vor.u32 %v5915, %v5916
      %v5919 = vrot.slane %v5915, 4
      %v5921 = vshrl.u32 %v5656, 16
      %v5923 = vrot.slane %v5921, 7
      %v5924 = vshll.u32 %v5656, 16
      %v5926 = vor.u32 %v5923, %v5924
      %v5927 = vsel %vm412, %v5919, %v5926
      %v5928 = vrot.slane %v5923, 4
      %s5977 = scalar_lea.vmem [#allocation3], 12
      %v5978 = vld [vmem:[%s5977] sm:$0xf]
      %v5979 = vsel %vm736, %v5663, %v5978
      %5980 = vst [vmem:[%s5977] sm:$0xf] %v5979
      %5981 = vst.msk [vmem:[%s5977 + $0x4] sm:$0xf] %vm226, %v5672
      %v5982 = vld [vmem:[%s5977 + $0x8] sm:$0x1]
      %v5983 = vsel %vm742, %v5673, %v5982
      %5984 = vst [vmem:[%s5977 + $0x8] sm:$0x1] %v5983
      %v5985 = vld [vmem:[%s5977 + $0xc] sm:$0xf]
      %v5986 = vsel %vm736, %v5680, %v5985
      %5987 = vst [vmem:[%s5977 + $0xc] sm:$0xf] %v5986
      %5988 = vst.msk [vmem:[%s5977 + $0x10] sm:$0xf] %vm226, %v5689
      %v5989 = vld [vmem:[%s5977 + $0x14] sm:$0x1]
      %v5990 = vsel %vm742, %v5690, %v5989
      %5991 = vst [vmem:[%s5977 + $0x14] sm:$0x1] %v5990
      %v5992 = vld [vmem:[%s5977 + $0x18] sm:$0xf]
      %v5993 = vsel %vm736, %v5697, %v5992
      %5994 = vst [vmem:[%s5977 + $0x18] sm:$0xf] %v5993
      %5995 = vst.msk [vmem:[%s5977 + $0x1c] sm:$0xf] %vm226, %v5706
      %v5996 = vld [vmem:[%s5977 + $0x20] sm:$0x1]
      %v5997 = vsel %vm742, %v5707, %v5996
      %5998 = vst [vmem:[%s5977 + $0x20] sm:$0x1] %v5997
      %v5999 = vld [vmem:[%s5977 + $0x24] sm:$0xf]
      %v6000 = vsel %vm736, %v5714, %v5999
      %6001 = vst [vmem:[%s5977 + $0x24] sm:$0xf] %v6000
      %6002 = vst.msk [vmem:[%s5977 + $0x28] sm:$0xf] %vm226, %v5723
      %v6003 = vld [vmem:[%s5977 + $0x2c] sm:$0x1]
      %v6004 = vsel %vm742, %v5724, %v6003
      %6005 = vst [vmem:[%s5977 + $0x2c] sm:$0x1] %v6004
      %v6006 = vld [vmem:[%s5977 + $0x30] sm:$0xf]
      %v6007 = vsel %vm736, %v5731, %v6006
      %6008 = vst [vmem:[%s5977 + $0x30] sm:$0xf] %v6007
      %6009 = vst.msk [vmem:[%s5977 + $0x34] sm:$0xf] %vm226, %v5740
      %v6010 = vld [vmem:[%s5977 + $0x38] sm:$0x1]
      %v6011 = vsel %vm742, %v5741, %v6010
      %6012 = vst [vmem:[%s5977 + $0x38] sm:$0x1] %v6011
      %v6013 = vld [vmem:[%s5977 + $0x3c] sm:$0xf]
      %v6014 = vsel %vm736, %v5748, %v6013
      %6015 = vst [vmem:[%s5977 + $0x3c] sm:$0xf] %v6014
      %6016 = vst.msk [vmem:[%s5977 + $0x40] sm:$0xf] %vm226, %v5757
      %v6017 = vld [vmem:[%s5977 + $0x44] sm:$0x1]
      %v6018 = vsel %vm742, %v5758, %v6017
      %6019 = vst [vmem:[%s5977 + $0x44] sm:$0x1] %v6018
      %v6020 = vld [vmem:[%s5977 + $0x48] sm:$0xf]
      %v6021 = vsel %vm736, %v5765, %v6020
      %6022 = vst [vmem:[%s5977 + $0x48] sm:$0xf] %v6021
      %6023 = vst.msk [vmem:[%s5977 + $0x4c] sm:$0xf] %vm226, %v5774
      %v6024 = vld [vmem:[%s5977 + $0x50] sm:$0x1]
      %v6025 = vsel %vm742, %v5775, %v6024
      %6026 = vst [vmem:[%s5977 + $0x50] sm:$0x1] %v6025
      %v6027 = vld [vmem:[%s5977 + $0x54] sm:$0xf]
      %v6028 = vsel %vm736, %v5782, %v6027
      %6029 = vst [vmem:[%s5977 + $0x54] sm:$0xf] %v6028
      %6030 = vst.msk [vmem:[%s5977 + $0x58] sm:$0xf] %vm226, %v5791
      %v6031 = vld [vmem:[%s5977 + $0x5c] sm:$0x1]
      %v6032 = vsel %vm742, %v5792, %v6031
      %6033 = vst [vmem:[%s5977 + $0x5c] sm:$0x1] %v6032
      %v6034 = vld [vmem:[%s5977 + $0x60] sm:$0xf]
      %v6035 = vsel %vm736, %v5799, %v6034
      %6036 = vst [vmem:[%s5977 + $0x60] sm:$0xf] %v6035
      %6037 = vst.msk [vmem:[%s5977 + $0x64] sm:$0xf] %vm226, %v5808
      %v6038 = vld [vmem:[%s5977 + $0x68] sm:$0x1]
      %v6039 = vsel %vm742, %v5809, %v6038
      %6040 = vst [vmem:[%s5977 + $0x68] sm:$0x1] %v6039
      %v6041 = vld [vmem:[%s5977 + $0x6c] sm:$0xf]
      %v6042 = vsel %vm736, %v5816, %v6041
      %6043 = vst [vmem:[%s5977 + $0x6c] sm:$0xf] %v6042
      %6044 = vst.msk [vmem:[%s5977 + $0x70] sm:$0xf] %vm226, %v5825
      %v6045 = vld [vmem:[%s5977 + $0x74] sm:$0x1]
      %v6046 = vsel %vm742, %v5826, %v6045
      %6047 = vst [vmem:[%s5977 + $0x74] sm:$0x1] %v6046
      %v6048 = vld [vmem:[%s5977 + $0x78] sm:$0xf]
      %v6049 = vsel %vm736, %v5833, %v6048
      %6050 = vst [vmem:[%s5977 + $0x78] sm:$0xf] %v6049
      %6051 = vst.msk [vmem:[%s5977 + $0x7c] sm:$0xf] %vm226, %v5842
      %v6052 = vld [vmem:[%s5977 + $0x80] sm:$0x1]
      %v6053 = vsel %vm742, %v5843, %v6052
      %6054 = vst [vmem:[%s5977 + $0x80] sm:$0x1] %v6053
      %v6055 = vld [vmem:[%s5977 + $0x84] sm:$0xf]
      %v6056 = vsel %vm736, %v5850, %v6055
      %6057 = vst [vmem:[%s5977 + $0x84] sm:$0xf] %v6056
      %6058 = vst.msk [vmem:[%s5977 + $0x88] sm:$0xf] %vm226, %v5859
      %v6059 = vld [vmem:[%s5977 + $0x8c] sm:$0x1]
      %v6060 = vsel %vm742, %v5860, %v6059
      %6061 = vst [vmem:[%s5977 + $0x8c] sm:$0x1] %v6060
      %v6062 = vld [vmem:[%s5977 + $0x90] sm:$0xf]
      %v6063 = vsel %vm736, %v5867, %v6062
      %6064 = vst [vmem:[%s5977 + $0x90] sm:$0xf] %v6063
      %6065 = vst.msk [vmem:[%s5977 + $0x94] sm:$0xf] %vm226, %v5876
      %v6066 = vld [vmem:[%s5977 + $0x98] sm:$0x1]
      %v6067 = vsel %vm742, %v5877, %v6066
      %6068 = vst [vmem:[%s5977 + $0x98] sm:$0x1] %v6067
      %v6069 = vld [vmem:[%s5977 + $0x9c] sm:$0xf]
      %v6070 = vsel %vm736, %v5884, %v6069
      %6071 = vst [vmem:[%s5977 + $0x9c] sm:$0xf] %v6070
      %6072 = vst.msk [vmem:[%s5977 + $0xa0] sm:$0xf] %vm226, %v5893
      %v6073 = vld [vmem:[%s5977 + $0xa4] sm:$0x1]
      %v6074 = vsel %vm742, %v5894, %v6073
      %6075 = vst [vmem:[%s5977 + $0xa4] sm:$0x1] %v6074
      %v6076 = vld [vmem:[%s5977 + $0xa8] sm:$0xf]
      %v6077 = vsel %vm736, %v5901, %v6076
      %6078 = vst [vmem:[%s5977 + $0xa8] sm:$0xf] %v6077
      %6079 = vst.msk [vmem:[%s5977 + $0xac] sm:$0xf] %vm226, %v5910
      %v6080 = vld [vmem:[%s5977 + $0xb0] sm:$0x1]
      %v6081 = vsel %vm742, %v5911, %v6080
      %6082 = vst [vmem:[%s5977 + $0xb0] sm:$0x1] %v6081
      %v6083 = vld [vmem:[%s5977 + $0xb4] sm:$0xf]
      %v6084 = vsel %vm736, %v5918, %v6083
      %6085 = vst [vmem:[%s5977 + $0xb4] sm:$0xf] %v6084
      %6086 = vst.msk [vmem:[%s5977 + $0xb8] sm:$0xf] %vm226, %v5927
      %v6087 = vld [vmem:[%s5977 + $0xbc] sm:$0x1]
      %v6088 = vsel %vm742, %v5928, %v6087
      %6089 = vst [vmem:[%s5977 + $0xbc] sm:$0x1] %v6088
      %v6090 = vld [vmem:[#allocation3] sm:$0xf]
      %v6091 = vld [vmem:[#allocation3 + $0x4] sm:$0xf]
      %v6092 = vld [vmem:[#allocation3 + $0xc] sm:$0xf]
      %v6093 = vld [vmem:[#allocation3 + $0x10] sm:$0xf]
      %v6094 = vld [vmem:[#allocation3 + $0x18] sm:$0xf]
      %v6095 = vld [vmem:[#allocation3 + $0x1c] sm:$0xf]
      %v6096 = vld [vmem:[#allocation3 + $0x24] sm:$0xf]
      %v6097 = vld [vmem:[#allocation3 + $0x28] sm:$0xf]
      %v6098 = vld [vmem:[#allocation3 + $0x30] sm:$0xf]
      %v6099 = vld [vmem:[#allocation3 + $0x34] sm:$0xf]
      %v6100 = vld [vmem:[#allocation3 + $0x3c] sm:$0xf]
      %v6101 = vld [vmem:[#allocation3 + $0x40] sm:$0xf]
      %v6102 = vld [vmem:[#allocation3 + $0x48] sm:$0xf]
      %v6103 = vld [vmem:[#allocation3 + $0x4c] sm:$0xf]
      %v6104 = vld [vmem:[#allocation3 + $0x54] sm:$0xf]
      %v6105 = vld [vmem:[#allocation3 + $0x58] sm:$0xf]
      %v6106 = vld [vmem:[#allocation3 + $0x60] sm:$0xf]
      %v6107 = vld [vmem:[#allocation3 + $0x64] sm:$0xf]
      %v6108 = vld [vmem:[#allocation3 + $0x6c] sm:$0xf]
      %v6109 = vld [vmem:[#allocation3 + $0x70] sm:$0xf]
      %v6110 = vld [vmem:[#allocation3 + $0x78] sm:$0xf]
      %v6111 = vld [vmem:[#allocation3 + $0x7c] sm:$0xf]
      %v6112 = vld [vmem:[#allocation3 + $0x84] sm:$0xf]
      %v6113 = vld [vmem:[#allocation3 + $0x88] sm:$0xf]
      %v6114 = vld [vmem:[#allocation3 + $0x90] sm:$0xf]
      %v6115 = vld [vmem:[#allocation3 + $0x94] sm:$0xf]
      %v6116 = vld [vmem:[#allocation3 + $0x9c] sm:$0xf]
      %v6117 = vld [vmem:[#allocation3 + $0xa0] sm:$0xf]
      %v6118 = vld [vmem:[#allocation3 + $0xa8] sm:$0xf]
      %v6119 = vld [vmem:[#allocation3 + $0xac] sm:$0xf]
      %v6120 = vld [vmem:[#allocation3 + $0xb4] sm:$0xf]
      %v6121 = vld [vmem:[#allocation3 + $0xb8] sm:$0xf]
      %v6122 = vld [vmem:[%s3] sm:$0xf]
      %v6123 = vld [vmem:[%s3 + $0x4] sm:$0xf]
      %v6124 = vld [vmem:[#allocation3 + $0x8] sm:$0x1]
      %v6125 = vld [vmem:[#allocation3 + $0x14] sm:$0x1]
      %v6126 = vld [vmem:[#allocation3 + $0x20] sm:$0x1]
      %v6127 = vld [vmem:[#allocation3 + $0x2c] sm:$0x1]
      %v6128 = vld [vmem:[#allocation3 + $0x38] sm:$0x1]
      %v6129 = vld [vmem:[#allocation3 + $0x44] sm:$0x1]
      %v6130 = vld [vmem:[#allocation3 + $0x50] sm:$0x1]
      %v6131 = vld [vmem:[#allocation3 + $0x5c] sm:$0x1]
      %v6132 = vld [vmem:[#allocation3 + $0x68] sm:$0x1]
      %v6133 = vld [vmem:[#allocation3 + $0x74] sm:$0x1]
      %v6134 = vld [vmem:[#allocation3 + $0x80] sm:$0x1]
      %v6135 = vld [vmem:[#allocation3 + $0x8c] sm:$0x1]
      %v6136 = vld [vmem:[#allocation3 + $0x98] sm:$0x1]
      %v6137 = vld [vmem:[#allocation3 + $0xa4] sm:$0x1]
      %v6138 = vld [vmem:[#allocation3 + $0xb0] sm:$0x1]
      %v6139 = vld [vmem:[#allocation3 + $0xbc] sm:$0x1]
      %v6141 = vshrl.u32 %v6090, 16
      %v6143 = vrot.slane %v6141, 4
      %v6144 = vshll.u32 %v6090, 16
      %v6146 = vrot.slane %v6144, 5
      %v6147 = vor.u32 %v6143, %v6146
      %v6148 = vrot.slane %v6147, 4
      %v6150 = vshll.u32 %v6091, 16
      %v6152 = vrot.slane %v6150, 5
      %v6153 = vsel %vm903, %v6148, %v6152
      %v6154 = vshrl.u32 %v6091, 16
      %v6156 = vrot.slane %v6154, 4
      %v6157 = vor.u32 %v6156, %v6152
      %v6158 = vrot.slane %v6157, 4
      %v6160 = vshll.u32 %v6124, 16
      %v6162 = vrot.slane %v6160, 5
      %v6163 = vsel %vm903, %v6158, %v6162
      %v6165 = vshrl.u32 %v6092, 16
      %v6167 = vrot.slane %v6165, 4
      %v6168 = vshll.u32 %v6092, 16
      %v6170 = vrot.slane %v6168, 5
      %v6171 = vor.u32 %v6167, %v6170
      %v6172 = vrot.slane %v6171, 4
      %v6174 = vshll.u32 %v6093, 16
      %v6176 = vrot.slane %v6174, 5
      %v6177 = vsel %vm903, %v6172, %v6176
      %v6178 = vshrl.u32 %v6093, 16
      %v6180 = vrot.slane %v6178, 4
      %v6181 = vor.u32 %v6180, %v6176
      %v6182 = vrot.slane %v6181, 4
      %v6184 = vshll.u32 %v6125, 16
      %v6186 = vrot.slane %v6184, 5
      %v6187 = vsel %vm903, %v6182, %v6186
      %v6189 = vshrl.u32 %v6094, 16
      %v6191 = vrot.slane %v6189, 4
      %v6192 = vshll.u32 %v6094, 16
      %v6194 = vrot.slane %v6192, 5
      %v6195 = vor.u32 %v6191, %v6194
      %v6196 = vrot.slane %v6195, 4
      %v6198 = vshll.u32 %v6095, 16
      %v6200 = vrot.slane %v6198, 5
      %v6201 = vsel %vm903, %v6196, %v6200
      %v6202 = vshrl.u32 %v6095, 16
      %v6204 = vrot.slane %v6202, 4
      %v6205 = vor.u32 %v6204, %v6200
      %v6206 = vrot.slane %v6205, 4
      %v6208 = vshll.u32 %v6126, 16
      %v6210 = vrot.slane %v6208, 5
      %v6211 = vsel %vm903, %v6206, %v6210
      %v6213 = vshrl.u32 %v6096, 16
      %v6215 = vrot.slane %v6213, 4
      %v6216 = vshll.u32 %v6096, 16
      %v6218 = vrot.slane %v6216, 5
      %v6219 = vor.u32 %v6215, %v6218
      %v6220 = vrot.slane %v6219, 4
      %v6222 = vshll.u32 %v6097, 16
      %v6224 = vrot.slane %v6222, 5
      %v6225 = vsel %vm903, %v6220, %v6224
      %v6226 = vshrl.u32 %v6097, 16
      %v6228 = vrot.slane %v6226, 4
      %v6229 = vor.u32 %v6228, %v6224
      %v6230 = vrot.slane %v6229, 4
      %v6232 = vshll.u32 %v6127, 16
      %v6234 = vrot.slane %v6232, 5
      %v6235 = vsel %vm903, %v6230, %v6234
      %v6237 = vshrl.u32 %v6098, 16
      %v6239 = vrot.slane %v6237, 4
      %v6240 = vshll.u32 %v6098, 16
      %v6242 = vrot.slane %v6240, 5
      %v6243 = vor.u32 %v6239, %v6242
      %v6244 = vrot.slane %v6243, 4
      %v6246 = vshll.u32 %v6099, 16
      %v6248 = vrot.slane %v6246, 5
      %v6249 = vsel %vm903, %v6244, %v6248
      %v6250 = vshrl.u32 %v6099, 16
      %v6252 = vrot.slane %v6250, 4
      %v6253 = vor.u32 %v6252, %v6248
      %v6254 = vrot.slane %v6253, 4
      %v6256 = vshll.u32 %v6128, 16
      %v6258 = vrot.slane %v6256, 5
      %v6259 = vsel %vm903, %v6254, %v6258
      %v6261 = vshrl.u32 %v6100, 16
      %v6263 = vrot.slane %v6261, 4
      %v6264 = vshll.u32 %v6100, 16
      %v6266 = vrot.slane %v6264, 5
      %v6267 = vor.u32 %v6263, %v6266
      %v6268 = vrot.slane %v6267, 4
      %v6270 = vshll.u32 %v6101, 16
      %v6272 = vrot.slane %v6270, 5
      %v6273 = vsel %vm903, %v6268, %v6272
      %v6274 = vshrl.u32 %v6101, 16
      %v6276 = vrot.slane %v6274, 4
      %v6277 = vor.u32 %v6276, %v6272
      %v6278 = vrot.slane %v6277, 4
      %v6280 = vshll.u32 %v6129, 16
      %v6282 = vrot.slane %v6280, 5
      %v6283 = vsel %vm903, %v6278, %v6282
      %v6285 = vshrl.u32 %v6102, 16
      %v6287 = vrot.slane %v6285, 4
      %v6288 = vshll.u32 %v6102, 16
      %v6290 = vrot.slane %v6288, 5
      %v6291 = vor.u32 %v6287, %v6290
      %v6292 = vrot.slane %v6291, 4
      %v6294 = vshll.u32 %v6103, 16
      %v6296 = vrot.slane %v6294, 5
      %v6297 = vsel %vm903, %v6292, %v6296
      %v6298 = vshrl.u32 %v6103, 16
      %v6300 = vrot.slane %v6298, 4
      %v6301 = vor.u32 %v6300, %v6296
      %v6302 = vrot.slane %v6301, 4
      %v6304 = vshll.u32 %v6130, 16
      %v6306 = vrot.slane %v6304, 5
      %v6307 = vsel %vm903, %v6302, %v6306
      %v6309 = vshrl.u32 %v6104, 16
      %v6311 = vrot.slane %v6309, 4
      %v6312 = vshll.u32 %v6104, 16
      %v6314 = vrot.slane %v6312, 5
      %v6315 = vor.u32 %v6311, %v6314
      %v6316 = vrot.slane %v6315, 4
      %v6318 = vshll.u32 %v6105, 16
      %v6320 = vrot.slane %v6318, 5
      %v6321 = vsel %vm903, %v6316, %v6320
      %v6322 = vshrl.u32 %v6105, 16
      %v6324 = vrot.slane %v6322, 4
      %v6325 = vor.u32 %v6324, %v6320
      %v6326 = vrot.slane %v6325, 4
      %v6328 = vshll.u32 %v6131, 16
      %v6330 = vrot.slane %v6328, 5
      %v6331 = vsel %vm903, %v6326, %v6330
      %v6333 = vshrl.u32 %v6106, 16
      %v6335 = vrot.slane %v6333, 4
      %v6336 = vshll.u32 %v6106, 16
      %v6338 = vrot.slane %v6336, 5
      %v6339 = vor.u32 %v6335, %v6338
      %v6340 = vrot.slane %v6339, 4
      %v6342 = vshll.u32 %v6107, 16
      %v6344 = vrot.slane %v6342, 5
      %v6345 = vsel %vm903, %v6340, %v6344
      %v6346 = vshrl.u32 %v6107, 16
      %v6348 = vrot.slane %v6346, 4
      %v6349 = vor.u32 %v6348, %v6344
      %v6350 = vrot.slane %v6349, 4
      %v6352 = vshll.u32 %v6132, 16
      %v6354 = vrot.slane %v6352, 5
      %v6355 = vsel %vm903, %v6350, %v6354
      %v6357 = vshrl.u32 %v6108, 16
      %v6359 = vrot.slane %v6357, 4
      %v6360 = vshll.u32 %v6108, 16
      %v6362 = vrot.slane %v6360, 5
      %v6363 = vor.u32 %v6359, %v6362
      %v6364 = vrot.slane %v6363, 4
      %v6366 = vshll.u32 %v6109, 16
      %v6368 = vrot.slane %v6366, 5
      %v6369 = vsel %vm903, %v6364, %v6368
      %v6370 = vshrl.u32 %v6109, 16
      %v6372 = vrot.slane %v6370, 4
      %v6373 = vor.u32 %v6372, %v6368
      %v6374 = vrot.slane %v6373, 4
      %v6376 = vshll.u32 %v6133, 16
      %v6378 = vrot.slane %v6376, 5
      %v6379 = vsel %vm903, %v6374, %v6378
      %v6381 = vshrl.u32 %v6110, 16
      %v6383 = vrot.slane %v6381, 4
      %v6384 = vshll.u32 %v6110, 16
      %v6386 = vrot.slane %v6384, 5
      %v6387 = vor.u32 %v6383, %v6386
      %v6388 = vrot.slane %v6387, 4
      %v6390 = vshll.u32 %v6111, 16
      %v6392 = vrot.slane %v6390, 5
      %v6393 = vsel %vm903, %v6388, %v6392
      %v6394 = vshrl.u32 %v6111, 16
      %v6396 = vrot.slane %v6394, 4
      %v6397 = vor.u32 %v6396, %v6392
      %v6398 = vrot.slane %v6397, 4
      %v6400 = vshll.u32 %v6134, 16
      %v6402 = vrot.slane %v6400, 5
      %v6403 = vsel %vm903, %v6398, %v6402
      %v6405 = vshrl.u32 %v6112, 16
      %v6407 = vrot.slane %v6405, 4
      %v6408 = vshll.u32 %v6112, 16
      %v6410 = vrot.slane %v6408, 5
      %v6411 = vor.u32 %v6407, %v6410
      %v6412 = vrot.slane %v6411, 4
      %v6414 = vshll.u32 %v6113, 16
      %v6416 = vrot.slane %v6414, 5
      %v6417 = vsel %vm903, %v6412, %v6416
      %v6418 = vshrl.u32 %v6113, 16
      %v6420 = vrot.slane %v6418, 4
      %v6421 = vor.u32 %v6420, %v6416
      %v6422 = vrot.slane %v6421, 4
      %v6424 = vshll.u32 %v6135, 16
      %v6426 = vrot.slane %v6424, 5
      %v6427 = vsel %vm903, %v6422, %v6426
      %v6429 = vshrl.u32 %v6114, 16
      %v6431 = vrot.slane %v6429, 4
      %v6432 = vshll.u32 %v6114, 16
      %v6434 = vrot.slane %v6432, 5
      %v6435 = vor.u32 %v6431, %v6434
      %v6436 = vrot.slane %v6435, 4
      %v6438 = vshll.u32 %v6115, 16
      %v6440 = vrot.slane %v6438, 5
      %v6441 = vsel %vm903, %v6436, %v6440
      %v6442 = vshrl.u32 %v6115, 16
      %v6444 = vrot.slane %v6442, 4
      %v6445 = vor.u32 %v6444, %v6440
      %v6446 = vrot.slane %v6445, 4
      %v6448 = vshll.u32 %v6136, 16
      %v6450 = vrot.slane %v6448, 5
      %v6451 = vsel %vm903, %v6446, %v6450
      %v6453 = vshrl.u32 %v6116, 16
      %v6455 = vrot.slane %v6453, 4
      %v6456 = vshll.u32 %v6116, 16
      %v6458 = vrot.slane %v6456, 5
      %v6459 = vor.u32 %v6455, %v6458
      %v6460 = vrot.slane %v6459, 4
      %v6462 = vshll.u32 %v6117, 16
      %v6464 = vrot.slane %v6462, 5
      %v6465 = vsel %vm903, %v6460, %v6464
      %v6466 = vshrl.u32 %v6117, 16
      %v6468 = vrot.slane %v6466, 4
      %v6469 = vor.u32 %v6468, %v6464
      %v6470 = vrot.slane %v6469, 4
      %v6472 = vshll.u32 %v6137, 16
      %v6474 = vrot.slane %v6472, 5
      %v6475 = vsel %vm903, %v6470, %v6474
      %v6477 = vshrl.u32 %v6118, 16
      %v6479 = vrot.slane %v6477, 4
      %v6480 = vshll.u32 %v6118, 16
      %v6482 = vrot.slane %v6480, 5
      %v6483 = vor.u32 %v6479, %v6482
      %v6484 = vrot.slane %v6483, 4
      %v6486 = vshll.u32 %v6119, 16
      %v6488 = vrot.slane %v6486, 5
      %v6489 = vsel %vm903, %v6484, %v6488
      %v6490 = vshrl.u32 %v6119, 16
      %v6492 = vrot.slane %v6490, 4
      %v6493 = vor.u32 %v6492, %v6488
      %v6494 = vrot.slane %v6493, 4
      %v6496 = vshll.u32 %v6138, 16
      %v6498 = vrot.slane %v6496, 5
      %v6499 = vsel %vm903, %v6494, %v6498
      %v6501 = vshrl.u32 %v6120, 16
      %v6503 = vrot.slane %v6501, 4
      %v6504 = vshll.u32 %v6120, 16
      %v6506 = vrot.slane %v6504, 5
      %v6507 = vor.u32 %v6503, %v6506
      %v6508 = vrot.slane %v6507, 4
      %v6510 = vshll.u32 %v6121, 16
      %v6512 = vrot.slane %v6510, 5
      %v6513 = vsel %vm903, %v6508, %v6512
      %v6514 = vshrl.u32 %v6121, 16
      %v6516 = vrot.slane %v6514, 4
      %v6517 = vor.u32 %v6516, %v6512
      %v6518 = vrot.slane %v6517, 4
      %v6520 = vshll.u32 %v6139, 16
      %v6522 = vrot.slane %v6520, 5
      %v6523 = vsel %vm903, %v6518, %v6522
      %v6524 = vld [vmem:[%s3 + $0x8] sm:$0xf]
      %v6525 = vld [vmem:[%s3 + $0xc] sm:$0xf]
      %v6526 = vunpack.c.l.b16 %v6153
      %v6527 = vunpack.c.l.b16 %v6163
      %v6528 = vunpack.c.l.b16 %v6177
      %v6529 = vunpack.c.l.b16 %v6187
      %v6530 = vunpack.c.l.b16 %v6201
      %v6531 = vunpack.c.l.b16 %v6211
      %v6532 = vunpack.c.l.b16 %v6225
      %v6533 = vunpack.c.l.b16 %v6235
      %v6534 = vunpack.c.l.b16 %v6249
      %v6535 = vunpack.c.l.b16 %v6259
      %v6536 = vunpack.c.l.b16 %v6273
      %v6537 = vunpack.c.l.b16 %v6283
      %v6538 = vunpack.c.l.b16 %v6297
      %v6539 = vunpack.c.l.b16 %v6307
      %v6540 = vunpack.c.l.b16 %v6321
      %v6541 = vunpack.c.l.b16 %v6331
      %v6542 = vunpack.c.l.b16 %v6345
      %v6543 = vunpack.c.l.b16 %v6355
      %v6544 = vunpack.c.l.b16 %v6369
      %v6545 = vunpack.c.l.b16 %v6379
      %v6546 = vunpack.c.l.b16 %v6393
      %v6547 = vunpack.c.l.b16 %v6403
      %v6548 = vunpack.c.l.b16 %v6417
      %v6549 = vunpack.c.l.b16 %v6427
      %v6550 = vunpack.c.l.b16 %v6441
      %v6551 = vunpack.c.l.b16 %v6451
      %v6552 = vunpack.c.l.b16 %v6465
      %v6553 = vunpack.c.l.b16 %v6475
      %v6554 = vunpack.c.l.b16 %v6489
      %v6555 = vunpack.c.l.b16 %v6499
      %v6556 = vunpack.c.l.b16 %v6513
      %v6557 = vunpack.c.l.b16 %v6523
      %v6558 = vpack.c.b16 %v6527, %v6526
      %v6559 = vpack.c.b16 %v6529, %v6528
      %v6560 = vpack.c.b16 %v6531, %v6530
      %v6561 = vpack.c.b16 %v6533, %v6532
      %v6562 = vpack.c.b16 %v6535, %v6534
      %v6563 = vpack.c.b16 %v6537, %v6536
      %v6564 = vpack.c.b16 %v6539, %v6538
      %v6565 = vpack.c.b16 %v6541, %v6540
      %v6566 = vpack.c.b16 %v6543, %v6542
      %v6567 = vpack.c.b16 %v6545, %v6544
      %v6568 = vpack.c.b16 %v6547, %v6546
      %v6569 = vpack.c.b16 %v6549, %v6548
      %v6570 = vpack.c.b16 %v6551, %v6550
      %v6571 = vpack.c.b16 %v6553, %v6552
      %v6572 = vpack.c.b16 %v6555, %v6554
      %v6573 = vpack.c.b16 %v6557, %v6556
      %v6576 = vunpack.c.l.b16 %v6524
      %v6577 = vunpack.c.l.b16 %v6525
      %v6578 = vpack.c.b16 %v6577, %v6576
      %v6581 = vsel %vm1344, %v6558, 0
      %v6584 = vsel %vm1344, %v6559, 0
      %v6587 = vsel %vm1344, %v6560, 0
      %v6590 = vsel %vm1344, %v6561, 0
      %v6593 = vsel %vm1344, %v6562, 0
      %v6596 = vsel %vm1344, %v6563, 0
      %v6599 = vsel %vm1344, %v6564, 0
      %v6602 = vsel %vm1344, %v6565, 0
      %v6605 = vsel %vm1344, %v6566, 0
      %v6608 = vsel %vm1344, %v6567, 0
      %v6611 = vsel %vm1344, %v6568, 0
      %v6614 = vsel %vm1344, %v6569, 0
      %v6617 = vsel %vm1344, %v6570, 0
      %v6620 = vsel %vm1344, %v6571, 0
      %v6623 = vsel %vm1344, %v6572, 0
      %v6626 = vsel %vm1344, %v6573, 0
      %6628 = vmatprep.subr.bf16.mxu0 0
      %6629 = vmatpush1.bf16.msra.mxu0 %v6578
      %6630 = vmatprep.subr.bf16.mxu0 0
      %6631 = vmatpush1.bf16.msra.mxu0 0
      %6632 = vmatprep.subr.bf16.mxu0 0
      %6633 = vmatpush1.bf16.msra.mxu0 0
      %6634 = vmatprep.subr.bf16.mxu0 0
      %6635 = vmatpush1.bf16.msra.mxu0 0
      %6636 = vmatprep.subr.bf16.mxu0 0
      %6637 = vmatpush1.bf16.msra.mxu0 0
      %6638 = vmatprep.subr.bf16.mxu0 0
      %6639 = vmatpush1.bf16.msra.mxu0 0
      %6640 = vmatprep.subr.bf16.mxu0 0
      %6641 = vmatpush1.bf16.msra.mxu0 0
      %6642 = vmatprep.subr.bf16.mxu0 0
      %6643 = vmatpush1.bf16.msra.mxu0 0
      %6644 = vmatprep.subr.bf16.mxu0 0
      %6645 = vmatpush1.bf16.msra.mxu0 0
      %6646 = vmatprep.subr.bf16.mxu0 0
      %6647 = vmatpush1.bf16.msra.mxu0 0
      %6648 = vmatprep.subr.bf16.mxu0 0
      %6649 = vmatpush1.bf16.msra.mxu0 0
      %6650 = vmatprep.subr.bf16.mxu0 0
      %6651 = vmatpush1.bf16.msra.mxu0 0
      %6652 = vmatprep.subr.bf16.mxu0 0
      %6653 = vmatpush1.bf16.msra.mxu0 0
      %6654 = vmatprep.subr.bf16.mxu0 0
      %6655 = vmatpush1.bf16.msra.mxu0 0
      %6656 = vmatprep.subr.bf16.mxu0 0
      %6657 = vmatpush1.bf16.msra.mxu0 0
      %6658 = vmatprep.subr.bf16.mxu0 0
      %6659 = vmatpush1.bf16.msra.mxu0 0
      %6660 = vmatprep.mubr.bf16.mxu0 0
      %6661 = vmatmul.mubr.bf16.gmra.mrb[0].mxu0 %v6581
      %v6662 = vpop.f32.mrb[0].mxu0
      %v6663 = vadd.f32 0.0, %v6662
      %v6664 = vpop.f32.mrb[0].mxu0
      %v6665 = vpop.f32.mrb[0].mxu0
      %v6666 = vadd.f32 0.0, %v6665
      %v6667 = vpop.f32.mrb[0].mxu0
      %6668 = vmatprep.mubr.bf16.mxu0 0
      %6669 = vmatmul.mubr.bf16.gmra.mrb[0].mxu0 %v6584
      %v6670 = vpop.f32.mrb[0].mxu0
      %v6671 = vadd.f32 0.0, %v6670
      %v6672 = vpop.f32.mrb[0].mxu0
      %v6673 = vpop.f32.mrb[0].mxu0
      %v6674 = vadd.f32 0.0, %v6673
      %v6675 = vpop.f32.mrb[0].mxu0
      %6676 = vmatprep.mubr.bf16.mxu0 0
      %6677 = vmatmul.mubr.bf16.gmra.mrb[0].mxu0 %v6587
      %v6678 = vpop.f32.mrb[0].mxu0
      %v6679 = vadd.f32 0.0, %v6678
      %v6680 = vpop.f32.mrb[0].mxu0
      %v6681 = vpop.f32.mrb[0].mxu0
      %v6682 = vadd.f32 0.0, %v6681
      %v6683 = vpop.f32.mrb[0].mxu0
      %6684 = vmatprep.mubr.bf16.mxu0 0
      %6685 = vmatmul.mubr.bf16.gmra.mrb[0].mxu0 %v6590
      %v6686 = vpop.f32.mrb[0].mxu0
      %v6687 = vadd.f32 0.0, %v6686
      %v6688 = vpop.f32.mrb[0].mxu0
      %v6689 = vpop.f32.mrb[0].mxu0
      %v6690 = vadd.f32 0.0, %v6689
      %v6691 = vpop.f32.mrb[0].mxu0
      %6692 = vmatprep.mubr.bf16.mxu0 0
      %6693 = vmatmul.mubr.bf16.gmra.mrb[0].mxu0 %v6593
      %v6694 = vpop.f32.mrb[0].mxu0
      %v6695 = vadd.f32 0.0, %v6694
      %v6696 = vpop.f32.mrb[0].mxu0
      %v6697 = vpop.f32.mrb[0].mxu0
      %v6698 = vadd.f32 0.0, %v6697
      %v6699 = vpop.f32.mrb[0].mxu0
      %6700 = vmatprep.mubr.bf16.mxu0 0
      %6701 = vmatmul.mubr.bf16.gmra.mrb[0].mxu0 %v6596
      %v6702 = vpop.f32.mrb[0].mxu0
      %v6703 = vadd.f32 0.0, %v6702
      %v6704 = vpop.f32.mrb[0].mxu0
      %v6705 = vpop.f32.mrb[0].mxu0
      %v6706 = vadd.f32 0.0, %v6705
      %v6707 = vpop.f32.mrb[0].mxu0
      %6708 = vmatprep.mubr.bf16.mxu0 0
      %6709 = vmatmul.mubr.bf16.gmra.mrb[0].mxu0 %v6599
      %v6710 = vpop.f32.mrb[0].mxu0
      %v6711 = vadd.f32 0.0, %v6710
      %v6712 = vpop.f32.mrb[0].mxu0
      %v6713 = vpop.f32.mrb[0].mxu0
      %v6714 = vadd.f32 0.0, %v6713
      %v6715 = vpop.f32.mrb[0].mxu0
      %6716 = vmatprep.mubr.bf16.mxu0 0
      %6717 = vmatmul.mubr.bf16.gmra.mrb[0].mxu0 %v6602
      %v6718 = vpop.f32.mrb[0].mxu0
      %v6719 = vadd.f32 0.0, %v6718
      %v6720 = vpop.f32.mrb[0].mxu0
      %v6721 = vpop.f32.mrb[0].mxu0
      %v6722 = vadd.f32 0.0, %v6721
      %v6723 = vpop.f32.mrb[0].mxu0
      %6724 = vmatprep.mubr.bf16.mxu0 0
      %6725 = vmatmul.mubr.bf16.gmra.mrb[0].mxu0 %v6605
      %v6726 = vpop.f32.mrb[0].mxu0
      %v6727 = vadd.f32 0.0, %v6726
      %v6728 = vpop.f32.mrb[0].mxu0
      %v6729 = vpop.f32.mrb[0].mxu0
      %v6730 = vadd.f32 0.0, %v6729
      %v6731 = vpop.f32.mrb[0].mxu0
      %6732 = vmatprep.mubr.bf16.mxu0 0
      %6733 = vmatmul.mubr.bf16.gmra.mrb[0].mxu0 %v6608
      %v6734 = vpop.f32.mrb[0].mxu0
      %v6735 = vadd.f32 0.0, %v6734
      %v6736 = vpop.f32.mrb[0].mxu0
      %v6737 = vpop.f32.mrb[0].mxu0
      %v6738 = vadd.f32 0.0, %v6737
      %v6739 = vpop.f32.mrb[0].mxu0
      %6740 = vmatprep.mubr.bf16.mxu0 0
      %6741 = vmatmul.mubr.bf16.gmra.mrb[0].mxu0 %v6611
      %v6742 = vpop.f32.mrb[0].mxu0
      %v6743 = vadd.f32 0.0, %v6742
      %v6744 = vpop.f32.mrb[0].mxu0
      %v6745 = vpop.f32.mrb[0].mxu0
      %v6746 = vadd.f32 0.0, %v6745
      %v6747 = vpop.f32.mrb[0].mxu0
      %6748 = vmatprep.mubr.bf16.mxu0 0
      %6749 = vmatmul.mubr.bf16.gmra.mrb[0].mxu0 %v6614
      %v6750 = vpop.f32.mrb[0].mxu0
      %v6751 = vadd.f32 0.0, %v6750
      %v6752 = vpop.f32.mrb[0].mxu0
      %v6753 = vpop.f32.mrb[0].mxu0
      %v6754 = vadd.f32 0.0, %v6753
      %v6755 = vpop.f32.mrb[0].mxu0
      %6756 = vmatprep.mubr.bf16.mxu0 0
      %6757 = vmatmul.mubr.bf16.gmra.mrb[0].mxu0 %v6617
      %v6758 = vpop.f32.mrb[0].mxu0
      %v6759 = vadd.f32 0.0, %v6758
      %v6760 = vpop.f32.mrb[0].mxu0
      %v6761 = vpop.f32.mrb[0].mxu0
      %v6762 = vadd.f32 0.0, %v6761
      %v6763 = vpop.f32.mrb[0].mxu0
      %6764 = vmatprep.mubr.bf16.mxu0 0
      %6765 = vmatmul.mubr.bf16.gmra.mrb[0].mxu0 %v6620
      %v6766 = vpop.f32.mrb[0].mxu0
      %v6767 = vadd.f32 0.0, %v6766
      %v6768 = vpop.f32.mrb[0].mxu0
      %v6769 = vpop.f32.mrb[0].mxu0
      %v6770 = vadd.f32 0.0, %v6769
      %v6771 = vpop.f32.mrb[0].mxu0
      %6772 = vmatprep.mubr.bf16.mxu0 0
      %6773 = vmatmul.mubr.bf16.gmra.mrb[0].mxu0 %v6623
      %v6774 = vpop.f32.mrb[0].mxu0
      %v6775 = vadd.f32 0.0, %v6774
      %v6776 = vpop.f32.mrb[0].mxu0
      %v6777 = vpop.f32.mrb[0].mxu0
      %v6778 = vadd.f32 0.0, %v6777
      %v6779 = vpop.f32.mrb[0].mxu0
      %6780 = vmatprep.mubr.bf16.mxu0 0
      %6781 = vmatmul.mubr.bf16.gmra.mrb[0].mxu0 %v6626
      %v6782 = vpop.f32.mrb[0].mxu0
      %v6783 = vadd.f32 0.0, %v6782
      %v6784 = vpop.f32.mrb[0].mxu0
      %v6785 = vpop.f32.mrb[0].mxu0
      %v6786 = vadd.f32 0.0, %v6785
      %v6787 = vpop.f32.mrb[0].mxu0
      %6788 = vdwg.mxu0
      %v6821 = vunpack.c.l.b16 %v6090
      %v6822 = vunpack.c.l.b16 %v6091
      %v6823 = vunpack.c.l.b16 %v6092
      %v6824 = vunpack.c.l.b16 %v6093
      %v6825 = vunpack.c.l.b16 %v6094
      %v6826 = vunpack.c.l.b16 %v6095
      %v6827 = vunpack.c.l.b16 %v6096
      %v6828 = vunpack.c.l.b16 %v6097
      %v6829 = vunpack.c.l.b16 %v6098
      %v6830 = vunpack.c.l.b16 %v6099
      %v6831 = vunpack.c.l.b16 %v6100
      %v6832 = vunpack.c.l.b16 %v6101
      %v6833 = vunpack.c.l.b16 %v6102
      %v6834 = vunpack.c.l.b16 %v6103
      %v6835 = vunpack.c.l.b16 %v6104
      %v6836 = vunpack.c.l.b16 %v6105
      %v6837 = vunpack.c.l.b16 %v6106
      %v6838 = vunpack.c.l.b16 %v6107
      %v6839 = vunpack.c.l.b16 %v6108
      %v6840 = vunpack.c.l.b16 %v6109
      %v6841 = vunpack.c.l.b16 %v6110
      %v6842 = vunpack.c.l.b16 %v6111
      %v6843 = vunpack.c.l.b16 %v6112
      %v6844 = vunpack.c.l.b16 %v6113
      %v6845 = vunpack.c.l.b16 %v6114
      %v6846 = vunpack.c.l.b16 %v6115
      %v6847 = vunpack.c.l.b16 %v6116
      %v6848 = vunpack.c.l.b16 %v6117
      %v6849 = vunpack.c.l.b16 %v6118
      %v6850 = vunpack.c.l.b16 %v6119
      %v6851 = vunpack.c.l.b16 %v6120
      %v6852 = vunpack.c.l.b16 %v6121
      %v6853 = vpack.c.b16 %v6822, %v6821
      %v6854 = vpack.c.b16 %v6824, %v6823
      %v6855 = vpack.c.b16 %v6826, %v6825
      %v6856 = vpack.c.b16 %v6828, %v6827
      %v6857 = vpack.c.b16 %v6830, %v6829
      %v6858 = vpack.c.b16 %v6832, %v6831
      %v6859 = vpack.c.b16 %v6834, %v6833
      %v6860 = vpack.c.b16 %v6836, %v6835
      %v6861 = vpack.c.b16 %v6838, %v6837
      %v6862 = vpack.c.b16 %v6840, %v6839
      %v6863 = vpack.c.b16 %v6842, %v6841
      %v6864 = vpack.c.b16 %v6844, %v6843
      %v6865 = vpack.c.b16 %v6846, %v6845
      %v6866 = vpack.c.b16 %v6848, %v6847
      %v6867 = vpack.c.b16 %v6850, %v6849
      %v6868 = vpack.c.b16 %v6852, %v6851
      %v6871 = vunpack.c.l.b16 %v6122
      %v6872 = vunpack.c.l.b16 %v6123
      %v6873 = vpack.c.b16 %v6872, %v6871
      %v6876 = vsel %vm1344, %v6853, 0
      %v6879 = vsel %vm1344, %v6854, 0
      %v6882 = vsel %vm1344, %v6855, 0
      %v6885 = vsel %vm1344, %v6856, 0
      %v6888 = vsel %vm1344, %v6857, 0
      %v6891 = vsel %vm1344, %v6858, 0
      %v6894 = vsel %vm1344, %v6859, 0
      %v6897 = vsel %vm1344, %v6860, 0
      %v6900 = vsel %vm1344, %v6861, 0
      %v6903 = vsel %vm1344, %v6862, 0
      %v6906 = vsel %vm1344, %v6863, 0
      %v6909 = vsel %vm1344, %v6864, 0
      %v6912 = vsel %vm1344, %v6865, 0
      %v6915 = vsel %vm1344, %v6866, 0
      %v6918 = vsel %vm1344, %v6867, 0
      %v6921 = vsel %vm1344, %v6868, 0
      %6923 = vmatprep.subr.bf16.mxu0 0
      %6924 = vmatpush1.bf16.msra.mxu0 %v6873
      %6925 = vmatprep.subr.bf16.mxu0 0
      %6926 = vmatpush1.bf16.msra.mxu0 0
      %6927 = vmatprep.subr.bf16.mxu0 0
      %6928 = vmatpush1.bf16.msra.mxu0 0
      %6929 = vmatprep.subr.bf16.mxu0 0
      %6930 = vmatpush1.bf16.msra.mxu0 0
      %6931 = vmatprep.subr.bf16.mxu0 0
      %6932 = vmatpush1.bf16.msra.mxu0 0
      %6933 = vmatprep.subr.bf16.mxu0 0
      %6934 = vmatpush1.bf16.msra.mxu0 0
      %6935 = vmatprep.subr.bf16.mxu0 0
      %6936 = vmatpush1.bf16.msra.mxu0 0
      %6937 = vmatprep.subr.bf16.mxu0 0
      %6938 = vmatpush1.bf16.msra.mxu0 0
      %6939 = vmatprep.subr.bf16.mxu0 0
      %6940 = vmatpush1.bf16.msra.mxu0 0
      %6941 = vmatprep.subr.bf16.mxu0 0
      %6942 = vmatpush1.bf16.msra.mxu0 0
      %6943 = vmatprep.subr.bf16.mxu0 0
      %6944 = vmatpush1.bf16.msra.mxu0 0
      %6945 = vmatprep.subr.bf16.mxu0 0
      %6946 = vmatpush1.bf16.msra.mxu0 0
      %6947 = vmatprep.subr.bf16.mxu0 0
      %6948 = vmatpush1.bf16.msra.mxu0 0
      %6949 = vmatprep.subr.bf16.mxu0 0
      %6950 = vmatpush1.bf16.msra.mxu0 0
      %6951 = vmatprep.subr.bf16.mxu0 0
      %6952 = vmatpush1.bf16.msra.mxu0 0
      %6953 = vmatprep.subr.bf16.mxu0 0
      %6954 = vmatpush1.bf16.msra.mxu0 0
      %6955 = vmatprep.mubr.bf16.mxu0 0
      %6956 = vmatmul.mubr.bf16.gmra.mrb[0].mxu0 %v6876
      %v6957 = vpop.f32.mrb[0].mxu0
      %v6958 = vadd.f32 %v6663, %v6957
      %v6959 = vpop.f32.mrb[0].mxu0
      %v6960 = vpop.f32.mrb[0].mxu0
      %v6961 = vadd.f32 %v6666, %v6960
      %v6962 = vpop.f32.mrb[0].mxu0
      %6963 = vmatprep.mubr.bf16.mxu0 0
      %6964 = vmatmul.mubr.bf16.gmra.mrb[0].mxu0 %v6879
      %v6965 = vpop.f32.mrb[0].mxu0
      %v6966 = vadd.f32 %v6671, %v6965
      %v6967 = vpop.f32.mrb[0].mxu0
      %v6968 = vpop.f32.mrb[0].mxu0
      %v6969 = vadd.f32 %v6674, %v6968
      %v6970 = vpop.f32.mrb[0].mxu0
      %6971 = vmatprep.mubr.bf16.mxu0 0
      %6972 = vmatmul.mubr.bf16.gmra.mrb[0].mxu0 %v6882
      %v6973 = vpop.f32.mrb[0].mxu0
      %v6974 = vadd.f32 %v6679, %v6973
      %v6975 = vpop.f32.mrb[0].mxu0
      %v6976 = vpop.f32.mrb[0].mxu0
      %v6977 = vadd.f32 %v6682, %v6976
      %v6978 = vpop.f32.mrb[0].mxu0
      %6979 = vmatprep.mubr.bf16.mxu0 0
      %6980 = vmatmul.mubr.bf16.gmra.mrb[0].mxu0 %v6885
      %v6981 = vpop.f32.mrb[0].mxu0
      %v6982 = vadd.f32 %v6687, %v6981
      %v6983 = vpop.f32.mrb[0].mxu0
      %v6984 = vpop.f32.mrb[0].mxu0
      %v6985 = vadd.f32 %v6690, %v6984
      %v6986 = vpop.f32.mrb[0].mxu0
      %6987 = vmatprep.mubr.bf16.mxu0 0
      %6988 = vmatmul.mubr.bf16.gmra.mrb[0].mxu0 %v6888
      %v6989 = vpop.f32.mrb[0].mxu0
      %v6990 = vadd.f32 %v6695, %v6989
      %v6991 = vpop.f32.mrb[0].mxu0
      %v6992 = vpop.f32.mrb[0].mxu0
      %v6993 = vadd.f32 %v6698, %v6992
      %v6994 = vpop.f32.mrb[0].mxu0
      %6995 = vmatprep.mubr.bf16.mxu0 0
      %6996 = vmatmul.mubr.bf16.gmra.mrb[0].mxu0 %v6891
      %v6997 = vpop.f32.mrb[0].mxu0
      %v6998 = vadd.f32 %v6703, %v6997
      %v6999 = vpop.f32.mrb[0].mxu0
      %v7000 = vpop.f32.mrb[0].mxu0
      %v7001 = vadd.f32 %v6706, %v7000
      %v7002 = vpop.f32.mrb[0].mxu0
      %7003 = vmatprep.mubr.bf16.mxu0 0
      %7004 = vmatmul.mubr.bf16.gmra.mrb[0].mxu0 %v6894
      %v7005 = vpop.f32.mrb[0].mxu0
      %v7006 = vadd.f32 %v6711, %v7005
      %v7007 = vpop.f32.mrb[0].mxu0
      %v7008 = vpop.f32.mrb[0].mxu0
      %v7009 = vadd.f32 %v6714, %v7008
      %v7010 = vpop.f32.mrb[0].mxu0
      %7011 = vmatprep.mubr.bf16.mxu0 0
      %7012 = vmatmul.mubr.bf16.gmra.mrb[0].mxu0 %v6897
      %v7013 = vpop.f32.mrb[0].mxu0
      %v7014 = vadd.f32 %v6719, %v7013
      %v7015 = vpop.f32.mrb[0].mxu0
      %v7016 = vpop.f32.mrb[0].mxu0
      %v7017 = vadd.f32 %v6722, %v7016
      %v7018 = vpop.f32.mrb[0].mxu0
      %7019 = vmatprep.mubr.bf16.mxu0 0
      %7020 = vmatmul.mubr.bf16.gmra.mrb[0].mxu0 %v6900
      %v7021 = vpop.f32.mrb[0].mxu0
      %v7022 = vadd.f32 %v6727, %v7021
      %v7023 = vpop.f32.mrb[0].mxu0
      %v7024 = vpop.f32.mrb[0].mxu0
      %v7025 = vadd.f32 %v6730, %v7024
      %v7026 = vpop.f32.mrb[0].mxu0
      %7027 = vmatprep.mubr.bf16.mxu0 0
      %7028 = vmatmul.mubr.bf16.gmra.mrb[0].mxu0 %v6903
      %v7029 = vpop.f32.mrb[0].mxu0
      %v7030 = vadd.f32 %v6735, %v7029
      %v7031 = vpop.f32.mrb[0].mxu0
      %v7032 = vpop.f32.mrb[0].mxu0
      %v7033 = vadd.f32 %v6738, %v7032
      %v7034 = vpop.f32.mrb[0].mxu0
      %7035 = vmatprep.mubr.bf16.mxu0 0
      %7036 = vmatmul.mubr.bf16.gmra.mrb[0].mxu0 %v6906
      %v7037 = vpop.f32.mrb[0].mxu0
      %v7038 = vadd.f32 %v6743, %v7037
      %v7039 = vpop.f32.mrb[0].mxu0
      %v7040 = vpop.f32.mrb[0].mxu0
      %v7041 = vadd.f32 %v6746, %v7040
      %v7042 = vpop.f32.mrb[0].mxu0
      %7043 = vmatprep.mubr.bf16.mxu0 0
      %7044 = vmatmul.mubr.bf16.gmra.mrb[0].mxu0 %v6909
      %v7045 = vpop.f32.mrb[0].mxu0
      %v7046 = vadd.f32 %v6751, %v7045
      %v7047 = vpop.f32.mrb[0].mxu0
      %v7048 = vpop.f32.mrb[0].mxu0
      %v7049 = vadd.f32 %v6754, %v7048
      %v7050 = vpop.f32.mrb[0].mxu0
      %7051 = vmatprep.mubr.bf16.mxu0 0
      %7052 = vmatmul.mubr.bf16.gmra.mrb[0].mxu0 %v6912
      %v7053 = vpop.f32.mrb[0].mxu0
      %v7054 = vadd.f32 %v6759, %v7053
      %v7055 = vpop.f32.mrb[0].mxu0
      %v7056 = vpop.f32.mrb[0].mxu0
      %v7057 = vadd.f32 %v6762, %v7056
      %v7058 = vpop.f32.mrb[0].mxu0
      %7059 = vmatprep.mubr.bf16.mxu0 0
      %7060 = vmatmul.mubr.bf16.gmra.mrb[0].mxu0 %v6915
      %v7061 = vpop.f32.mrb[0].mxu0
      %v7062 = vadd.f32 %v6767, %v7061
      %v7063 = vpop.f32.mrb[0].mxu0
      %v7064 = vpop.f32.mrb[0].mxu0
      %v7065 = vadd.f32 %v6770, %v7064
      %v7066 = vpop.f32.mrb[0].mxu0
      %7067 = vmatprep.mubr.bf16.mxu0 0
      %7068 = vmatmul.mubr.bf16.gmra.mrb[0].mxu0 %v6918
      %v7069 = vpop.f32.mrb[0].mxu0
      %v7070 = vadd.f32 %v6775, %v7069
      %v7071 = vpop.f32.mrb[0].mxu0
      %v7072 = vpop.f32.mrb[0].mxu0
      %v7073 = vadd.f32 %v6778, %v7072
      %v7074 = vpop.f32.mrb[0].mxu0
      %7075 = vmatprep.mubr.bf16.mxu0 0
      %7076 = vmatmul.mubr.bf16.gmra.mrb[0].mxu0 %v6921
      %v7077 = vpop.f32.mrb[0].mxu0
      %v7078 = vadd.f32 %v6783, %v7077
      %v7079 = vpop.f32.mrb[0].mxu0
      %v7080 = vpop.f32.mrb[0].mxu0
      %v7081 = vadd.f32 %v6786, %v7080
      %v7082 = vpop.f32.mrb[0].mxu0
      %7083 = vdwg.mxu0
      %v7084 = vld [vmem:[#allocation3] sm:$0xe]
      %v7085 = vld [vmem:[#allocation3 + $0xc] sm:$0xe]
      %v7086 = vld [vmem:[#allocation3 + $0x18] sm:$0xe]
      %v7087 = vld [vmem:[#allocation3 + $0x24] sm:$0xe]
      %v7088 = vld [vmem:[#allocation3 + $0x30] sm:$0xe]
      %v7089 = vld [vmem:[#allocation3 + $0x3c] sm:$0xe]
      %v7090 = vld [vmem:[#allocation3 + $0x48] sm:$0xe]
      %v7091 = vld [vmem:[#allocation3 + $0x54] sm:$0xe]
      %v7092 = vld [vmem:[#allocation3 + $0x60] sm:$0xe]
      %v7093 = vld [vmem:[#allocation3 + $0x6c] sm:$0xe]
      %v7094 = vld [vmem:[#allocation3 + $0x78] sm:$0xe]
      %v7095 = vld [vmem:[#allocation3 + $0x84] sm:$0xe]
      %v7096 = vld [vmem:[#allocation3 + $0x90] sm:$0xe]
      %v7097 = vld [vmem:[#allocation3 + $0x9c] sm:$0xe]
      %v7098 = vld [vmem:[#allocation3 + $0xa8] sm:$0xe]
      %v7099 = vld [vmem:[#allocation3 + $0xb4] sm:$0xe]
      %v7132 = vrot.slane %v7084, 5
      %v7133 = vrot.slane %v7132, 4
      %v7134 = vrot.slane %v6091, 5
      %v7135 = vsel %vm1899, %v7133, %v7134
      %v7136 = vrot.slane %v7134, 4
      %v7137 = vrot.slane %v6124, 5
      %v7138 = vsel %vm1899, %v7136, %v7137
      %v7139 = vrot.slane %v7085, 5
      %v7140 = vrot.slane %v7139, 4
      %v7141 = vrot.slane %v6093, 5
      %v7142 = vsel %vm1899, %v7140, %v7141
      %v7143 = vrot.slane %v7141, 4
      %v7144 = vrot.slane %v6125, 5
      %v7145 = vsel %vm1899, %v7143, %v7144
      %v7146 = vrot.slane %v7086, 5
      %v7147 = vrot.slane %v7146, 4
      %v7148 = vrot.slane %v6095, 5
      %v7149 = vsel %vm1899, %v7147, %v7148
      %v7150 = vrot.slane %v7148, 4
      %v7151 = vrot.slane %v6126, 5
      %v7152 = vsel %vm1899, %v7150, %v7151
      %v7153 = vrot.slane %v7087, 5
      %v7154 = vrot.slane %v7153, 4
      %v7155 = vrot.slane %v6097, 5
      %v7156 = vsel %vm1899, %v7154, %v7155
      %v7157 = vrot.slane %v7155, 4
      %v7158 = vrot.slane %v6127, 5
      %v7159 = vsel %vm1899, %v7157, %v7158
      %v7160 = vrot.slane %v7088, 5
      %v7161 = vrot.slane %v7160, 4
      %v7162 = vrot.slane %v6099, 5
      %v7163 = vsel %vm1899, %v7161, %v7162
      %v7164 = vrot.slane %v7162, 4
      %v7165 = vrot.slane %v6128, 5
      %v7166 = vsel %vm1899, %v7164, %v7165
      %v7167 = vrot.slane %v7089, 5
      %v7168 = vrot.slane %v7167, 4
      %v7169 = vrot.slane %v6101, 5
      %v7170 = vsel %vm1899, %v7168, %v7169
      %v7171 = vrot.slane %v7169, 4
      %v7172 = vrot.slane %v6129, 5
      %v7173 = vsel %vm1899, %v7171, %v7172
      %v7174 = vrot.slane %v7090, 5
      %v7175 = vrot.slane %v7174, 4
      %v7176 = vrot.slane %v6103, 5
      %v7177 = vsel %vm1899, %v7175, %v7176
      %v7178 = vrot.slane %v7176, 4
      %v7179 = vrot.slane %v6130, 5
      %v7180 = vsel %vm1899, %v7178, %v7179
      %v7181 = vrot.slane %v7091, 5
      %v7182 = vrot.slane %v7181, 4
      %v7183 = vrot.slane %v6105, 5
      %v7184 = vsel %vm1899, %v7182, %v7183
      %v7185 = vrot.slane %v7183, 4
      %v7186 = vrot.slane %v6131, 5
      %v7187 = vsel %vm1899, %v7185, %v7186
      %v7188 = vrot.slane %v7092, 5
      %v7189 = vrot.slane %v7188, 4
      %v7190 = vrot.slane %v6107, 5
      %v7191 = vsel %vm1899, %v7189, %v7190
      %v7192 = vrot.slane %v7190, 4
      %v7193 = vrot.slane %v6132, 5
      %v7194 = vsel %vm1899, %v7192, %v7193
      %v7195 = vrot.slane %v7093, 5
      %v7196 = vrot.slane %v7195, 4
      %v7197 = vrot.slane %v6109, 5
      %v7198 = vsel %vm1899, %v7196, %v7197
      %v7199 = vrot.slane %v7197, 4
      %v7200 = vrot.slane %v6133, 5
      %v7201 = vsel %vm1899, %v7199, %v7200
      %v7202 = vrot.slane %v7094, 5
      %v7203 = vrot.slane %v7202, 4
      %v7204 = vrot.slane %v6111, 5
      %v7205 = vsel %vm1899, %v7203, %v7204
      %v7206 = vrot.slane %v7204, 4
      %v7207 = vrot.slane %v6134, 5
      %v7208 = vsel %vm1899, %v7206, %v7207
      %v7209 = vrot.slane %v7095, 5
      %v7210 = vrot.slane %v7209, 4
      %v7211 = vrot.slane %v6113, 5
      %v7212 = vsel %vm1899, %v7210, %v7211
      %v7213 = vrot.slane %v7211, 4
      %v7214 = vrot.slane %v6135, 5
      %v7215 = vsel %vm1899, %v7213, %v7214
      %v7216 = vrot.slane %v7096, 5
      %v7217 = vrot.slane %v7216, 4
      %v7218 = vrot.slane %v6115, 5
      %v7219 = vsel %vm1899, %v7217, %v7218
      %v7220 = vrot.slane %v7218, 4
      %v7221 = vrot.slane %v6136, 5
      %v7222 = vsel %vm1899, %v7220, %v7221
      %v7223 = vrot.slane %v7097, 5
      %v7224 = vrot.slane %v7223, 4
      %v7225 = vrot.slane %v6117, 5
      %v7226 = vsel %vm1899, %v7224, %v7225
      %v7227 = vrot.slane %v7225, 4
      %v7228 = vrot.slane %v6137, 5
      %v7229 = vsel %vm1899, %v7227, %v7228
      %v7230 = vrot.slane %v7098, 5
      %v7231 = vrot.slane %v7230, 4
      %v7232 = vrot.slane %v6119, 5
      %v7233 = vsel %vm1899, %v7231, %v7232
      %v7234 = vrot.slane %v7232, 4
      %v7235 = vrot.slane %v6138, 5
      %v7236 = vsel %vm1899, %v7234, %v7235
      %v7237 = vrot.slane %v7099, 5
      %v7238 = vrot.slane %v7237, 4
      %v7239 = vrot.slane %v6121, 5
      %v7240 = vsel %vm1899, %v7238, %v7239
      %v7241 = vrot.slane %v7239, 4
      %v7242 = vrot.slane %v6139, 5
      %v7243 = vsel %vm1899, %v7241, %v7242
      %v7244 = vld [vmem:[%s3 + $0x10] sm:$0xf]
      %v7245 = vld [vmem:[%s3 + $0x14] sm:$0xf]
      %v7246 = vunpack.c.l.b16 %v7135
      %v7247 = vunpack.c.l.b16 %v7138
      %v7248 = vunpack.c.l.b16 %v7142
      %v7249 = vunpack.c.l.b16 %v7145
      %v7250 = vunpack.c.l.b16 %v7149
      %v7251 = vunpack.c.l.b16 %v7152
      %v7252 = vunpack.c.l.b16 %v7156
      %v7253 = vunpack.c.l.b16 %v7159
      %v7254 = vunpack.c.l.b16 %v7163
      %v7255 = vunpack.c.l.b16 %v7166
      %v7256 = vunpack.c.l.b16 %v7170
      %v7257 = vunpack.c.l.b16 %v7173
      %v7258 = vunpack.c.l.b16 %v7177
      %v7259 = vunpack.c.l.b16 %v7180
      %v7260 = vunpack.c.l.b16 %v7184
      %v7261 = vunpack.c.l.b16 %v7187
      %v7262 = vunpack.c.l.b16 %v7191
      %v7263 = vunpack.c.l.b16 %v7194
      %v7264 = vunpack.c.l.b16 %v7198
      %v7265 = vunpack.c.l.b16 %v7201
      %v7266 = vunpack.c.l.b16 %v7205
      %v7267 = vunpack.c.l.b16 %v7208
      %v7268 = vunpack.c.l.b16 %v7212
      %v7269 = vunpack.c.l.b16 %v7215
      %v7270 = vunpack.c.l.b16 %v7219
      %v7271 = vunpack.c.l.b16 %v7222
      %v7272 = vunpack.c.l.b16 %v7226
      %v7273 = vunpack.c.l.b16 %v7229
      %v7274 = vunpack.c.l.b16 %v7233
      %v7275 = vunpack.c.l.b16 %v7236
      %v7276 = vunpack.c.l.b16 %v7240
      %v7277 = vunpack.c.l.b16 %v7243
      %v7278 = vpack.c.b16 %v7247, %v7246
      %v7279 = vpack.c.b16 %v7249, %v7248
      %v7280 = vpack.c.b16 %v7251, %v7250
      %v7281 = vpack.c.b16 %v7253, %v7252
      %v7282 = vpack.c.b16 %v7255, %v7254
      %v7283 = vpack.c.b16 %v7257, %v7256
      %v7284 = vpack.c.b16 %v7259, %v7258
      %v7285 = vpack.c.b16 %v7261, %v7260
      %v7286 = vpack.c.b16 %v7263, %v7262
      %v7287 = vpack.c.b16 %v7265, %v7264
      %v7288 = vpack.c.b16 %v7267, %v7266
      %v7289 = vpack.c.b16 %v7269, %v7268
      %v7290 = vpack.c.b16 %v7271, %v7270
      %v7291 = vpack.c.b16 %v7273, %v7272
      %v7292 = vpack.c.b16 %v7275, %v7274
      %v7293 = vpack.c.b16 %v7277, %v7276
      %v7296 = vunpack.c.l.b16 %v7244
      %v7297 = vunpack.c.l.b16 %v7245
      %v7298 = vpack.c.b16 %v7297, %v7296
      %v7301 = vsel %vm1344, %v7278, 0
      %v7304 = vsel %vm1344, %v7279, 0
      %v7307 = vsel %vm1344, %v7280, 0
      %v7310 = vsel %vm1344, %v7281, 0
      %v7313 = vsel %vm1344, %v7282, 0
      %v7316 = vsel %vm1344, %v7283, 0
      %v7319 = vsel %vm1344, %v7284, 0
      %v7322 = vsel %vm1344, %v7285, 0
      %v7325 = vsel %vm1344, %v7286, 0
      %v7328 = vsel %vm1344, %v7287, 0
      %v7331 = vsel %vm1344, %v7288, 0
      %v7334 = vsel %vm1344, %v7289, 0
      %v7337 = vsel %vm1344, %v7290, 0
      %v7340 = vsel %vm1344, %v7291, 0
      %v7343 = vsel %vm1344, %v7292, 0
      %v7346 = vsel %vm1344, %v7293, 0
      %7348 = vmatprep.subr.bf16.mxu0 0
      %7349 = vmatpush1.bf16.msra.mxu0 %v7298
      %7350 = vmatprep.subr.bf16.mxu0 0
      %7351 = vmatpush1.bf16.msra.mxu0 0
      %7352 = vmatprep.subr.bf16.mxu0 0
      %7353 = vmatpush1.bf16.msra.mxu0 0
      %7354 = vmatprep.subr.bf16.mxu0 0
      %7355 = vmatpush1.bf16.msra.mxu0 0
      %7356 = vmatprep.subr.bf16.mxu0 0
      %7357 = vmatpush1.bf16.msra.mxu0 0
      %7358 = vmatprep.subr.bf16.mxu0 0
      %7359 = vmatpush1.bf16.msra.mxu0 0
      %7360 = vmatprep.subr.bf16.mxu0 0
      %7361 = vmatpush1.bf16.msra.mxu0 0
      %7362 = vmatprep.subr.bf16.mxu0 0
      %7363 = vmatpush1.bf16.msra.mxu0 0
      %7364 = vmatprep.subr.bf16.mxu0 0
      %7365 = vmatpush1.bf16.msra.mxu0 0
      %7366 = vmatprep.subr.bf16.mxu0 0
      %7367 = vmatpush1.bf16.msra.mxu0 0
      %7368 = vmatprep.subr.bf16.mxu0 0
      %7369 = vmatpush1.bf16.msra.mxu0 0
      %7370 = vmatprep.subr.bf16.mxu0 0
      %7371 = vmatpush1.bf16.msra.mxu0 0
      %7372 = vmatprep.subr.bf16.mxu0 0
      %7373 = vmatpush1.bf16.msra.mxu0 0
      %7374 = vmatprep.subr.bf16.mxu0 0
      %7375 = vmatpush1.bf16.msra.mxu0 0
      %7376 = vmatprep.subr.bf16.mxu0 0
      %7377 = vmatpush1.bf16.msra.mxu0 0
      %7378 = vmatprep.subr.bf16.mxu0 0
      %7379 = vmatpush1.bf16.msra.mxu0 0
      %7380 = vmatprep.mubr.bf16.mxu0 0
      %7381 = vmatmul.mubr.bf16.gmra.mrb[0].mxu0 %v7301
      %v7382 = vpop.f32.mrb[0].mxu0
      %v7383 = vadd.f32 0.0, %v7382
      %v7384 = vpop.f32.mrb[0].mxu0
      %v7385 = vpop.f32.mrb[0].mxu0
      %v7386 = vadd.f32 0.0, %v7385
      %v7387 = vpop.f32.mrb[0].mxu0
      %7388 = vmatprep.mubr.bf16.mxu0 0
      %7389 = vmatmul.mubr.bf16.gmra.mrb[0].mxu0 %v7304
      %v7390 = vpop.f32.mrb[0].mxu0
      %v7391 = vadd.f32 0.0, %v7390
      %v7392 = vpop.f32.mrb[0].mxu0
      %v7393 = vpop.f32.mrb[0].mxu0
      %v7394 = vadd.f32 0.0, %v7393
      %v7395 = vpop.f32.mrb[0].mxu0
      %7396 = vmatprep.mubr.bf16.mxu0 0
      %7397 = vmatmul.mubr.bf16.gmra.mrb[0].mxu0 %v7307
      %v7398 = vpop.f32.mrb[0].mxu0
      %v7399 = vadd.f32 0.0, %v7398
      %v7400 = vpop.f32.mrb[0].mxu0
      %v7401 = vpop.f32.mrb[0].mxu0
      %v7402 = vadd.f32 0.0, %v7401
      %v7403 = vpop.f32.mrb[0].mxu0
      %7404 = vmatprep.mubr.bf16.mxu0 0
      %7405 = vmatmul.mubr.bf16.gmra.mrb[0].mxu0 %v7310
      %v7406 = vpop.f32.mrb[0].mxu0
      %v7407 = vadd.f32 0.0, %v7406
      %v7408 = vpop.f32.mrb[0].mxu0
      %v7409 = vpop.f32.mrb[0].mxu0
      %v7410 = vadd.f32 0.0, %v7409
      %v7411 = vpop.f32.mrb[0].mxu0
      %7412 = vmatprep.mubr.bf16.mxu0 0
      %7413 = vmatmul.mubr.bf16.gmra.mrb[0].mxu0 %v7313
      %v7414 = vpop.f32.mrb[0].mxu0
      %v7415 = vadd.f32 0.0, %v7414
      %v7416 = vpop.f32.mrb[0].mxu0
      %v7417 = vpop.f32.mrb[0].mxu0
      %v7418 = vadd.f32 0.0, %v7417
      %v7419 = vpop.f32.mrb[0].mxu0
      %7420 = vmatprep.mubr.bf16.mxu0 0
      %7421 = vmatmul.mubr.bf16.gmra.mrb[0].mxu0 %v7316
      %v7422 = vpop.f32.mrb[0].mxu0
      %v7423 = vadd.f32 0.0, %v7422
      %v7424 = vpop.f32.mrb[0].mxu0
      %v7425 = vpop.f32.mrb[0].mxu0
      %v7426 = vadd.f32 0.0, %v7425
      %v7427 = vpop.f32.mrb[0].mxu0
      %7428 = vmatprep.mubr.bf16.mxu0 0
      %7429 = vmatmul.mubr.bf16.gmra.mrb[0].mxu0 %v7319
      %v7430 = vpop.f32.mrb[0].mxu0
      %v7431 = vadd.f32 0.0, %v7430
      %v7432 = vpop.f32.mrb[0].mxu0
      %v7433 = vpop.f32.mrb[0].mxu0
      %v7434 = vadd.f32 0.0, %v7433
      %v7435 = vpop.f32.mrb[0].mxu0
      %7436 = vmatprep.mubr.bf16.mxu0 0
      %7437 = vmatmul.mubr.bf16.gmra.mrb[0].mxu0 %v7322
      %v7438 = vpop.f32.mrb[0].mxu0
      %v7439 = vadd.f32 0.0, %v7438
      %v7440 = vpop.f32.mrb[0].mxu0
      %v7441 = vpop.f32.mrb[0].mxu0
      %v7442 = vadd.f32 0.0, %v7441
      %v7443 = vpop.f32.mrb[0].mxu0
      %7444 = vmatprep.mubr.bf16.mxu0 0
      %7445 = vmatmul.mubr.bf16.gmra.mrb[0].mxu0 %v7325
      %v7446 = vpop.f32.mrb[0].mxu0
      %v7447 = vadd.f32 0.0, %v7446
      %v7448 = vpop.f32.mrb[0].mxu0
      %v7449 = vpop.f32.mrb[0].mxu0
      %v7450 = vadd.f32 0.0, %v7449
      %v7451 = vpop.f32.mrb[0].mxu0
      %7452 = vmatprep.mubr.bf16.mxu0 0
      %7453 = vmatmul.mubr.bf16.gmra.mrb[0].mxu0 %v7328
      %v7454 = vpop.f32.mrb[0].mxu0
      %v7455 = vadd.f32 0.0, %v7454
      %v7456 = vpop.f32.mrb[0].mxu0
      %v7457 = vpop.f32.mrb[0].mxu0
      %v7458 = vadd.f32 0.0, %v7457
      %v7459 = vpop.f32.mrb[0].mxu0
      %7460 = vmatprep.mubr.bf16.mxu0 0
      %7461 = vmatmul.mubr.bf16.gmra.mrb[0].mxu0 %v7331
      %v7462 = vpop.f32.mrb[0].mxu0
      %v7463 = vadd.f32 0.0, %v7462
      %v7464 = vpop.f32.mrb[0].mxu0
      %v7465 = vpop.f32.mrb[0].mxu0
      %v7466 = vadd.f32 0.0, %v7465
      %v7467 = vpop.f32.mrb[0].mxu0
      %7468 = vmatprep.mubr.bf16.mxu0 0
      %7469 = vmatmul.mubr.bf16.gmra.mrb[0].mxu0 %v7334
      %v7470 = vpop.f32.mrb[0].mxu0
      %v7471 = vadd.f32 0.0, %v7470
      %v7472 = vpop.f32.mrb[0].mxu0
      %v7473 = vpop.f32.mrb[0].mxu0
      %v7474 = vadd.f32 0.0, %v7473
      %v7475 = vpop.f32.mrb[0].mxu0
      %7476 = vmatprep.mubr.bf16.mxu0 0
      %7477 = vmatmul.mubr.bf16.gmra.mrb[0].mxu0 %v7337
      %v7478 = vpop.f32.mrb[0].mxu0
      %v7479 = vadd.f32 0.0, %v7478
      %v7480 = vpop.f32.mrb[0].mxu0
      %v7481 = vpop.f32.mrb[0].mxu0
      %v7482 = vadd.f32 0.0, %v7481
      %v7483 = vpop.f32.mrb[0].mxu0
      %7484 = vmatprep.mubr.bf16.mxu0 0
      %7485 = vmatmul.mubr.bf16.gmra.mrb[0].mxu0 %v7340
      %v7486 = vpop.f32.mrb[0].mxu0
      %v7487 = vadd.f32 0.0, %v7486
      %v7488 = vpop.f32.mrb[0].mxu0
      %v7489 = vpop.f32.mrb[0].mxu0
      %v7490 = vadd.f32 0.0, %v7489
      %v7491 = vpop.f32.mrb[0].mxu0
      %7492 = vmatprep.mubr.bf16.mxu0 0
      %7493 = vmatmul.mubr.bf16.gmra.mrb[0].mxu0 %v7343
      %v7494 = vpop.f32.mrb[0].mxu0
      %v7495 = vadd.f32 0.0, %v7494
      %v7496 = vpop.f32.mrb[0].mxu0
      %v7497 = vpop.f32.mrb[0].mxu0
      %v7498 = vadd.f32 0.0, %v7497
      %v7499 = vpop.f32.mrb[0].mxu0
      %7500 = vmatprep.mubr.bf16.mxu0 0
      %7501 = vmatmul.mubr.bf16.gmra.mrb[0].mxu0 %v7346
      %v7502 = vpop.f32.mrb[0].mxu0
      %v7503 = vadd.f32 0.0, %v7502
      %v7504 = vpop.f32.mrb[0].mxu0
      %v7505 = vpop.f32.mrb[0].mxu0
      %v7506 = vadd.f32 0.0, %v7505
      %v7507 = vpop.f32.mrb[0].mxu0
      %7508 = vdwg.mxu0
      %v7509 = vadd.f32 %v6958, %v7383
      %v7510 = vadd.f32 %v6961, %v7386
      %v7511 = vadd.f32 %v6966, %v7391
      %v7512 = vadd.f32 %v6969, %v7394
      %v7513 = vadd.f32 %v6974, %v7399
      %v7514 = vadd.f32 %v6977, %v7402
      %v7515 = vadd.f32 %v6982, %v7407
      %v7516 = vadd.f32 %v6985, %v7410
      %v7517 = vadd.f32 %v6990, %v7415
      %v7518 = vadd.f32 %v6993, %v7418
      %v7519 = vadd.f32 %v6998, %v7423
      %v7520 = vadd.f32 %v7001, %v7426
      %v7521 = vadd.f32 %v7006, %v7431
      %v7522 = vadd.f32 %v7009, %v7434
      %v7523 = vadd.f32 %v7014, %v7439
      %v7524 = vadd.f32 %v7017, %v7442
      %v7525 = vadd.f32 %v7022, %v7447
      %v7526 = vadd.f32 %v7025, %v7450
      %v7527 = vadd.f32 %v7030, %v7455
      %v7528 = vadd.f32 %v7033, %v7458
      %v7529 = vadd.f32 %v7038, %v7463
      %v7530 = vadd.f32 %v7041, %v7466
      %v7531 = vadd.f32 %v7046, %v7471
      %v7532 = vadd.f32 %v7049, %v7474
      %v7533 = vadd.f32 %v7054, %v7479
      %v7534 = vadd.f32 %v7057, %v7482
      %v7535 = vadd.f32 %v7062, %v7487
      %v7536 = vadd.f32 %v7065, %v7490
      %v7537 = vadd.f32 %v7070, %v7495
      %v7538 = vadd.f32 %v7073, %v7498
      %v7539 = vadd.f32 %v7078, %v7503
      %v7540 = vadd.f32 %v7081, %v7506
      %v7541 = vld [vmem:[%s5977] sm:$0xf]
      %v7542 = vld [vmem:[%s5977 + $0x4] sm:$0xf]
      %v7543 = vld [vmem:[%s5977 + $0xc] sm:$0xf]
      %v7544 = vld [vmem:[%s5977 + $0x10] sm:$0xf]
      %v7545 = vld [vmem:[%s5977 + $0x18] sm:$0xf]
      %v7546 = vld [vmem:[%s5977 + $0x1c] sm:$0xf]
      %v7547 = vld [vmem:[%s5977 + $0x24] sm:$0xf]
      %v7548 = vld [vmem:[%s5977 + $0x28] sm:$0xf]
      %v7549 = vld [vmem:[%s5977 + $0x30] sm:$0xf]
      %v7550 = vld [vmem:[%s5977 + $0x34] sm:$0xf]
      %v7551 = vld [vmem:[%s5977 + $0x3c] sm:$0xf]
      %v7552 = vld [vmem:[%s5977 + $0x40] sm:$0xf]
      %v7553 = vld [vmem:[%s5977 + $0x48] sm:$0xf]
      %v7554 = vld [vmem:[%s5977 + $0x4c] sm:$0xf]
      %v7555 = vld [vmem:[%s5977 + $0x54] sm:$0xf]
      %v7556 = vld [vmem:[%s5977 + $0x58] sm:$0xf]
      %v7557 = vld [vmem:[%s5977 + $0x60] sm:$0xf]
      %v7558 = vld [vmem:[%s5977 + $0x64] sm:$0xf]
      %v7559 = vld [vmem:[%s5977 + $0x6c] sm:$0xf]
      %v7560 = vld [vmem:[%s5977 + $0x70] sm:$0xf]
      %v7561 = vld [vmem:[%s5977 + $0x78] sm:$0xf]
      %v7562 = vld [vmem:[%s5977 + $0x7c] sm:$0xf]
      %v7563 = vld [vmem:[%s5977 + $0x84] sm:$0xf]
      %v7564 = vld [vmem:[%s5977 + $0x88] sm:$0xf]
      %v7565 = vld [vmem:[%s5977 + $0x90] sm:$0xf]
      %v7566 = vld [vmem:[%s5977 + $0x94] sm:$0xf]
      %v7567 = vld [vmem:[%s5977 + $0x9c] sm:$0xf]
      %v7568 = vld [vmem:[%s5977 + $0xa0] sm:$0xf]
      %v7569 = vld [vmem:[%s5977 + $0xa8] sm:$0xf]
      %v7570 = vld [vmem:[%s5977 + $0xac] sm:$0xf]
      %v7571 = vld [vmem:[%s5977 + $0xb4] sm:$0xf]
      %v7572 = vld [vmem:[%s5977 + $0xb8] sm:$0xf]
      %v7573 = vld [vmem:[%s3 + $0x18] sm:$0xf]
      %v7574 = vld [vmem:[%s3 + $0x1c] sm:$0xf]
      %v7607 = vunpack.c.l.b16 %v7541
      %v7608 = vunpack.c.l.b16 %v7542
      %v7609 = vunpack.c.l.b16 %v7543
      %v7610 = vunpack.c.l.b16 %v7544
      %v7611 = vunpack.c.l.b16 %v7545
      %v7612 = vunpack.c.l.b16 %v7546
      %v7613 = vunpack.c.l.b16 %v7547
      %v7614 = vunpack.c.l.b16 %v7548
      %v7615 = vunpack.c.l.b16 %v7549
      %v7616 = vunpack.c.l.b16 %v7550
      %v7617 = vunpack.c.l.b16 %v7551
      %v7618 = vunpack.c.l.b16 %v7552
      %v7619 = vunpack.c.l.b16 %v7553
      %v7620 = vunpack.c.l.b16 %v7554
      %v7621 = vunpack.c.l.b16 %v7555
      %v7622 = vunpack.c.l.b16 %v7556
      %v7623 = vunpack.c.l.b16 %v7557
      %v7624 = vunpack.c.l.b16 %v7558
      %v7625 = vunpack.c.l.b16 %v7559
      %v7626 = vunpack.c.l.b16 %v7560
      %v7627 = vunpack.c.l.b16 %v7561
      %v7628 = vunpack.c.l.b16 %v7562
      %v7629 = vunpack.c.l.b16 %v7563
      %v7630 = vunpack.c.l.b16 %v7564
      %v7631 = vunpack.c.l.b16 %v7565
      %v7632 = vunpack.c.l.b16 %v7566
      %v7633 = vunpack.c.l.b16 %v7567
      %v7634 = vunpack.c.l.b16 %v7568
      %v7635 = vunpack.c.l.b16 %v7569
      %v7636 = vunpack.c.l.b16 %v7570
      %v7637 = vunpack.c.l.b16 %v7571
      %v7638 = vunpack.c.l.b16 %v7572
      %v7639 = vpack.c.b16 %v7608, %v7607
      %v7640 = vpack.c.b16 %v7610, %v7609
      %v7641 = vpack.c.b16 %v7612, %v7611
      %v7642 = vpack.c.b16 %v7614, %v7613
      %v7643 = vpack.c.b16 %v7616, %v7615
      %v7644 = vpack.c.b16 %v7618, %v7617
      %v7645 = vpack.c.b16 %v7620, %v7619
      %v7646 = vpack.c.b16 %v7622, %v7621
      %v7647 = vpack.c.b16 %v7624, %v7623
      %v7648 = vpack.c.b16 %v7626, %v7625
      %v7649 = vpack.c.b16 %v7628, %v7627
      %v7650 = vpack.c.b16 %v7630, %v7629
      %v7651 = vpack.c.b16 %v7632, %v7631
      %v7652 = vpack.c.b16 %v7634, %v7633
      %v7653 = vpack.c.b16 %v7636, %v7635
      %v7654 = vpack.c.b16 %v7638, %v7637
      %v7657 = vunpack.c.l.b16 %v7573
      %v7658 = vunpack.c.l.b16 %v7574
      %v7659 = vpack.c.b16 %v7658, %v7657
      %v7662 = vsel %vm1344, %v7639, 0
      %v7665 = vsel %vm1344, %v7640, 0
      %v7668 = vsel %vm1344, %v7641, 0
      %v7671 = vsel %vm1344, %v7642, 0
      %v7674 = vsel %vm1344, %v7643, 0
      %v7677 = vsel %vm1344, %v7644, 0
      %v7680 = vsel %vm1344, %v7645, 0
      %v7683 = vsel %vm1344, %v7646, 0
      %v7686 = vsel %vm1344, %v7647, 0
      %v7689 = vsel %vm1344, %v7648, 0
      %v7692 = vsel %vm1344, %v7649, 0
      %v7695 = vsel %vm1344, %v7650, 0
      %v7698 = vsel %vm1344, %v7651, 0
      %v7701 = vsel %vm1344, %v7652, 0
      %v7704 = vsel %vm1344, %v7653, 0
      %v7707 = vsel %vm1344, %v7654, 0
      %7709 = vmatprep.subr.bf16.mxu0 0
      %7710 = vmatpush1.bf16.msra.mxu0 %v7659
      %7711 = vmatprep.subr.bf16.mxu0 0
      %7712 = vmatpush1.bf16.msra.mxu0 0
      %7713 = vmatprep.subr.bf16.mxu0 0
      %7714 = vmatpush1.bf16.msra.mxu0 0
      %7715 = vmatprep.subr.bf16.mxu0 0
      %7716 = vmatpush1.bf16.msra.mxu0 0
      %7717 = vmatprep.subr.bf16.mxu0 0
      %7718 = vmatpush1.bf16.msra.mxu0 0
      %7719 = vmatprep.subr.bf16.mxu0 0
      %7720 = vmatpush1.bf16.msra.mxu0 0
      %7721 = vmatprep.subr.bf16.mxu0 0
      %7722 = vmatpush1.bf16.msra.mxu0 0
      %7723 = vmatprep.subr.bf16.mxu0 0
      %7724 = vmatpush1.bf16.msra.mxu0 0
      %7725 = vmatprep.subr.bf16.mxu0 0
      %7726 = vmatpush1.bf16.msra.mxu0 0
      %7727 = vmatprep.subr.bf16.mxu0 0
      %7728 = vmatpush1.bf16.msra.mxu0 0
      %7729 = vmatprep.subr.bf16.mxu0 0
      %7730 = vmatpush1.bf16.msra.mxu0 0
      %7731 = vmatprep.subr.bf16.mxu0 0
      %7732 = vmatpush1.bf16.msra.mxu0 0
      %7733 = vmatprep.subr.bf16.mxu0 0
      %7734 = vmatpush1.bf16.msra.mxu0 0
      %7735 = vmatprep.subr.bf16.mxu0 0
      %7736 = vmatpush1.bf16.msra.mxu0 0
      %7737 = vmatprep.subr.bf16.mxu0 0
      %7738 = vmatpush1.bf16.msra.mxu0 0
      %7739 = vmatprep.subr.bf16.mxu0 0
      %7740 = vmatpush1.bf16.msra.mxu0 0
      %7741 = vmatprep.mubr.bf16.mxu0 0
      %7742 = vmatmul.mubr.bf16.gmra.mrb[0].mxu0 %v7662
      %v7743 = vpop.f32.mrb[0].mxu0
      %v7744 = vadd.f32 0.0, %v7743
      %v7745 = vpop.f32.mrb[0].mxu0
      %v7746 = vpop.f32.mrb[0].mxu0
      %v7747 = vadd.f32 0.0, %v7746
      %v7748 = vpop.f32.mrb[0].mxu0
      %7749 = vmatprep.mubr.bf16.mxu0 0
      %7750 = vmatmul.mubr.bf16.gmra.mrb[0].mxu0 %v7665
      %v7751 = vpop.f32.mrb[0].mxu0
      %v7752 = vadd.f32 0.0, %v7751
      %v7753 = vpop.f32.mrb[0].mxu0
      %v7754 = vpop.f32.mrb[0].mxu0
      %v7755 = vadd.f32 0.0, %v7754
      %v7756 = vpop.f32.mrb[0].mxu0
      %7757 = vmatprep.mubr.bf16.mxu0 0
      %7758 = vmatmul.mubr.bf16.gmra.mrb[0].mxu0 %v7668
      %v7759 = vpop.f32.mrb[0].mxu0
      %v7760 = vadd.f32 0.0, %v7759
      %v7761 = vpop.f32.mrb[0].mxu0
      %v7762 = vpop.f32.mrb[0].mxu0
      %v7763 = vadd.f32 0.0, %v7762
      %v7764 = vpop.f32.mrb[0].mxu0
      %7765 = vmatprep.mubr.bf16.mxu0 0
      %7766 = vmatmul.mubr.bf16.gmra.mrb[0].mxu0 %v7671
      %v7767 = vpop.f32.mrb[0].mxu0
      %v7768 = vadd.f32 0.0, %v7767
      %v7769 = vpop.f32.mrb[0].mxu0
      %v7770 = vpop.f32.mrb[0].mxu0
      %v7771 = vadd.f32 0.0, %v7770
      %v7772 = vpop.f32.mrb[0].mxu0
      %7773 = vmatprep.mubr.bf16.mxu0 0
      %7774 = vmatmul.mubr.bf16.gmra.mrb[0].mxu0 %v7674
      %v7775 = vpop.f32.mrb[0].mxu0
      %v7776 = vadd.f32 0.0, %v7775
      %v7777 = vpop.f32.mrb[0].mxu0
      %v7778 = vpop.f32.mrb[0].mxu0
      %v7779 = vadd.f32 0.0, %v7778
      %v7780 = vpop.f32.mrb[0].mxu0
      %7781 = vmatprep.mubr.bf16.mxu0 0
      %7782 = vmatmul.mubr.bf16.gmra.mrb[0].mxu0 %v7677
      %v7783 = vpop.f32.mrb[0].mxu0
      %v7784 = vadd.f32 0.0, %v7783
      %v7785 = vpop.f32.mrb[0].mxu0
      %v7786 = vpop.f32.mrb[0].mxu0
      %v7787 = vadd.f32 0.0, %v7786
      %v7788 = vpop.f32.mrb[0].mxu0
      %7789 = vmatprep.mubr.bf16.mxu0 0
      %7790 = vmatmul.mubr.bf16.gmra.mrb[0].mxu0 %v7680
      %v7791 = vpop.f32.mrb[0].mxu0
      %v7792 = vadd.f32 0.0, %v7791
      %v7793 = vpop.f32.mrb[0].mxu0
      %v7794 = vpop.f32.mrb[0].mxu0
      %v7795 = vadd.f32 0.0, %v7794
      %v7796 = vpop.f32.mrb[0].mxu0
      %7797 = vmatprep.mubr.bf16.mxu0 0
      %7798 = vmatmul.mubr.bf16.gmra.mrb[0].mxu0 %v7683
      %v7799 = vpop.f32.mrb[0].mxu0
      %v7800 = vadd.f32 0.0, %v7799
      %v7801 = vpop.f32.mrb[0].mxu0
      %v7802 = vpop.f32.mrb[0].mxu0
      %v7803 = vadd.f32 0.0, %v7802
      %v7804 = vpop.f32.mrb[0].mxu0
      %7805 = vmatprep.mubr.bf16.mxu0 0
      %7806 = vmatmul.mubr.bf16.gmra.mrb[0].mxu0 %v7686
      %v7807 = vpop.f32.mrb[0].mxu0
      %v7808 = vadd.f32 0.0, %v7807
      %v7809 = vpop.f32.mrb[0].mxu0
      %v7810 = vpop.f32.mrb[0].mxu0
      %v7811 = vadd.f32 0.0, %v7810
      %v7812 = vpop.f32.mrb[0].mxu0
      %7813 = vmatprep.mubr.bf16.mxu0 0
      %7814 = vmatmul.mubr.bf16.gmra.mrb[0].mxu0 %v7689
      %v7815 = vpop.f32.mrb[0].mxu0
      %v7816 = vadd.f32 0.0, %v7815
      %v7817 = vpop.f32.mrb[0].mxu0
      %v7818 = vpop.f32.mrb[0].mxu0
      %v7819 = vadd.f32 0.0, %v7818
      %v7820 = vpop.f32.mrb[0].mxu0
      %7821 = vmatprep.mubr.bf16.mxu0 0
      %7822 = vmatmul.mubr.bf16.gmra.mrb[0].mxu0 %v7692
      %v7823 = vpop.f32.mrb[0].mxu0
      %v7824 = vadd.f32 0.0, %v7823
      %v7825 = vpop.f32.mrb[0].mxu0
      %v7826 = vpop.f32.mrb[0].mxu0
      %v7827 = vadd.f32 0.0, %v7826
      %v7828 = vpop.f32.mrb[0].mxu0
      %7829 = vmatprep.mubr.bf16.mxu0 0
      %7830 = vmatmul.mubr.bf16.gmra.mrb[0].mxu0 %v7695
      %v7831 = vpop.f32.mrb[0].mxu0
      %v7832 = vadd.f32 0.0, %v7831
      %v7833 = vpop.f32.mrb[0].mxu0
      %v7834 = vpop.f32.mrb[0].mxu0
      %v7835 = vadd.f32 0.0, %v7834
      %v7836 = vpop.f32.mrb[0].mxu0
      %7837 = vmatprep.mubr.bf16.mxu0 0
      %7838 = vmatmul.mubr.bf16.gmra.mrb[0].mxu0 %v7698
      %v7839 = vpop.f32.mrb[0].mxu0
      %v7840 = vadd.f32 0.0, %v7839
      %v7841 = vpop.f32.mrb[0].mxu0
      %v7842 = vpop.f32.mrb[0].mxu0
      %v7843 = vadd.f32 0.0, %v7842
      %v7844 = vpop.f32.mrb[0].mxu0
      %7845 = vmatprep.mubr.bf16.mxu0 0
      %7846 = vmatmul.mubr.bf16.gmra.mrb[0].mxu0 %v7701
      %v7847 = vpop.f32.mrb[0].mxu0
      %v7848 = vadd.f32 0.0, %v7847
      %v7849 = vpop.f32.mrb[0].mxu0
      %v7850 = vpop.f32.mrb[0].mxu0
      %v7851 = vadd.f32 0.0, %v7850
      %v7852 = vpop.f32.mrb[0].mxu0
      %7853 = vmatprep.mubr.bf16.mxu0 0
      %7854 = vmatmul.mubr.bf16.gmra.mrb[0].mxu0 %v7704
      %v7855 = vpop.f32.mrb[0].mxu0
      %v7856 = vadd.f32 0.0, %v7855
      %v7857 = vpop.f32.mrb[0].mxu0
      %v7858 = vpop.f32.mrb[0].mxu0
      %v7859 = vadd.f32 0.0, %v7858
      %v7860 = vpop.f32.mrb[0].mxu0
      %7861 = vmatprep.mubr.bf16.mxu0 0
      %7862 = vmatmul.mubr.bf16.gmra.mrb[0].mxu0 %v7707
      %v7863 = vpop.f32.mrb[0].mxu0
      %v7864 = vadd.f32 0.0, %v7863
      %v7865 = vpop.f32.mrb[0].mxu0
      %v7866 = vpop.f32.mrb[0].mxu0
      %v7867 = vadd.f32 0.0, %v7866
      %v7868 = vpop.f32.mrb[0].mxu0
      %7869 = vdwg.mxu0
      %v7870 = vadd.f32 %v7509, %v7744
      %v7871 = vadd.f32 %v7510, %v7747
      %v7872 = vadd.f32 %v7511, %v7752
      %v7873 = vadd.f32 %v7512, %v7755
      %v7874 = vadd.f32 %v7513, %v7760
      %v7875 = vadd.f32 %v7514, %v7763
      %v7876 = vadd.f32 %v7515, %v7768
      %v7877 = vadd.f32 %v7516, %v7771
      %v7878 = vadd.f32 %v7517, %v7776
      %v7879 = vadd.f32 %v7518, %v7779
      %v7880 = vadd.f32 %v7519, %v7784
      %v7881 = vadd.f32 %v7520, %v7787
      %v7882 = vadd.f32 %v7521, %v7792
      %v7883 = vadd.f32 %v7522, %v7795
      %v7884 = vadd.f32 %v7523, %v7800
      %v7885 = vadd.f32 %v7524, %v7803
      %v7886 = vadd.f32 %v7525, %v7808
      %v7887 = vadd.f32 %v7526, %v7811
      %v7888 = vadd.f32 %v7527, %v7816
      %v7889 = vadd.f32 %v7528, %v7819
      %v7890 = vadd.f32 %v7529, %v7824
      %v7891 = vadd.f32 %v7530, %v7827
      %v7892 = vadd.f32 %v7531, %v7832
      %v7893 = vadd.f32 %v7532, %v7835
      %v7894 = vadd.f32 %v7533, %v7840
      %v7895 = vadd.f32 %v7534, %v7843
      %v7896 = vadd.f32 %v7535, %v7848
      %v7897 = vadd.f32 %v7536, %v7851
      %v7898 = vadd.f32 %v7537, %v7856
      %v7899 = vadd.f32 %v7538, %v7859
      %v7900 = vadd.f32 %v7539, %v7864
      %v7901 = vadd.f32 %v7540, %v7867
      %v7902 = vld [vmem:[%s5977] sm:$0xf]
      %v7903 = vld [vmem:[%s5977 + $0x4] sm:$0xf]
      %v7904 = vld [vmem:[%s5977 + $0x8] sm:$0x1]
      %v7905 = vld [vmem:[%s5977 + $0xc] sm:$0xf]
      %v7906 = vld [vmem:[%s5977 + $0x10] sm:$0xf]
      %v7907 = vld [vmem:[%s5977 + $0x14] sm:$0x1]
      %v7908 = vld [vmem:[%s5977 + $0x18] sm:$0xf]
      %v7909 = vld [vmem:[%s5977 + $0x1c] sm:$0xf]
      %v7910 = vld [vmem:[%s5977 + $0x20] sm:$0x1]
      %v7911 = vld [vmem:[%s5977 + $0x24] sm:$0xf]
      %v7912 = vld [vmem:[%s5977 + $0x28] sm:$0xf]
      %v7913 = vld [vmem:[%s5977 + $0x2c] sm:$0x1]
      %v7914 = vld [vmem:[%s5977 + $0x30] sm:$0xf]
      %v7915 = vld [vmem:[%s5977 + $0x34] sm:$0xf]
      %v7916 = vld [vmem:[%s5977 + $0x38] sm:$0x1]
      %v7917 = vld [vmem:[%s5977 + $0x3c] sm:$0xf]
      %v7918 = vld [vmem:[%s5977 + $0x40] sm:$0xf]
      %v7919 = vld [vmem:[%s5977 + $0x44] sm:$0x1]
      %v7920 = vld [vmem:[%s5977 + $0x48] sm:$0xf]
      %v7921 = vld [vmem:[%s5977 + $0x4c] sm:$0xf]
      %v7922 = vld [vmem:[%s5977 + $0x50] sm:$0x1]
      %v7923 = vld [vmem:[%s5977 + $0x54] sm:$0xf]
      %v7924 = vld [vmem:[%s5977 + $0x58] sm:$0xf]
      %v7925 = vld [vmem:[%s5977 + $0x5c] sm:$0x1]
      %v7926 = vld [vmem:[%s5977 + $0x60] sm:$0xf]
      %v7927 = vld [vmem:[%s5977 + $0x64] sm:$0xf]
      %v7928 = vld [vmem:[%s5977 + $0x68] sm:$0x1]
      %v7929 = vld [vmem:[%s5977 + $0x6c] sm:$0xf]
      %v7930 = vld [vmem:[%s5977 + $0x70] sm:$0xf]
      %v7931 = vld [vmem:[%s5977 + $0x74] sm:$0x1]
      %v7932 = vld [vmem:[%s5977 + $0x78] sm:$0xf]
      %v7933 = vld [vmem:[%s5977 + $0x7c] sm:$0xf]
      %v7934 = vld [vmem:[%s5977 + $0x80] sm:$0x1]
      %v7935 = vld [vmem:[%s5977 + $0x84] sm:$0xf]
      %v7936 = vld [vmem:[%s5977 + $0x88] sm:$0xf]
      %v7937 = vld [vmem:[%s5977 + $0x8c] sm:$0x1]
      %v7938 = vld [vmem:[%s5977 + $0x90] sm:$0xf]
      %v7939 = vld [vmem:[%s5977 + $0x94] sm:$0xf]
      %v7940 = vld [vmem:[%s5977 + $0x98] sm:$0x1]
      %v7941 = vld [vmem:[%s5977 + $0x9c] sm:$0xf]
      %v7942 = vld [vmem:[%s5977 + $0xa0] sm:$0xf]
      %v7943 = vld [vmem:[%s5977 + $0xa4] sm:$0x1]
      %v7944 = vld [vmem:[%s5977 + $0xa8] sm:$0xf]
      %v7945 = vld [vmem:[%s5977 + $0xac] sm:$0xf]
      %v7946 = vld [vmem:[%s5977 + $0xb0] sm:$0x1]
      %v7947 = vld [vmem:[%s5977 + $0xb4] sm:$0xf]
      %v7948 = vld [vmem:[%s5977 + $0xb8] sm:$0xf]
      %v7949 = vld [vmem:[%s5977 + $0xbc] sm:$0x1]
      %v7951 = vshrl.u32 %v7902, 16
      %v7953 = vrot.slane %v7951, 4
      %v7954 = vshll.u32 %v7902, 16
      %v7956 = vrot.slane %v7954, 5
      %v7957 = vor.u32 %v7953, %v7956
      %v7958 = vrot.slane %v7957, 4
      %v7960 = vshll.u32 %v7903, 16
      %v7962 = vrot.slane %v7960, 5
      %v7963 = vsel %vm903, %v7958, %v7962
      %v7964 = vshrl.u32 %v7903, 16
      %v7966 = vrot.slane %v7964, 4
      %v7967 = vor.u32 %v7966, %v7962
      %v7968 = vrot.slane %v7967, 4
      %v7970 = vshll.u32 %v7904, 16
      %v7972 = vrot.slane %v7970, 5
      %v7973 = vsel %vm903, %v7968, %v7972
      %v7975 = vshrl.u32 %v7905, 16
      %v7977 = vrot.slane %v7975, 4
      %v7978 = vshll.u32 %v7905, 16
      %v7980 = vrot.slane %v7978, 5
      %v7981 = vor.u32 %v7977, %v7980
      %v7982 = vrot.slane %v7981, 4
      %v7984 = vshll.u32 %v7906, 16
      %v7986 = vrot.slane %v7984, 5
      %v7987 = vsel %vm903, %v7982, %v7986
      %v7988 = vshrl.u32 %v7906, 16
      %v7990 = vrot.slane %v7988, 4
      %v7991 = vor.u32 %v7990, %v7986
      %v7992 = vrot.slane %v7991, 4
      %v7994 = vshll.u32 %v7907, 16
      %v7996 = vrot.slane %v7994, 5
      %v7997 = vsel %vm903, %v7992, %v7996
      %v7999 = vshrl.u32 %v7908, 16
      %v8001 = vrot.slane %v7999, 4
      %v8002 = vshll.u32 %v7908, 16
      %v8004 = vrot.slane %v8002, 5
      %v8005 = vor.u32 %v8001, %v8004
      %v8006 = vrot.slane %v8005, 4
      %v8008 = vshll.u32 %v7909, 16
      %v8010 = vrot.slane %v8008, 5
      %v8011 = vsel %vm903, %v8006, %v8010
      %v8012 = vshrl.u32 %v7909, 16
      %v8014 = vrot.slane %v8012, 4
      %v8015 = vor.u32 %v8014, %v8010
      %v8016 = vrot.slane %v8015, 4
      %v8018 = vshll.u32 %v7910, 16
      %v8020 = vrot.slane %v8018, 5
      %v8021 = vsel %vm903, %v8016, %v8020
      %v8023 = vshrl.u32 %v7911, 16
      %v8025 = vrot.slane %v8023, 4
      %v8026 = vshll.u32 %v7911, 16
      %v8028 = vrot.slane %v8026, 5
      %v8029 = vor.u32 %v8025, %v8028
      %v8030 = vrot.slane %v8029, 4
      %v8032 = vshll.u32 %v7912, 16
      %v8034 = vrot.slane %v8032, 5
      %v8035 = vsel %vm903, %v8030, %v8034
      %v8036 = vshrl.u32 %v7912, 16
      %v8038 = vrot.slane %v8036, 4
      %v8039 = vor.u32 %v8038, %v8034
      %v8040 = vrot.slane %v8039, 4
      %v8042 = vshll.u32 %v7913, 16
      %v8044 = vrot.slane %v8042, 5
      %v8045 = vsel %vm903, %v8040, %v8044
      %v8047 = vshrl.u32 %v7914, 16
      %v8049 = vrot.slane %v8047, 4
      %v8050 = vshll.u32 %v7914, 16
      %v8052 = vrot.slane %v8050, 5
      %v8053 = vor.u32 %v8049, %v8052
      %v8054 = vrot.slane %v8053, 4
      %v8056 = vshll.u32 %v7915, 16
      %v8058 = vrot.slane %v8056, 5
      %v8059 = vsel %vm903, %v8054, %v8058
      %v8060 = vshrl.u32 %v7915, 16
      %v8062 = vrot.slane %v8060, 4
      %v8063 = vor.u32 %v8062, %v8058
      %v8064 = vrot.slane %v8063, 4
      %v8066 = vshll.u32 %v7916, 16
      %v8068 = vrot.slane %v8066, 5
      %v8069 = vsel %vm903, %v8064, %v8068
      %v8071 = vshrl.u32 %v7917, 16
      %v8073 = vrot.slane %v8071, 4
      %v8074 = vshll.u32 %v7917, 16
      %v8076 = vrot.slane %v8074, 5
      %v8077 = vor.u32 %v8073, %v8076
      %v8078 = vrot.slane %v8077, 4
      %v8080 = vshll.u32 %v7918, 16
      %v8082 = vrot.slane %v8080, 5
      %v8083 = vsel %vm903, %v8078, %v8082
      %v8084 = vshrl.u32 %v7918, 16
      %v8086 = vrot.slane %v8084, 4
      %v8087 = vor.u32 %v8086, %v8082
      %v8088 = vrot.slane %v8087, 4
      %v8090 = vshll.u32 %v7919, 16
      %v8092 = vrot.slane %v8090, 5
      %v8093 = vsel %vm903, %v8088, %v8092
      %v8095 = vshrl.u32 %v7920, 16
      %v8097 = vrot.slane %v8095, 4
      %v8098 = vshll.u32 %v7920, 16
      %v8100 = vrot.slane %v8098, 5
      %v8101 = vor.u32 %v8097, %v8100
      %v8102 = vrot.slane %v8101, 4
      %v8104 = vshll.u32 %v7921, 16
      %v8106 = vrot.slane %v8104, 5
      %v8107 = vsel %vm903, %v8102, %v8106
      %v8108 = vshrl.u32 %v7921, 16
      %v8110 = vrot.slane %v8108, 4
      %v8111 = vor.u32 %v8110, %v8106
      %v8112 = vrot.slane %v8111, 4
      %v8114 = vshll.u32 %v7922, 16
      %v8116 = vrot.slane %v8114, 5
      %v8117 = vsel %vm903, %v8112, %v8116
      %v8119 = vshrl.u32 %v7923, 16
      %v8121 = vrot.slane %v8119, 4
      %v8122 = vshll.u32 %v7923, 16
      %v8124 = vrot.slane %v8122, 5
      %v8125 = vor.u32 %v8121, %v8124
      %v8126 = vrot.slane %v8125, 4
      %v8128 = vshll.u32 %v7924, 16
      %v8130 = vrot.slane %v8128, 5
      %v8131 = vsel %vm903, %v8126, %v8130
      %v8132 = vshrl.u32 %v7924, 16
      %v8134 = vrot.slane %v8132, 4
      %v8135 = vor.u32 %v8134, %v8130
      %v8136 = vrot.slane %v8135, 4
      %v8138 = vshll.u32 %v7925, 16
      %v8140 = vrot.slane %v8138, 5
      %v8141 = vsel %vm903, %v8136, %v8140
      %v8143 = vshrl.u32 %v7926, 16
      %v8145 = vrot.slane %v8143, 4
      %v8146 = vshll.u32 %v7926, 16
      %v8148 = vrot.slane %v8146, 5
      %v8149 = vor.u32 %v8145, %v8148
      %v8150 = vrot.slane %v8149, 4
      %v8152 = vshll.u32 %v7927, 16
      %v8154 = vrot.slane %v8152, 5
      %v8155 = vsel %vm903, %v8150, %v8154
      %v8156 = vshrl.u32 %v7927, 16
      %v8158 = vrot.slane %v8156, 4
      %v8159 = vor.u32 %v8158, %v8154
      %v8160 = vrot.slane %v8159, 4
      %v8162 = vshll.u32 %v7928, 16
      %v8164 = vrot.slane %v8162, 5
      %v8165 = vsel %vm903, %v8160, %v8164
      %v8167 = vshrl.u32 %v7929, 16
      %v8169 = vrot.slane %v8167, 4
      %v8170 = vshll.u32 %v7929, 16
      %v8172 = vrot.slane %v8170, 5
      %v8173 = vor.u32 %v8169, %v8172
      %v8174 = vrot.slane %v8173, 4
      %v8176 = vshll.u32 %v7930, 16
      %v8178 = vrot.slane %v8176, 5
      %v8179 = vsel %vm903, %v8174, %v8178
      %v8180 = vshrl.u32 %v7930, 16
      %v8182 = vrot.slane %v8180, 4
      %v8183 = vor.u32 %v8182, %v8178
      %v8184 = vrot.slane %v8183, 4
      %v8186 = vshll.u32 %v7931, 16
      %v8188 = vrot.slane %v8186, 5
      %v8189 = vsel %vm903, %v8184, %v8188
      %v8191 = vshrl.u32 %v7932, 16
      %v8193 = vrot.slane %v8191, 4
      %v8194 = vshll.u32 %v7932, 16
      %v8196 = vrot.slane %v8194, 5
      %v8197 = vor.u32 %v8193, %v8196
      %v8198 = vrot.slane %v8197, 4
      %v8200 = vshll.u32 %v7933, 16
      %v8202 = vrot.slane %v8200, 5
      %v8203 = vsel %vm903, %v8198, %v8202
      %v8204 = vshrl.u32 %v7933, 16
      %v8206 = vrot.slane %v8204, 4
      %v8207 = vor.u32 %v8206, %v8202
      %v8208 = vrot.slane %v8207, 4
      %v8210 = vshll.u32 %v7934, 16
      %v8212 = vrot.slane %v8210, 5
      %v8213 = vsel %vm903, %v8208, %v8212
      %v8215 = vshrl.u32 %v7935, 16
      %v8217 = vrot.slane %v8215, 4
      %v8218 = vshll.u32 %v7935, 16
      %v8220 = vrot.slane %v8218, 5
      %v8221 = vor.u32 %v8217, %v8220
      %v8222 = vrot.slane %v8221, 4
      %v8224 = vshll.u32 %v7936, 16
      %v8226 = vrot.slane %v8224, 5
      %v8227 = vsel %vm903, %v8222, %v8226
      %v8228 = vshrl.u32 %v7936, 16
      %v8230 = vrot.slane %v8228, 4
      %v8231 = vor.u32 %v8230, %v8226
      %v8232 = vrot.slane %v8231, 4
      %v8234 = vshll.u32 %v7937, 16
      %v8236 = vrot.slane %v8234, 5
      %v8237 = vsel %vm903, %v8232, %v8236
      %v8239 = vshrl.u32 %v7938, 16
      %v8241 = vrot.slane %v8239, 4
      %v8242 = vshll.u32 %v7938, 16
      %v8244 = vrot.slane %v8242, 5
      %v8245 = vor.u32 %v8241, %v8244
      %v8246 = vrot.slane %v8245, 4
      %v8248 = vshll.u32 %v7939, 16
      %v8250 = vrot.slane %v8248, 5
      %v8251 = vsel %vm903, %v8246, %v8250
      %v8252 = vshrl.u32 %v7939, 16
      %v8254 = vrot.slane %v8252, 4
      %v8255 = vor.u32 %v8254, %v8250
      %v8256 = vrot.slane %v8255, 4
      %v8258 = vshll.u32 %v7940, 16
      %v8260 = vrot.slane %v8258, 5
      %v8261 = vsel %vm903, %v8256, %v8260
      %v8263 = vshrl.u32 %v7941, 16
      %v8265 = vrot.slane %v8263, 4
      %v8266 = vshll.u32 %v7941, 16
      %v8268 = vrot.slane %v8266, 5
      %v8269 = vor.u32 %v8265, %v8268
      %v8270 = vrot.slane %v8269, 4
      %v8272 = vshll.u32 %v7942, 16
      %v8274 = vrot.slane %v8272, 5
      %v8275 = vsel %vm903, %v8270, %v8274
      %v8276 = vshrl.u32 %v7942, 16
      %v8278 = vrot.slane %v8276, 4
      %v8279 = vor.u32 %v8278, %v8274
      %v8280 = vrot.slane %v8279, 4
      %v8282 = vshll.u32 %v7943, 16
      %v8284 = vrot.slane %v8282, 5
      %v8285 = vsel %vm903, %v8280, %v8284
      %v8287 = vshrl.u32 %v7944, 16
      %v8289 = vrot.slane %v8287, 4
      %v8290 = vshll.u32 %v7944, 16
      %v8292 = vrot.slane %v8290, 5
      %v8293 = vor.u32 %v8289, %v8292
      %v8294 = vrot.slane %v8293, 4
      %v8296 = vshll.u32 %v7945, 16
      %v8298 = vrot.slane %v8296, 5
      %v8299 = vsel %vm903, %v8294, %v8298
      %v8300 = vshrl.u32 %v7945, 16
      %v8302 = vrot.slane %v8300, 4
      %v8303 = vor.u32 %v8302, %v8298
      %v8304 = vrot.slane %v8303, 4
      %v8306 = vshll.u32 %v7946, 16
      %v8308 = vrot.slane %v8306, 5
      %v8309 = vsel %vm903, %v8304, %v8308
      %v8311 = vshrl.u32 %v7947, 16
      %v8313 = vrot.slane %v8311, 4
      %v8314 = vshll.u32 %v7947, 16
      %v8316 = vrot.slane %v8314, 5
      %v8317 = vor.u32 %v8313, %v8316
      %v8318 = vrot.slane %v8317, 4
      %v8320 = vshll.u32 %v7948, 16
      %v8322 = vrot.slane %v8320, 5
      %v8323 = vsel %vm903, %v8318, %v8322
      %v8324 = vshrl.u32 %v7948, 16
      %v8326 = vrot.slane %v8324, 4
      %v8327 = vor.u32 %v8326, %v8322
      %v8328 = vrot.slane %v8327, 4
      %v8330 = vshll.u32 %v7949, 16
      %v8332 = vrot.slane %v8330, 5
      %v8333 = vsel %vm903, %v8328, %v8332
      %v8334 = vld [vmem:[%s3 + $0x20] sm:$0xf]
      %v8335 = vld [vmem:[%s3 + $0x24] sm:$0xf]
      %v8336 = vunpack.c.l.b16 %v7963
      %v8337 = vunpack.c.l.b16 %v7973
      %v8338 = vunpack.c.l.b16 %v7987
      %v8339 = vunpack.c.l.b16 %v7997
      %v8340 = vunpack.c.l.b16 %v8011
      %v8341 = vunpack.c.l.b16 %v8021
      %v8342 = vunpack.c.l.b16 %v8035
      %v8343 = vunpack.c.l.b16 %v8045
      %v8344 = vunpack.c.l.b16 %v8059
      %v8345 = vunpack.c.l.b16 %v8069
      %v8346 = vunpack.c.l.b16 %v8083
      %v8347 = vunpack.c.l.b16 %v8093
      %v8348 = vunpack.c.l.b16 %v8107
      %v8349 = vunpack.c.l.b16 %v8117
      %v8350 = vunpack.c.l.b16 %v8131
      %v8351 = vunpack.c.l.b16 %v8141
      %v8352 = vunpack.c.l.b16 %v8155
      %v8353 = vunpack.c.l.b16 %v8165
      %v8354 = vunpack.c.l.b16 %v8179
      %v8355 = vunpack.c.l.b16 %v8189
      %v8356 = vunpack.c.l.b16 %v8203
      %v8357 = vunpack.c.l.b16 %v8213
      %v8358 = vunpack.c.l.b16 %v8227
      %v8359 = vunpack.c.l.b16 %v8237
      %v8360 = vunpack.c.l.b16 %v8251
      %v8361 = vunpack.c.l.b16 %v8261
      %v8362 = vunpack.c.l.b16 %v8275
      %v8363 = vunpack.c.l.b16 %v8285
      %v8364 = vunpack.c.l.b16 %v8299
      %v8365 = vunpack.c.l.b16 %v8309
      %v8366 = vunpack.c.l.b16 %v8323
      %v8367 = vunpack.c.l.b16 %v8333
      %v8368 = vpack.c.b16 %v8337, %v8336
      %v8369 = vpack.c.b16 %v8339, %v8338
      %v8370 = vpack.c.b16 %v8341, %v8340
      %v8371 = vpack.c.b16 %v8343, %v8342
      %v8372 = vpack.c.b16 %v8345, %v8344
      %v8373 = vpack.c.b16 %v8347, %v8346
      %v8374 = vpack.c.b16 %v8349, %v8348
      %v8375 = vpack.c.b16 %v8351, %v8350
      %v8376 = vpack.c.b16 %v8353, %v8352
      %v8377 = vpack.c.b16 %v8355, %v8354
      %v8378 = vpack.c.b16 %v8357, %v8356
      %v8379 = vpack.c.b16 %v8359, %v8358
      %v8380 = vpack.c.b16 %v8361, %v8360
      %v8381 = vpack.c.b16 %v8363, %v8362
      %v8382 = vpack.c.b16 %v8365, %v8364
      %v8383 = vpack.c.b16 %v8367, %v8366
      %v8386 = vunpack.c.l.b16 %v8334
      %v8387 = vunpack.c.l.b16 %v8335
      %v8388 = vpack.c.b16 %v8387, %v8386
      %v8391 = vsel %vm1344, %v8368, 0
      %v8394 = vsel %vm1344, %v8369, 0
      %v8397 = vsel %vm1344, %v8370, 0
      %v8400 = vsel %vm1344, %v8371, 0
      %v8403 = vsel %vm1344, %v8372, 0
      %v8406 = vsel %vm1344, %v8373, 0
      %v8409 = vsel %vm1344, %v8374, 0
      %v8412 = vsel %vm1344, %v8375, 0
      %v8415 = vsel %vm1344, %v8376, 0
      %v8418 = vsel %vm1344, %v8377, 0
      %v8421 = vsel %vm1344, %v8378, 0
      %v8424 = vsel %vm1344, %v8379, 0
      %v8427 = vsel %vm1344, %v8380, 0
      %v8430 = vsel %vm1344, %v8381, 0
      %v8433 = vsel %vm1344, %v8382, 0
      %v8436 = vsel %vm1344, %v8383, 0
      %8438 = vmatprep.subr.bf16.mxu0 0
      %8439 = vmatpush1.bf16.msra.mxu0 %v8388
      %8440 = vmatprep.subr.bf16.mxu0 0
      %8441 = vmatpush1.bf16.msra.mxu0 0
      %8442 = vmatprep.subr.bf16.mxu0 0
      %8443 = vmatpush1.bf16.msra.mxu0 0
      %8444 = vmatprep.subr.bf16.mxu0 0
      %8445 = vmatpush1.bf16.msra.mxu0 0
      %8446 = vmatprep.subr.bf16.mxu0 0
      %8447 = vmatpush1.bf16.msra.mxu0 0
      %8448 = vmatprep.subr.bf16.mxu0 0
      %8449 = vmatpush1.bf16.msra.mxu0 0
      %8450 = vmatprep.subr.bf16.mxu0 0
      %8451 = vmatpush1.bf16.msra.mxu0 0
      %8452 = vmatprep.subr.bf16.mxu0 0
      %8453 = vmatpush1.bf16.msra.mxu0 0
      %8454 = vmatprep.subr.bf16.mxu0 0
      %8455 = vmatpush1.bf16.msra.mxu0 0
      %8456 = vmatprep.subr.bf16.mxu0 0
      %8457 = vmatpush1.bf16.msra.mxu0 0
      %8458 = vmatprep.subr.bf16.mxu0 0
      %8459 = vmatpush1.bf16.msra.mxu0 0
      %8460 = vmatprep.subr.bf16.mxu0 0
      %8461 = vmatpush1.bf16.msra.mxu0 0
      %8462 = vmatprep.subr.bf16.mxu0 0
      %8463 = vmatpush1.bf16.msra.mxu0 0
      %8464 = vmatprep.subr.bf16.mxu0 0
      %8465 = vmatpush1.bf16.msra.mxu0 0
      %8466 = vmatprep.subr.bf16.mxu0 0
      %8467 = vmatpush1.bf16.msra.mxu0 0
      %8468 = vmatprep.subr.bf16.mxu0 0
      %8469 = vmatpush1.bf16.msra.mxu0 0
      %8470 = vmatprep.mubr.bf16.mxu0 0
      %8471 = vmatmul.mubr.bf16.gmra.mrb[0].mxu0 %v8391
      %v8472 = vpop.f32.mrb[0].mxu0
      %v8473 = vadd.f32 0.0, %v8472
      %v8474 = vpop.f32.mrb[0].mxu0
      %v8475 = vpop.f32.mrb[0].mxu0
      %v8476 = vadd.f32 0.0, %v8475
      %v8477 = vpop.f32.mrb[0].mxu0
      %8478 = vmatprep.mubr.bf16.mxu0 0
      %8479 = vmatmul.mubr.bf16.gmra.mrb[0].mxu0 %v8394
      %v8480 = vpop.f32.mrb[0].mxu0
      %v8481 = vadd.f32 0.0, %v8480
      %v8482 = vpop.f32.mrb[0].mxu0
      %v8483 = vpop.f32.mrb[0].mxu0
      %v8484 = vadd.f32 0.0, %v8483
      %v8485 = vpop.f32.mrb[0].mxu0
      %8486 = vmatprep.mubr.bf16.mxu0 0
      %8487 = vmatmul.mubr.bf16.gmra.mrb[0].mxu0 %v8397
      %v8488 = vpop.f32.mrb[0].mxu0
      %v8489 = vadd.f32 0.0, %v8488
      %v8490 = vpop.f32.mrb[0].mxu0
      %v8491 = vpop.f32.mrb[0].mxu0
      %v8492 = vadd.f32 0.0, %v8491
      %v8493 = vpop.f32.mrb[0].mxu0
      %8494 = vmatprep.mubr.bf16.mxu0 0
      %8495 = vmatmul.mubr.bf16.gmra.mrb[0].mxu0 %v8400
      %v8496 = vpop.f32.mrb[0].mxu0
      %v8497 = vadd.f32 0.0, %v8496
      %v8498 = vpop.f32.mrb[0].mxu0
      %v8499 = vpop.f32.mrb[0].mxu0
      %v8500 = vadd.f32 0.0, %v8499
      %v8501 = vpop.f32.mrb[0].mxu0
      %8502 = vmatprep.mubr.bf16.mxu0 0
      %8503 = vmatmul.mubr.bf16.gmra.mrb[0].mxu0 %v8403
      %v8504 = vpop.f32.mrb[0].mxu0
      %v8505 = vadd.f32 0.0, %v8504
      %v8506 = vpop.f32.mrb[0].mxu0
      %v8507 = vpop.f32.mrb[0].mxu0
      %v8508 = vadd.f32 0.0, %v8507
      %v8509 = vpop.f32.mrb[0].mxu0
      %8510 = vmatprep.mubr.bf16.mxu0 0
      %8511 = vmatmul.mubr.bf16.gmra.mrb[0].mxu0 %v8406
      %v8512 = vpop.f32.mrb[0].mxu0
      %v8513 = vadd.f32 0.0, %v8512
      %v8514 = vpop.f32.mrb[0].mxu0
      %v8515 = vpop.f32.mrb[0].mxu0
      %v8516 = vadd.f32 0.0, %v8515
      %v8517 = vpop.f32.mrb[0].mxu0
      %8518 = vmatprep.mubr.bf16.mxu0 0
      %8519 = vmatmul.mubr.bf16.gmra.mrb[0].mxu0 %v8409
      %v8520 = vpop.f32.mrb[0].mxu0
      %v8521 = vadd.f32 0.0, %v8520
      %v8522 = vpop.f32.mrb[0].mxu0
      %v8523 = vpop.f32.mrb[0].mxu0
      %v8524 = vadd.f32 0.0, %v8523
      %v8525 = vpop.f32.mrb[0].mxu0
      %8526 = vmatprep.mubr.bf16.mxu0 0
      %8527 = vmatmul.mubr.bf16.gmra.mrb[0].mxu0 %v8412
      %v8528 = vpop.f32.mrb[0].mxu0
      %v8529 = vadd.f32 0.0, %v8528
      %v8530 = vpop.f32.mrb[0].mxu0
      %v8531 = vpop.f32.mrb[0].mxu0
      %v8532 = vadd.f32 0.0, %v8531
      %v8533 = vpop.f32.mrb[0].mxu0
      %8534 = vmatprep.mubr.bf16.mxu0 0
      %8535 = vmatmul.mubr.bf16.gmra.mrb[0].mxu0 %v8415
      %v8536 = vpop.f32.mrb[0].mxu0
      %v8537 = vadd.f32 0.0, %v8536
      %v8538 = vpop.f32.mrb[0].mxu0
      %v8539 = vpop.f32.mrb[0].mxu0
      %v8540 = vadd.f32 0.0, %v8539
      %v8541 = vpop.f32.mrb[0].mxu0
      %8542 = vmatprep.mubr.bf16.mxu0 0
      %8543 = vmatmul.mubr.bf16.gmra.mrb[0].mxu0 %v8418
      %v8544 = vpop.f32.mrb[0].mxu0
      %v8545 = vadd.f32 0.0, %v8544
      %v8546 = vpop.f32.mrb[0].mxu0
      %v8547 = vpop.f32.mrb[0].mxu0
      %v8548 = vadd.f32 0.0, %v8547
      %v8549 = vpop.f32.mrb[0].mxu0
      %8550 = vmatprep.mubr.bf16.mxu0 0
      %8551 = vmatmul.mubr.bf16.gmra.mrb[0].mxu0 %v8421
      %v8552 = vpop.f32.mrb[0].mxu0
      %v8553 = vadd.f32 0.0, %v8552
      %v8554 = vpop.f32.mrb[0].mxu0
      %v8555 = vpop.f32.mrb[0].mxu0
      %v8556 = vadd.f32 0.0, %v8555
      %v8557 = vpop.f32.mrb[0].mxu0
      %8558 = vmatprep.mubr.bf16.mxu0 0
      %8559 = vmatmul.mubr.bf16.gmra.mrb[0].mxu0 %v8424
      %v8560 = vpop.f32.mrb[0].mxu0
      %v8561 = vadd.f32 0.0, %v8560
      %v8562 = vpop.f32.mrb[0].mxu0
      %v8563 = vpop.f32.mrb[0].mxu0
      %v8564 = vadd.f32 0.0, %v8563
      %v8565 = vpop.f32.mrb[0].mxu0
      %8566 = vmatprep.mubr.bf16.mxu0 0
      %8567 = vmatmul.mubr.bf16.gmra.mrb[0].mxu0 %v8427
      %v8568 = vpop.f32.mrb[0].mxu0
      %v8569 = vadd.f32 0.0, %v8568
      %v8570 = vpop.f32.mrb[0].mxu0
      %v8571 = vpop.f32.mrb[0].mxu0
      %v8572 = vadd.f32 0.0, %v8571
      %v8573 = vpop.f32.mrb[0].mxu0
      %8574 = vmatprep.mubr.bf16.mxu0 0
      %8575 = vmatmul.mubr.bf16.gmra.mrb[0].mxu0 %v8430
      %v8576 = vpop.f32.mrb[0].mxu0
      %v8577 = vadd.f32 0.0, %v8576
      %v8578 = vpop.f32.mrb[0].mxu0
      %v8579 = vpop.f32.mrb[0].mxu0
      %v8580 = vadd.f32 0.0, %v8579
      %v8581 = vpop.f32.mrb[0].mxu0
      %8582 = vmatprep.mubr.bf16.mxu0 0
      %8583 = vmatmul.mubr.bf16.gmra.mrb[0].mxu0 %v8433
      %v8584 = vpop.f32.mrb[0].mxu0
      %v8585 = vadd.f32 0.0, %v8584
      %v8586 = vpop.f32.mrb[0].mxu0
      %v8587 = vpop.f32.mrb[0].mxu0
      %v8588 = vadd.f32 0.0, %v8587
      %v8589 = vpop.f32.mrb[0].mxu0
      %8590 = vmatprep.mubr.bf16.mxu0 0
      %8591 = vmatmul.mubr.bf16.gmra.mrb[0].mxu0 %v8436
      %v8592 = vpop.f32.mrb[0].mxu0
      %v8593 = vadd.f32 0.0, %v8592
      %v8594 = vpop.f32.mrb[0].mxu0
      %v8595 = vpop.f32.mrb[0].mxu0
      %v8596 = vadd.f32 0.0, %v8595
      %v8597 = vpop.f32.mrb[0].mxu0
      %8598 = vdwg.mxu0
      %v8599 = vadd.f32 %v7870, %v8473
      %v8600 = vadd.f32 %v7871, %v8476
      %v8601 = vadd.f32 %v7872, %v8481
      %v8602 = vadd.f32 %v7873, %v8484
      %v8603 = vadd.f32 %v7874, %v8489
      %v8604 = vadd.f32 %v7875, %v8492
      %v8605 = vadd.f32 %v7876, %v8497
      %v8606 = vadd.f32 %v7877, %v8500
      %v8607 = vadd.f32 %v7878, %v8505
      %v8608 = vadd.f32 %v7879, %v8508
      %v8609 = vadd.f32 %v7880, %v8513
      %v8610 = vadd.f32 %v7881, %v8516
      %v8611 = vadd.f32 %v7882, %v8521
      %v8612 = vadd.f32 %v7883, %v8524
      %v8613 = vadd.f32 %v7884, %v8529
      %v8614 = vadd.f32 %v7885, %v8532
      %v8615 = vadd.f32 %v7886, %v8537
      %v8616 = vadd.f32 %v7887, %v8540
      %v8617 = vadd.f32 %v7888, %v8545
      %v8618 = vadd.f32 %v7889, %v8548
      %v8619 = vadd.f32 %v7890, %v8553
      %v8620 = vadd.f32 %v7891, %v8556
      %v8621 = vadd.f32 %v7892, %v8561
      %v8622 = vadd.f32 %v7893, %v8564
      %v8623 = vadd.f32 %v7894, %v8569
      %v8624 = vadd.f32 %v7895, %v8572
      %v8625 = vadd.f32 %v7896, %v8577
      %v8626 = vadd.f32 %v7897, %v8580
      %v8627 = vadd.f32 %v7898, %v8585
      %v8628 = vadd.f32 %v7899, %v8588
      %v8629 = vadd.f32 %v7900, %v8593
      %v8630 = vadd.f32 %v7901, %v8596
      %v8631 = vld [vmem:[%s5977] sm:$0xe]
      %v8632 = vld [vmem:[%s5977 + $0xc] sm:$0xe]
      %v8633 = vld [vmem:[%s5977 + $0x18] sm:$0xe]
      %v8634 = vld [vmem:[%s5977 + $0x24] sm:$0xe]
      %v8635 = vld [vmem:[%s5977 + $0x30] sm:$0xe]
      %v8636 = vld [vmem:[%s5977 + $0x3c] sm:$0xe]
      %v8637 = vld [vmem:[%s5977 + $0x48] sm:$0xe]
      %v8638 = vld [vmem:[%s5977 + $0x54] sm:$0xe]
      %v8639 = vld [vmem:[%s5977 + $0x60] sm:$0xe]
      %v8640 = vld [vmem:[%s5977 + $0x6c] sm:$0xe]
      %v8641 = vld [vmem:[%s5977 + $0x78] sm:$0xe]
      %v8642 = vld [vmem:[%s5977 + $0x84] sm:$0xe]
      %v8643 = vld [vmem:[%s5977 + $0x90] sm:$0xe]
      %v8644 = vld [vmem:[%s5977 + $0x9c] sm:$0xe]
      %v8645 = vld [vmem:[%s5977 + $0xa8] sm:$0xe]
      %v8646 = vld [vmem:[%s5977 + $0xb4] sm:$0xe]
      %v8695 = vrot.slane %v8631, 5
      %v8696 = vrot.slane %v8695, 4
      %v8697 = vrot.slane %v7903, 5
      %v8698 = vsel %vm1899, %v8696, %v8697
      %v8699 = vrot.slane %v8697, 4
      %v8700 = vrot.slane %v7904, 5
      %v8701 = vsel %vm1899, %v8699, %v8700
      %v8702 = vrot.slane %v8632, 5
      %v8703 = vrot.slane %v8702, 4
      %v8704 = vrot.slane %v7906, 5
      %v8705 = vsel %vm1899, %v8703, %v8704
      %v8706 = vrot.slane %v8704, 4
      %v8707 = vrot.slane %v7907, 5
      %v8708 = vsel %vm1899, %v8706, %v8707
      %v8709 = vrot.slane %v8633, 5
      %v8710 = vrot.slane %v8709, 4
      %v8711 = vrot.slane %v7909, 5
      %v8712 = vsel %vm1899, %v8710, %v8711
      %v8713 = vrot.slane %v8711, 4
      %v8714 = vrot.slane %v7910, 5
      %v8715 = vsel %vm1899, %v8713, %v8714
      %v8716 = vrot.slane %v8634, 5
      %v8717 = vrot.slane %v8716, 4
      %v8718 = vrot.slane %v7912, 5
      %v8719 = vsel %vm1899, %v8717, %v8718
      %v8720 = vrot.slane %v8718, 4
      %v8721 = vrot.slane %v7913, 5
      %v8722 = vsel %vm1899, %v8720, %v8721
      %v8723 = vrot.slane %v8635, 5
      %v8724 = vrot.slane %v8723, 4
      %v8725 = vrot.slane %v7915, 5
      %v8726 = vsel %vm1899, %v8724, %v8725
      %v8727 = vrot.slane %v8725, 4
      %v8728 = vrot.slane %v7916, 5
      %v8729 = vsel %vm1899, %v8727, %v8728
      %v8730 = vrot.slane %v8636, 5
      %v8731 = vrot.slane %v8730, 4
      %v8732 = vrot.slane %v7918, 5
      %v8733 = vsel %vm1899, %v8731, %v8732
      %v8734 = vrot.slane %v8732, 4
      %v8735 = vrot.slane %v7919, 5
      %v8736 = vsel %vm1899, %v8734, %v8735
      %v8737 = vrot.slane %v8637, 5
      %v8738 = vrot.slane %v8737, 4
      %v8739 = vrot.slane %v7921, 5
      %v8740 = vsel %vm1899, %v8738, %v8739
      %v8741 = vrot.slane %v8739, 4
      %v8742 = vrot.slane %v7922, 5
      %v8743 = vsel %vm1899, %v8741, %v8742
      %v8744 = vrot.slane %v8638, 5
      %v8745 = vrot.slane %v8744, 4
      %v8746 = vrot.slane %v7924, 5
      %v8747 = vsel %vm1899, %v8745, %v8746
      %v8748 = vrot.slane %v8746, 4
      %v8749 = vrot.slane %v7925, 5
      %v8750 = vsel %vm1899, %v8748, %v8749
      %v8751 = vrot.slane %v8639, 5
      %v8752 = vrot.slane %v8751, 4
      %v8753 = vrot.slane %v7927, 5
      %v8754 = vsel %vm1899, %v8752, %v8753
      %v8755 = vrot.slane %v8753, 4
      %v8756 = vrot.slane %v7928, 5
      %v8757 = vsel %vm1899, %v8755, %v8756
      %v8758 = vrot.slane %v8640, 5
      %v8759 = vrot.slane %v8758, 4
      %v8760 = vrot.slane %v7930, 5
      %v8761 = vsel %vm1899, %v8759, %v8760
      %v8762 = vrot.slane %v8760, 4
      %v8763 = vrot.slane %v7931, 5
      %v8764 = vsel %vm1899, %v8762, %v8763
      %v8765 = vrot.slane %v8641, 5
      %v8766 = vrot.slane %v8765, 4
      %v8767 = vrot.slane %v7933, 5
      %v8768 = vsel %vm1899, %v8766, %v8767
      %v8769 = vrot.slane %v8767, 4
      %v8770 = vrot.slane %v7934, 5
      %v8771 = vsel %vm1899, %v8769, %v8770
      %v8772 = vrot.slane %v8642, 5
      %v8773 = vrot.slane %v8772, 4
      %v8774 = vrot.slane %v7936, 5
      %v8775 = vsel %vm1899, %v8773, %v8774
      %v8776 = vrot.slane %v8774, 4
      %v8777 = vrot.slane %v7937, 5
      %v8778 = vsel %vm1899, %v8776, %v8777
      %v8779 = vrot.slane %v8643, 5
      %v8780 = vrot.slane %v8779, 4
      %v8781 = vrot.slane %v7939, 5
      %v8782 = vsel %vm1899, %v8780, %v8781
      %v8783 = vrot.slane %v8781, 4
      %v8784 = vrot.slane %v7940, 5
      %v8785 = vsel %vm1899, %v8783, %v8784
      %v8786 = vrot.slane %v8644, 5
      %v8787 = vrot.slane %v8786, 4
      %v8788 = vrot.slane %v7942, 5
      %v8789 = vsel %vm1899, %v8787, %v8788
      %v8790 = vrot.slane %v8788, 4
      %v8791 = vrot.slane %v7943, 5
      %v8792 = vsel %vm1899, %v8790, %v8791
      %v8793 = vrot.slane %v8645, 5
      %v8794 = vrot.slane %v8793, 4
      %v8795 = vrot.slane %v7945, 5
      %v8796 = vsel %vm1899, %v8794, %v8795
      %v8797 = vrot.slane %v8795, 4
      %v8798 = vrot.slane %v7946, 5
      %v8799 = vsel %vm1899, %v8797, %v8798
      %v8800 = vrot.slane %v8646, 5
      %v8801 = vrot.slane %v8800, 4
      %v8802 = vrot.slane %v7948, 5
      %v8803 = vsel %vm1899, %v8801, %v8802
      %v8804 = vrot.slane %v8802, 4
      %v8805 = vrot.slane %v7949, 5
      %v8806 = vsel %vm1899, %v8804, %v8805
      %v8807 = vld [vmem:[%s3 + $0x28] sm:$0xf]
      %v8808 = vld [vmem:[%s3 + $0x2c] sm:$0xf]
      %v8809 = vunpack.c.l.b16 %v8698
      %v8810 = vunpack.c.l.b16 %v8701
      %v8811 = vunpack.c.l.b16 %v8705
      %v8812 = vunpack.c.l.b16 %v8708
      %v8813 = vunpack.c.l.b16 %v8712
      %v8814 = vunpack.c.l.b16 %v8715
      %v8815 = vunpack.c.l.b16 %v8719
      %v8816 = vunpack.c.l.b16 %v8722
      %v8817 = vunpack.c.l.b16 %v8726
      %v8818 = vunpack.c.l.b16 %v8729
      %v8819 = vunpack.c.l.b16 %v8733
      %v8820 = vunpack.c.l.b16 %v8736
      %v8821 = vunpack.c.l.b16 %v8740
      %v8822 = vunpack.c.l.b16 %v8743
      %v8823 = vunpack.c.l.b16 %v8747
      %v8824 = vunpack.c.l.b16 %v8750
      %v8825 = vunpack.c.l.b16 %v8754
      %v8826 = vunpack.c.l.b16 %v8757
      %v8827 = vunpack.c.l.b16 %v8761
      %v8828 = vunpack.c.l.b16 %v8764
      %v8829 = vunpack.c.l.b16 %v8768
      %v8830 = vunpack.c.l.b16 %v8771
      %v8831 = vunpack.c.l.b16 %v8775
      %v8832 = vunpack.c.l.b16 %v8778
      %v8833 = vunpack.c.l.b16 %v8782
      %v8834 = vunpack.c.l.b16 %v8785
      %v8835 = vunpack.c.l.b16 %v8789
      %v8836 = vunpack.c.l.b16 %v8792
      %v8837 = vunpack.c.l.b16 %v8796
      %v8838 = vunpack.c.l.b16 %v8799
      %v8839 = vunpack.c.l.b16 %v8803
      %v8840 = vunpack.c.l.b16 %v8806
      %v8841 = vpack.c.b16 %v8810, %v8809
      %v8842 = vpack.c.b16 %v8812, %v8811
      %v8843 = vpack.c.b16 %v8814, %v8813
      %v8844 = vpack.c.b16 %v8816, %v8815
      %v8845 = vpack.c.b16 %v8818, %v8817
      %v8846 = vpack.c.b16 %v8820, %v8819
      %v8847 = vpack.c.b16 %v8822, %v8821
      %v8848 = vpack.c.b16 %v8824, %v8823
      %v8849 = vpack.c.b16 %v8826, %v8825
      %v8850 = vpack.c.b16 %v8828, %v8827
      %v8851 = vpack.c.b16 %v8830, %v8829
      %v8852 = vpack.c.b16 %v8832, %v8831
      %v8853 = vpack.c.b16 %v8834, %v8833
      %v8854 = vpack.c.b16 %v8836, %v8835
      %v8855 = vpack.c.b16 %v8838, %v8837
      %v8856 = vpack.c.b16 %v8840, %v8839
      %v8859 = vunpack.c.l.b16 %v8807
      %v8860 = vunpack.c.l.b16 %v8808
      %v8861 = vpack.c.b16 %v8860, %v8859
      %v8864 = vsel %vm1344, %v8841, 0
      %v8867 = vsel %vm1344, %v8842, 0
      %v8870 = vsel %vm1344, %v8843, 0
      %v8873 = vsel %vm1344, %v8844, 0
      %v8876 = vsel %vm1344, %v8845, 0
      %v8879 = vsel %vm1344, %v8846, 0
      %v8882 = vsel %vm1344, %v8847, 0
      %v8885 = vsel %vm1344, %v8848, 0
      %v8888 = vsel %vm1344, %v8849, 0
      %v8891 = vsel %vm1344, %v8850, 0
      %v8894 = vsel %vm1344, %v8851, 0
      %v8897 = vsel %vm1344, %v8852, 0
      %v8900 = vsel %vm1344, %v8853, 0
      %v8903 = vsel %vm1344, %v8854, 0
      %v8906 = vsel %vm1344, %v8855, 0
      %v8909 = vsel %vm1344, %v8856, 0
      %8911 = vmatprep.subr.bf16.mxu0 0
      %8912 = vmatpush1.bf16.msra.mxu0 %v8861
      %8913 = vmatprep.subr.bf16.mxu0 0
      %8914 = vmatpush1.bf16.msra.mxu0 0
      %8915 = vmatprep.subr.bf16.mxu0 0
      %8916 = vmatpush1.bf16.msra.mxu0 0
      %8917 = vmatprep.subr.bf16.mxu0 0
      %8918 = vmatpush1.bf16.msra.mxu0 0
      %8919 = vmatprep.subr.bf16.mxu0 0
      %8920 = vmatpush1.bf16.msra.mxu0 0
      %8921 = vmatprep.subr.bf16.mxu0 0
      %8922 = vmatpush1.bf16.msra.mxu0 0
      %8923 = vmatprep.subr.bf16.mxu0 0
      %8924 = vmatpush1.bf16.msra.mxu0 0
      %8925 = vmatprep.subr.bf16.mxu0 0
      %8926 = vmatpush1.bf16.msra.mxu0 0
      %8927 = vmatprep.subr.bf16.mxu0 0
      %8928 = vmatpush1.bf16.msra.mxu0 0
      %8929 = vmatprep.subr.bf16.mxu0 0
      %8930 = vmatpush1.bf16.msra.mxu0 0
      %8931 = vmatprep.subr.bf16.mxu0 0
      %8932 = vmatpush1.bf16.msra.mxu0 0
      %8933 = vmatprep.subr.bf16.mxu0 0
      %8934 = vmatpush1.bf16.msra.mxu0 0
      %8935 = vmatprep.subr.bf16.mxu0 0
      %8936 = vmatpush1.bf16.msra.mxu0 0
      %8937 = vmatprep.subr.bf16.mxu0 0
      %8938 = vmatpush1.bf16.msra.mxu0 0
      %8939 = vmatprep.subr.bf16.mxu0 0
      %8940 = vmatpush1.bf16.msra.mxu0 0
      %8941 = vmatprep.subr.bf16.mxu0 0
      %8942 = vmatpush1.bf16.msra.mxu0 0
      %8943 = vmatprep.mubr.bf16.mxu0 0
      %8944 = vmatmul.mubr.bf16.gmra.mrb[0].mxu0 %v8864
      %v8945 = vpop.f32.mrb[0].mxu0
      %v8946 = vadd.f32 0.0, %v8945
      %v8947 = vpop.f32.mrb[0].mxu0
      %v8948 = vpop.f32.mrb[0].mxu0
      %v8949 = vadd.f32 0.0, %v8948
      %v8950 = vpop.f32.mrb[0].mxu0
      %8951 = vmatprep.mubr.bf16.mxu0 0
      %8952 = vmatmul.mubr.bf16.gmra.mrb[0].mxu0 %v8867
      %v8953 = vpop.f32.mrb[0].mxu0
      %v8954 = vadd.f32 0.0, %v8953
      %v8955 = vpop.f32.mrb[0].mxu0
      %v8956 = vpop.f32.mrb[0].mxu0
      %v8957 = vadd.f32 0.0, %v8956
      %v8958 = vpop.f32.mrb[0].mxu0
      %8959 = vmatprep.mubr.bf16.mxu0 0
      %8960 = vmatmul.mubr.bf16.gmra.mrb[0].mxu0 %v8870
      %v8961 = vpop.f32.mrb[0].mxu0
      %v8962 = vadd.f32 0.0, %v8961
      %v8963 = vpop.f32.mrb[0].mxu0
      %v8964 = vpop.f32.mrb[0].mxu0
      %v8965 = vadd.f32 0.0, %v8964
      %v8966 = vpop.f32.mrb[0].mxu0
      %8967 = vmatprep.mubr.bf16.mxu0 0
      %8968 = vmatmul.mubr.bf16.gmra.mrb[0].mxu0 %v8873
      %v8969 = vpop.f32.mrb[0].mxu0
      %v8970 = vadd.f32 0.0, %v8969
      %v8971 = vpop.f32.mrb[0].mxu0
      %v8972 = vpop.f32.mrb[0].mxu0
      %v8973 = vadd.f32 0.0, %v8972
      %v8974 = vpop.f32.mrb[0].mxu0
      %8975 = vmatprep.mubr.bf16.mxu0 0
      %8976 = vmatmul.mubr.bf16.gmra.mrb[0].mxu0 %v8876
      %v8977 = vpop.f32.mrb[0].mxu0
      %v8978 = vadd.f32 0.0, %v8977
      %v8979 = vpop.f32.mrb[0].mxu0
      %v8980 = vpop.f32.mrb[0].mxu0
      %v8981 = vadd.f32 0.0, %v8980
      %v8982 = vpop.f32.mrb[0].mxu0
      %8983 = vmatprep.mubr.bf16.mxu0 0
      %8984 = vmatmul.mubr.bf16.gmra.mrb[0].mxu0 %v8879
      %v8985 = vpop.f32.mrb[0].mxu0
      %v8986 = vadd.f32 0.0, %v8985
      %v8987 = vpop.f32.mrb[0].mxu0
      %v8988 = vpop.f32.mrb[0].mxu0
      %v8989 = vadd.f32 0.0, %v8988
      %v8990 = vpop.f32.mrb[0].mxu0
      %8991 = vmatprep.mubr.bf16.mxu0 0
      %8992 = vmatmul.mubr.bf16.gmra.mrb[0].mxu0 %v8882
      %v8993 = vpop.f32.mrb[0].mxu0
      %v8994 = vadd.f32 0.0, %v8993
      %v8995 = vpop.f32.mrb[0].mxu0
      %v8996 = vpop.f32.mrb[0].mxu0
      %v8997 = vadd.f32 0.0, %v8996
      %v8998 = vpop.f32.mrb[0].mxu0
      %8999 = vmatprep.mubr.bf16.mxu0 0
      %9000 = vmatmul.mubr.bf16.gmra.mrb[0].mxu0 %v8885
      %v9001 = vpop.f32.mrb[0].mxu0
      %v9002 = vadd.f32 0.0, %v9001
      %v9003 = vpop.f32.mrb[0].mxu0
      %v9004 = vpop.f32.mrb[0].mxu0
      %v9005 = vadd.f32 0.0, %v9004
      %v9006 = vpop.f32.mrb[0].mxu0
      %9007 = vmatprep.mubr.bf16.mxu0 0
      %9008 = vmatmul.mubr.bf16.gmra.mrb[0].mxu0 %v8888
      %v9009 = vpop.f32.mrb[0].mxu0
      %v9010 = vadd.f32 0.0, %v9009
      %v9011 = vpop.f32.mrb[0].mxu0
      %v9012 = vpop.f32.mrb[0].mxu0
      %v9013 = vadd.f32 0.0, %v9012
      %v9014 = vpop.f32.mrb[0].mxu0
      %9015 = vmatprep.mubr.bf16.mxu0 0
      %9016 = vmatmul.mubr.bf16.gmra.mrb[0].mxu0 %v8891
      %v9017 = vpop.f32.mrb[0].mxu0
      %v9018 = vadd.f32 0.0, %v9017
      %v9019 = vpop.f32.mrb[0].mxu0
      %v9020 = vpop.f32.mrb[0].mxu0
      %v9021 = vadd.f32 0.0, %v9020
      %v9022 = vpop.f32.mrb[0].mxu0
      %9023 = vmatprep.mubr.bf16.mxu0 0
      %9024 = vmatmul.mubr.bf16.gmra.mrb[0].mxu0 %v8894
      %v9025 = vpop.f32.mrb[0].mxu0
      %v9026 = vadd.f32 0.0, %v9025
      %v9027 = vpop.f32.mrb[0].mxu0
      %v9028 = vpop.f32.mrb[0].mxu0
      %v9029 = vadd.f32 0.0, %v9028
      %v9030 = vpop.f32.mrb[0].mxu0
      %9031 = vmatprep.mubr.bf16.mxu0 0
      %9032 = vmatmul.mubr.bf16.gmra.mrb[0].mxu0 %v8897
      %v9033 = vpop.f32.mrb[0].mxu0
      %v9034 = vadd.f32 0.0, %v9033
      %v9035 = vpop.f32.mrb[0].mxu0
      %v9036 = vpop.f32.mrb[0].mxu0
      %v9037 = vadd.f32 0.0, %v9036
      %v9038 = vpop.f32.mrb[0].mxu0
      %9039 = vmatprep.mubr.bf16.mxu0 0
      %9040 = vmatmul.mubr.bf16.gmra.mrb[0].mxu0 %v8900
      %v9041 = vpop.f32.mrb[0].mxu0
      %v9042 = vadd.f32 0.0, %v9041
      %v9043 = vpop.f32.mrb[0].mxu0
      %v9044 = vpop.f32.mrb[0].mxu0
      %v9045 = vadd.f32 0.0, %v9044
      %v9046 = vpop.f32.mrb[0].mxu0
      %9047 = vmatprep.mubr.bf16.mxu0 0
      %9048 = vmatmul.mubr.bf16.gmra.mrb[0].mxu0 %v8903
      %v9049 = vpop.f32.mrb[0].mxu0
      %v9050 = vadd.f32 0.0, %v9049
      %v9051 = vpop.f32.mrb[0].mxu0
      %v9052 = vpop.f32.mrb[0].mxu0
      %v9053 = vadd.f32 0.0, %v9052
      %v9054 = vpop.f32.mrb[0].mxu0
      %9055 = vmatprep.mubr.bf16.mxu0 0
      %9056 = vmatmul.mubr.bf16.gmra.mrb[0].mxu0 %v8906
      %v9057 = vpop.f32.mrb[0].mxu0
      %v9058 = vadd.f32 0.0, %v9057
      %v9059 = vpop.f32.mrb[0].mxu0
      %v9060 = vpop.f32.mrb[0].mxu0
      %v9061 = vadd.f32 0.0, %v9060
      %v9062 = vpop.f32.mrb[0].mxu0
      %9063 = vmatprep.mubr.bf16.mxu0 0
      %9064 = vmatmul.mubr.bf16.gmra.mrb[0].mxu0 %v8909
      %v9065 = vpop.f32.mrb[0].mxu0
      %v9066 = vadd.f32 0.0, %v9065
      %v9067 = vpop.f32.mrb[0].mxu0
      %v9068 = vpop.f32.mrb[0].mxu0
      %v9069 = vadd.f32 0.0, %v9068
      %v9070 = vpop.f32.mrb[0].mxu0
      %9071 = vdwg.mxu0
      %v9072 = vadd.f32 %v8599, %v8946
      %v9073 = vadd.f32 %v8600, %v8949
      %v9074 = vadd.f32 %v8601, %v8954
      %v9075 = vadd.f32 %v8602, %v8957
      %v9076 = vadd.f32 %v8603, %v8962
      %v9077 = vadd.f32 %v8604, %v8965
      %v9078 = vadd.f32 %v8605, %v8970
      %v9079 = vadd.f32 %v8606, %v8973
      %v9080 = vadd.f32 %v8607, %v8978
      %v9081 = vadd.f32 %v8608, %v8981
      %v9082 = vadd.f32 %v8609, %v8986
      %v9083 = vadd.f32 %v8610, %v8989
      %v9084 = vadd.f32 %v8611, %v8994
      %v9085 = vadd.f32 %v8612, %v8997
      %v9086 = vadd.f32 %v8613, %v9002
      %v9087 = vadd.f32 %v8614, %v9005
      %v9088 = vadd.f32 %v8615, %v9010
      %v9089 = vadd.f32 %v8616, %v9013
      %v9090 = vadd.f32 %v8617, %v9018
      %v9091 = vadd.f32 %v8618, %v9021
      %v9092 = vadd.f32 %v8619, %v9026
      %v9093 = vadd.f32 %v8620, %v9029
      %v9094 = vadd.f32 %v8621, %v9034
      %v9095 = vadd.f32 %v8622, %v9037
      %v9096 = vadd.f32 %v8623, %v9042
      %v9097 = vadd.f32 %v8624, %v9045
      %v9098 = vadd.f32 %v8625, %v9050
      %v9099 = vadd.f32 %v8626, %v9053
      %v9100 = vadd.f32 %v8627, %v9058
      %v9101 = vadd.f32 %v8628, %v9061
      %v9102 = vadd.f32 %v8629, %v9066
      %v9103 = vadd.f32 %v8630, %v9069
      %s9104 = scalar_lea.vmem [#allocation3], 24
      %v9105 = vld [vmem:[%s9104] sm:$0xf]
      %v9106 = vld [vmem:[%s9104 + $0x4] sm:$0xf]
      %v9107 = vld [vmem:[%s9104 + $0xc] sm:$0xf]
      %v9108 = vld [vmem:[%s9104 + $0x10] sm:$0xf]
      %v9109 = vld [vmem:[%s9104 + $0x18] sm:$0xf]
      %v9110 = vld [vmem:[%s9104 + $0x1c] sm:$0xf]
      %v9111 = vld [vmem:[%s9104 + $0x24] sm:$0xf]
      %v9112 = vld [vmem:[%s9104 + $0x28] sm:$0xf]
      %v9113 = vld [vmem:[%s9104 + $0x30] sm:$0xf]
      %v9114 = vld [vmem:[%s9104 + $0x34] sm:$0xf]
      %v9115 = vld [vmem:[%s9104 + $0x3c] sm:$0xf]
      %v9116 = vld [vmem:[%s9104 + $0x40] sm:$0xf]
      %v9117 = vld [vmem:[%s9104 + $0x48] sm:$0xf]
      %v9118 = vld [vmem:[%s9104 + $0x4c] sm:$0xf]
      %v9119 = vld [vmem:[%s9104 + $0x54] sm:$0xf]
      %v9120 = vld [vmem:[%s9104 + $0x58] sm:$0xf]
      %v9121 = vld [vmem:[%s9104 + $0x60] sm:$0xf]
      %v9122 = vld [vmem:[%s9104 + $0x64] sm:$0xf]
      %v9123 = vld [vmem:[%s9104 + $0x6c] sm:$0xf]
      %v9124 = vld [vmem:[%s9104 + $0x70] sm:$0xf]
      %v9125 = vld [vmem:[%s9104 + $0x78] sm:$0xf]
      %v9126 = vld [vmem:[%s9104 + $0x7c] sm:$0xf]
      %v9127 = vld [vmem:[%s9104 + $0x84] sm:$0xf]
      %v9128 = vld [vmem:[%s9104 + $0x88] sm:$0xf]
      %v9129 = vld [vmem:[%s9104 + $0x90] sm:$0xf]
      %v9130 = vld [vmem:[%s9104 + $0x94] sm:$0xf]
      %v9131 = vld [vmem:[%s9104 + $0x9c] sm:$0xf]
      %v9132 = vld [vmem:[%s9104 + $0xa0] sm:$0xf]
      %v9133 = vld [vmem:[%s9104 + $0xa8] sm:$0xf]
      %v9134 = vld [vmem:[%s9104 + $0xac] sm:$0xf]
      %v9135 = vld [vmem:[%s9104 + $0xb4] sm:$0xf]
      %v9136 = vld [vmem:[%s9104 + $0xb8] sm:$0xf]
      %v9137 = vld [vmem:[%s3 + $0x30] sm:$0xf]
      %v9138 = vld [vmem:[%s3 + $0x34] sm:$0xf]
      %v9171 = vunpack.c.l.b16 %v9105
      %v9172 = vunpack.c.l.b16 %v9106
      %v9173 = vunpack.c.l.b16 %v9107
      %v9174 = vunpack.c.l.b16 %v9108
      %v9175 = vunpack.c.l.b16 %v9109
      %v9176 = vunpack.c.l.b16 %v9110
      %v9177 = vunpack.c.l.b16 %v9111
      %v9178 = vunpack.c.l.b16 %v9112
      %v9179 = vunpack.c.l.b16 %v9113
      %v9180 = vunpack.c.l.b16 %v9114
      %v9181 = vunpack.c.l.b16 %v9115
      %v9182 = vunpack.c.l.b16 %v9116
      %v9183 = vunpack.c.l.b16 %v9117
      %v9184 = vunpack.c.l.b16 %v9118
      %v9185 = vunpack.c.l.b16 %v9119
      %v9186 = vunpack.c.l.b16 %v9120
      %v9187 = vunpack.c.l.b16 %v9121
      %v9188 = vunpack.c.l.b16 %v9122
      %v9189 = vunpack.c.l.b16 %v9123
      %v9190 = vunpack.c.l.b16 %v9124
      %v9191 = vunpack.c.l.b16 %v9125
      %v9192 = vunpack.c.l.b16 %v9126
      %v9193 = vunpack.c.l.b16 %v9127
      %v9194 = vunpack.c.l.b16 %v9128
      %v9195 = vunpack.c.l.b16 %v9129
      %v9196 = vunpack.c.l.b16 %v9130
      %v9197 = vunpack.c.l.b16 %v9131
      %v9198 = vunpack.c.l.b16 %v9132
      %v9199 = vunpack.c.l.b16 %v9133
      %v9200 = vunpack.c.l.b16 %v9134
      %v9201 = vunpack.c.l.b16 %v9135
      %v9202 = vunpack.c.l.b16 %v9136
      %v9203 = vpack.c.b16 %v9172, %v9171
      %v9204 = vpack.c.b16 %v9174, %v9173
      %v9205 = vpack.c.b16 %v9176, %v9175
      %v9206 = vpack.c.b16 %v9178, %v9177
      %v9207 = vpack.c.b16 %v9180, %v9179
      %v9208 = vpack.c.b16 %v9182, %v9181
      %v9209 = vpack.c.b16 %v9184, %v9183
      %v9210 = vpack.c.b16 %v9186, %v9185
      %v9211 = vpack.c.b16 %v9188, %v9187
      %v9212 = vpack.c.b16 %v9190, %v9189
      %v9213 = vpack.c.b16 %v9192, %v9191
      %v9214 = vpack.c.b16 %v9194, %v9193
      %v9215 = vpack.c.b16 %v9196, %v9195
      %v9216 = vpack.c.b16 %v9198, %v9197
      %v9217 = vpack.c.b16 %v9200, %v9199
      %v9218 = vpack.c.b16 %v9202, %v9201
      %v9221 = vunpack.c.l.b16 %v9137
      %v9222 = vunpack.c.l.b16 %v9138
      %v9223 = vpack.c.b16 %v9222, %v9221
      %v9226 = vsel %vm1344, %v9203, 0
      %v9229 = vsel %vm1344, %v9204, 0
      %v9232 = vsel %vm1344, %v9205, 0
      %v9235 = vsel %vm1344, %v9206, 0
      %v9238 = vsel %vm1344, %v9207, 0
      %v9241 = vsel %vm1344, %v9208, 0
      %v9244 = vsel %vm1344, %v9209, 0
      %v9247 = vsel %vm1344, %v9210, 0
      %v9250 = vsel %vm1344, %v9211, 0
      %v9253 = vsel %vm1344, %v9212, 0
      %v9256 = vsel %vm1344, %v9213, 0
      %v9259 = vsel %vm1344, %v9214, 0
      %v9262 = vsel %vm1344, %v9215, 0
      %v9265 = vsel %vm1344, %v9216, 0
      %v9268 = vsel %vm1344, %v9217, 0
      %v9271 = vsel %vm1344, %v9218, 0
      %9273 = vmatprep.subr.bf16.mxu0 0
      %9274 = vmatpush1.bf16.msra.mxu0 %v9223
      %9275 = vmatprep.subr.bf16.mxu0 0
      %9276 = vmatpush1.bf16.msra.mxu0 0
      %9277 = vmatprep.subr.bf16.mxu0 0
      %9278 = vmatpush1.bf16.msra.mxu0 0
      %9279 = vmatprep.subr.bf16.mxu0 0
      %9280 = vmatpush1.bf16.msra.mxu0 0
      %9281 = vmatprep.subr.bf16.mxu0 0
      %9282 = vmatpush1.bf16.msra.mxu0 0
      %9283 = vmatprep.subr.bf16.mxu0 0
      %9284 = vmatpush1.bf16.msra.mxu0 0
      %9285 = vmatprep.subr.bf16.mxu0 0
      %9286 = vmatpush1.bf16.msra.mxu0 0
      %9287 = vmatprep.subr.bf16.mxu0 0
      %9288 = vmatpush1.bf16.msra.mxu0 0
      %9289 = vmatprep.subr.bf16.mxu0 0
      %9290 = vmatpush1.bf16.msra.mxu0 0
      %9291 = vmatprep.subr.bf16.mxu0 0
      %9292 = vmatpush1.bf16.msra.mxu0 0
      %9293 = vmatprep.subr.bf16.mxu0 0
      %9294 = vmatpush1.bf16.msra.mxu0 0
      %9295 = vmatprep.subr.bf16.mxu0 0
      %9296 = vmatpush1.bf16.msra.mxu0 0
      %9297 = vmatprep.subr.bf16.mxu0 0
      %9298 = vmatpush1.bf16.msra.mxu0 0
      %9299 = vmatprep.subr.bf16.mxu0 0
      %9300 = vmatpush1.bf16.msra.mxu0 0
      %9301 = vmatprep.subr.bf16.mxu0 0
      %9302 = vmatpush1.bf16.msra.mxu0 0
      %9303 = vmatprep.subr.bf16.mxu0 0
      %9304 = vmatpush1.bf16.msra.mxu0 0
      %9305 = vmatprep.mubr.bf16.mxu0 0
      %9306 = vmatmul.mubr.bf16.gmra.mrb[0].mxu0 %v9226
      %v9307 = vpop.f32.mrb[0].mxu0
      %v9308 = vadd.f32 0.0, %v9307
      %v9309 = vpop.f32.mrb[0].mxu0
      %v9310 = vpop.f32.mrb[0].mxu0
      %v9311 = vadd.f32 0.0, %v9310
      %v9312 = vpop.f32.mrb[0].mxu0
      %9313 = vmatprep.mubr.bf16.mxu0 0
      %9314 = vmatmul.mubr.bf16.gmra.mrb[0].mxu0 %v9229
      %v9315 = vpop.f32.mrb[0].mxu0
      %v9316 = vadd.f32 0.0, %v9315
      %v9317 = vpop.f32.mrb[0].mxu0
      %v9318 = vpop.f32.mrb[0].mxu0
      %v9319 = vadd.f32 0.0, %v9318
      %v9320 = vpop.f32.mrb[0].mxu0
      %9321 = vmatprep.mubr.bf16.mxu0 0
      %9322 = vmatmul.mubr.bf16.gmra.mrb[0].mxu0 %v9232
      %v9323 = vpop.f32.mrb[0].mxu0
      %v9324 = vadd.f32 0.0, %v9323
      %v9325 = vpop.f32.mrb[0].mxu0
      %v9326 = vpop.f32.mrb[0].mxu0
      %v9327 = vadd.f32 0.0, %v9326
      %v9328 = vpop.f32.mrb[0].mxu0
      %9329 = vmatprep.mubr.bf16.mxu0 0
      %9330 = vmatmul.mubr.bf16.gmra.mrb[0].mxu0 %v9235
      %v9331 = vpop.f32.mrb[0].mxu0
      %v9332 = vadd.f32 0.0, %v9331
      %v9333 = vpop.f32.mrb[0].mxu0
      %v9334 = vpop.f32.mrb[0].mxu0
      %v9335 = vadd.f32 0.0, %v9334
      %v9336 = vpop.f32.mrb[0].mxu0
      %9337 = vmatprep.mubr.bf16.mxu0 0
      %9338 = vmatmul.mubr.bf16.gmra.mrb[0].mxu0 %v9238
      %v9339 = vpop.f32.mrb[0].mxu0
      %v9340 = vadd.f32 0.0, %v9339
      %v9341 = vpop.f32.mrb[0].mxu0
      %v9342 = vpop.f32.mrb[0].mxu0
      %v9343 = vadd.f32 0.0, %v9342
      %v9344 = vpop.f32.mrb[0].mxu0
      %9345 = vmatprep.mubr.bf16.mxu0 0
      %9346 = vmatmul.mubr.bf16.gmra.mrb[0].mxu0 %v9241
      %v9347 = vpop.f32.mrb[0].mxu0
      %v9348 = vadd.f32 0.0, %v9347
      %v9349 = vpop.f32.mrb[0].mxu0
      %v9350 = vpop.f32.mrb[0].mxu0
      %v9351 = vadd.f32 0.0, %v9350
      %v9352 = vpop.f32.mrb[0].mxu0
      %9353 = vmatprep.mubr.bf16.mxu0 0
      %9354 = vmatmul.mubr.bf16.gmra.mrb[0].mxu0 %v9244
      %v9355 = vpop.f32.mrb[0].mxu0
      %v9356 = vadd.f32 0.0, %v9355
      %v9357 = vpop.f32.mrb[0].mxu0
      %v9358 = vpop.f32.mrb[0].mxu0
      %v9359 = vadd.f32 0.0, %v9358
      %v9360 = vpop.f32.mrb[0].mxu0
      %9361 = vmatprep.mubr.bf16.mxu0 0
      %9362 = vmatmul.mubr.bf16.gmra.mrb[0].mxu0 %v9247
      %v9363 = vpop.f32.mrb[0].mxu0
      %v9364 = vadd.f32 0.0, %v9363
      %v9365 = vpop.f32.mrb[0].mxu0
      %v9366 = vpop.f32.mrb[0].mxu0
      %v9367 = vadd.f32 0.0, %v9366
      %v9368 = vpop.f32.mrb[0].mxu0
      %9369 = vmatprep.mubr.bf16.mxu0 0
      %9370 = vmatmul.mubr.bf16.gmra.mrb[0].mxu0 %v9250
      %v9371 = vpop.f32.mrb[0].mxu0
      %v9372 = vadd.f32 0.0, %v9371
      %v9373 = vpop.f32.mrb[0].mxu0
      %v9374 = vpop.f32.mrb[0].mxu0
      %v9375 = vadd.f32 0.0, %v9374
      %v9376 = vpop.f32.mrb[0].mxu0
      %9377 = vmatprep.mubr.bf16.mxu0 0
      %9378 = vmatmul.mubr.bf16.gmra.mrb[0].mxu0 %v9253
      %v9379 = vpop.f32.mrb[0].mxu0
      %v9380 = vadd.f32 0.0, %v9379
      %v9381 = vpop.f32.mrb[0].mxu0
      %v9382 = vpop.f32.mrb[0].mxu0
      %v9383 = vadd.f32 0.0, %v9382
      %v9384 = vpop.f32.mrb[0].mxu0
      %9385 = vmatprep.mubr.bf16.mxu0 0
      %9386 = vmatmul.mubr.bf16.gmra.mrb[0].mxu0 %v9256
      %v9387 = vpop.f32.mrb[0].mxu0
      %v9388 = vadd.f32 0.0, %v9387
      %v9389 = vpop.f32.mrb[0].mxu0
      %v9390 = vpop.f32.mrb[0].mxu0
      %v9391 = vadd.f32 0.0, %v9390
      %v9392 = vpop.f32.mrb[0].mxu0
      %9393 = vmatprep.mubr.bf16.mxu0 0
      %9394 = vmatmul.mubr.bf16.gmra.mrb[0].mxu0 %v9259
      %v9395 = vpop.f32.mrb[0].mxu0
      %v9396 = vadd.f32 0.0, %v9395
      %v9397 = vpop.f32.mrb[0].mxu0
      %v9398 = vpop.f32.mrb[0].mxu0
      %v9399 = vadd.f32 0.0, %v9398
      %v9400 = vpop.f32.mrb[0].mxu0
      %9401 = vmatprep.mubr.bf16.mxu0 0
      %9402 = vmatmul.mubr.bf16.gmra.mrb[0].mxu0 %v9262
      %v9403 = vpop.f32.mrb[0].mxu0
      %v9404 = vadd.f32 0.0, %v9403
      %v9405 = vpop.f32.mrb[0].mxu0
      %v9406 = vpop.f32.mrb[0].mxu0
      %v9407 = vadd.f32 0.0, %v9406
      %v9408 = vpop.f32.mrb[0].mxu0
      %9409 = vmatprep.mubr.bf16.mxu0 0
      %9410 = vmatmul.mubr.bf16.gmra.mrb[0].mxu0 %v9265
      %v9411 = vpop.f32.mrb[0].mxu0
      %v9412 = vadd.f32 0.0, %v9411
      %v9413 = vpop.f32.mrb[0].mxu0
      %v9414 = vpop.f32.mrb[0].mxu0
      %v9415 = vadd.f32 0.0, %v9414
      %v9416 = vpop.f32.mrb[0].mxu0
      %9417 = vmatprep.mubr.bf16.mxu0 0
      %9418 = vmatmul.mubr.bf16.gmra.mrb[0].mxu0 %v9268
      %v9419 = vpop.f32.mrb[0].mxu0
      %v9420 = vadd.f32 0.0, %v9419
      %v9421 = vpop.f32.mrb[0].mxu0
      %v9422 = vpop.f32.mrb[0].mxu0
      %v9423 = vadd.f32 0.0, %v9422
      %v9424 = vpop.f32.mrb[0].mxu0
      %9425 = vmatprep.mubr.bf16.mxu0 0
      %9426 = vmatmul.mubr.bf16.gmra.mrb[0].mxu0 %v9271
      %v9427 = vpop.f32.mrb[0].mxu0
      %v9428 = vadd.f32 0.0, %v9427
      %v9429 = vpop.f32.mrb[0].mxu0
      %v9430 = vpop.f32.mrb[0].mxu0
      %v9431 = vadd.f32 0.0, %v9430
      %v9432 = vpop.f32.mrb[0].mxu0
      %9433 = vdwg.mxu0
      %v9434 = vadd.f32 %v9072, %v9308
      %v9435 = vadd.f32 %v9073, %v9311
      %v9436 = vadd.f32 %v9074, %v9316
      %v9437 = vadd.f32 %v9075, %v9319
      %v9438 = vadd.f32 %v9076, %v9324
      %v9439 = vadd.f32 %v9077, %v9327
      %v9440 = vadd.f32 %v9078, %v9332
      %v9441 = vadd.f32 %v9079, %v9335
      %v9442 = vadd.f32 %v9080, %v9340
      %v9443 = vadd.f32 %v9081, %v9343
      %v9444 = vadd.f32 %v9082, %v9348
      %v9445 = vadd.f32 %v9083, %v9351
      %v9446 = vadd.f32 %v9084, %v9356
      %v9447 = vadd.f32 %v9085, %v9359
      %v9448 = vadd.f32 %v9086, %v9364
      %v9449 = vadd.f32 %v9087, %v9367
      %v9450 = vadd.f32 %v9088, %v9372
      %v9451 = vadd.f32 %v9089, %v9375
      %v9452 = vadd.f32 %v9090, %v9380
      %v9453 = vadd.f32 %v9091, %v9383
      %v9454 = vadd.f32 %v9092, %v9388
      %v9455 = vadd.f32 %v9093, %v9391
      %v9456 = vadd.f32 %v9094, %v9396
      %v9457 = vadd.f32 %v9095, %v9399
      %v9458 = vadd.f32 %v9096, %v9404
      %v9459 = vadd.f32 %v9097, %v9407
      %v9460 = vadd.f32 %v9098, %v9412
      %v9461 = vadd.f32 %v9099, %v9415
      %v9462 = vadd.f32 %v9100, %v9420
      %v9463 = vadd.f32 %v9101, %v9423
      %v9464 = vadd.f32 %v9102, %v9428
      %v9465 = vadd.f32 %v9103, %v9431
      %v9466 = vld [vmem:[%s9104] sm:$0xf]
      %v9467 = vld [vmem:[%s9104 + $0x4] sm:$0xf]
      %v9468 = vld [vmem:[%s9104 + $0x8] sm:$0x1]
      %v9469 = vld [vmem:[%s9104 + $0xc] sm:$0xf]
      %v9470 = vld [vmem:[%s9104 + $0x10] sm:$0xf]
      %v9471 = vld [vmem:[%s9104 + $0x14] sm:$0x1]
      %v9472 = vld [vmem:[%s9104 + $0x18] sm:$0xf]
      %v9473 = vld [vmem:[%s9104 + $0x1c] sm:$0xf]
      %v9474 = vld [vmem:[%s9104 + $0x20] sm:$0x1]
      %v9475 = vld [vmem:[%s9104 + $0x24] sm:$0xf]
      %v9476 = vld [vmem:[%s9104 + $0x28] sm:$0xf]
      %v9477 = vld [vmem:[%s9104 + $0x2c] sm:$0x1]
      %v9478 = vld [vmem:[%s9104 + $0x30] sm:$0xf]
      %v9479 = vld [vmem:[%s9104 + $0x34] sm:$0xf]
      %v9480 = vld [vmem:[%s9104 + $0x38] sm:$0x1]
      %v9481 = vld [vmem:[%s9104 + $0x3c] sm:$0xf]
      %v9482 = vld [vmem:[%s9104 + $0x40] sm:$0xf]
      %v9483 = vld [vmem:[%s9104 + $0x44] sm:$0x1]
      %v9484 = vld [vmem:[%s9104 + $0x48] sm:$0xf]
      %v9485 = vld [vmem:[%s9104 + $0x4c] sm:$0xf]
      %v9486 = vld [vmem:[%s9104 + $0x50] sm:$0x1]
      %v9487 = vld [vmem:[%s9104 + $0x54] sm:$0xf]
      %v9488 = vld [vmem:[%s9104 + $0x58] sm:$0xf]
      %v9489 = vld [vmem:[%s9104 + $0x5c] sm:$0x1]
      %v9490 = vld [vmem:[%s9104 + $0x60] sm:$0xf]
      %v9491 = vld [vmem:[%s9104 + $0x64] sm:$0xf]
      %v9492 = vld [vmem:[%s9104 + $0x68] sm:$0x1]
      %v9493 = vld [vmem:[%s9104 + $0x6c] sm:$0xf]
      %v9494 = vld [vmem:[%s9104 + $0x70] sm:$0xf]
      %v9495 = vld [vmem:[%s9104 + $0x74] sm:$0x1]
      %v9496 = vld [vmem:[%s9104 + $0x78] sm:$0xf]
      %v9497 = vld [vmem:[%s9104 + $0x7c] sm:$0xf]
      %v9498 = vld [vmem:[%s9104 + $0x80] sm:$0x1]
      %v9499 = vld [vmem:[%s9104 + $0x84] sm:$0xf]
      %v9500 = vld [vmem:[%s9104 + $0x88] sm:$0xf]
      %v9501 = vld [vmem:[%s9104 + $0x8c] sm:$0x1]
      %v9502 = vld [vmem:[%s9104 + $0x90] sm:$0xf]
      %v9503 = vld [vmem:[%s9104 + $0x94] sm:$0xf]
      %v9504 = vld [vmem:[%s9104 + $0x98] sm:$0x1]
      %v9505 = vld [vmem:[%s9104 + $0x9c] sm:$0xf]
      %v9506 = vld [vmem:[%s9104 + $0xa0] sm:$0xf]
      %v9507 = vld [vmem:[%s9104 + $0xa4] sm:$0x1]
      %v9508 = vld [vmem:[%s9104 + $0xa8] sm:$0xf]
      %v9509 = vld [vmem:[%s9104 + $0xac] sm:$0xf]
      %v9510 = vld [vmem:[%s9104 + $0xb0] sm:$0x1]
      %v9511 = vld [vmem:[%s9104 + $0xb4] sm:$0xf]
      %v9512 = vld [vmem:[%s9104 + $0xb8] sm:$0xf]
      %v9513 = vld [vmem:[%s9104 + $0xbc] sm:$0x1]
      %v9515 = vshrl.u32 %v9466, 16
      %v9517 = vrot.slane %v9515, 4
      %v9518 = vshll.u32 %v9466, 16
      %v9520 = vrot.slane %v9518, 5
      %v9521 = vor.u32 %v9517, %v9520
      %v9522 = vrot.slane %v9521, 4
      %v9524 = vshll.u32 %v9467, 16
      %v9526 = vrot.slane %v9524, 5
      %v9527 = vsel %vm903, %v9522, %v9526
      %v9528 = vshrl.u32 %v9467, 16
      %v9530 = vrot.slane %v9528, 4
      %v9531 = vor.u32 %v9530, %v9526
      %v9532 = vrot.slane %v9531, 4
      %v9534 = vshll.u32 %v9468, 16
      %v9536 = vrot.slane %v9534, 5
      %v9537 = vsel %vm903, %v9532, %v9536
      %v9539 = vshrl.u32 %v9469, 16
      %v9541 = vrot.slane %v9539, 4
      %v9542 = vshll.u32 %v9469, 16
      %v9544 = vrot.slane %v9542, 5
      %v9545 = vor.u32 %v9541, %v9544
      %v9546 = vrot.slane %v9545, 4
      %v9548 = vshll.u32 %v9470, 16
      %v9550 = vrot.slane %v9548, 5
      %v9551 = vsel %vm903, %v9546, %v9550
      %v9552 = vshrl.u32 %v9470, 16
      %v9554 = vrot.slane %v9552, 4
      %v9555 = vor.u32 %v9554, %v9550
      %v9556 = vrot.slane %v9555, 4
      %v9558 = vshll.u32 %v9471, 16
      %v9560 = vrot.slane %v9558, 5
      %v9561 = vsel %vm903, %v9556, %v9560
      %v9563 = vshrl.u32 %v9472, 16
      %v9565 = vrot.slane %v9563, 4
      %v9566 = vshll.u32 %v9472, 16
      %v9568 = vrot.slane %v9566, 5
      %v9569 = vor.u32 %v9565, %v9568
      %v9570 = vrot.slane %v9569, 4
      %v9572 = vshll.u32 %v9473, 16
      %v9574 = vrot.slane %v9572, 5
      %v9575 = vsel %vm903, %v9570, %v9574
      %v9576 = vshrl.u32 %v9473, 16
      %v9578 = vrot.slane %v9576, 4
      %v9579 = vor.u32 %v9578, %v9574
      %v9580 = vrot.slane %v9579, 4
      %v9582 = vshll.u32 %v9474, 16
      %v9584 = vrot.slane %v9582, 5
      %v9585 = vsel %vm903, %v9580, %v9584
      %v9587 = vshrl.u32 %v9475, 16
      %v9589 = vrot.slane %v9587, 4
      %v9590 = vshll.u32 %v9475, 16
      %v9592 = vrot.slane %v9590, 5
      %v9593 = vor.u32 %v9589, %v9592
      %v9594 = vrot.slane %v9593, 4
      %v9596 = vshll.u32 %v9476, 16
      %v9598 = vrot.slane %v9596, 5
      %v9599 = vsel %vm903, %v9594, %v9598
      %v9600 = vshrl.u32 %v9476, 16
      %v9602 = vrot.slane %v9600, 4
      %v9603 = vor.u32 %v9602, %v9598
      %v9604 = vrot.slane %v9603, 4
      %v9606 = vshll.u32 %v9477, 16
      %v9608 = vrot.slane %v9606, 5
      %v9609 = vsel %vm903, %v9604, %v9608
      %v9611 = vshrl.u32 %v9478, 16
      %v9613 = vrot.slane %v9611, 4
      %v9614 = vshll.u32 %v9478, 16
      %v9616 = vrot.slane %v9614, 5
      %v9617 = vor.u32 %v9613, %v9616
      %v9618 = vrot.slane %v9617, 4
      %v9620 = vshll.u32 %v9479, 16
      %v9622 = vrot.slane %v9620, 5
      %v9623 = vsel %vm903, %v9618, %v9622
      %v9624 = vshrl.u32 %v9479, 16
      %v9626 = vrot.slane %v9624, 4
      %v9627 = vor.u32 %v9626, %v9622
      %v9628 = vrot.slane %v9627, 4
      %v9630 = vshll.u32 %v9480, 16
      %v9632 = vrot.slane %v9630, 5
      %v9633 = vsel %vm903, %v9628, %v9632
      %v9635 = vshrl.u32 %v9481, 16
      %v9637 = vrot.slane %v9635, 4
      %v9638 = vshll.u32 %v9481, 16
      %v9640 = vrot.slane %v9638, 5
      %v9641 = vor.u32 %v9637, %v9640
      %v9642 = vrot.slane %v9641, 4
      %v9644 = vshll.u32 %v9482, 16
      %v9646 = vrot.slane %v9644, 5
      %v9647 = vsel %vm903, %v9642, %v9646
      %v9648 = vshrl.u32 %v9482, 16
      %v9650 = vrot.slane %v9648, 4
      %v9651 = vor.u32 %v9650, %v9646
      %v9652 = vrot.slane %v9651, 4
      %v9654 = vshll.u32 %v9483, 16
      %v9656 = vrot.slane %v9654, 5
      %v9657 = vsel %vm903, %v9652, %v9656
      %v9659 = vshrl.u32 %v9484, 16
      %v9661 = vrot.slane %v9659, 4
      %v9662 = vshll.u32 %v9484, 16
      %v9664 = vrot.slane %v9662, 5
      %v9665 = vor.u32 %v9661, %v9664
      %v9666 = vrot.slane %v9665, 4
      %v9668 = vshll.u32 %v9485, 16
      %v9670 = vrot.slane %v9668, 5
      %v9671 = vsel %vm903, %v9666, %v9670
      %v9672 = vshrl.u32 %v9485, 16
      %v9674 = vrot.slane %v9672, 4
      %v9675 = vor.u32 %v9674, %v9670
      %v9676 = vrot.slane %v9675, 4
      %v9678 = vshll.u32 %v9486, 16
      %v9680 = vrot.slane %v9678, 5
      %v9681 = vsel %vm903, %v9676, %v9680
      %v9683 = vshrl.u32 %v9487, 16
      %v9685 = vrot.slane %v9683, 4
      %v9686 = vshll.u32 %v9487, 16
      %v9688 = vrot.slane %v9686, 5
      %v9689 = vor.u32 %v9685, %v9688
      %v9690 = vrot.slane %v9689, 4
      %v9692 = vshll.u32 %v9488, 16
      %v9694 = vrot.slane %v9692, 5
      %v9695 = vsel %vm903, %v9690, %v9694
      %v9696 = vshrl.u32 %v9488, 16
      %v9698 = vrot.slane %v9696, 4
      %v9699 = vor.u32 %v9698, %v9694
      %v9700 = vrot.slane %v9699, 4
      %v9702 = vshll.u32 %v9489, 16
      %v9704 = vrot.slane %v9702, 5
      %v9705 = vsel %vm903, %v9700, %v9704
      %v9707 = vshrl.u32 %v9490, 16
      %v9709 = vrot.slane %v9707, 4
      %v9710 = vshll.u32 %v9490, 16
      %v9712 = vrot.slane %v9710, 5
      %v9713 = vor.u32 %v9709, %v9712
      %v9714 = vrot.slane %v9713, 4
      %v9716 = vshll.u32 %v9491, 16
      %v9718 = vrot.slane %v9716, 5
      %v9719 = vsel %vm903, %v9714, %v9718
      %v9720 = vshrl.u32 %v9491, 16
      %v9722 = vrot.slane %v9720, 4
      %v9723 = vor.u32 %v9722, %v9718
      %v9724 = vrot.slane %v9723, 4
      %v9726 = vshll.u32 %v9492, 16
      %v9728 = vrot.slane %v9726, 5
      %v9729 = vsel %vm903, %v9724, %v9728
      %v9731 = vshrl.u32 %v9493, 16
      %v9733 = vrot.slane %v9731, 4
      %v9734 = vshll.u32 %v9493, 16
      %v9736 = vrot.slane %v9734, 5
      %v9737 = vor.u32 %v9733, %v9736
      %v9738 = vrot.slane %v9737, 4
      %v9740 = vshll.u32 %v9494, 16
      %v9742 = vrot.slane %v9740, 5
      %v9743 = vsel %vm903, %v9738, %v9742
      %v9744 = vshrl.u32 %v9494, 16
      %v9746 = vrot.slane %v9744, 4
      %v9747 = vor.u32 %v9746, %v9742
      %v9748 = vrot.slane %v9747, 4
      %v9750 = vshll.u32 %v9495, 16
      %v9752 = vrot.slane %v9750, 5
      %v9753 = vsel %vm903, %v9748, %v9752
      %v9755 = vshrl.u32 %v9496, 16
      %v9757 = vrot.slane %v9755, 4
      %v9758 = vshll.u32 %v9496, 16
      %v9760 = vrot.slane %v9758, 5
      %v9761 = vor.u32 %v9757, %v9760
      %v9762 = vrot.slane %v9761, 4
      %v9764 = vshll.u32 %v9497, 16
      %v9766 = vrot.slane %v9764, 5
      %v9767 = vsel %vm903, %v9762, %v9766
      %v9768 = vshrl.u32 %v9497, 16
      %v9770 = vrot.slane %v9768, 4
      %v9771 = vor.u32 %v9770, %v9766
      %v9772 = vrot.slane %v9771, 4
      %v9774 = vshll.u32 %v9498, 16
      %v9776 = vrot.slane %v9774, 5
      %v9777 = vsel %vm903, %v9772, %v9776
      %v9779 = vshrl.u32 %v9499, 16
      %v9781 = vrot.slane %v9779, 4
      %v9782 = vshll.u32 %v9499, 16
      %v9784 = vrot.slane %v9782, 5
      %v9785 = vor.u32 %v9781, %v9784
      %v9786 = vrot.slane %v9785, 4
      %v9788 = vshll.u32 %v9500, 16
      %v9790 = vrot.slane %v9788, 5
      %v9791 = vsel %vm903, %v9786, %v9790
      %v9792 = vshrl.u32 %v9500, 16
      %v9794 = vrot.slane %v9792, 4
      %v9795 = vor.u32 %v9794, %v9790
      %v9796 = vrot.slane %v9795, 4
      %v9798 = vshll.u32 %v9501, 16
      %v9800 = vrot.slane %v9798, 5
      %v9801 = vsel %vm903, %v9796, %v9800
      %v9803 = vshrl.u32 %v9502, 16
      %v9805 = vrot.slane %v9803, 4
      %v9806 = vshll.u32 %v9502, 16
      %v9808 = vrot.slane %v9806, 5
      %v9809 = vor.u32 %v9805, %v9808
      %v9810 = vrot.slane %v9809, 4
      %v9812 = vshll.u32 %v9503, 16
      %v9814 = vrot.slane %v9812, 5
      %v9815 = vsel %vm903, %v9810, %v9814
      %v9816 = vshrl.u32 %v9503, 16
      %v9818 = vrot.slane %v9816, 4
      %v9819 = vor.u32 %v9818, %v9814
      %v9820 = vrot.slane %v9819, 4
      %v9822 = vshll.u32 %v9504, 16
      %v9824 = vrot.slane %v9822, 5
      %v9825 = vsel %vm903, %v9820, %v9824
      %v9827 = vshrl.u32 %v9505, 16
      %v9829 = vrot.slane %v9827, 4
      %v9830 = vshll.u32 %v9505, 16
      %v9832 = vrot.slane %v9830, 5
      %v9833 = vor.u32 %v9829, %v9832
      %v9834 = vrot.slane %v9833, 4
      %v9836 = vshll.u32 %v9506, 16
      %v9838 = vrot.slane %v9836, 5
      %v9839 = vsel %vm903, %v9834, %v9838
      %v9840 = vshrl.u32 %v9506, 16
      %v9842 = vrot.slane %v9840, 4
      %v9843 = vor.u32 %v9842, %v9838
      %v9844 = vrot.slane %v9843, 4
      %v9846 = vshll.u32 %v9507, 16
      %v9848 = vrot.slane %v9846, 5
      %v9849 = vsel %vm903, %v9844, %v9848
      %v9851 = vshrl.u32 %v9508, 16
      %v9853 = vrot.slane %v9851, 4
      %v9854 = vshll.u32 %v9508, 16
      %v9856 = vrot.slane %v9854, 5
      %v9857 = vor.u32 %v9853, %v9856
      %v9858 = vrot.slane %v9857, 4
      %v9860 = vshll.u32 %v9509, 16
      %v9862 = vrot.slane %v9860, 5
      %v9863 = vsel %vm903, %v9858, %v9862
      %v9864 = vshrl.u32 %v9509, 16
      %v9866 = vrot.slane %v9864, 4
      %v9867 = vor.u32 %v9866, %v9862
      %v9868 = vrot.slane %v9867, 4
      %v9870 = vshll.u32 %v9510, 16
      %v9872 = vrot.slane %v9870, 5
      %v9873 = vsel %vm903, %v9868, %v9872
      %v9875 = vshrl.u32 %v9511, 16
      %v9877 = vrot.slane %v9875, 4
      %v9878 = vshll.u32 %v9511, 16
      %v9880 = vrot.slane %v9878, 5
      %v9881 = vor.u32 %v9877, %v9880
      %v9882 = vrot.slane %v9881, 4
      %v9884 = vshll.u32 %v9512, 16
      %v9886 = vrot.slane %v9884, 5
      %v9887 = vsel %vm903, %v9882, %v9886
      %v9888 = vshrl.u32 %v9512, 16
      %v9890 = vrot.slane %v9888, 4
      %v9891 = vor.u32 %v9890, %v9886
      %v9892 = vrot.slane %v9891, 4
      %v9894 = vshll.u32 %v9513, 16
      %v9896 = vrot.slane %v9894, 5
      %v9897 = vsel %vm903, %v9892, %v9896
      %v9898 = vld [vmem:[%s3 + $0x38] sm:$0xf]
      %v9899 = vld [vmem:[%s3 + $0x3c] sm:$0xf]
      %v9900 = vunpack.c.l.b16 %v9527
      %v9901 = vunpack.c.l.b16 %v9537
      %v9902 = vunpack.c.l.b16 %v9551
      %v9903 = vunpack.c.l.b16 %v9561
      %v9904 = vunpack.c.l.b16 %v9575
      %v9905 = vunpack.c.l.b16 %v9585
      %v9906 = vunpack.c.l.b16 %v9599
      %v9907 = vunpack.c.l.b16 %v9609
      %v9908 = vunpack.c.l.b16 %v9623
      %v9909 = vunpack.c.l.b16 %v9633
      %v9910 = vunpack.c.l.b16 %v9647
      %v9911 = vunpack.c.l.b16 %v9657
      %v9912 = vunpack.c.l.b16 %v9671
      %v9913 = vunpack.c.l.b16 %v9681
      %v9914 = vunpack.c.l.b16 %v9695
      %v9915 = vunpack.c.l.b16 %v9705
      %v9916 = vunpack.c.l.b16 %v9719
      %v9917 = vunpack.c.l.b16 %v9729
      %v9918 = vunpack.c.l.b16 %v9743
      %v9919 = vunpack.c.l.b16 %v9753
      %v9920 = vunpack.c.l.b16 %v9767
      %v9921 = vunpack.c.l.b16 %v9777
      %v9922 = vunpack.c.l.b16 %v9791
      %v9923 = vunpack.c.l.b16 %v9801
      %v9924 = vunpack.c.l.b16 %v9815
      %v9925 = vunpack.c.l.b16 %v9825
      %v9926 = vunpack.c.l.b16 %v9839
      %v9927 = vunpack.c.l.b16 %v9849
      %v9928 = vunpack.c.l.b16 %v9863
      %v9929 = vunpack.c.l.b16 %v9873
      %v9930 = vunpack.c.l.b16 %v9887
      %v9931 = vunpack.c.l.b16 %v9897
      %v9932 = vpack.c.b16 %v9901, %v9900
      %v9933 = vpack.c.b16 %v9903, %v9902
      %v9934 = vpack.c.b16 %v9905, %v9904
      %v9935 = vpack.c.b16 %v9907, %v9906
      %v9936 = vpack.c.b16 %v9909, %v9908
      %v9937 = vpack.c.b16 %v9911, %v9910
      %v9938 = vpack.c.b16 %v9913, %v9912
      %v9939 = vpack.c.b16 %v9915, %v9914
      %v9940 = vpack.c.b16 %v9917, %v9916
      %v9941 = vpack.c.b16 %v9919, %v9918
      %v9942 = vpack.c.b16 %v9921, %v9920
      %v9943 = vpack.c.b16 %v9923, %v9922
      %v9944 = vpack.c.b16 %v9925, %v9924
      %v9945 = vpack.c.b16 %v9927, %v9926
      %v9946 = vpack.c.b16 %v9929, %v9928
      %v9947 = vpack.c.b16 %v9931, %v9930
      %v9950 = vunpack.c.l.b16 %v9898
      %v9951 = vunpack.c.l.b16 %v9899
      %v9952 = vpack.c.b16 %v9951, %v9950
      %v9955 = vsel %vm1344, %v9932, 0
      %v9958 = vsel %vm1344, %v9933, 0
      %v9961 = vsel %vm1344, %v9934, 0
      %v9964 = vsel %vm1344, %v9935, 0
      %v9967 = vsel %vm1344, %v9936, 0
      %v9970 = vsel %vm1344, %v9937, 0
      %v9973 = vsel %vm1344, %v9938, 0
      %v9976 = vsel %vm1344, %v9939, 0
      %v9979 = vsel %vm1344, %v9940, 0
      %v9982 = vsel %vm1344, %v9941, 0
      %v9985 = vsel %vm1344, %v9942, 0
      %v9988 = vsel %vm1344, %v9943, 0
      %v9991 = vsel %vm1344, %v9944, 0
      %v9994 = vsel %vm1344, %v9945, 0
      %v9997 = vsel %vm1344, %v9946, 0
      %v10000 = vsel %vm1344, %v9947, 0
      %10002 = vmatprep.subr.bf16.mxu0 0
      %10003 = vmatpush1.bf16.msra.mxu0 %v9952
      %10004 = vmatprep.subr.bf16.mxu0 0
      %10005 = vmatpush1.bf16.msra.mxu0 0
      %10006 = vmatprep.subr.bf16.mxu0 0
      %10007 = vmatpush1.bf16.msra.mxu0 0
      %10008 = vmatprep.subr.bf16.mxu0 0
      %10009 = vmatpush1.bf16.msra.mxu0 0
      %10010 = vmatprep.subr.bf16.mxu0 0
      %10011 = vmatpush1.bf16.msra.mxu0 0
      %10012 = vmatprep.subr.bf16.mxu0 0
      %10013 = vmatpush1.bf16.msra.mxu0 0
      %10014 = vmatprep.subr.bf16.mxu0 0
      %10015 = vmatpush1.bf16.msra.mxu0 0
      %10016 = vmatprep.subr.bf16.mxu0 0
      %10017 = vmatpush1.bf16.msra.mxu0 0
      %10018 = vmatprep.subr.bf16.mxu0 0
      %10019 = vmatpush1.bf16.msra.mxu0 0
      %10020 = vmatprep.subr.bf16.mxu0 0
      %10021 = vmatpush1.bf16.msra.mxu0 0
      %10022 = vmatprep.subr.bf16.mxu0 0
      %10023 = vmatpush1.bf16.msra.mxu0 0
      %10024 = vmatprep.subr.bf16.mxu0 0
      %10025 = vmatpush1.bf16.msra.mxu0 0
      %10026 = vmatprep.subr.bf16.mxu0 0
      %10027 = vmatpush1.bf16.msra.mxu0 0
      %10028 = vmatprep.subr.bf16.mxu0 0
      %10029 = vmatpush1.bf16.msra.mxu0 0
      %10030 = vmatprep.subr.bf16.mxu0 0
      %10031 = vmatpush1.bf16.msra.mxu0 0
      %10032 = vmatprep.subr.bf16.mxu0 0
      %10033 = vmatpush1.bf16.msra.mxu0 0
      %10034 = vmatprep.mubr.bf16.mxu0 0
      %10035 = vmatmul.mubr.bf16.gmra.mrb[0].mxu0 %v9955
      %v10036 = vpop.f32.mrb[0].mxu0
      %v10037 = vadd.f32 0.0, %v10036
      %v10038 = vpop.f32.mrb[0].mxu0
      %v10039 = vpop.f32.mrb[0].mxu0
      %v10040 = vadd.f32 0.0, %v10039
      %v10041 = vpop.f32.mrb[0].mxu0
      %10042 = vmatprep.mubr.bf16.mxu0 0
      %10043 = vmatmul.mubr.bf16.gmra.mrb[0].mxu0 %v9958
      %v10044 = vpop.f32.mrb[0].mxu0
      %v10045 = vadd.f32 0.0, %v10044
      %v10046 = vpop.f32.mrb[0].mxu0
      %v10047 = vpop.f32.mrb[0].mxu0
      %v10048 = vadd.f32 0.0, %v10047
      %v10049 = vpop.f32.mrb[0].mxu0
      %10050 = vmatprep.mubr.bf16.mxu0 0
      %10051 = vmatmul.mubr.bf16.gmra.mrb[0].mxu0 %v9961
      %v10052 = vpop.f32.mrb[0].mxu0
      %v10053 = vadd.f32 0.0, %v10052
      %v10054 = vpop.f32.mrb[0].mxu0
      %v10055 = vpop.f32.mrb[0].mxu0
      %v10056 = vadd.f32 0.0, %v10055
      %v10057 = vpop.f32.mrb[0].mxu0
      %10058 = vmatprep.mubr.bf16.mxu0 0
      %10059 = vmatmul.mubr.bf16.gmra.mrb[0].mxu0 %v9964
      %v10060 = vpop.f32.mrb[0].mxu0
      %v10061 = vadd.f32 0.0, %v10060
      %v10062 = vpop.f32.mrb[0].mxu0
      %v10063 = vpop.f32.mrb[0].mxu0
      %v10064 = vadd.f32 0.0, %v10063
      %v10065 = vpop.f32.mrb[0].mxu0
      %10066 = vmatprep.mubr.bf16.mxu0 0
      %10067 = vmatmul.mubr.bf16.gmra.mrb[0].mxu0 %v9967
      %v10068 = vpop.f32.mrb[0].mxu0
      %v10069 = vadd.f32 0.0, %v10068
      %v10070 = vpop.f32.mrb[0].mxu0
      %v10071 = vpop.f32.mrb[0].mxu0
      %v10072 = vadd.f32 0.0, %v10071
      %v10073 = vpop.f32.mrb[0].mxu0
      %10074 = vmatprep.mubr.bf16.mxu0 0
      %10075 = vmatmul.mubr.bf16.gmra.mrb[0].mxu0 %v9970
      %v10076 = vpop.f32.mrb[0].mxu0
      %v10077 = vadd.f32 0.0, %v10076
      %v10078 = vpop.f32.mrb[0].mxu0
      %v10079 = vpop.f32.mrb[0].mxu0
      %v10080 = vadd.f32 0.0, %v10079
      %v10081 = vpop.f32.mrb[0].mxu0
      %10082 = vmatprep.mubr.bf16.mxu0 0
      %10083 = vmatmul.mubr.bf16.gmra.mrb[0].mxu0 %v9973
      %v10084 = vpop.f32.mrb[0].mxu0
      %v10085 = vadd.f32 0.0, %v10084
      %v10086 = vpop.f32.mrb[0].mxu0
      %v10087 = vpop.f32.mrb[0].mxu0
      %v10088 = vadd.f32 0.0, %v10087
      %v10089 = vpop.f32.mrb[0].mxu0
      %10090 = vmatprep.mubr.bf16.mxu0 0
      %10091 = vmatmul.mubr.bf16.gmra.mrb[0].mxu0 %v9976
      %v10092 = vpop.f32.mrb[0].mxu0
      %v10093 = vadd.f32 0.0, %v10092
      %v10094 = vpop.f32.mrb[0].mxu0
      %v10095 = vpop.f32.mrb[0].mxu0
      %v10096 = vadd.f32 0.0, %v10095
      %v10097 = vpop.f32.mrb[0].mxu0
      %10098 = vmatprep.mubr.bf16.mxu0 0
      %10099 = vmatmul.mubr.bf16.gmra.mrb[0].mxu0 %v9979
      %v10100 = vpop.f32.mrb[0].mxu0
      %v10101 = vadd.f32 0.0, %v10100
      %v10102 = vpop.f32.mrb[0].mxu0
      %v10103 = vpop.f32.mrb[0].mxu0
      %v10104 = vadd.f32 0.0, %v10103
      %v10105 = vpop.f32.mrb[0].mxu0
      %10106 = vmatprep.mubr.bf16.mxu0 0
      %10107 = vmatmul.mubr.bf16.gmra.mrb[0].mxu0 %v9982
      %v10108 = vpop.f32.mrb[0].mxu0
      %v10109 = vadd.f32 0.0, %v10108
      %v10110 = vpop.f32.mrb[0].mxu0
      %v10111 = vpop.f32.mrb[0].mxu0
      %v10112 = vadd.f32 0.0, %v10111
      %v10113 = vpop.f32.mrb[0].mxu0
      %10114 = vmatprep.mubr.bf16.mxu0 0
      %10115 = vmatmul.mubr.bf16.gmra.mrb[0].mxu0 %v9985
      %v10116 = vpop.f32.mrb[0].mxu0
      %v10117 = vadd.f32 0.0, %v10116
      %v10118 = vpop.f32.mrb[0].mxu0
      %v10119 = vpop.f32.mrb[0].mxu0
      %v10120 = vadd.f32 0.0, %v10119
      %v10121 = vpop.f32.mrb[0].mxu0
      %10122 = vmatprep.mubr.bf16.mxu0 0
      %10123 = vmatmul.mubr.bf16.gmra.mrb[0].mxu0 %v9988
      %v10124 = vpop.f32.mrb[0].mxu0
      %v10125 = vadd.f32 0.0, %v10124
      %v10126 = vpop.f32.mrb[0].mxu0
      %v10127 = vpop.f32.mrb[0].mxu0
      %v10128 = vadd.f32 0.0, %v10127
      %v10129 = vpop.f32.mrb[0].mxu0
      %10130 = vmatprep.mubr.bf16.mxu0 0
      %10131 = vmatmul.mubr.bf16.gmra.mrb[0].mxu0 %v9991
      %v10132 = vpop.f32.mrb[0].mxu0
      %v10133 = vadd.f32 0.0, %v10132
      %v10134 = vpop.f32.mrb[0].mxu0
      %v10135 = vpop.f32.mrb[0].mxu0
      %v10136 = vadd.f32 0.0, %v10135
      %v10137 = vpop.f32.mrb[0].mxu0
      %10138 = vmatprep.mubr.bf16.mxu0 0
      %10139 = vmatmul.mubr.bf16.gmra.mrb[0].mxu0 %v9994
      %v10140 = vpop.f32.mrb[0].mxu0
      %v10141 = vadd.f32 0.0, %v10140
      %v10142 = vpop.f32.mrb[0].mxu0
      %v10143 = vpop.f32.mrb[0].mxu0
      %v10144 = vadd.f32 0.0, %v10143
      %v10145 = vpop.f32.mrb[0].mxu0
      %10146 = vmatprep.mubr.bf16.mxu0 0
      %10147 = vmatmul.mubr.bf16.gmra.mrb[0].mxu0 %v9997
      %v10148 = vpop.f32.mrb[0].mxu0
      %v10149 = vadd.f32 0.0, %v10148
      %v10150 = vpop.f32.mrb[0].mxu0
      %v10151 = vpop.f32.mrb[0].mxu0
      %v10152 = vadd.f32 0.0, %v10151
      %v10153 = vpop.f32.mrb[0].mxu0
      %10154 = vmatprep.mubr.bf16.mxu0 0
      %10155 = vmatmul.mubr.bf16.gmra.mrb[0].mxu0 %v10000
      %v10156 = vpop.f32.mrb[0].mxu0
      %v10157 = vadd.f32 0.0, %v10156
      %v10158 = vpop.f32.mrb[0].mxu0
      %v10159 = vpop.f32.mrb[0].mxu0
      %v10160 = vadd.f32 0.0, %v10159
      %v10161 = vpop.f32.mrb[0].mxu0
      %10162 = vdwg.mxu0
      %v10163 = vadd.f32 %v9434, %v10037
      %v10164 = vadd.f32 %v9435, %v10040
      %v10165 = vadd.f32 %v9436, %v10045
      %v10166 = vadd.f32 %v9437, %v10048
      %v10167 = vadd.f32 %v9438, %v10053
      %v10168 = vadd.f32 %v9439, %v10056
      %v10169 = vadd.f32 %v9440, %v10061
      %v10170 = vadd.f32 %v9441, %v10064
      %v10171 = vadd.f32 %v9442, %v10069
      %v10172 = vadd.f32 %v9443, %v10072
      %v10173 = vadd.f32 %v9444, %v10077
      %v10174 = vadd.f32 %v9445, %v10080
      %v10175 = vadd.f32 %v9446, %v10085
      %v10176 = vadd.f32 %v9447, %v10088
      %v10177 = vadd.f32 %v9448, %v10093
      %v10178 = vadd.f32 %v9449, %v10096
      %v10179 = vadd.f32 %v9450, %v10101
      %v10180 = vadd.f32 %v9451, %v10104
      %v10181 = vadd.f32 %v9452, %v10109
      %v10182 = vadd.f32 %v9453, %v10112
      %v10183 = vadd.f32 %v9454, %v10117
      %v10184 = vadd.f32 %v9455, %v10120
      %v10185 = vadd.f32 %v9456, %v10125
      %v10186 = vadd.f32 %v9457, %v10128
      %v10187 = vadd.f32 %v9458, %v10133
      %v10188 = vadd.f32 %v9459, %v10136
      %v10189 = vadd.f32 %v9460, %v10141
      %v10190 = vadd.f32 %v9461, %v10144
      %v10191 = vadd.f32 %v9462, %v10149
      %v10192 = vadd.f32 %v9463, %v10152
      %v10193 = vadd.f32 %v9464, %v10157
      %v10194 = vadd.f32 %v9465, %v10160
      %v10195 = vld [vmem:[%s9104] sm:$0xe]
      %v10196 = vld [vmem:[%s9104 + $0xc] sm:$0xe]
      %v10197 = vld [vmem:[%s9104 + $0x18] sm:$0xe]
      %v10198 = vld [vmem:[%s9104 + $0x24] sm:$0xe]
      %v10199 = vld [vmem:[%s9104 + $0x30] sm:$0xe]
      %v10200 = vld [vmem:[%s9104 + $0x3c] sm:$0xe]
      %v10201 = vld [vmem:[%s9104 + $0x48] sm:$0xe]
      %v10202 = vld [vmem:[%s9104 + $0x54] sm:$0xe]
      %v10203 = vld [vmem:[%s9104 + $0x60] sm:$0xe]
      %v10204 = vld [vmem:[%s9104 + $0x6c] sm:$0xe]
      %v10205 = vld [vmem:[%s9104 + $0x78] sm:$0xe]
      %v10206 = vld [vmem:[%s9104 + $0x84] sm:$0xe]
      %v10207 = vld [vmem:[%s9104 + $0x90] sm:$0xe]
      %v10208 = vld [vmem:[%s9104 + $0x9c] sm:$0xe]
      %v10209 = vld [vmem:[%s9104 + $0xa8] sm:$0xe]
      %v10210 = vld [vmem:[%s9104 + $0xb4] sm:$0xe]
      %v10259 = vrot.slane %v10195, 5
      %v10260 = vrot.slane %v10259, 4
      %v10261 = vrot.slane %v9467, 5
      %v10262 = vsel %vm1899, %v10260, %v10261
      %v10263 = vrot.slane %v10261, 4
      %v10264 = vrot.slane %v9468, 5
      %v10265 = vsel %vm1899, %v10263, %v10264
      %v10266 = vrot.slane %v10196, 5
      %v10267 = vrot.slane %v10266, 4
      %v10268 = vrot.slane %v9470, 5
      %v10269 = vsel %vm1899, %v10267, %v10268
      %v10270 = vrot.slane %v10268, 4
      %v10271 = vrot.slane %v9471, 5
      %v10272 = vsel %vm1899, %v10270, %v10271
      %v10273 = vrot.slane %v10197, 5
      %v10274 = vrot.slane %v10273, 4
      %v10275 = vrot.slane %v9473, 5
      %v10276 = vsel %vm1899, %v10274, %v10275
      %v10277 = vrot.slane %v10275, 4
      %v10278 = vrot.slane %v9474, 5
      %v10279 = vsel %vm1899, %v10277, %v10278
      %v10280 = vrot.slane %v10198, 5
      %v10281 = vrot.slane %v10280, 4
      %v10282 = vrot.slane %v9476, 5
      %v10283 = vsel %vm1899, %v10281, %v10282
      %v10284 = vrot.slane %v10282, 4
      %v10285 = vrot.slane %v9477, 5
      %v10286 = vsel %vm1899, %v10284, %v10285
      %v10287 = vrot.slane %v10199, 5
      %v10288 = vrot.slane %v10287, 4
      %v10289 = vrot.slane %v9479, 5
      %v10290 = vsel %vm1899, %v10288, %v10289
      %v10291 = vrot.slane %v10289, 4
      %v10292 = vrot.slane %v9480, 5
      %v10293 = vsel %vm1899, %v10291, %v10292
      %v10294 = vrot.slane %v10200, 5
      %v10295 = vrot.slane %v10294, 4
      %v10296 = vrot.slane %v9482, 5
      %v10297 = vsel %vm1899, %v10295, %v10296
      %v10298 = vrot.slane %v10296, 4
      %v10299 = vrot.slane %v9483, 5
      %v10300 = vsel %vm1899, %v10298, %v10299
      %v10301 = vrot.slane %v10201, 5
      %v10302 = vrot.slane %v10301, 4
      %v10303 = vrot.slane %v9485, 5
      %v10304 = vsel %vm1899, %v10302, %v10303
      %v10305 = vrot.slane %v10303, 4
      %v10306 = vrot.slane %v9486, 5
      %v10307 = vsel %vm1899, %v10305, %v10306
      %v10308 = vrot.slane %v10202, 5
      %v10309 = vrot.slane %v10308, 4
      %v10310 = vrot.slane %v9488, 5
      %v10311 = vsel %vm1899, %v10309, %v10310
      %v10312 = vrot.slane %v10310, 4
      %v10313 = vrot.slane %v9489, 5
      %v10314 = vsel %vm1899, %v10312, %v10313
      %v10315 = vrot.slane %v10203, 5
      %v10316 = vrot.slane %v10315, 4
      %v10317 = vrot.slane %v9491, 5
      %v10318 = vsel %vm1899, %v10316, %v10317
      %v10319 = vrot.slane %v10317, 4
      %v10320 = vrot.slane %v9492, 5
      %v10321 = vsel %vm1899, %v10319, %v10320
      %v10322 = vrot.slane %v10204, 5
      %v10323 = vrot.slane %v10322, 4
      %v10324 = vrot.slane %v9494, 5
      %v10325 = vsel %vm1899, %v10323, %v10324
      %v10326 = vrot.slane %v10324, 4
      %v10327 = vrot.slane %v9495, 5
      %v10328 = vsel %vm1899, %v10326, %v10327
      %v10329 = vrot.slane %v10205, 5
      %v10330 = vrot.slane %v10329, 4
      %v10331 = vrot.slane %v9497, 5
      %v10332 = vsel %vm1899, %v10330, %v10331
      %v10333 = vrot.slane %v10331, 4
      %v10334 = vrot.slane %v9498, 5
      %v10335 = vsel %vm1899, %v10333, %v10334
      %v10336 = vrot.slane %v10206, 5
      %v10337 = vrot.slane %v10336, 4
      %v10338 = vrot.slane %v9500, 5
      %v10339 = vsel %vm1899, %v10337, %v10338
      %v10340 = vrot.slane %v10338, 4
      %v10341 = vrot.slane %v9501, 5
      %v10342 = vsel %vm1899, %v10340, %v10341
      %v10343 = vrot.slane %v10207, 5
      %v10344 = vrot.slane %v10343, 4
      %v10345 = vrot.slane %v9503, 5
      %v10346 = vsel %vm1899, %v10344, %v10345
      %v10347 = vrot.slane %v10345, 4
      %v10348 = vrot.slane %v9504, 5
      %v10349 = vsel %vm1899, %v10347, %v10348
      %v10350 = vrot.slane %v10208, 5
      %v10351 = vrot.slane %v10350, 4
      %v10352 = vrot.slane %v9506, 5
      %v10353 = vsel %vm1899, %v10351, %v10352
      %v10354 = vrot.slane %v10352, 4
      %v10355 = vrot.slane %v9507, 5
      %v10356 = vsel %vm1899, %v10354, %v10355
      %v10357 = vrot.slane %v10209, 5
      %v10358 = vrot.slane %v10357, 4
      %v10359 = vrot.slane %v9509, 5
      %v10360 = vsel %vm1899, %v10358, %v10359
      %v10361 = vrot.slane %v10359, 4
      %v10362 = vrot.slane %v9510, 5
      %v10363 = vsel %vm1899, %v10361, %v10362
      %v10364 = vrot.slane %v10210, 5
      %v10365 = vrot.slane %v10364, 4
      %v10366 = vrot.slane %v9512, 5
      %v10367 = vsel %vm1899, %v10365, %v10366
      %v10368 = vrot.slane %v10366, 4
      %v10369 = vrot.slane %v9513, 5
      %v10370 = vsel %vm1899, %v10368, %v10369
      %v10371 = vld [vmem:[%s3 + $0x40] sm:$0xf]
      %v10372 = vld [vmem:[%s3 + $0x44] sm:$0xf]
      %v10373 = vunpack.c.l.b16 %v10262
      %v10374 = vunpack.c.l.b16 %v10265
      %v10375 = vunpack.c.l.b16 %v10269
      %v10376 = vunpack.c.l.b16 %v10272
      %v10377 = vunpack.c.l.b16 %v10276
      %v10378 = vunpack.c.l.b16 %v10279
      %v10379 = vunpack.c.l.b16 %v10283
      %v10380 = vunpack.c.l.b16 %v10286
      %v10381 = vunpack.c.l.b16 %v10290
      %v10382 = vunpack.c.l.b16 %v10293
      %v10383 = vunpack.c.l.b16 %v10297
      %v10384 = vunpack.c.l.b16 %v10300
      %v10385 = vunpack.c.l.b16 %v10304
      %v10386 = vunpack.c.l.b16 %v10307
      %v10387 = vunpack.c.l.b16 %v10311
      %v10388 = vunpack.c.l.b16 %v10314
      %v10389 = vunpack.c.l.b16 %v10318
      %v10390 = vunpack.c.l.b16 %v10321
      %v10391 = vunpack.c.l.b16 %v10325
      %v10392 = vunpack.c.l.b16 %v10328
      %v10393 = vunpack.c.l.b16 %v10332
      %v10394 = vunpack.c.l.b16 %v10335
      %v10395 = vunpack.c.l.b16 %v10339
      %v10396 = vunpack.c.l.b16 %v10342
      %v10397 = vunpack.c.l.b16 %v10346
      %v10398 = vunpack.c.l.b16 %v10349
      %v10399 = vunpack.c.l.b16 %v10353
      %v10400 = vunpack.c.l.b16 %v10356
      %v10401 = vunpack.c.l.b16 %v10360
      %v10402 = vunpack.c.l.b16 %v10363
      %v10403 = vunpack.c.l.b16 %v10367
      %v10404 = vunpack.c.l.b16 %v10370
      %v10405 = vpack.c.b16 %v10374, %v10373
      %v10406 = vpack.c.b16 %v10376, %v10375
      %v10407 = vpack.c.b16 %v10378, %v10377
      %v10408 = vpack.c.b16 %v10380, %v10379
      %v10409 = vpack.c.b16 %v10382, %v10381
      %v10410 = vpack.c.b16 %v10384, %v10383
      %v10411 = vpack.c.b16 %v10386, %v10385
      %v10412 = vpack.c.b16 %v10388, %v10387
      %v10413 = vpack.c.b16 %v10390, %v10389
      %v10414 = vpack.c.b16 %v10392, %v10391
      %v10415 = vpack.c.b16 %v10394, %v10393
      %v10416 = vpack.c.b16 %v10396, %v10395
      %v10417 = vpack.c.b16 %v10398, %v10397
      %v10418 = vpack.c.b16 %v10400, %v10399
      %v10419 = vpack.c.b16 %v10402, %v10401
      %v10420 = vpack.c.b16 %v10404, %v10403
      %v10423 = vunpack.c.l.b16 %v10371
      %v10424 = vunpack.c.l.b16 %v10372
      %v10425 = vpack.c.b16 %v10424, %v10423
      %v10428 = vsel %vm1344, %v10405, 0
      %v10431 = vsel %vm1344, %v10406, 0
      %v10434 = vsel %vm1344, %v10407, 0
      %v10437 = vsel %vm1344, %v10408, 0
      %v10440 = vsel %vm1344, %v10409, 0
      %v10443 = vsel %vm1344, %v10410, 0
      %v10446 = vsel %vm1344, %v10411, 0
      %v10449 = vsel %vm1344, %v10412, 0
      %v10452 = vsel %vm1344, %v10413, 0
      %v10455 = vsel %vm1344, %v10414, 0
      %v10458 = vsel %vm1344, %v10415, 0
      %v10461 = vsel %vm1344, %v10416, 0
      %v10464 = vsel %vm1344, %v10417, 0
      %v10467 = vsel %vm1344, %v10418, 0
      %v10470 = vsel %vm1344, %v10419, 0
      %v10473 = vsel %vm1344, %v10420, 0
      %10475 = vmatprep.subr.bf16.mxu0 0
      %10476 = vmatpush1.bf16.msra.mxu0 %v10425
      %10477 = vmatprep.subr.bf16.mxu0 0
      %10478 = vmatpush1.bf16.msra.mxu0 0
      %10479 = vmatprep.subr.bf16.mxu0 0
      %10480 = vmatpush1.bf16.msra.mxu0 0
      %10481 = vmatprep.subr.bf16.mxu0 0
      %10482 = vmatpush1.bf16.msra.mxu0 0
      %10483 = vmatprep.subr.bf16.mxu0 0
      %10484 = vmatpush1.bf16.msra.mxu0 0
      %10485 = vmatprep.subr.bf16.mxu0 0
      %10486 = vmatpush1.bf16.msra.mxu0 0
      %10487 = vmatprep.subr.bf16.mxu0 0
      %10488 = vmatpush1.bf16.msra.mxu0 0
      %10489 = vmatprep.subr.bf16.mxu0 0
      %10490 = vmatpush1.bf16.msra.mxu0 0
      %10491 = vmatprep.subr.bf16.mxu0 0
      %10492 = vmatpush1.bf16.msra.mxu0 0
      %10493 = vmatprep.subr.bf16.mxu0 0
      %10494 = vmatpush1.bf16.msra.mxu0 0
      %10495 = vmatprep.subr.bf16.mxu0 0
      %10496 = vmatpush1.bf16.msra.mxu0 0
      %10497 = vmatprep.subr.bf16.mxu0 0
      %10498 = vmatpush1.bf16.msra.mxu0 0
      %10499 = vmatprep.subr.bf16.mxu0 0
      %10500 = vmatpush1.bf16.msra.mxu0 0
      %10501 = vmatprep.subr.bf16.mxu0 0
      %10502 = vmatpush1.bf16.msra.mxu0 0
      %10503 = vmatprep.subr.bf16.mxu0 0
      %10504 = vmatpush1.bf16.msra.mxu0 0
      %10505 = vmatprep.subr.bf16.mxu0 0
      %10506 = vmatpush1.bf16.msra.mxu0 0
      %10507 = vmatprep.mubr.bf16.mxu0 0
      %10508 = vmatmul.mubr.bf16.gmra.mrb[0].mxu0 %v10428
      %v10509 = vpop.f32.mrb[0].mxu0
      %v10510 = vadd.f32 0.0, %v10509
      %v10511 = vpop.f32.mrb[0].mxu0
      %v10512 = vpop.f32.mrb[0].mxu0
      %v10513 = vadd.f32 0.0, %v10512
      %v10514 = vpop.f32.mrb[0].mxu0
      %10515 = vmatprep.mubr.bf16.mxu0 0
      %10516 = vmatmul.mubr.bf16.gmra.mrb[0].mxu0 %v10431
      %v10517 = vpop.f32.mrb[0].mxu0
      %v10518 = vadd.f32 0.0, %v10517
      %v10519 = vpop.f32.mrb[0].mxu0
      %v10520 = vpop.f32.mrb[0].mxu0
      %v10521 = vadd.f32 0.0, %v10520
      %v10522 = vpop.f32.mrb[0].mxu0
      %10523 = vmatprep.mubr.bf16.mxu0 0
      %10524 = vmatmul.mubr.bf16.gmra.mrb[0].mxu0 %v10434
      %v10525 = vpop.f32.mrb[0].mxu0
      %v10526 = vadd.f32 0.0, %v10525
      %v10527 = vpop.f32.mrb[0].mxu0
      %v10528 = vpop.f32.mrb[0].mxu0
      %v10529 = vadd.f32 0.0, %v10528
      %v10530 = vpop.f32.mrb[0].mxu0
      %10531 = vmatprep.mubr.bf16.mxu0 0
      %10532 = vmatmul.mubr.bf16.gmra.mrb[0].mxu0 %v10437
      %v10533 = vpop.f32.mrb[0].mxu0
      %v10534 = vadd.f32 0.0, %v10533
      %v10535 = vpop.f32.mrb[0].mxu0
      %v10536 = vpop.f32.mrb[0].mxu0
      %v10537 = vadd.f32 0.0, %v10536
      %v10538 = vpop.f32.mrb[0].mxu0
      %10539 = vmatprep.mubr.bf16.mxu0 0
      %10540 = vmatmul.mubr.bf16.gmra.mrb[0].mxu0 %v10440
      %v10541 = vpop.f32.mrb[0].mxu0
      %v10542 = vadd.f32 0.0, %v10541
      %v10543 = vpop.f32.mrb[0].mxu0
      %v10544 = vpop.f32.mrb[0].mxu0
      %v10545 = vadd.f32 0.0, %v10544
      %v10546 = vpop.f32.mrb[0].mxu0
      %10547 = vmatprep.mubr.bf16.mxu0 0
      %10548 = vmatmul.mubr.bf16.gmra.mrb[0].mxu0 %v10443
      %v10549 = vpop.f32.mrb[0].mxu0
      %v10550 = vadd.f32 0.0, %v10549
      %v10551 = vpop.f32.mrb[0].mxu0
      %v10552 = vpop.f32.mrb[0].mxu0
      %v10553 = vadd.f32 0.0, %v10552
      %v10554 = vpop.f32.mrb[0].mxu0
      %10555 = vmatprep.mubr.bf16.mxu0 0
      %10556 = vmatmul.mubr.bf16.gmra.mrb[0].mxu0 %v10446
      %v10557 = vpop.f32.mrb[0].mxu0
      %v10558 = vadd.f32 0.0, %v10557
      %v10559 = vpop.f32.mrb[0].mxu0
      %v10560 = vpop.f32.mrb[0].mxu0
      %v10561 = vadd.f32 0.0, %v10560
      %v10562 = vpop.f32.mrb[0].mxu0
      %10563 = vmatprep.mubr.bf16.mxu0 0
      %10564 = vmatmul.mubr.bf16.gmra.mrb[0].mxu0 %v10449
      %v10565 = vpop.f32.mrb[0].mxu0
      %v10566 = vadd.f32 0.0, %v10565
      %v10567 = vpop.f32.mrb[0].mxu0
      %v10568 = vpop.f32.mrb[0].mxu0
      %v10569 = vadd.f32 0.0, %v10568
      %v10570 = vpop.f32.mrb[0].mxu0
      %10571 = vmatprep.mubr.bf16.mxu0 0
      %10572 = vmatmul.mubr.bf16.gmra.mrb[0].mxu0 %v10452
      %v10573 = vpop.f32.mrb[0].mxu0
      %v10574 = vadd.f32 0.0, %v10573
      %v10575 = vpop.f32.mrb[0].mxu0
      %v10576 = vpop.f32.mrb[0].mxu0
      %v10577 = vadd.f32 0.0, %v10576
      %v10578 = vpop.f32.mrb[0].mxu0
      %10579 = vmatprep.mubr.bf16.mxu0 0
      %10580 = vmatmul.mubr.bf16.gmra.mrb[0].mxu0 %v10455
      %v10581 = vpop.f32.mrb[0].mxu0
      %v10582 = vadd.f32 0.0, %v10581
      %v10583 = vpop.f32.mrb[0].mxu0
      %v10584 = vpop.f32.mrb[0].mxu0
      %v10585 = vadd.f32 0.0, %v10584
      %v10586 = vpop.f32.mrb[0].mxu0
      %10587 = vmatprep.mubr.bf16.mxu0 0
      %10588 = vmatmul.mubr.bf16.gmra.mrb[0].mxu0 %v10458
      %v10589 = vpop.f32.mrb[0].mxu0
      %v10590 = vadd.f32 0.0, %v10589
      %v10591 = vpop.f32.mrb[0].mxu0
      %v10592 = vpop.f32.mrb[0].mxu0
      %v10593 = vadd.f32 0.0, %v10592
      %v10594 = vpop.f32.mrb[0].mxu0
      %10595 = vmatprep.mubr.bf16.mxu0 0
      %10596 = vmatmul.mubr.bf16.gmra.mrb[0].mxu0 %v10461
      %v10597 = vpop.f32.mrb[0].mxu0
      %v10598 = vadd.f32 0.0, %v10597
      %v10599 = vpop.f32.mrb[0].mxu0
      %v10600 = vpop.f32.mrb[0].mxu0
      %v10601 = vadd.f32 0.0, %v10600
      %v10602 = vpop.f32.mrb[0].mxu0
      %10603 = vmatprep.mubr.bf16.mxu0 0
      %10604 = vmatmul.mubr.bf16.gmra.mrb[0].mxu0 %v10464
      %v10605 = vpop.f32.mrb[0].mxu0
      %v10606 = vadd.f32 0.0, %v10605
      %v10607 = vpop.f32.mrb[0].mxu0
      %v10608 = vpop.f32.mrb[0].mxu0
      %v10609 = vadd.f32 0.0, %v10608
      %v10610 = vpop.f32.mrb[0].mxu0
      %10611 = vmatprep.mubr.bf16.mxu0 0
      %10612 = vmatmul.mubr.bf16.gmra.mrb[0].mxu0 %v10467
      %v10613 = vpop.f32.mrb[0].mxu0
      %v10614 = vadd.f32 0.0, %v10613
      %v10615 = vpop.f32.mrb[0].mxu0
      %v10616 = vpop.f32.mrb[0].mxu0
      %v10617 = vadd.f32 0.0, %v10616
      %v10618 = vpop.f32.mrb[0].mxu0
      %10619 = vmatprep.mubr.bf16.mxu0 0
      %10620 = vmatmul.mubr.bf16.gmra.mrb[0].mxu0 %v10470
      %v10621 = vpop.f32.mrb[0].mxu0
      %v10622 = vadd.f32 0.0, %v10621
      %v10623 = vpop.f32.mrb[0].mxu0
      %v10624 = vpop.f32.mrb[0].mxu0
      %v10625 = vadd.f32 0.0, %v10624
      %v10626 = vpop.f32.mrb[0].mxu0
      %10627 = vmatprep.mubr.bf16.mxu0 0
      %10628 = vmatmul.mubr.bf16.gmra.mrb[0].mxu0 %v10473
      %v10629 = vpop.f32.mrb[0].mxu0
      %v10630 = vadd.f32 0.0, %v10629
      %v10631 = vpop.f32.mrb[0].mxu0
      %v10632 = vpop.f32.mrb[0].mxu0
      %v10633 = vadd.f32 0.0, %v10632
      %v10634 = vpop.f32.mrb[0].mxu0
      %10635 = vdwg.mxu0
      %v10636 = vadd.f32 %v10163, %v10510
      %v10637 = vadd.f32 %v10164, %v10513
      %v10638 = vadd.f32 %v10165, %v10518
      %v10639 = vadd.f32 %v10166, %v10521
      %v10640 = vadd.f32 %v10167, %v10526
      %v10641 = vadd.f32 %v10168, %v10529
      %v10642 = vadd.f32 %v10169, %v10534
      %v10643 = vadd.f32 %v10170, %v10537
      %v10644 = vadd.f32 %v10171, %v10542
      %v10645 = vadd.f32 %v10172, %v10545
      %v10646 = vadd.f32 %v10173, %v10550
      %v10647 = vadd.f32 %v10174, %v10553
      %v10648 = vadd.f32 %v10175, %v10558
      %v10649 = vadd.f32 %v10176, %v10561
      %v10650 = vadd.f32 %v10177, %v10566
      %v10651 = vadd.f32 %v10178, %v10569
      %v10652 = vadd.f32 %v10179, %v10574
      %v10653 = vadd.f32 %v10180, %v10577
      %v10654 = vadd.f32 %v10181, %v10582
      %v10655 = vadd.f32 %v10182, %v10585
      %v10656 = vadd.f32 %v10183, %v10590
      %v10657 = vadd.f32 %v10184, %v10593
      %v10658 = vadd.f32 %v10185, %v10598
      %v10659 = vadd.f32 %v10186, %v10601
      %v10660 = vadd.f32 %v10187, %v10606
      %v10661 = vadd.f32 %v10188, %v10609
      %v10662 = vadd.f32 %v10189, %v10614
      %v10663 = vadd.f32 %v10190, %v10617
      %v10664 = vadd.f32 %v10191, %v10622
      %v10665 = vadd.f32 %v10192, %v10625
      %v10666 = vadd.f32 %v10193, %v10630
      %v10667 = vadd.f32 %v10194, %v10633
      %v10668 = vld [vmem:[%s4] sm:$0x1]
      %v10670 = vlaneseq
      %v10671 = vshrl.u32 %v10670, 7
      %v10672 = vsub.s32 0, %v10671
      %v10673 = vrot.slane %v10668, %v10672
      %v10675 = vadd.f32 %v10636, %v10673
      %v10676 = vadd.f32 %v10637, %v10673
      %v10677 = vadd.f32 %v10638, %v10673
      %v10678 = vadd.f32 %v10639, %v10673
      %v10679 = vadd.f32 %v10640, %v10673
      %v10680 = vadd.f32 %v10641, %v10673
      %v10681 = vadd.f32 %v10642, %v10673
      %v10682 = vadd.f32 %v10643, %v10673
      %v10683 = vadd.f32 %v10644, %v10673
      %v10684 = vadd.f32 %v10645, %v10673
      %v10685 = vadd.f32 %v10646, %v10673
      %v10686 = vadd.f32 %v10647, %v10673
      %v10687 = vadd.f32 %v10648, %v10673
      %v10688 = vadd.f32 %v10649, %v10673
      %v10689 = vadd.f32 %v10650, %v10673
      %v10690 = vadd.f32 %v10651, %v10673
      %v10691 = vadd.f32 %v10652, %v10673
      %v10692 = vadd.f32 %v10653, %v10673
      %v10693 = vadd.f32 %v10654, %v10673
      %v10694 = vadd.f32 %v10655, %v10673
      %v10695 = vadd.f32 %v10656, %v10673
      %v10696 = vadd.f32 %v10657, %v10673
      %v10697 = vadd.f32 %v10658, %v10673
      %v10698 = vadd.f32 %v10659, %v10673
      %v10699 = vadd.f32 %v10660, %v10673
      %v10700 = vadd.f32 %v10661, %v10673
      %v10701 = vadd.f32 %v10662, %v10673
      %v10702 = vadd.f32 %v10663, %v10673
      %v10703 = vadd.f32 %v10664, %v10673
      %v10704 = vadd.f32 %v10665, %v10673
      %v10705 = vadd.f32 %v10666, %v10673
      %v10706 = vadd.f32 %v10667, %v10673
      %v10707 = vld [vmem:[%s219] sm:$0xff]
      %v10708 = vld [vmem:[%s219 + $0x8] sm:$0xff]
      %v10709 = vld [vmem:[%s219 + $0x10] sm:$0xff]
      %v10710 = vld [vmem:[%s219 + $0x18] sm:$0xff]
      %v10711 = vld [vmem:[%s219 + $0x20] sm:$0xff]
      %v10712 = vld [vmem:[%s219 + $0x28] sm:$0xff]
      %v10713 = vld [vmem:[%s219 + $0x30] sm:$0xff]
      %v10714 = vld [vmem:[%s219 + $0x38] sm:$0xff]
      %v10715 = vld [vmem:[%s219 + $0x40] sm:$0xff]
      %v10716 = vld [vmem:[%s219 + $0x48] sm:$0xff]
      %v10717 = vld [vmem:[%s219 + $0x50] sm:$0xff]
      %v10718 = vld [vmem:[%s219 + $0x58] sm:$0xff]
      %v10719 = vld [vmem:[%s219 + $0x60] sm:$0xff]
      %v10720 = vld [vmem:[%s219 + $0x68] sm:$0xff]
      %v10721 = vld [vmem:[%s219 + $0x70] sm:$0xff]
      %v10722 = vld [vmem:[%s219 + $0x78] sm:$0xff]
      %v10723 = vld [vmem:[%s219 + $0x80] sm:$0xff]
      %v10724 = vld [vmem:[%s219 + $0x88] sm:$0xff]
      %v10725 = vld [vmem:[%s219 + $0x90] sm:$0xff]
      %v10726 = vld [vmem:[%s219 + $0x98] sm:$0xff]
      %v10727 = vld [vmem:[%s219 + $0xa0] sm:$0xff]
      %v10728 = vld [vmem:[%s219 + $0xa8] sm:$0xff]
      %v10729 = vld [vmem:[%s219 + $0xb0] sm:$0xff]
      %v10730 = vld [vmem:[%s219 + $0xb8] sm:$0xff]
      %v10731 = vld [vmem:[%s219 + $0xc0] sm:$0xff]
      %v10732 = vld [vmem:[%s219 + $0xc8] sm:$0xff]
      %v10733 = vld [vmem:[%s219 + $0xd0] sm:$0xff]
      %v10734 = vld [vmem:[%s219 + $0xd8] sm:$0xff]
      %v10735 = vld [vmem:[%s219 + $0xe0] sm:$0xff]
      %v10736 = vld [vmem:[%s219 + $0xe8] sm:$0xff]
      %v10737 = vld [vmem:[%s219 + $0xf0] sm:$0xff]
      %v10738 = vld [vmem:[%s219 + $0xf8] sm:$0xff]
      %v10739 = vadd.f32 %v10675, %v10707
      %v10740 = vadd.f32 %v10676, %v10708
      %v10741 = vadd.f32 %v10677, %v10709
      %v10742 = vadd.f32 %v10678, %v10710
      %v10743 = vadd.f32 %v10679, %v10711
      %v10744 = vadd.f32 %v10680, %v10712
      %v10745 = vadd.f32 %v10681, %v10713
      %v10746 = vadd.f32 %v10682, %v10714
      %v10747 = vadd.f32 %v10683, %v10715
      %v10748 = vadd.f32 %v10684, %v10716
      %v10749 = vadd.f32 %v10685, %v10717
      %v10750 = vadd.f32 %v10686, %v10718
      %v10751 = vadd.f32 %v10687, %v10719
      %v10752 = vadd.f32 %v10688, %v10720
      %v10753 = vadd.f32 %v10689, %v10721
      %v10754 = vadd.f32 %v10690, %v10722
      %v10755 = vadd.f32 %v10691, %v10723
      %v10756 = vadd.f32 %v10692, %v10724
      %v10757 = vadd.f32 %v10693, %v10725
      %v10758 = vadd.f32 %v10694, %v10726
      %v10759 = vadd.f32 %v10695, %v10727
      %v10760 = vadd.f32 %v10696, %v10728
      %v10761 = vadd.f32 %v10697, %v10729
      %v10762 = vadd.f32 %v10698, %v10730
      %v10763 = vadd.f32 %v10699, %v10731
      %v10764 = vadd.f32 %v10700, %v10732
      %v10765 = vadd.f32 %v10701, %v10733
      %v10766 = vadd.f32 %v10702, %v10734
      %v10767 = vadd.f32 %v10703, %v10735
      %v10768 = vadd.f32 %v10704, %v10736
      %v10769 = vadd.f32 %v10705, %v10737
      %v10770 = vadd.f32 %v10706, %v10738
      %v10771 = vmax.f32 %v10739, 0.0
      %v10772 = vmax.f32 %v10740, 0.0
      %v10773 = vmax.f32 %v10741, 0.0
      %v10774 = vmax.f32 %v10742, 0.0
      %v10775 = vmax.f32 %v10743, 0.0
      %v10776 = vmax.f32 %v10744, 0.0
      %v10777 = vmax.f32 %v10745, 0.0
      %v10778 = vmax.f32 %v10746, 0.0
      %v10779 = vmax.f32 %v10747, 0.0
      %v10780 = vmax.f32 %v10748, 0.0
      %v10781 = vmax.f32 %v10749, 0.0
      %v10782 = vmax.f32 %v10750, 0.0
      %v10783 = vmax.f32 %v10751, 0.0
      %v10784 = vmax.f32 %v10752, 0.0
      %v10785 = vmax.f32 %v10753, 0.0
      %v10786 = vmax.f32 %v10754, 0.0
      %v10787 = vmax.f32 %v10755, 0.0
      %v10788 = vmax.f32 %v10756, 0.0
      %v10789 = vmax.f32 %v10757, 0.0
      %v10790 = vmax.f32 %v10758, 0.0
      %v10791 = vmax.f32 %v10759, 0.0
      %v10792 = vmax.f32 %v10760, 0.0
      %v10793 = vmax.f32 %v10761, 0.0
      %v10794 = vmax.f32 %v10762, 0.0
      %v10795 = vmax.f32 %v10763, 0.0
      %v10796 = vmax.f32 %v10764, 0.0
      %v10797 = vmax.f32 %v10765, 0.0
      %v10798 = vmax.f32 %v10766, 0.0
      %v10799 = vmax.f32 %v10767, 0.0
      %v10800 = vmax.f32 %v10768, 0.0
      %v10801 = vmax.f32 %v10769, 0.0
      %v10802 = vmax.f32 %v10770, 0.0
      %10803 = vst.msk [vmem:[%s224] sm:$0xff] %vm1344, %v10771
      %10804 = vst.msk [vmem:[%s224 + $0x8] sm:$0xff] %vm1344, %v10772
      %10805 = vst.msk [vmem:[%s224 + $0x10] sm:$0xff] %vm1344, %v10773
      %10806 = vst.msk [vmem:[%s224 + $0x18] sm:$0xff] %vm1344, %v10774
      %10807 = vst.msk [vmem:[%s224 + $0x20] sm:$0xff] %vm1344, %v10775
      %10808 = vst.msk [vmem:[%s224 + $0x28] sm:$0xff] %vm1344, %v10776
      %10809 = vst.msk [vmem:[%s224 + $0x30] sm:$0xff] %vm1344, %v10777
      %10810 = vst.msk [vmem:[%s224 + $0x38] sm:$0xff] %vm1344, %v10778
      %10811 = vst.msk [vmem:[%s224 + $0x40] sm:$0xff] %vm1344, %v10779
      %10812 = vst.msk [vmem:[%s224 + $0x48] sm:$0xff] %vm1344, %v10780
      %10813 = vst.msk [vmem:[%s224 + $0x50] sm:$0xff] %vm1344, %v10781
      %10814 = vst.msk [vmem:[%s224 + $0x58] sm:$0xff] %vm1344, %v10782
      %10815 = vst.msk [vmem:[%s224 + $0x60] sm:$0xff] %vm1344, %v10783
      %10816 = vst.msk [vmem:[%s224 + $0x68] sm:$0xff] %vm1344, %v10784
      %10817 = vst.msk [vmem:[%s224 + $0x70] sm:$0xff] %vm1344, %v10785
      %10818 = vst.msk [vmem:[%s224 + $0x78] sm:$0xff] %vm1344, %v10786
      %10819 = vst.msk [vmem:[%s224 + $0x80] sm:$0xff] %vm1344, %v10787
      %10820 = vst.msk [vmem:[%s224 + $0x88] sm:$0xff] %vm1344, %v10788
      %10821 = vst.msk [vmem:[%s224 + $0x90] sm:$0xff] %vm1344, %v10789
      %10822 = vst.msk [vmem:[%s224 + $0x98] sm:$0xff] %vm1344, %v10790
      %10823 = vst.msk [vmem:[%s224 + $0xa0] sm:$0xff] %vm1344, %v10791
      %10824 = vst.msk [vmem:[%s224 + $0xa8] sm:$0xff] %vm1344, %v10792
      %10825 = vst.msk [vmem:[%s224 + $0xb0] sm:$0xff] %vm1344, %v10793
      %10826 = vst.msk [vmem:[%s224 + $0xb8] sm:$0xff] %vm1344, %v10794
      %10827 = vst.msk [vmem:[%s224 + $0xc0] sm:$0xff] %vm1344, %v10795
      %10828 = vst.msk [vmem:[%s224 + $0xc8] sm:$0xff] %vm1344, %v10796
      %10829 = vst.msk [vmem:[%s224 + $0xd0] sm:$0xff] %vm1344, %v10797
      %10830 = vst.msk [vmem:[%s224 + $0xd8] sm:$0xff] %vm1344, %v10798
      %10831 = vst.msk [vmem:[%s224 + $0xe0] sm:$0xff] %vm1344, %v10799
      %10832 = vst.msk [vmem:[%s224 + $0xe8] sm:$0xff] %vm1344, %v10800
      %10833 = vst.msk [vmem:[%s224 + $0xf0] sm:$0xff] %vm1344, %v10801
      %10834 = vst.msk [vmem:[%s224 + $0xf8] sm:$0xff] %vm1344, %v10802
      %p10835 = scmp.lt.s32.totalorder %s16, 1
      %s10836 = scalar_select %p10835, %s16, 1
      %s10837 = smul.addr %s10836, 32
      %s10838 = smul.addr %s10837, 8
      %s10839 = scalar_lea.vmem %s5, %s10838
      // Predicated region
      $region41: #{block_forward.1} parent=39 // pred_check
        %p10840 = pneg %p144
      $region42: #{block_forward.1} parent=39 // pred_check_branch
        %10842 = sbr.rel (%p10840) target = $region44
      $region43: #{block_forward.1} parent=39 // pred_region
        _
      $region44: #{block_forward.1} parent=39 // pred_fallthru
        _
    $region40: #{block_forward.1} parent=5 // pred_fallthru
      _
    %p10843 = scmp.le.s32.totalorder 2, %s11
    // Predicated region
    $region45: #{block_forward.1} parent=5 // pred_check
      %p10844 = pneg %p10843
    $region46: #{block_forward.1} parent=5 // pred_check_branch
      %10846 = sbr.rel (%p10844) target = $region48
    $region47: #{block_forward.1} parent=5 // pred_region
      %s10847 = ssub.s32 %s11, 2
      // Predicated region
      $region49: #{block_forward.1} parent=47 // pred_check
        %p10848 = pneg %p150
      $region50: #{block_forward.1} parent=47 // pred_check_branch
        %10850 = sbr.rel (%p10848) target = $region52
      $region51: #{block_forward.1} parent=47 // pred_region
        %p10851 = scmp.lt.s32.totalorder %s17, 1
        %s10852 = scalar_select %p10851, %s17, 1
        %s10853 = smul.addr %s10852, 32
        %s10854 = smul.addr %s10853, 8
        %s10855 = scalar_lea.vmem %s5, %s10854
      $region52: #{block_forward.1} parent=47 // pred_fallthru
        _
    $region48: #{block_forward.1} parent=5 // pred_fallthru
      _
  $region6: #{block_forward.1} parent=0 // loop_footer
    %s15 = sadd.s32 1, %s11
  $region7: #{block_forward.1} parent=0 // loop_footer_branch
    %10 = sbr.rel target = $region3
  $region8: #{block_forward.1} parent=0 // loop_exit
    _

</llo_original>
